<compile_context>
chip_gen: v7x
topology: tpu7x:2x2x1
jax: 0.10.0
libtpu: 0.0.40
codegen_flags: <defaults>
</compile_context>

<pallas_src>
import numpy as np
import jax
import jax.numpy as jnp
from jax.experimental import pallas as pl
from jax.experimental.pallas import tpu as pltpu

# ----------------------------------------------------------------------------
# OPLIB: each operator set = (nodal, pool, act)
# ----------------------------------------------------------------------------
OPLIB = [
    ("mul",   "sum", "tanh"),   # set 0: classic convolution neuron
    ("sine",  "sum", "tanh"),   # set 1
    ("cubic", "sum", "tanh"),   # set 2
]

# Network architecture (deterministic, small)
IN_CHANNELS      = 4
TIER_SIZES       = [8, 4]
KERNEL_SIZES     = [3, 3]
OPERATORS        = [[0, 1], [2]]   # operator-set index of each OpBlock per OpTier
SAMPLING_FACTORS = [1, 1]          # TODO(synk): non-unit sampling factors (max-pool / interp resampling) not implemented
PAD              = -1              # -1 => 'same' padding (kernel_size // 2), as in fastonn


# ----------------------------------------------------------------------------
# Host-side helpers
# ----------------------------------------------------------------------------
def _build_tap_masks(H, W, K, pad, n_rep):
    """[K*K, 1, n_rep*H*W] float32 validity mask per conv tap ('same' zero pad).

    With the batch folded into the lane axis, a tap's lane-roll may wrap across
    an image boundary; those lanes are exactly the ones this mask zeroes, so
    tiling the per-image mask n_rep times keeps the fold correct.
    """
    ii, jj = np.meshgrid(np.arange(H), np.arange(W), indexing="ij")
    rows = []
    for kh in range(K):
        for kw in range(K):
            dh, dw = kh - pad, kw - pad
            valid = (ii + dh >= 0) & (ii + dh < H) & (jj + dw >= 0) & (jj + dw < W)
            rows.append(valid.astype(np.float32).reshape(-1))
    m = np.stack(rows, axis=0)              # [K*K, H*W]
    m = np.tile(m, (1, n_rep))              # [K*K, N*H*W]
    return m.reshape(K * K, 1, n_rep * H * W)


# ----------------------------------------------------------------------------
# Fused whole-network Pallas kernel
#   tier 1 = [mul-block, sine-block] fused into one matmul, tier 2 = cubic block
# ----------------------------------------------------------------------------
def _make_fused_opnet_kernel(W, K, pad, c1b, L):

    def kernel(x_ref, mask_ref, lhs1_ref, w1b_ref, b1_ref, w2_ref, b2_ref, o_ref):

        def im2col(arr):
            # Stack all K*K rolled+masked taps into one [K*K*C, L] slab.
            taps = []
            for kh in range(K):
                for kw in range(K):
                    dh, dw = kh - pad, kw - pad
                    s = dh * W + dw
                    t = arr if s == 0 else pltpu.roll(arr, shift=(-s) % L, axis=1)
                    if not (dh == 0 and dw == 0):
                        t = t * mask_ref[kh * K + kw]        # [1, L] broadcast
                    taps.append(t)
            return jnp.concatenate(taps, axis=0)

        x = x_ref[...]                                        # [cin, L] lane-dense

        # ---- Tier 1: mul-block + sine-block fused into ONE deep MXU matmul ----
        xs_all = im2col(x)                                    # [K*K*cin, L]
        xrep = jnp.concatenate([xs_all] * c1b, axis=0)        # [c1b*K*K*cin, L]
        sin_slab = jnp.sin(w1b_ref[...] * xrep)               # EUP, lane-dense
        rhs1 = jnp.concatenate([xs_all, sin_slab], axis=0)    # [(1+c1b)*K*K*cin, L]
        a1 = jnp.tanh(
            jnp.dot(lhs1_ref[...], rhs1, preferred_element_type=jnp.float32)
            + b1_ref[...])                                    # [c1, L] stays in VMEM

        # ---- Tier 2: nodal=cubic (w*x^3) + sum-pool == conv of a1^3; one matmul ----
        xs2_all = im2col(a1 * a1 * a1)                        # [K*K*c1, L]
        acc2 = jnp.dot(w2_ref[...], xs2_all,
                       preferred_element_type=jnp.float32) + b2_ref[...]
        o_ref[...] = jnp.tanh(acc2).astype(o_ref.dtype)       # [cout2, L]

    return kernel


def op_network_forward(x, params):
    """x: [N, Cin, H, W] -> [N, TIER_SIZES[-1], H, W] (NCHW, 'same' padding)."""
    # This fused kernel implements the configured architecture:
    #   tier 1 = [mul-block, sine-block], tier 2 = [cubic-block], sum-pool, tanh.
    assert [OPLIB[i][0] for i in OPERATORS[0]] == ["mul", "sine"]
    assert [OPLIB[i][0] for i in OPERATORS[1]] == ["cubic"]
    assert all(OPLIB[i][1] == "sum" and OPLIB[i][2] == "tanh"
               for ops in OPERATORS for i in ops)
    assert PAD == -1, "fused kernel assumes 'same' padding (pad=-1)"
    assert all(s == 1 for s in SAMPLING_FACTORS), "unit sampling factors only"

    (w1a, b1a), (w1b, b1b) = params[0]
    (w2, b2) = params[1][0]

    N, cin, H, W = x.shape
    K = KERNEL_SIZES[0]
    assert KERNEL_SIZES[1] == K, "fused kernel assumes equal kernel sizes"
    pad = K // 2
    HW = H * W
    L = N * HW                                   # batch folded into the lane axis
    assert L % 128 == 0, "batch*spatial must be lane-dense (multiple of 128)"

    c1a, c1b = w1a.shape[0], w1b.shape[0]
    c1 = c1a + c1b
    cout2 = w2.shape[0]
    P1 = K * K * cin                             # tier-1 im2col rows
    P2 = K * K * c1                              # tier-2 im2col rows

    # Channel-major, lane-dense input [cin, N*H*W]; tiled boundary masks.
    xT = x.transpose(1, 0, 2, 3).reshape(cin, L)
    mask = jnp.asarray(_build_tap_masks(H, W, K, pad, N))

    # Tier-1 fused LHS: block matrix [[W_mul, 0], [0, R_sine]] -> [c1, (1+c1b)*P1].
    # Column order matches rhs1 rows: xs_all rows are (kidx, ic); xrep rows are
    # (oc, kidx, ic).
    w1a_flat = w1a.transpose(0, 2, 3, 1).reshape(c1a, P1)
    r_sine = jnp.asarray(np.kron(np.eye(c1b, dtype=np.float32),
                                 np.ones((1, P1), np.float32)))      # [c1b, c1b*P1]
    lhs1 = jnp.concatenate(
        [jnp.concatenate([w1a_flat, jnp.zeros((c1a, c1b * P1), jnp.float32)], axis=1),
         jnp.concatenate([jnp.zeros((c1b, P1), jnp.float32), r_sine], axis=1)],
        axis=0)                                                       # [c1, (1+c1b)*P1]
    # Sine-block weight column, row order (oc, kh, kw, ic) to match xrep.
    w1b_col = w1b.transpose(0, 2, 3, 1).reshape(c1b * P1, 1)
    # Tier-2 weights pre-flattened, column order (kh, kw, ic) to match xs2_all.
    w2_flat = w2.transpose(0, 2, 3, 1).reshape(cout2, P2)
    # Biases as small columns, folded into the matmul results inside the kernel.
    b1 = jnp.concatenate([b1a, b1b]).reshape(c1, 1)
    b2c = b2.reshape(cout2, 1)

    kern = _make_fused_opnet_kernel(W, K, pad, c1b, L)
    # Grid-less call: whole working set (< 1 MiB) lives in VMEM for one step.
    y = pl.pallas_call(
        kern,
        out_shape=jax.ShapeDtypeStruct((cout2, L), jnp.float32),
    )(xT, mask, lhs1, w1b_col, b1, w2_flat, b2c)

    return y.reshape(cout2, N, H, W).transpose(1, 0, 2, 3)


# ----------------------------------------------------------------------------
# Parameter init (deterministic, small)
# ----------------------------------------------------------------------------
def init_params(key):
    params = []
    cin = IN_CHANNELS
    for tsize, ksize, ops in zip(TIER_SIZES, KERNEL_SIZES, OPERATORS):
        cout_per_block = tsize // len(ops)
        tier = []
        for _ in ops:
            key, kw, kb = jax.random.split(key, 3)
            w = 0.25 * jax.random.normal(kw, (cout_per_block, cin, ksize, ksize),
                                         jnp.float32)
            b = 0.05 * jax.random.normal(kb, (cout_per_block,), jnp.float32)
            tier.append((w, b))
        params.append(tier)
        cin = tsize
    return params


# ----------------------------------------------------------------------------
# Pure-JAX reference (generic im2col formulation, no Pallas) for correctness.
# ----------------------------------------------------------------------------
def im2col_nchw(x, K, pad):
    N, C, H, W = x.shape
    xp = jnp.pad(x, ((0, 0), (0, 0), (pad, pad), (pad, pad)))
    Ho = H + 2 * pad - K + 1
    Wo = W + 2 * pad - K + 1
    cols = []
    for kh in range(K):
        for kw in range(K):
            cols.append(xp[:, :, kh:kh + Ho, kw:kw + Wo])
    p = jnp.stack(cols, axis=2)                      # [N, C, K*K, Ho, Wo]
    p = p.reshape(N, C * K * K, Ho * Wo)             # F.unfold layout (c, kh, kw)
    p = p.transpose(0, 2, 1).reshape(N * Ho * Wo, C * K * K)
    return p, (N, Ho, Wo)


def op_network_ref(x, params):
    for tier_params, ksize, ops in zip(params, KERNEL_SIZES, OPERATORS):
        pad = (ksize // 2) if PAD == -1 else PAD
        patches, (N, Ho, Wo) = im2col_nchw(x, ksize, pad)     # [N*L, P]
        outs = []
        for (w, bias), op_idx in zip(tier_params, ops):
            nodal, _, _ = OPLIB[op_idx]
            cout = w.shape[0]
            w2 = w.reshape(cout, -1)
            xp = patches[:, None, :]                          # [NL, 1, P]
            wb = w2[None, :, :]                               # [1, Cout, P]
            if nodal == "mul":
                z = xp * wb
            elif nodal == "cubic":
                z = (xp ** 3) * wb
            elif nodal == "sine":
                z = jnp.sin(xp * wb)
            y = jnp.tanh(z.sum(-1) + bias[None, :])           # [NL, Cout]
            o = y.reshape(N, Ho * Wo, cout).transpose(0, 2, 1).reshape(N, cout, Ho, Wo)
            outs.append(o)
        x = jnp.concatenate(outs, axis=1)
    return x


if __name__ == "__main__":
    key = jax.random.PRNGKey(0)
    key, kx = jax.random.split(key)
    x = jax.random.normal(kx, (2, IN_CHANNELS, 16, 16), jnp.float32)

    params = init_params(key)

    fwd = jax.jit(op_network_forward)
    out = jax.block_until_ready(fwd(x, params))
    assert out.shape == (2, TIER_SIZES[-1], 16, 16), out.shape

    ref = jax.block_until_ready(op_network_ref(x, params))
    max_err = float(jnp.max(jnp.abs(out - ref)))
    assert max_err < 1e-2, f"mismatch vs reference: {max_err}"

    print("KERNEL_OK")
</pallas_src>

<mosaic_0001>
module attributes {stable_mosaic.version = 11 : i64} {
  func.func @kernel(%arg0: memref<4x512xf32, #tpu.memory_space<vmem>>, %arg1: memref<9x1x512xf32, #tpu.memory_space<vmem>>, %arg2: memref<8x180xf32, #tpu.memory_space<vmem>>, %arg3: memref<144x1xf32, #tpu.memory_space<vmem>>, %arg4: memref<8x1xf32, #tpu.memory_space<vmem>>, %arg5: memref<4x72xf32, #tpu.memory_space<vmem>>, %arg6: memref<4x1xf32, #tpu.memory_space<vmem>>, %arg7: memref<4x512xf32, #tpu.memory_space<vmem>>) attributes {dimension_semantics = [], scalar_prefetch = 0 : i64, scratch_operands = 0 : i64, tpu.core_type = #tpu.core_type<tc>} {
    %c0 = arith.constant 0 : index
    %c0_0 = arith.constant 0 : index
    %0 = vector.load %arg0[%c0, %c0_0] : memref<4x512xf32, #tpu.memory_space<vmem>>, vector<4x512xf32>
    %c17_i32 = arith.constant 17 : i32
    %1 = tpu.dynamic_rotate %0 by %c17_i32 dim 1 : vector<4x512xf32>, i32 -> vector<4x512xf32>
    %c0_1 = arith.constant 0 : index
    %c0_2 = arith.constant 0 : index
    %c0_3 = arith.constant 0 : index
    %2 = vector.load %arg1[%c0_1, %c0_2, %c0_3] : memref<9x1x512xf32, #tpu.memory_space<vmem>>, vector<1x1x512xf32>
    %3 = vector.shape_cast %2 : vector<1x1x512xf32> to vector<1x512xf32>
    %4 = vector.broadcast %3 : vector<1x512xf32> to vector<4x512xf32>
    %5 = arith.mulf %1, %4 : vector<4x512xf32>
    %c16_i32 = arith.constant 16 : i32
    %6 = tpu.dynamic_rotate %0 by %c16_i32 dim 1 : vector<4x512xf32>, i32 -> vector<4x512xf32>
    %c1 = arith.constant 1 : index
    %c0_4 = arith.constant 0 : index
    %c0_5 = arith.constant 0 : index
    %7 = vector.load %arg1[%c1, %c0_4, %c0_5] : memref<9x1x512xf32, #tpu.memory_space<vmem>>, vector<1x1x512xf32>
    %8 = vector.shape_cast %7 : vector<1x1x512xf32> to vector<1x512xf32>
    %9 = vector.broadcast %8 : vector<1x512xf32> to vector<4x512xf32>
    %10 = arith.mulf %6, %9 : vector<4x512xf32>
    %c15_i32 = arith.constant 15 : i32
    %11 = tpu.dynamic_rotate %0 by %c15_i32 dim 1 : vector<4x512xf32>, i32 -> vector<4x512xf32>
    %c2 = arith.constant 2 : index
    %c0_6 = arith.constant 0 : index
    %c0_7 = arith.constant 0 : index
    %12 = vector.load %arg1[%c2, %c0_6, %c0_7] : memref<9x1x512xf32, #tpu.memory_space<vmem>>, vector<1x1x512xf32>
    %13 = vector.shape_cast %12 : vector<1x1x512xf32> to vector<1x512xf32>
    %14 = vector.broadcast %13 : vector<1x512xf32> to vector<4x512xf32>
    %15 = arith.mulf %11, %14 : vector<4x512xf32>
    %c1_i32 = arith.constant 1 : i32
    %16 = tpu.dynamic_rotate %0 by %c1_i32 dim 1 : vector<4x512xf32>, i32 -> vector<4x512xf32>
    %c3 = arith.constant 3 : index
    %c0_8 = arith.constant 0 : index
    %c0_9 = arith.constant 0 : index
    %17 = vector.load %arg1[%c3, %c0_8, %c0_9] : memref<9x1x512xf32, #tpu.memory_space<vmem>>, vector<1x1x512xf32>
    %18 = vector.shape_cast %17 : vector<1x1x512xf32> to vector<1x512xf32>
    %19 = vector.broadcast %18 : vector<1x512xf32> to vector<4x512xf32>
    %20 = arith.mulf %16, %19 : vector<4x512xf32>
    %c511_i32 = arith.constant 511 : i32
    %21 = tpu.dynamic_rotate %0 by %c511_i32 dim 1 : vector<4x512xf32>, i32 -> vector<4x512xf32>
    %c5 = arith.constant 5 : index
    %c0_10 = arith.constant 0 : index
    %c0_11 = arith.constant 0 : index
    %22 = vector.load %arg1[%c5, %c0_10, %c0_11] : memref<9x1x512xf32, #tpu.memory_space<vmem>>, vector<1x1x512xf32>
    %23 = vector.shape_cast %22 : vector<1x1x512xf32> to vector<1x512xf32>
    %24 = vector.broadcast %23 : vector<1x512xf32> to vector<4x512xf32>
    %25 = arith.mulf %21, %24 : vector<4x512xf32>
    %c497_i32 = arith.constant 497 : i32
    %26 = tpu.dynamic_rotate %0 by %c497_i32 dim 1 : vector<4x512xf32>, i32 -> vector<4x512xf32>
    %c6 = arith.constant 6 : index
    %c0_12 = arith.constant 0 : index
    %c0_13 = arith.constant 0 : index
    %27 = vector.load %arg1[%c6, %c0_12, %c0_13] : memref<9x1x512xf32, #tpu.memory_space<vmem>>, vector<1x1x512xf32>
    %28 = vector.shape_cast %27 : vector<1x1x512xf32> to vector<1x512xf32>
    %29 = vector.broadcast %28 : vector<1x512xf32> to vector<4x512xf32>
    %30 = arith.mulf %26, %29 : vector<4x512xf32>
    %c496_i32 = arith.constant 496 : i32
    %31 = tpu.dynamic_rotate %0 by %c496_i32 dim 1 : vector<4x512xf32>, i32 -> vector<4x512xf32>
    %c7 = arith.constant 7 : index
    %c0_14 = arith.constant 0 : index
    %c0_15 = arith.constant 0 : index
    %32 = vector.load %arg1[%c7, %c0_14, %c0_15] : memref<9x1x512xf32, #tpu.memory_space<vmem>>, vector<1x1x512xf32>
    %33 = vector.shape_cast %32 : vector<1x1x512xf32> to vector<1x512xf32>
    %34 = vector.broadcast %33 : vector<1x512xf32> to vector<4x512xf32>
    %35 = arith.mulf %31, %34 : vector<4x512xf32>
    %c495_i32 = arith.constant 495 : i32
    %36 = tpu.dynamic_rotate %0 by %c495_i32 dim 1 : vector<4x512xf32>, i32 -> vector<4x512xf32>
    %c8 = arith.constant 8 : index
    %c0_16 = arith.constant 0 : index
    %c0_17 = arith.constant 0 : index
    %37 = vector.load %arg1[%c8, %c0_16, %c0_17] : memref<9x1x512xf32, #tpu.memory_space<vmem>>, vector<1x1x512xf32>
    %38 = vector.shape_cast %37 : vector<1x1x512xf32> to vector<1x512xf32>
    %39 = vector.broadcast %38 : vector<1x512xf32> to vector<4x512xf32>
    %40 = arith.mulf %36, %39 : vector<4x512xf32>
    %41 = tpu.concatenate %5, %10, %15, %20, %0, %25, %30, %35, %40 in 0 : vector<4x512xf32>, vector<4x512xf32>, vector<4x512xf32>, vector<4x512xf32>, vector<4x512xf32>, vector<4x512xf32>, vector<4x512xf32>, vector<4x512xf32>, vector<4x512xf32> -> vector<36x512xf32>
    %42 = tpu.concatenate %41, %41, %41, %41 in 0 : vector<36x512xf32>, vector<36x512xf32>, vector<36x512xf32>, vector<36x512xf32> -> vector<144x512xf32>
    %c0_18 = arith.constant 0 : index
    %c0_19 = arith.constant 0 : index
    %43 = vector.load %arg3[%c0_18, %c0_19] : memref<144x1xf32, #tpu.memory_space<vmem>>, vector<144x1xf32>
    %44 = vector.broadcast %43 : vector<144x1xf32> to vector<144x512xf32>
    %45 = arith.mulf %44, %42 : vector<144x512xf32>
    %46 = math.sin %45 : vector<144x512xf32>
    %47 = tpu.concatenate %41, %46 in 0 : vector<36x512xf32>, vector<144x512xf32> -> vector<180x512xf32>
    %c0_20 = arith.constant 0 : index
    %c0_21 = arith.constant 0 : index
    %48 = vector.load %arg2[%c0_20, %c0_21] : memref<8x180xf32, #tpu.memory_space<vmem>>, vector<8x180xf32>
    %cst = arith.constant dense<0.000000e+00> : vector<8x512xf32>
    %49 = tpu.matmul %48, %47, %cst {dimension_numbers = #tpu.dot_dimension_numbers<[1], [0], [0], [1], [0, 0, 1, 1], [], []>} : vector<8x180xf32>, vector<180x512xf32>, vector<8x512xf32> -> vector<8x512xf32>
    %c0_22 = arith.constant 0 : index
    %c0_23 = arith.constant 0 : index
    %50 = vector.load %arg4[%c0_22, %c0_23] : memref<8x1xf32, #tpu.memory_space<vmem>>, vector<8x1xf32>
    %51 = vector.broadcast %50 : vector<8x1xf32> to vector<8x512xf32>
    %52 = arith.addf %49, %51 : vector<8x512xf32>
    %53 = math.tanh %52 : vector<8x512xf32>
    %54 = arith.mulf %53, %53 : vector<8x512xf32>
    %55 = arith.mulf %54, %53 : vector<8x512xf32>
    %c17_i32_24 = arith.constant 17 : i32
    %56 = tpu.dynamic_rotate %55 by %c17_i32_24 dim 1 : vector<8x512xf32>, i32 -> vector<8x512xf32>
    %c0_25 = arith.constant 0 : index
    %c0_26 = arith.constant 0 : index
    %c0_27 = arith.constant 0 : index
    %57 = vector.load %arg1[%c0_25, %c0_26, %c0_27] : memref<9x1x512xf32, #tpu.memory_space<vmem>>, vector<1x1x512xf32>
    %58 = vector.shape_cast %57 : vector<1x1x512xf32> to vector<1x512xf32>
    %59 = vector.broadcast %58 : vector<1x512xf32> to vector<8x512xf32>
    %60 = arith.mulf %56, %59 : vector<8x512xf32>
    %c16_i32_28 = arith.constant 16 : i32
    %61 = tpu.dynamic_rotate %55 by %c16_i32_28 dim 1 : vector<8x512xf32>, i32 -> vector<8x512xf32>
    %c1_29 = arith.constant 1 : index
    %c0_30 = arith.constant 0 : index
    %c0_31 = arith.constant 0 : index
    %62 = vector.load %arg1[%c1_29, %c0_30, %c0_31] : memref<9x1x512xf32, #tpu.memory_space<vmem>>, vector<1x1x512xf32>
    %63 = vector.shape_cast %62 : vector<1x1x512xf32> to vector<1x512xf32>
    %64 = vector.broadcast %63 : vector<1x512xf32> to vector<8x512xf32>
    %65 = arith.mulf %61, %64 : vector<8x512xf32>
    %c15_i32_32 = arith.constant 15 : i32
    %66 = tpu.dynamic_rotate %55 by %c15_i32_32 dim 1 : vector<8x512xf32>, i32 -> vector<8x512xf32>
    %c2_33 = arith.constant 2 : index
    %c0_34 = arith.constant 0 : index
    %c0_35 = arith.constant 0 : index
    %67 = vector.load %arg1[%c2_33, %c0_34, %c0_35] : memref<9x1x512xf32, #tpu.memory_space<vmem>>, vector<1x1x512xf32>
    %68 = vector.shape_cast %67 : vector<1x1x512xf32> to vector<1x512xf32>
    %69 = vector.broadcast %68 : vector<1x512xf32> to vector<8x512xf32>
    %70 = arith.mulf %66, %69 : vector<8x512xf32>
    %c1_i32_36 = arith.constant 1 : i32
    %71 = tpu.dynamic_rotate %55 by %c1_i32_36 dim 1 : vector<8x512xf32>, i32 -> vector<8x512xf32>
    %c3_37 = arith.constant 3 : index
    %c0_38 = arith.constant 0 : index
    %c0_39 = arith.constant 0 : index
    %72 = vector.load %arg1[%c3_37, %c0_38, %c0_39] : memref<9x1x512xf32, #tpu.memory_space<vmem>>, vector<1x1x512xf32>
    %73 = vector.shape_cast %72 : vector<1x1x512xf32> to vector<1x512xf32>
    %74 = vector.broadcast %73 : vector<1x512xf32> to vector<8x512xf32>
    %75 = arith.mulf %71, %74 : vector<8x512xf32>
    %c511_i32_40 = arith.constant 511 : i32
    %76 = tpu.dynamic_rotate %55 by %c511_i32_40 dim 1 : vector<8x512xf32>, i32 -> vector<8x512xf32>
    %c5_41 = arith.constant 5 : index
    %c0_42 = arith.constant 0 : index
    %c0_43 = arith.constant 0 : index
    %77 = vector.load %arg1[%c5_41, %c0_42, %c0_43] : memref<9x1x512xf32, #tpu.memory_space<vmem>>, vector<1x1x512xf32>
    %78 = vector.shape_cast %77 : vector<1x1x512xf32> to vector<1x512xf32>
    %79 = vector.broadcast %78 : vector<1x512xf32> to vector<8x512xf32>
    %80 = arith.mulf %76, %79 : vector<8x512xf32>
    %c497_i32_44 = arith.constant 497 : i32
    %81 = tpu.dynamic_rotate %55 by %c497_i32_44 dim 1 : vector<8x512xf32>, i32 -> vector<8x512xf32>
    %c6_45 = arith.constant 6 : index
    %c0_46 = arith.constant 0 : index
    %c0_47 = arith.constant 0 : index
    %82 = vector.load %arg1[%c6_45, %c0_46, %c0_47] : memref<9x1x512xf32, #tpu.memory_space<vmem>>, vector<1x1x512xf32>
    %83 = vector.shape_cast %82 : vector<1x1x512xf32> to vector<1x512xf32>
    %84 = vector.broadcast %83 : vector<1x512xf32> to vector<8x512xf32>
    %85 = arith.mulf %81, %84 : vector<8x512xf32>
    %c496_i32_48 = arith.constant 496 : i32
    %86 = tpu.dynamic_rotate %55 by %c496_i32_48 dim 1 : vector<8x512xf32>, i32 -> vector<8x512xf32>
    %c7_49 = arith.constant 7 : index
    %c0_50 = arith.constant 0 : index
    %c0_51 = arith.constant 0 : index
    %87 = vector.load %arg1[%c7_49, %c0_50, %c0_51] : memref<9x1x512xf32, #tpu.memory_space<vmem>>, vector<1x1x512xf32>
    %88 = vector.shape_cast %87 : vector<1x1x512xf32> to vector<1x512xf32>
    %89 = vector.broadcast %88 : vector<1x512xf32> to vector<8x512xf32>
    %90 = arith.mulf %86, %89 : vector<8x512xf32>
    %c495_i32_52 = arith.constant 495 : i32
    %91 = tpu.dynamic_rotate %55 by %c495_i32_52 dim 1 : vector<8x512xf32>, i32 -> vector<8x512xf32>
    %c8_53 = arith.constant 8 : index
    %c0_54 = arith.constant 0 : index
    %c0_55 = arith.constant 0 : index
    %92 = vector.load %arg1[%c8_53, %c0_54, %c0_55] : memref<9x1x512xf32, #tpu.memory_space<vmem>>, vector<1x1x512xf32>
    %93 = vector.shape_cast %92 : vector<1x1x512xf32> to vector<1x512xf32>
    %94 = vector.broadcast %93 : vector<1x512xf32> to vector<8x512xf32>
    %95 = arith.mulf %91, %94 : vector<8x512xf32>
    %96 = tpu.concatenate %60, %65, %70, %75, %55, %80, %85, %90, %95 in 0 : vector<8x512xf32>, vector<8x512xf32>, vector<8x512xf32>, vector<8x512xf32>, vector<8x512xf32>, vector<8x512xf32>, vector<8x512xf32>, vector<8x512xf32>, vector<8x512xf32> -> vector<72x512xf32>
    %c0_56 = arith.constant 0 : index
    %c0_57 = arith.constant 0 : index
    %97 = vector.load %arg5[%c0_56, %c0_57] : memref<4x72xf32, #tpu.memory_space<vmem>>, vector<4x72xf32>
    %cst_58 = arith.constant dense<0.000000e+00> : vector<4x512xf32>
    %98 = tpu.matmul %97, %96, %cst_58 {dimension_numbers = #tpu.dot_dimension_numbers<[1], [0], [0], [1], [0, 0, 1, 1], [], []>} : vector<4x72xf32>, vector<72x512xf32>, vector<4x512xf32> -> vector<4x512xf32>
    %c0_59 = arith.constant 0 : index
    %c0_60 = arith.constant 0 : index
    %99 = vector.load %arg6[%c0_59, %c0_60] : memref<4x1xf32, #tpu.memory_space<vmem>>, vector<4x1xf32>
    %100 = vector.broadcast %99 : vector<4x1xf32> to vector<4x512xf32>
    %101 = arith.addf %98, %100 : vector<4x512xf32>
    %102 = math.tanh %101 : vector<4x512xf32>
    %c0_61 = arith.constant 0 : index
    %c0_62 = arith.constant 0 : index
    %103 = vector.load %arg7[%c0_61, %c0_62] : memref<4x512xf32, #tpu.memory_space<vmem>>, vector<4x512xf32>
    tpu.vector_store %arg7[%c0_61, %c0_62], %102 {strides = array<i32>} : memref<4x512xf32, #tpu.memory_space<vmem>>, vector<4x512xf32>,
    return
  }
}

</mosaic_0001>

<llo_original>
// kernel: op_network_forward.1
$region0: #{op_network_forward.1}
  #allocation0 [shape = 'u32[]', space=smem, size = 0x4, offset = 0x4, fixed_abs, tag = 'smem constant byte address 0x4 - core index']
  #allocation1 [shape = 'u32[144,128]{1,0:T(1,128)}', space=vmem, size = 0x12000, scoped, tag = 'internal scratch']
  %s0 = inlined_call_operand.vmem [shape: f32[4,512], index: 0, kind: input, shape index: {}]
  %s1 = inlined_call_operand.vmem [shape: f32[9,1,512], index: 1, kind: input, shape index: {}]
  %s2 = inlined_call_operand.vmem [shape: f32[8,180], index: 2, kind: input, shape index: {}]
  %s3 = inlined_call_operand.vmem [shape: f32[144,1], index: 3, kind: input, shape index: {}]
  %s4 = inlined_call_operand.vmem [shape: f32[8,1], index: 4, kind: input, shape index: {}]
  %s5 = inlined_call_operand.vmem [shape: f32[4,72], index: 5, kind: input, shape index: {}]
  %s6 = inlined_call_operand.vmem [shape: f32[4,1], index: 6, kind: input, shape index: {}]
  %s7 = inlined_call_operand.vmem [shape: f32[4,512], index: 7, kind: output, shape index: {}]
  %s8 = sld [smem:[#allocation0]]
  $region38: #{op_network_forward.1} parent=0
    _
  %s10 = ssub.s32 1, %s8
  %s11 = scalar_select 0, %s10, %s8
  // Predicated region
  $region2: #{op_network_forward.1} parent=0 // pred_check
    _
  $region3: #{op_network_forward.1} parent=0 // pred_check_branch
    %13 = sbr.rel (0) target = $region5
  $region4: #{op_network_forward.1} parent=0 // pred_region
    _
  $region5: #{op_network_forward.1} parent=0 // pred_fallthru
    _
  // Predicated region
  $region6: #{op_network_forward.1} parent=0 // pred_check
    _
  $region7: #{op_network_forward.1} parent=0 // pred_check_branch
    %15 = sbr.rel (0) target = $region9
  $region8: #{op_network_forward.1} parent=0 // pred_region
    _
  $region9: #{op_network_forward.1} parent=0 // pred_fallthru
    _
  // Predicated region
  $region10: #{op_network_forward.1} parent=0 // pred_check
    _
  $region11: #{op_network_forward.1} parent=0 // pred_check_branch
    %17 = sbr.rel (0) target = $region13
  $region12: #{op_network_forward.1} parent=0 // pred_region
    _
  $region13: #{op_network_forward.1} parent=0 // pred_fallthru
    _
  // Predicated region
  $region14: #{op_network_forward.1} parent=0 // pred_check
    _
  $region15: #{op_network_forward.1} parent=0 // pred_check_branch
    %19 = sbr.rel (0) target = $region17
  $region16: #{op_network_forward.1} parent=0 // pred_region
    _
  $region17: #{op_network_forward.1} parent=0 // pred_fallthru
    _
  // Predicated region
  $region18: #{op_network_forward.1} parent=0 // pred_check
    _
  $region19: #{op_network_forward.1} parent=0 // pred_check_branch
    %21 = sbr.rel (0) target = $region21
  $region20: #{op_network_forward.1} parent=0 // pred_region
    _
  $region21: #{op_network_forward.1} parent=0 // pred_fallthru
    _
  // Predicated region
  $region22: #{op_network_forward.1} parent=0 // pred_check
    _
  $region23: #{op_network_forward.1} parent=0 // pred_check_branch
    %23 = sbr.rel (0) target = $region25
  $region24: #{op_network_forward.1} parent=0 // pred_region
    _
  $region25: #{op_network_forward.1} parent=0 // pred_fallthru
    _
  // Predicated region
  $region26: #{op_network_forward.1} parent=0 // pred_check
    _
  $region27: #{op_network_forward.1} parent=0 // pred_check_branch
    %25 = sbr.rel (0) target = $region29
  $region28: #{op_network_forward.1} parent=0 // pred_region
    _
  $region29: #{op_network_forward.1} parent=0 // pred_fallthru
    _
  %v26 = vld [vmem:[%s0] sm:$0xff]
  %v27 = vld [vmem:[%s0 + $0x8] sm:$0xff]
  %v30 = vcombine.high %v26, %v26
  %v31 = vcombine.high %v27, %v27
  %34 = vrot.lane.b32.xlu0 %v26, 17
  %v35 = vpop.permute.xlu0 %34
  %36 = vrot.lane.b32.xlu0 %v30, 17
  %v37 = vpop.permute.xlu0 %36
  %38 = vrot.lane.b32.xlu0 %v27, 17
  %v39 = vpop.permute.xlu0 %38
  %40 = vrot.lane.b32.xlu0 %v31, 17
  %v41 = vpop.permute.xlu0 %40
  %v42 = vlaneseq
  %v43 = vand.u32 %v42, 127
  %vm44 = vcmp.lt.s32.totalorder %v43, 17
  %v45 = vsel %vm44, %v39, %v41
  %v46 = vsel %vm44, %v37, %v39
  %v47 = vsel %vm44, %v35, %v37
  %v48 = vsel %vm44, %v41, %v35
  %v49 = vld [vmem:[%s1] sm:$0xf]
  %v51 = vlaneseq
  %v52 = vshrl.u32 %v51, 7
  %v53 = vsub.s32 0, %v52
  %v54 = vrot.slane %v49, %v53
  %v55 = vlaneseq
  %v56 = vshrl.u32 %v55, 7
  %v57 = vsub.s32 1, %v56
  %v58 = vrot.slane %v49, %v57
  %v59 = vlaneseq
  %v60 = vshrl.u32 %v59, 7
  %v61 = vsub.s32 2, %v60
  %v62 = vrot.slane %v49, %v61
  %v63 = vlaneseq
  %v64 = vshrl.u32 %v63, 7
  %v65 = vsub.s32 3, %v64
  %v66 = vrot.slane %v49, %v65
  %v71 = vmul.f32 %v48, %v54
  %v72 = vmul.f32 %v47, %v58
  %v73 = vmul.f32 %v46, %v62
  %v74 = vmul.f32 %v45, %v66
  %75 = vrot.lane.b32.xlu0 %v26, 16
  %v76 = vpop.permute.xlu0 %75
  %77 = vrot.lane.b32.xlu0 %v30, 16
  %v78 = vpop.permute.xlu0 %77
  %79 = vrot.lane.b32.xlu0 %v27, 16
  %v80 = vpop.permute.xlu0 %79
  %81 = vrot.lane.b32.xlu0 %v31, 16
  %v82 = vpop.permute.xlu0 %81
  %vm83 = vcmp.lt.s32.totalorder %v43, 16
  %v84 = vsel %vm83, %v80, %v82
  %v85 = vsel %vm83, %v78, %v80
  %v86 = vsel %vm83, %v76, %v78
  %v87 = vsel %vm83, %v82, %v76
  %s88 = scalar_lea.vmem %s1, 4
  %v89 = vld [vmem:[%s88] sm:$0xf]
  %v91 = vlaneseq
  %v92 = vshrl.u32 %v91, 7
  %v93 = vsub.s32 0, %v92
  %v94 = vrot.slane %v89, %v93
  %v95 = vlaneseq
  %v96 = vshrl.u32 %v95, 7
  %v97 = vsub.s32 1, %v96
  %v98 = vrot.slane %v89, %v97
  %v99 = vlaneseq
  %v100 = vshrl.u32 %v99, 7
  %v101 = vsub.s32 2, %v100
  %v102 = vrot.slane %v89, %v101
  %v103 = vlaneseq
  %v104 = vshrl.u32 %v103, 7
  %v105 = vsub.s32 3, %v104
  %v106 = vrot.slane %v89, %v105
  %v111 = vmul.f32 %v87, %v94
  %v112 = vmul.f32 %v86, %v98
  %v113 = vmul.f32 %v85, %v102
  %v114 = vmul.f32 %v84, %v106
  %115 = vrot.lane.b32.xlu0 %v26, 15
  %v116 = vpop.permute.xlu0 %115
  %117 = vrot.lane.b32.xlu0 %v30, 15
  %v118 = vpop.permute.xlu0 %117
  %119 = vrot.lane.b32.xlu0 %v27, 15
  %v120 = vpop.permute.xlu0 %119
  %121 = vrot.lane.b32.xlu0 %v31, 15
  %v122 = vpop.permute.xlu0 %121
  %vm123 = vcmp.lt.s32.totalorder %v43, 15
  %v124 = vsel %vm123, %v120, %v122
  %v125 = vsel %vm123, %v118, %v120
  %v126 = vsel %vm123, %v116, %v118
  %v127 = vsel %vm123, %v122, %v116
  %s128 = scalar_lea.vmem %s1, 8
  %v129 = vld [vmem:[%s128] sm:$0xf]
  %v131 = vlaneseq
  %v132 = vshrl.u32 %v131, 7
  %v133 = vsub.s32 0, %v132
  %v134 = vrot.slane %v129, %v133
  %v135 = vlaneseq
  %v136 = vshrl.u32 %v135, 7
  %v137 = vsub.s32 1, %v136
  %v138 = vrot.slane %v129, %v137
  %v139 = vlaneseq
  %v140 = vshrl.u32 %v139, 7
  %v141 = vsub.s32 2, %v140
  %v142 = vrot.slane %v129, %v141
  %v143 = vlaneseq
  %v144 = vshrl.u32 %v143, 7
  %v145 = vsub.s32 3, %v144
  %v146 = vrot.slane %v129, %v145
  %v151 = vmul.f32 %v127, %v134
  %v152 = vmul.f32 %v126, %v138
  %v153 = vmul.f32 %v125, %v142
  %v154 = vmul.f32 %v124, %v146
  %155 = vrot.lane.b32.xlu0 %v26, 1
  %v156 = vpop.permute.xlu0 %155
  %157 = vrot.lane.b32.xlu0 %v30, 1
  %v158 = vpop.permute.xlu0 %157
  %159 = vrot.lane.b32.xlu0 %v27, 1
  %v160 = vpop.permute.xlu0 %159
  %161 = vrot.lane.b32.xlu0 %v31, 1
  %v162 = vpop.permute.xlu0 %161
  %vm163 = vcmp.lt.s32.totalorder %v43, 1
  %v164 = vsel %vm163, %v160, %v162
  %v165 = vsel %vm163, %v158, %v160
  %v166 = vsel %vm163, %v156, %v158
  %v167 = vsel %vm163, %v162, %v156
  %s168 = scalar_lea.vmem %s1, 12
  %v169 = vld [vmem:[%s168] sm:$0xf]
  %v171 = vlaneseq
  %v172 = vshrl.u32 %v171, 7
  %v173 = vsub.s32 0, %v172
  %v174 = vrot.slane %v169, %v173
  %v175 = vlaneseq
  %v176 = vshrl.u32 %v175, 7
  %v177 = vsub.s32 1, %v176
  %v178 = vrot.slane %v169, %v177
  %v179 = vlaneseq
  %v180 = vshrl.u32 %v179, 7
  %v181 = vsub.s32 2, %v180
  %v182 = vrot.slane %v169, %v181
  %v183 = vlaneseq
  %v184 = vshrl.u32 %v183, 7
  %v185 = vsub.s32 3, %v184
  %v186 = vrot.slane %v169, %v185
  %v191 = vmul.f32 %v167, %v174
  %v192 = vmul.f32 %v166, %v178
  %v193 = vmul.f32 %v165, %v182
  %v194 = vmul.f32 %v164, %v186
  %195 = vrot.lane.b32.xlu0 %v26, 127
  %v196 = vpop.permute.xlu0 %195
  %197 = vrot.lane.b32.xlu0 %v30, 127
  %v198 = vpop.permute.xlu0 %197
  %199 = vrot.lane.b32.xlu0 %v27, 127
  %v200 = vpop.permute.xlu0 %199
  %201 = vrot.lane.b32.xlu0 %v31, 127
  %v202 = vpop.permute.xlu0 %201
  %vm203 = vcmp.lt.s32.totalorder %v43, 127
  %v204 = vsel %vm203, %v200, %v202
  %v205 = vsel %vm203, %v198, %v200
  %v206 = vsel %vm203, %v196, %v198
  %v207 = vsel %vm203, %v202, %v196
  %s208 = scalar_lea.vmem %s1, 20
  %v209 = vld [vmem:[%s208] sm:$0xf]
  %v211 = vlaneseq
  %v212 = vshrl.u32 %v211, 7
  %v213 = vsub.s32 0, %v212
  %v214 = vrot.slane %v209, %v213
  %v215 = vlaneseq
  %v216 = vshrl.u32 %v215, 7
  %v217 = vsub.s32 1, %v216
  %v218 = vrot.slane %v209, %v217
  %v219 = vlaneseq
  %v220 = vshrl.u32 %v219, 7
  %v221 = vsub.s32 2, %v220
  %v222 = vrot.slane %v209, %v221
  %v223 = vlaneseq
  %v224 = vshrl.u32 %v223, 7
  %v225 = vsub.s32 3, %v224
  %v226 = vrot.slane %v209, %v225
  %v231 = vmul.f32 %v206, %v214
  %v232 = vmul.f32 %v205, %v218
  %v233 = vmul.f32 %v204, %v222
  %v234 = vmul.f32 %v207, %v226
  %235 = vrot.lane.b32.xlu0 %v26, 113
  %v236 = vpop.permute.xlu0 %235
  %237 = vrot.lane.b32.xlu0 %v30, 113
  %v238 = vpop.permute.xlu0 %237
  %239 = vrot.lane.b32.xlu0 %v27, 113
  %v240 = vpop.permute.xlu0 %239
  %241 = vrot.lane.b32.xlu0 %v31, 113
  %v242 = vpop.permute.xlu0 %241
  %vm243 = vcmp.lt.s32.totalorder %v43, 113
  %v244 = vsel %vm243, %v240, %v242
  %v245 = vsel %vm243, %v238, %v240
  %v246 = vsel %vm243, %v236, %v238
  %v247 = vsel %vm243, %v242, %v236
  %s248 = scalar_lea.vmem %s1, 24
  %v249 = vld [vmem:[%s248] sm:$0xf]
  %v251 = vlaneseq
  %v252 = vshrl.u32 %v251, 7
  %v253 = vsub.s32 0, %v252
  %v254 = vrot.slane %v249, %v253
  %v255 = vlaneseq
  %v256 = vshrl.u32 %v255, 7
  %v257 = vsub.s32 1, %v256
  %v258 = vrot.slane %v249, %v257
  %v259 = vlaneseq
  %v260 = vshrl.u32 %v259, 7
  %v261 = vsub.s32 2, %v260
  %v262 = vrot.slane %v249, %v261
  %v263 = vlaneseq
  %v264 = vshrl.u32 %v263, 7
  %v265 = vsub.s32 3, %v264
  %v266 = vrot.slane %v249, %v265
  %v271 = vmul.f32 %v246, %v254
  %v272 = vmul.f32 %v245, %v258
  %v273 = vmul.f32 %v244, %v262
  %v274 = vmul.f32 %v247, %v266
  %275 = vrot.lane.b32.xlu0 %v26, 112
  %v276 = vpop.permute.xlu0 %275
  %277 = vrot.lane.b32.xlu0 %v30, 112
  %v278 = vpop.permute.xlu0 %277
  %279 = vrot.lane.b32.xlu0 %v27, 112
  %v280 = vpop.permute.xlu0 %279
  %281 = vrot.lane.b32.xlu0 %v31, 112
  %v282 = vpop.permute.xlu0 %281
  %vm283 = vcmp.lt.s32.totalorder %v43, 112
  %v284 = vsel %vm283, %v280, %v282
  %v285 = vsel %vm283, %v278, %v280
  %v286 = vsel %vm283, %v276, %v278
  %v287 = vsel %vm283, %v282, %v276
  %s288 = scalar_lea.vmem %s1, 28
  %v289 = vld [vmem:[%s288] sm:$0xf]
  %v291 = vlaneseq
  %v292 = vshrl.u32 %v291, 7
  %v293 = vsub.s32 0, %v292
  %v294 = vrot.slane %v289, %v293
  %v295 = vlaneseq
  %v296 = vshrl.u32 %v295, 7
  %v297 = vsub.s32 1, %v296
  %v298 = vrot.slane %v289, %v297
  %v299 = vlaneseq
  %v300 = vshrl.u32 %v299, 7
  %v301 = vsub.s32 2, %v300
  %v302 = vrot.slane %v289, %v301
  %v303 = vlaneseq
  %v304 = vshrl.u32 %v303, 7
  %v305 = vsub.s32 3, %v304
  %v306 = vrot.slane %v289, %v305
  %v311 = vmul.f32 %v286, %v294
  %v312 = vmul.f32 %v285, %v298
  %v313 = vmul.f32 %v284, %v302
  %v314 = vmul.f32 %v287, %v306
  %315 = vrot.lane.b32.xlu0 %v26, 111
  %v316 = vpop.permute.xlu0 %315
  %317 = vrot.lane.b32.xlu0 %v30, 111
  %v318 = vpop.permute.xlu0 %317
  %319 = vrot.lane.b32.xlu0 %v27, 111
  %v320 = vpop.permute.xlu0 %319
  %321 = vrot.lane.b32.xlu0 %v31, 111
  %v322 = vpop.permute.xlu0 %321
  %vm323 = vcmp.lt.s32.totalorder %v43, 111
  %v324 = vsel %vm323, %v320, %v322
  %v325 = vsel %vm323, %v318, %v320
  %v326 = vsel %vm323, %v316, %v318
  %v327 = vsel %vm323, %v322, %v316
  %s328 = scalar_lea.vmem %s1, 32
  %v329 = vld [vmem:[%s328] sm:$0xf]
  %v331 = vlaneseq
  %v332 = vshrl.u32 %v331, 7
  %v333 = vsub.s32 0, %v332
  %v334 = vrot.slane %v329, %v333
  %v335 = vlaneseq
  %v336 = vshrl.u32 %v335, 7
  %v337 = vsub.s32 1, %v336
  %v338 = vrot.slane %v329, %v337
  %v339 = vlaneseq
  %v340 = vshrl.u32 %v339, 7
  %v341 = vsub.s32 2, %v340
  %v342 = vrot.slane %v329, %v341
  %v343 = vlaneseq
  %v344 = vshrl.u32 %v343, 7
  %v345 = vsub.s32 3, %v344
  %v346 = vrot.slane %v329, %v345
  %v351 = vmul.f32 %v326, %v334
  %v352 = vmul.f32 %v325, %v338
  %v353 = vmul.f32 %v324, %v342
  %v354 = vmul.f32 %v327, %v346
  %v359 = vrot.slane %v111, 4
  %v360 = vrot.slane %v112, 4
  %v361 = vrot.slane %v113, 4
  %v362 = vrot.slane %v114, 4
  %v371 = vrot.slane %v191, 4
  %v372 = vrot.slane %v192, 4
  %v373 = vrot.slane %v193, 4
  %v374 = vrot.slane %v194, 4
  %v383 = vrot.slane %v231, 4
  %v384 = vrot.slane %v232, 4
  %v385 = vrot.slane %v233, 4
  %v386 = vrot.slane %v234, 4
  %v395 = vrot.slane %v311, 4
  %v396 = vrot.slane %v312, 4
  %v397 = vrot.slane %v313, 4
  %v398 = vrot.slane %v314, 4
  %vm403 = vcmask 1043456
  %v404 = vsel %vm403, %v71, %v359
  %v405 = vsel %vm403, %v72, %v360
  %v406 = vsel %vm403, %v73, %v361
  %v407 = vsel %vm403, %v74, %v362
  %v408 = vsel %vm403, %v151, %v371
  %v409 = vsel %vm403, %v152, %v372
  %v410 = vsel %vm403, %v153, %v373
  %v411 = vsel %vm403, %v154, %v374
  %v412 = vsel %vm403, %v26, %v383
  %v413 = vsel %vm403, %v30, %v384
  %v414 = vsel %vm403, %v27, %v385
  %v415 = vsel %vm403, %v31, %v386
  %v416 = vsel %vm403, %v271, %v395
  %v417 = vsel %vm403, %v272, %v396
  %v418 = vsel %vm403, %v273, %v397
  %v419 = vsel %vm403, %v274, %v398
  %v440 = vrot.slane %v404, 4
  %v441 = vrot.slane %v405, 4
  %v442 = vrot.slane %v406, 4
  %v443 = vrot.slane %v407, 4
  %v444 = vrot.slane %v408, 4
  %v445 = vsel %vm403, %v440, %v444
  %v446 = vrot.slane %v409, 4
  %v447 = vsel %vm403, %v441, %v446
  %v448 = vrot.slane %v410, 4
  %v449 = vsel %vm403, %v442, %v448
  %v450 = vrot.slane %v411, 4
  %v451 = vsel %vm403, %v443, %v450
  %v452 = vrot.slane %v412, 4
  %v453 = vsel %vm403, %v444, %v452
  %v454 = vrot.slane %v413, 4
  %v455 = vsel %vm403, %v446, %v454
  %v456 = vrot.slane %v414, 4
  %v457 = vsel %vm403, %v448, %v456
  %v458 = vrot.slane %v415, 4
  %v459 = vsel %vm403, %v450, %v458
  %v460 = vrot.slane %v416, 4
  %v461 = vsel %vm403, %v452, %v460
  %v462 = vrot.slane %v417, 4
  %v463 = vsel %vm403, %v454, %v462
  %v464 = vrot.slane %v418, 4
  %v465 = vsel %vm403, %v456, %v464
  %v466 = vrot.slane %v419, 4
  %v467 = vsel %vm403, %v458, %v466
  %v468 = vrot.slane %v351, 4
  %v469 = vsel %vm403, %v460, %v468
  %v470 = vrot.slane %v352, 4
  %v471 = vsel %vm403, %v462, %v470
  %v472 = vrot.slane %v353, 4
  %v473 = vsel %vm403, %v464, %v472
  %v474 = vrot.slane %v354, 4
  %v475 = vsel %vm403, %v466, %v474
  %v496 = vsel %vm403, %v351, %v440
  %v497 = vsel %vm403, %v352, %v441
  %v498 = vsel %vm403, %v353, %v442
  %v499 = vsel %vm403, %v354, %v443
  %v500 = vld [vmem:[%s3] sm:$0xff]
  %v501 = vld [vmem:[%s3 + $0x8] sm:$0xff]
  %v502 = vld [vmem:[%s3 + $0x10] sm:$0xff]
  %v503 = vld [vmem:[%s3 + $0x18] sm:$0xff]
  %v504 = vld [vmem:[%s3 + $0x20] sm:$0xff]
  %v505 = vld [vmem:[%s3 + $0x28] sm:$0xff]
  %v506 = vld [vmem:[%s3 + $0x30] sm:$0xff]
  %v507 = vld [vmem:[%s3 + $0x38] sm:$0xff]
  %v508 = vld [vmem:[%s3 + $0x40] sm:$0xff]
  %v509 = vld [vmem:[%s3 + $0x48] sm:$0xff]
  %v510 = vld [vmem:[%s3 + $0x50] sm:$0xff]
  %v511 = vld [vmem:[%s3 + $0x58] sm:$0xff]
  %v512 = vld [vmem:[%s3 + $0x60] sm:$0xff]
  %v513 = vld [vmem:[%s3 + $0x68] sm:$0xff]
  %v514 = vld [vmem:[%s3 + $0x70] sm:$0xff]
  %v515 = vld [vmem:[%s3 + $0x78] sm:$0xff]
  %v516 = vld [vmem:[%s3 + $0x80] sm:$0xff]
  %v517 = vld [vmem:[%s3 + $0x88] sm:$0xff]
  %519 = vset.pattern.permute.xlu0 0
  %520 = vperm.xlu0 %519, %v500
  %v521 = vpop.permute.xlu0 %520
  %524 = vset.pattern.permute.xlu0 0
  %525 = vperm.xlu0 %524, %v501
  %v526 = vpop.permute.xlu0 %525
  %529 = vset.pattern.permute.xlu0 0
  %530 = vperm.xlu0 %529, %v502
  %v531 = vpop.permute.xlu0 %530
  %534 = vset.pattern.permute.xlu0 0
  %535 = vperm.xlu0 %534, %v503
  %v536 = vpop.permute.xlu0 %535
  %539 = vset.pattern.permute.xlu0 0
  %540 = vperm.xlu0 %539, %v504
  %v541 = vpop.permute.xlu0 %540
  %544 = vset.pattern.permute.xlu0 0
  %545 = vperm.xlu0 %544, %v505
  %v546 = vpop.permute.xlu0 %545
  %549 = vset.pattern.permute.xlu0 0
  %550 = vperm.xlu0 %549, %v506
  %v551 = vpop.permute.xlu0 %550
  %554 = vset.pattern.permute.xlu0 0
  %555 = vperm.xlu0 %554, %v507
  %v556 = vpop.permute.xlu0 %555
  %559 = vset.pattern.permute.xlu0 0
  %560 = vperm.xlu0 %559, %v508
  %v561 = vpop.permute.xlu0 %560
  %564 = vset.pattern.permute.xlu0 0
  %565 = vperm.xlu0 %564, %v509
  %v566 = vpop.permute.xlu0 %565
  %569 = vset.pattern.permute.xlu0 0
  %570 = vperm.xlu0 %569, %v510
  %v571 = vpop.permute.xlu0 %570
  %574 = vset.pattern.permute.xlu0 0
  %575 = vperm.xlu0 %574, %v511
  %v576 = vpop.permute.xlu0 %575
  %579 = vset.pattern.permute.xlu0 0
  %580 = vperm.xlu0 %579, %v512
  %v581 = vpop.permute.xlu0 %580
  %584 = vset.pattern.permute.xlu0 0
  %585 = vperm.xlu0 %584, %v513
  %v586 = vpop.permute.xlu0 %585
  %589 = vset.pattern.permute.xlu0 0
  %590 = vperm.xlu0 %589, %v514
  %v591 = vpop.permute.xlu0 %590
  %594 = vset.pattern.permute.xlu0 0
  %595 = vperm.xlu0 %594, %v515
  %v596 = vpop.permute.xlu0 %595
  %599 = vset.pattern.permute.xlu0 0
  %600 = vperm.xlu0 %599, %v516
  %v601 = vpop.permute.xlu0 %600
  %604 = vset.pattern.permute.xlu0 0
  %605 = vperm.xlu0 %604, %v517
  %v606 = vpop.permute.xlu0 %605
  %v608 = vmul.f32 %v521, %v404
  %v609 = vmul.f32 %v521, %v405
  %v610 = vmul.f32 %v521, %v406
  %v611 = vmul.f32 %v521, %v407
  %v612 = vmul.f32 %v526, %v408
  %v613 = vmul.f32 %v526, %v409
  %v614 = vmul.f32 %v526, %v410
  %v615 = vmul.f32 %v526, %v411
  %v616 = vmul.f32 %v531, %v412
  %v617 = vmul.f32 %v531, %v413
  %v618 = vmul.f32 %v531, %v414
  %v619 = vmul.f32 %v531, %v415
  %v620 = vmul.f32 %v536, %v416
  %v621 = vmul.f32 %v536, %v417
  %v622 = vmul.f32 %v536, %v418
  %v623 = vmul.f32 %v536, %v419
  %v624 = vmul.f32 %v541, %v496
  %v625 = vmul.f32 %v541, %v497
  %v626 = vmul.f32 %v541, %v498
  %v627 = vmul.f32 %v541, %v499
  %v628 = vmul.f32 %v546, %v445
  %v629 = vmul.f32 %v546, %v447
  %v630 = vmul.f32 %v546, %v449
  %v631 = vmul.f32 %v546, %v451
  %v632 = vmul.f32 %v551, %v453
  %v633 = vmul.f32 %v551, %v455
  %v634 = vmul.f32 %v551, %v457
  %v635 = vmul.f32 %v551, %v459
  %v636 = vmul.f32 %v556, %v461
  %v637 = vmul.f32 %v556, %v463
  %v638 = vmul.f32 %v556, %v465
  %v639 = vmul.f32 %v556, %v467
  %v640 = vmul.f32 %v561, %v469
  %v641 = vmul.f32 %v561, %v471
  %v642 = vmul.f32 %v561, %v473
  %v643 = vmul.f32 %v561, %v475
  %v644 = vmul.f32 %v566, %v404
  %v645 = vmul.f32 %v566, %v405
  %v646 = vmul.f32 %v566, %v406
  %v647 = vmul.f32 %v566, %v407
  %v648 = vmul.f32 %v571, %v408
  %v649 = vmul.f32 %v571, %v409
  %v650 = vmul.f32 %v571, %v410
  %v651 = vmul.f32 %v571, %v411
  %v652 = vmul.f32 %v576, %v412
  %v653 = vmul.f32 %v576, %v413
  %v654 = vmul.f32 %v576, %v414
  %v655 = vmul.f32 %v576, %v415
  %v656 = vmul.f32 %v581, %v416
  %v657 = vmul.f32 %v581, %v417
  %v658 = vmul.f32 %v581, %v418
  %v659 = vmul.f32 %v581, %v419
  %v660 = vmul.f32 %v586, %v496
  %v661 = vmul.f32 %v586, %v497
  %v662 = vmul.f32 %v586, %v498
  %v663 = vmul.f32 %v586, %v499
  %v664 = vmul.f32 %v591, %v445
  %v665 = vmul.f32 %v591, %v447
  %v666 = vmul.f32 %v591, %v449
  %v667 = vmul.f32 %v591, %v451
  %v668 = vmul.f32 %v596, %v453
  %v669 = vmul.f32 %v596, %v455
  %v670 = vmul.f32 %v596, %v457
  %v671 = vmul.f32 %v596, %v459
  %v672 = vmul.f32 %v601, %v461
  %v673 = vmul.f32 %v601, %v463
  %v674 = vmul.f32 %v601, %v465
  %v675 = vmul.f32 %v601, %v467
  %v676 = vmul.f32 %v606, %v469
  %v677 = vmul.f32 %v606, %v471
  %v678 = vmul.f32 %v606, %v473
  %v679 = vmul.f32 %v606, %v475
  %v680 = vand.u32 2147483647, %v608
  %vm681 = vcmp.le.f32.partialorder %v680, 0.7853982
  %vm682 = vcmp.lt.s32.totalorder %v608, 0
  %v683 = vand.u32 %v608, 2139095040
  %v684 = vshrl.u32 %v683, 23
  %v685 = vsub.s32 %v684, 127
  %v686 = vand.u32 2147483647, %v608
  %v687 = vand.u32 %v686, 8388607
  %v688 = vor.u32 %v687, 8388608
  %v689 = vsub.s32 0, %v688
  %v690 = vadd.s32 %v685, 1
  %vm691 = vcmp.gt.s32.totalorder %v690, 0
  %v692 = vsel %vm691, %v690, 0
  %v693 = vshrl.u32 %v692, 5
  %v694 = vand.u32 %v692, 31
  %v695 = vsub.s32 32, %v694
  %v696 = vshrl.u32 683565275, %v695
  %v697 = vshll.u32 683565275, %v694
  %v698 = vshrl.u32 2475754826, %v695
  %v699 = vor.u32 %v697, %v698
  %v700 = vshll.u32 2475754826, %v694
  %v701 = vshrl.u32 2131351028, %v695
  %v702 = vor.u32 %v700, %v701
  %v703 = vshll.u32 2131351028, %v694
  %v704 = vshrl.u32 2102212464, %v695
  %v705 = vor.u32 %v703, %v704
  %v706 = vshll.u32 2102212464, %v694
  %v707 = vshrl.u32 920167782, %v695
  %v708 = vor.u32 %v706, %v707
  %v709 = vshll.u32 920167782, %v694
  %v710 = vshrl.u32 1326507024, %v695
  %v711 = vor.u32 %v709, %v710
  %vm712 = vcmp.lt.s32.totalorder %v693, 1
  %vm713 = vcmp.lt.s32.totalorder %v693, 2
  %vm714 = vcmp.lt.s32.totalorder %v693, 3
  %vm715 = vcmp.lt.s32.totalorder %v693, 4
  %v716 = vsel %vm712, %v696, %v699
  %v717 = vsel %vm715, %v705, 2102212464
  %v718 = vsel %vm714, %v702, %v717
  %v719 = vsel %vm713, %v716, %v718
  %v720 = vsel %vm712, %v699, %v702
  %v721 = vsel %vm715, %v708, 920167782
  %v722 = vsel %vm714, %v705, %v721
  %v723 = vsel %vm713, %v720, %v722
  %v724 = vsel %vm712, %v702, %v705
  %v725 = vsel %vm715, %v711, 1326507024
  %v726 = vsel %vm714, %v708, %v725
  %v727 = vsel %vm713, %v724, %v726
  %v728 = vshll.u32 %v688, 8
  %v729 = vmul.u32.u64.compose %v728, %v727
  %v730 = vextract.low.u32 %v729
  %v731 = vextract.high.u32 %v729
  %v732 = vmul.u32.u64.compose %v728, %v723
  %v733 = vextract.low.u32 %v732
  %v734 = vextract.high.u32 %v732
  %v735 = vmul.u32 %v728, %v719
  %v736 = vadd.s32 %v731, %v733
  %vm737 = vc.u32 %v731, %v733
  %v738 = vadd.s32 %v734, 1
  %v739 = vsel %vm737, %v738, %v734
  %v740 = vadd.s32 %v735, %v739
  %v741 = vadd.s32 %v740, 536870912
  %v742 = vshrl.u32 %v741, 30
  %v743 = vshll.u32 %v742, 30
  %v744 = vsub.s32 %v740, %v743
  %vm745 = vcmp.lt.s32.totalorder %v744, 0
  %v746 = vsub.s32 0, %v744
  %v747 = vsel %vm745, %v746, %v744
  %v748 = vclz %v747
  %v749 = vsub.s32 %v748, 2
  %vm750 = vcmp.gt.s32.totalorder 0, %v749
  %v751 = vsel %vm750, 0, %v749
  %v752 = vsub.s32 32, %v751
  %v753 = vshll.u32 %v744, %v751
  %v754 = vshrl.u32 %v736, %v752
  %v755 = vor.u32 %v753, %v754
  %v756 = vsub.s32 4294967266, %v751
  %v757 = vadd.s32 %v756, 127
  %v758 = vshll.u32 %v757, 23
  %v759 = vor.u32 4788187, %v758
  %v760 = vand.u32 2147483647, %v759
  %v762 = vcvt.s32.f32 %v755
  %v763 = vmul.f32 %v762, %v760
  %v764 = vxor.u32 %v763, 2147483648
  %v765 = vsel %vm682, %v764, %v763
  %v766 = vsub.s32 4, %v742
  %v767 = vsel %vm682, %v766, %v742
  %v768 = vsel %vm681, %v608, %v765
  %v769 = vsel %vm681, 0, %v767
  %v770 = vcosq.f32.pop %v768
  %v771 = vsinq.f32.pop %v768
  %vm772 = vweird.f32 %v608
  %v773 = vadd.s32 %v769, 3
  %v774 = vand.u32 %v773, 3
  %vm775 = vcmp.lt.s32.totalorder %v774, 2
  %vm776 = vcmp.eq.s32.totalorder %v774, 0
  %v777 = vxor.u32 %v771, 2147483648
  %v778 = vsel %vm776, %v770, %v777
  %vm779 = vcmp.eq.s32.totalorder %v774, 2
  %v780 = vxor.u32 %v770, 2147483648
  %v781 = vsel %vm779, %v780, %v771
  %v782 = vsel %vm775, %v778, %v781
  %v783 = vsel %vm772, nan, %v782
  %v784 = vand.u32 2147483647, %v609
  %vm785 = vcmp.le.f32.partialorder %v784, 0.7853982
  %vm786 = vcmp.lt.s32.totalorder %v609, 0
  %v787 = vand.u32 %v609, 2139095040
  %v788 = vshrl.u32 %v787, 23
  %v789 = vsub.s32 %v788, 127
  %v790 = vand.u32 2147483647, %v609
  %v791 = vand.u32 %v790, 8388607
  %v792 = vor.u32 %v791, 8388608
  %v793 = vsub.s32 0, %v792
  %v794 = vadd.s32 %v789, 1
  %vm795 = vcmp.gt.s32.totalorder %v794, 0
  %v796 = vsel %vm795, %v794, 0
  %v797 = vshrl.u32 %v796, 5
  %v798 = vand.u32 %v796, 31
  %v799 = vsub.s32 32, %v798
  %v800 = vshrl.u32 683565275, %v799
  %v801 = vshll.u32 683565275, %v798
  %v802 = vshrl.u32 2475754826, %v799
  %v803 = vor.u32 %v801, %v802
  %v804 = vshll.u32 2475754826, %v798
  %v805 = vshrl.u32 2131351028, %v799
  %v806 = vor.u32 %v804, %v805
  %v807 = vshll.u32 2131351028, %v798
  %v808 = vshrl.u32 2102212464, %v799
  %v809 = vor.u32 %v807, %v808
  %v810 = vshll.u32 2102212464, %v798
  %v811 = vshrl.u32 920167782, %v799
  %v812 = vor.u32 %v810, %v811
  %v813 = vshll.u32 920167782, %v798
  %v814 = vshrl.u32 1326507024, %v799
  %v815 = vor.u32 %v813, %v814
  %vm816 = vcmp.lt.s32.totalorder %v797, 1
  %vm817 = vcmp.lt.s32.totalorder %v797, 2
  %vm818 = vcmp.lt.s32.totalorder %v797, 3
  %vm819 = vcmp.lt.s32.totalorder %v797, 4
  %v820 = vsel %vm816, %v800, %v803
  %v821 = vsel %vm819, %v809, 2102212464
  %v822 = vsel %vm818, %v806, %v821
  %v823 = vsel %vm817, %v820, %v822
  %v824 = vsel %vm816, %v803, %v806
  %v825 = vsel %vm819, %v812, 920167782
  %v826 = vsel %vm818, %v809, %v825
  %v827 = vsel %vm817, %v824, %v826
  %v828 = vsel %vm816, %v806, %v809
  %v829 = vsel %vm819, %v815, 1326507024
  %v830 = vsel %vm818, %v812, %v829
  %v831 = vsel %vm817, %v828, %v830
  %v832 = vshll.u32 %v792, 8
  %v833 = vmul.u32.u64.compose %v832, %v831
  %v834 = vextract.low.u32 %v833
  %v835 = vextract.high.u32 %v833
  %v836 = vmul.u32.u64.compose %v832, %v827
  %v837 = vextract.low.u32 %v836
  %v838 = vextract.high.u32 %v836
  %v839 = vmul.u32 %v832, %v823
  %v840 = vadd.s32 %v835, %v837
  %vm841 = vc.u32 %v835, %v837
  %v842 = vadd.s32 %v838, 1
  %v843 = vsel %vm841, %v842, %v838
  %v844 = vadd.s32 %v839, %v843
  %v845 = vadd.s32 %v844, 536870912
  %v846 = vshrl.u32 %v845, 30
  %v847 = vshll.u32 %v846, 30
  %v848 = vsub.s32 %v844, %v847
  %vm849 = vcmp.lt.s32.totalorder %v848, 0
  %v850 = vsub.s32 0, %v848
  %v851 = vsel %vm849, %v850, %v848
  %v852 = vclz %v851
  %v853 = vsub.s32 %v852, 2
  %vm854 = vcmp.gt.s32.totalorder 0, %v853
  %v855 = vsel %vm854, 0, %v853
  %v856 = vsub.s32 32, %v855
  %v857 = vshll.u32 %v848, %v855
  %v858 = vshrl.u32 %v840, %v856
  %v859 = vor.u32 %v857, %v858
  %v860 = vsub.s32 4294967266, %v855
  %v861 = vadd.s32 %v860, 127
  %v862 = vshll.u32 %v861, 23
  %v863 = vor.u32 4788187, %v862
  %v864 = vand.u32 2147483647, %v863
  %v866 = vcvt.s32.f32 %v859
  %v867 = vmul.f32 %v866, %v864
  %v868 = vxor.u32 %v867, 2147483648
  %v869 = vsel %vm786, %v868, %v867
  %v870 = vsub.s32 4, %v846
  %v871 = vsel %vm786, %v870, %v846
  %v872 = vsel %vm785, %v609, %v869
  %v873 = vsel %vm785, 0, %v871
  %v874 = vcosq.f32.pop %v872
  %v875 = vsinq.f32.pop %v872
  %vm876 = vweird.f32 %v609
  %v877 = vadd.s32 %v873, 3
  %v878 = vand.u32 %v877, 3
  %vm879 = vcmp.lt.s32.totalorder %v878, 2
  %vm880 = vcmp.eq.s32.totalorder %v878, 0
  %v881 = vxor.u32 %v875, 2147483648
  %v882 = vsel %vm880, %v874, %v881
  %vm883 = vcmp.eq.s32.totalorder %v878, 2
  %v884 = vxor.u32 %v874, 2147483648
  %v885 = vsel %vm883, %v884, %v875
  %v886 = vsel %vm879, %v882, %v885
  %v887 = vsel %vm876, nan, %v886
  %v888 = vand.u32 2147483647, %v610
  %vm889 = vcmp.le.f32.partialorder %v888, 0.7853982
  %vm890 = vcmp.lt.s32.totalorder %v610, 0
  %v891 = vand.u32 %v610, 2139095040
  %v892 = vshrl.u32 %v891, 23
  %v893 = vsub.s32 %v892, 127
  %v894 = vand.u32 2147483647, %v610
  %v895 = vand.u32 %v894, 8388607
  %v896 = vor.u32 %v895, 8388608
  %v897 = vsub.s32 0, %v896
  %v898 = vadd.s32 %v893, 1
  %vm899 = vcmp.gt.s32.totalorder %v898, 0
  %v900 = vsel %vm899, %v898, 0
  %v901 = vshrl.u32 %v900, 5
  %v902 = vand.u32 %v900, 31
  %v903 = vsub.s32 32, %v902
  %v904 = vshrl.u32 683565275, %v903
  %v905 = vshll.u32 683565275, %v902
  %v906 = vshrl.u32 2475754826, %v903
  %v907 = vor.u32 %v905, %v906
  %v908 = vshll.u32 2475754826, %v902
  %v909 = vshrl.u32 2131351028, %v903
  %v910 = vor.u32 %v908, %v909
  %v911 = vshll.u32 2131351028, %v902
  %v912 = vshrl.u32 2102212464, %v903
  %v913 = vor.u32 %v911, %v912
  %v914 = vshll.u32 2102212464, %v902
  %v915 = vshrl.u32 920167782, %v903
  %v916 = vor.u32 %v914, %v915
  %v917 = vshll.u32 920167782, %v902
  %v918 = vshrl.u32 1326507024, %v903
  %v919 = vor.u32 %v917, %v918
  %vm920 = vcmp.lt.s32.totalorder %v901, 1
  %vm921 = vcmp.lt.s32.totalorder %v901, 2
  %vm922 = vcmp.lt.s32.totalorder %v901, 3
  %vm923 = vcmp.lt.s32.totalorder %v901, 4
  %v924 = vsel %vm920, %v904, %v907
  %v925 = vsel %vm923, %v913, 2102212464
  %v926 = vsel %vm922, %v910, %v925
  %v927 = vsel %vm921, %v924, %v926
  %v928 = vsel %vm920, %v907, %v910
  %v929 = vsel %vm923, %v916, 920167782
  %v930 = vsel %vm922, %v913, %v929
  %v931 = vsel %vm921, %v928, %v930
  %v932 = vsel %vm920, %v910, %v913
  %v933 = vsel %vm923, %v919, 1326507024
  %v934 = vsel %vm922, %v916, %v933
  %v935 = vsel %vm921, %v932, %v934
  %v936 = vshll.u32 %v896, 8
  %v937 = vmul.u32.u64.compose %v936, %v935
  %v938 = vextract.low.u32 %v937
  %v939 = vextract.high.u32 %v937
  %v940 = vmul.u32.u64.compose %v936, %v931
  %v941 = vextract.low.u32 %v940
  %v942 = vextract.high.u32 %v940
  %v943 = vmul.u32 %v936, %v927
  %v944 = vadd.s32 %v939, %v941
  %vm945 = vc.u32 %v939, %v941
  %v946 = vadd.s32 %v942, 1
  %v947 = vsel %vm945, %v946, %v942
  %v948 = vadd.s32 %v943, %v947
  %v949 = vadd.s32 %v948, 536870912
  %v950 = vshrl.u32 %v949, 30
  %v951 = vshll.u32 %v950, 30
  %v952 = vsub.s32 %v948, %v951
  %vm953 = vcmp.lt.s32.totalorder %v952, 0
  %v954 = vsub.s32 0, %v952
  %v955 = vsel %vm953, %v954, %v952
  %v956 = vclz %v955
  %v957 = vsub.s32 %v956, 2
  %vm958 = vcmp.gt.s32.totalorder 0, %v957
  %v959 = vsel %vm958, 0, %v957
  %v960 = vsub.s32 32, %v959
  %v961 = vshll.u32 %v952, %v959
  %v962 = vshrl.u32 %v944, %v960
  %v963 = vor.u32 %v961, %v962
  %v964 = vsub.s32 4294967266, %v959
  %v965 = vadd.s32 %v964, 127
  %v966 = vshll.u32 %v965, 23
  %v967 = vor.u32 4788187, %v966
  %v968 = vand.u32 2147483647, %v967
  %v970 = vcvt.s32.f32 %v963
  %v971 = vmul.f32 %v970, %v968
  %v972 = vxor.u32 %v971, 2147483648
  %v973 = vsel %vm890, %v972, %v971
  %v974 = vsub.s32 4, %v950
  %v975 = vsel %vm890, %v974, %v950
  %v976 = vsel %vm889, %v610, %v973
  %v977 = vsel %vm889, 0, %v975
  %v978 = vcosq.f32.pop %v976
  %v979 = vsinq.f32.pop %v976
  %vm980 = vweird.f32 %v610
  %v981 = vadd.s32 %v977, 3
  %v982 = vand.u32 %v981, 3
  %vm983 = vcmp.lt.s32.totalorder %v982, 2
  %vm984 = vcmp.eq.s32.totalorder %v982, 0
  %v985 = vxor.u32 %v979, 2147483648
  %v986 = vsel %vm984, %v978, %v985
  %vm987 = vcmp.eq.s32.totalorder %v982, 2
  %v988 = vxor.u32 %v978, 2147483648
  %v989 = vsel %vm987, %v988, %v979
  %v990 = vsel %vm983, %v986, %v989
  %v991 = vsel %vm980, nan, %v990
  %v992 = vand.u32 2147483647, %v611
  %vm993 = vcmp.le.f32.partialorder %v992, 0.7853982
  %vm994 = vcmp.lt.s32.totalorder %v611, 0
  %v995 = vand.u32 %v611, 2139095040
  %v996 = vshrl.u32 %v995, 23
  %v997 = vsub.s32 %v996, 127
  %v998 = vand.u32 2147483647, %v611
  %v999 = vand.u32 %v998, 8388607
  %v1000 = vor.u32 %v999, 8388608
  %v1001 = vsub.s32 0, %v1000
  %v1002 = vadd.s32 %v997, 1
  %vm1003 = vcmp.gt.s32.totalorder %v1002, 0
  %v1004 = vsel %vm1003, %v1002, 0
  %v1005 = vshrl.u32 %v1004, 5
  %v1006 = vand.u32 %v1004, 31
  %v1007 = vsub.s32 32, %v1006
  %v1008 = vshrl.u32 683565275, %v1007
  %v1009 = vshll.u32 683565275, %v1006
  %v1010 = vshrl.u32 2475754826, %v1007
  %v1011 = vor.u32 %v1009, %v1010
  %v1012 = vshll.u32 2475754826, %v1006
  %v1013 = vshrl.u32 2131351028, %v1007
  %v1014 = vor.u32 %v1012, %v1013
  %v1015 = vshll.u32 2131351028, %v1006
  %v1016 = vshrl.u32 2102212464, %v1007
  %v1017 = vor.u32 %v1015, %v1016
  %v1018 = vshll.u32 2102212464, %v1006
  %v1019 = vshrl.u32 920167782, %v1007
  %v1020 = vor.u32 %v1018, %v1019
  %v1021 = vshll.u32 920167782, %v1006
  %v1022 = vshrl.u32 1326507024, %v1007
  %v1023 = vor.u32 %v1021, %v1022
  %vm1024 = vcmp.lt.s32.totalorder %v1005, 1
  %vm1025 = vcmp.lt.s32.totalorder %v1005, 2
  %vm1026 = vcmp.lt.s32.totalorder %v1005, 3
  %vm1027 = vcmp.lt.s32.totalorder %v1005, 4
  %v1028 = vsel %vm1024, %v1008, %v1011
  %v1029 = vsel %vm1027, %v1017, 2102212464
  %v1030 = vsel %vm1026, %v1014, %v1029
  %v1031 = vsel %vm1025, %v1028, %v1030
  %v1032 = vsel %vm1024, %v1011, %v1014
  %v1033 = vsel %vm1027, %v1020, 920167782
  %v1034 = vsel %vm1026, %v1017, %v1033
  %v1035 = vsel %vm1025, %v1032, %v1034
  %v1036 = vsel %vm1024, %v1014, %v1017
  %v1037 = vsel %vm1027, %v1023, 1326507024
  %v1038 = vsel %vm1026, %v1020, %v1037
  %v1039 = vsel %vm1025, %v1036, %v1038
  %v1040 = vshll.u32 %v1000, 8
  %v1041 = vmul.u32.u64.compose %v1040, %v1039
  %v1042 = vextract.low.u32 %v1041
  %v1043 = vextract.high.u32 %v1041
  %v1044 = vmul.u32.u64.compose %v1040, %v1035
  %v1045 = vextract.low.u32 %v1044
  %v1046 = vextract.high.u32 %v1044
  %v1047 = vmul.u32 %v1040, %v1031
  %v1048 = vadd.s32 %v1043, %v1045
  %vm1049 = vc.u32 %v1043, %v1045
  %v1050 = vadd.s32 %v1046, 1
  %v1051 = vsel %vm1049, %v1050, %v1046
  %v1052 = vadd.s32 %v1047, %v1051
  %v1053 = vadd.s32 %v1052, 536870912
  %v1054 = vshrl.u32 %v1053, 30
  %v1055 = vshll.u32 %v1054, 30
  %v1056 = vsub.s32 %v1052, %v1055
  %vm1057 = vcmp.lt.s32.totalorder %v1056, 0
  %v1058 = vsub.s32 0, %v1056
  %v1059 = vsel %vm1057, %v1058, %v1056
  %v1060 = vclz %v1059
  %v1061 = vsub.s32 %v1060, 2
  %vm1062 = vcmp.gt.s32.totalorder 0, %v1061
  %v1063 = vsel %vm1062, 0, %v1061
  %v1064 = vsub.s32 32, %v1063
  %v1065 = vshll.u32 %v1056, %v1063
  %v1066 = vshrl.u32 %v1048, %v1064
  %v1067 = vor.u32 %v1065, %v1066
  %v1068 = vsub.s32 4294967266, %v1063
  %v1069 = vadd.s32 %v1068, 127
  %v1070 = vshll.u32 %v1069, 23
  %v1071 = vor.u32 4788187, %v1070
  %v1072 = vand.u32 2147483647, %v1071
  %v1074 = vcvt.s32.f32 %v1067
  %v1075 = vmul.f32 %v1074, %v1072
  %v1076 = vxor.u32 %v1075, 2147483648
  %v1077 = vsel %vm994, %v1076, %v1075
  %v1078 = vsub.s32 4, %v1054
  %v1079 = vsel %vm994, %v1078, %v1054
  %v1080 = vsel %vm993, %v611, %v1077
  %v1081 = vsel %vm993, 0, %v1079
  %v1082 = vcosq.f32.pop %v1080
  %v1083 = vsinq.f32.pop %v1080
  %vm1084 = vweird.f32 %v611
  %v1085 = vadd.s32 %v1081, 3
  %v1086 = vand.u32 %v1085, 3
  %vm1087 = vcmp.lt.s32.totalorder %v1086, 2
  %vm1088 = vcmp.eq.s32.totalorder %v1086, 0
  %v1089 = vxor.u32 %v1083, 2147483648
  %v1090 = vsel %vm1088, %v1082, %v1089
  %vm1091 = vcmp.eq.s32.totalorder %v1086, 2
  %v1092 = vxor.u32 %v1082, 2147483648
  %v1093 = vsel %vm1091, %v1092, %v1083
  %v1094 = vsel %vm1087, %v1090, %v1093
  %v1095 = vsel %vm1084, nan, %v1094
  %v1096 = vand.u32 2147483647, %v612
  %vm1097 = vcmp.le.f32.partialorder %v1096, 0.7853982
  %vm1098 = vcmp.lt.s32.totalorder %v612, 0
  %v1099 = vand.u32 %v612, 2139095040
  %v1100 = vshrl.u32 %v1099, 23
  %v1101 = vsub.s32 %v1100, 127
  %v1102 = vand.u32 2147483647, %v612
  %v1103 = vand.u32 %v1102, 8388607
  %v1104 = vor.u32 %v1103, 8388608
  %v1105 = vsub.s32 0, %v1104
  %v1106 = vadd.s32 %v1101, 1
  %vm1107 = vcmp.gt.s32.totalorder %v1106, 0
  %v1108 = vsel %vm1107, %v1106, 0
  %v1109 = vshrl.u32 %v1108, 5
  %v1110 = vand.u32 %v1108, 31
  %v1111 = vsub.s32 32, %v1110
  %v1112 = vshrl.u32 683565275, %v1111
  %v1113 = vshll.u32 683565275, %v1110
  %v1114 = vshrl.u32 2475754826, %v1111
  %v1115 = vor.u32 %v1113, %v1114
  %v1116 = vshll.u32 2475754826, %v1110
  %v1117 = vshrl.u32 2131351028, %v1111
  %v1118 = vor.u32 %v1116, %v1117
  %v1119 = vshll.u32 2131351028, %v1110
  %v1120 = vshrl.u32 2102212464, %v1111
  %v1121 = vor.u32 %v1119, %v1120
  %v1122 = vshll.u32 2102212464, %v1110
  %v1123 = vshrl.u32 920167782, %v1111
  %v1124 = vor.u32 %v1122, %v1123
  %v1125 = vshll.u32 920167782, %v1110
  %v1126 = vshrl.u32 1326507024, %v1111
  %v1127 = vor.u32 %v1125, %v1126
  %vm1128 = vcmp.lt.s32.totalorder %v1109, 1
  %vm1129 = vcmp.lt.s32.totalorder %v1109, 2
  %vm1130 = vcmp.lt.s32.totalorder %v1109, 3
  %vm1131 = vcmp.lt.s32.totalorder %v1109, 4
  %v1132 = vsel %vm1128, %v1112, %v1115
  %v1133 = vsel %vm1131, %v1121, 2102212464
  %v1134 = vsel %vm1130, %v1118, %v1133
  %v1135 = vsel %vm1129, %v1132, %v1134
  %v1136 = vsel %vm1128, %v1115, %v1118
  %v1137 = vsel %vm1131, %v1124, 920167782
  %v1138 = vsel %vm1130, %v1121, %v1137
  %v1139 = vsel %vm1129, %v1136, %v1138
  %v1140 = vsel %vm1128, %v1118, %v1121
  %v1141 = vsel %vm1131, %v1127, 1326507024
  %v1142 = vsel %vm1130, %v1124, %v1141
  %v1143 = vsel %vm1129, %v1140, %v1142
  %v1144 = vshll.u32 %v1104, 8
  %v1145 = vmul.u32.u64.compose %v1144, %v1143
  %v1146 = vextract.low.u32 %v1145
  %v1147 = vextract.high.u32 %v1145
  %v1148 = vmul.u32.u64.compose %v1144, %v1139
  %v1149 = vextract.low.u32 %v1148
  %v1150 = vextract.high.u32 %v1148
  %v1151 = vmul.u32 %v1144, %v1135
  %v1152 = vadd.s32 %v1147, %v1149
  %vm1153 = vc.u32 %v1147, %v1149
  %v1154 = vadd.s32 %v1150, 1
  %v1155 = vsel %vm1153, %v1154, %v1150
  %v1156 = vadd.s32 %v1151, %v1155
  %v1157 = vadd.s32 %v1156, 536870912
  %v1158 = vshrl.u32 %v1157, 30
  %v1159 = vshll.u32 %v1158, 30
  %v1160 = vsub.s32 %v1156, %v1159
  %vm1161 = vcmp.lt.s32.totalorder %v1160, 0
  %v1162 = vsub.s32 0, %v1160
  %v1163 = vsel %vm1161, %v1162, %v1160
  %v1164 = vclz %v1163
  %v1165 = vsub.s32 %v1164, 2
  %vm1166 = vcmp.gt.s32.totalorder 0, %v1165
  %v1167 = vsel %vm1166, 0, %v1165
  %v1168 = vsub.s32 32, %v1167
  %v1169 = vshll.u32 %v1160, %v1167
  %v1170 = vshrl.u32 %v1152, %v1168
  %v1171 = vor.u32 %v1169, %v1170
  %v1172 = vsub.s32 4294967266, %v1167
  %v1173 = vadd.s32 %v1172, 127
  %v1174 = vshll.u32 %v1173, 23
  %v1175 = vor.u32 4788187, %v1174
  %v1176 = vand.u32 2147483647, %v1175
  %v1178 = vcvt.s32.f32 %v1171
  %v1179 = vmul.f32 %v1178, %v1176
  %v1180 = vxor.u32 %v1179, 2147483648
  %v1181 = vsel %vm1098, %v1180, %v1179
  %v1182 = vsub.s32 4, %v1158
  %v1183 = vsel %vm1098, %v1182, %v1158
  %v1184 = vsel %vm1097, %v612, %v1181
  %v1185 = vsel %vm1097, 0, %v1183
  %v1186 = vcosq.f32.pop %v1184
  %v1187 = vsinq.f32.pop %v1184
  %vm1188 = vweird.f32 %v612
  %v1189 = vadd.s32 %v1185, 3
  %v1190 = vand.u32 %v1189, 3
  %vm1191 = vcmp.lt.s32.totalorder %v1190, 2
  %vm1192 = vcmp.eq.s32.totalorder %v1190, 0
  %v1193 = vxor.u32 %v1187, 2147483648
  %v1194 = vsel %vm1192, %v1186, %v1193
  %vm1195 = vcmp.eq.s32.totalorder %v1190, 2
  %v1196 = vxor.u32 %v1186, 2147483648
  %v1197 = vsel %vm1195, %v1196, %v1187
  %v1198 = vsel %vm1191, %v1194, %v1197
  %v1199 = vsel %vm1188, nan, %v1198
  %v1200 = vand.u32 2147483647, %v613
  %vm1201 = vcmp.le.f32.partialorder %v1200, 0.7853982
  %vm1202 = vcmp.lt.s32.totalorder %v613, 0
  %v1203 = vand.u32 %v613, 2139095040
  %v1204 = vshrl.u32 %v1203, 23
  %v1205 = vsub.s32 %v1204, 127
  %v1206 = vand.u32 2147483647, %v613
  %v1207 = vand.u32 %v1206, 8388607
  %v1208 = vor.u32 %v1207, 8388608
  %v1209 = vsub.s32 0, %v1208
  %v1210 = vadd.s32 %v1205, 1
  %vm1211 = vcmp.gt.s32.totalorder %v1210, 0
  %v1212 = vsel %vm1211, %v1210, 0
  %v1213 = vshrl.u32 %v1212, 5
  %v1214 = vand.u32 %v1212, 31
  %v1215 = vsub.s32 32, %v1214
  %v1216 = vshrl.u32 683565275, %v1215
  %v1217 = vshll.u32 683565275, %v1214
  %v1218 = vshrl.u32 2475754826, %v1215
  %v1219 = vor.u32 %v1217, %v1218
  %v1220 = vshll.u32 2475754826, %v1214
  %v1221 = vshrl.u32 2131351028, %v1215
  %v1222 = vor.u32 %v1220, %v1221
  %v1223 = vshll.u32 2131351028, %v1214
  %v1224 = vshrl.u32 2102212464, %v1215
  %v1225 = vor.u32 %v1223, %v1224
  %v1226 = vshll.u32 2102212464, %v1214
  %v1227 = vshrl.u32 920167782, %v1215
  %v1228 = vor.u32 %v1226, %v1227
  %v1229 = vshll.u32 920167782, %v1214
  %v1230 = vshrl.u32 1326507024, %v1215
  %v1231 = vor.u32 %v1229, %v1230
  %vm1232 = vcmp.lt.s32.totalorder %v1213, 1
  %vm1233 = vcmp.lt.s32.totalorder %v1213, 2
  %vm1234 = vcmp.lt.s32.totalorder %v1213, 3
  %vm1235 = vcmp.lt.s32.totalorder %v1213, 4
  %v1236 = vsel %vm1232, %v1216, %v1219
  %v1237 = vsel %vm1235, %v1225, 2102212464
  %v1238 = vsel %vm1234, %v1222, %v1237
  %v1239 = vsel %vm1233, %v1236, %v1238
  %v1240 = vsel %vm1232, %v1219, %v1222
  %v1241 = vsel %vm1235, %v1228, 920167782
  %v1242 = vsel %vm1234, %v1225, %v1241
  %v1243 = vsel %vm1233, %v1240, %v1242
  %v1244 = vsel %vm1232, %v1222, %v1225
  %v1245 = vsel %vm1235, %v1231, 1326507024
  %v1246 = vsel %vm1234, %v1228, %v1245
  %v1247 = vsel %vm1233, %v1244, %v1246
  %v1248 = vshll.u32 %v1208, 8
  %v1249 = vmul.u32.u64.compose %v1248, %v1247
  %v1250 = vextract.low.u32 %v1249
  %v1251 = vextract.high.u32 %v1249
  %v1252 = vmul.u32.u64.compose %v1248, %v1243
  %v1253 = vextract.low.u32 %v1252
  %v1254 = vextract.high.u32 %v1252
  %v1255 = vmul.u32 %v1248, %v1239
  %v1256 = vadd.s32 %v1251, %v1253
  %vm1257 = vc.u32 %v1251, %v1253
  %v1258 = vadd.s32 %v1254, 1
  %v1259 = vsel %vm1257, %v1258, %v1254
  %v1260 = vadd.s32 %v1255, %v1259
  %v1261 = vadd.s32 %v1260, 536870912
  %v1262 = vshrl.u32 %v1261, 30
  %v1263 = vshll.u32 %v1262, 30
  %v1264 = vsub.s32 %v1260, %v1263
  %vm1265 = vcmp.lt.s32.totalorder %v1264, 0
  %v1266 = vsub.s32 0, %v1264
  %v1267 = vsel %vm1265, %v1266, %v1264
  %v1268 = vclz %v1267
  %v1269 = vsub.s32 %v1268, 2
  %vm1270 = vcmp.gt.s32.totalorder 0, %v1269
  %v1271 = vsel %vm1270, 0, %v1269
  %v1272 = vsub.s32 32, %v1271
  %v1273 = vshll.u32 %v1264, %v1271
  %v1274 = vshrl.u32 %v1256, %v1272
  %v1275 = vor.u32 %v1273, %v1274
  %v1276 = vsub.s32 4294967266, %v1271
  %v1277 = vadd.s32 %v1276, 127
  %v1278 = vshll.u32 %v1277, 23
  %v1279 = vor.u32 4788187, %v1278
  %v1280 = vand.u32 2147483647, %v1279
  %v1282 = vcvt.s32.f32 %v1275
  %v1283 = vmul.f32 %v1282, %v1280
  %v1284 = vxor.u32 %v1283, 2147483648
  %v1285 = vsel %vm1202, %v1284, %v1283
  %v1286 = vsub.s32 4, %v1262
  %v1287 = vsel %vm1202, %v1286, %v1262
  %v1288 = vsel %vm1201, %v613, %v1285
  %v1289 = vsel %vm1201, 0, %v1287
  %v1290 = vcosq.f32.pop %v1288
  %v1291 = vsinq.f32.pop %v1288
  %vm1292 = vweird.f32 %v613
  %v1293 = vadd.s32 %v1289, 3
  %v1294 = vand.u32 %v1293, 3
  %vm1295 = vcmp.lt.s32.totalorder %v1294, 2
  %vm1296 = vcmp.eq.s32.totalorder %v1294, 0
  %v1297 = vxor.u32 %v1291, 2147483648
  %v1298 = vsel %vm1296, %v1290, %v1297
  %vm1299 = vcmp.eq.s32.totalorder %v1294, 2
  %v1300 = vxor.u32 %v1290, 2147483648
  %v1301 = vsel %vm1299, %v1300, %v1291
  %v1302 = vsel %vm1295, %v1298, %v1301
  %v1303 = vsel %vm1292, nan, %v1302
  %v1304 = vand.u32 2147483647, %v614
  %vm1305 = vcmp.le.f32.partialorder %v1304, 0.7853982
  %vm1306 = vcmp.lt.s32.totalorder %v614, 0
  %v1307 = vand.u32 %v614, 2139095040
  %v1308 = vshrl.u32 %v1307, 23
  %v1309 = vsub.s32 %v1308, 127
  %v1310 = vand.u32 2147483647, %v614
  %v1311 = vand.u32 %v1310, 8388607
  %v1312 = vor.u32 %v1311, 8388608
  %v1313 = vsub.s32 0, %v1312
  %v1314 = vadd.s32 %v1309, 1
  %vm1315 = vcmp.gt.s32.totalorder %v1314, 0
  %v1316 = vsel %vm1315, %v1314, 0
  %v1317 = vshrl.u32 %v1316, 5
  %v1318 = vand.u32 %v1316, 31
  %v1319 = vsub.s32 32, %v1318
  %v1320 = vshrl.u32 683565275, %v1319
  %v1321 = vshll.u32 683565275, %v1318
  %v1322 = vshrl.u32 2475754826, %v1319
  %v1323 = vor.u32 %v1321, %v1322
  %v1324 = vshll.u32 2475754826, %v1318
  %v1325 = vshrl.u32 2131351028, %v1319
  %v1326 = vor.u32 %v1324, %v1325
  %v1327 = vshll.u32 2131351028, %v1318
  %v1328 = vshrl.u32 2102212464, %v1319
  %v1329 = vor.u32 %v1327, %v1328
  %v1330 = vshll.u32 2102212464, %v1318
  %v1331 = vshrl.u32 920167782, %v1319
  %v1332 = vor.u32 %v1330, %v1331
  %v1333 = vshll.u32 920167782, %v1318
  %v1334 = vshrl.u32 1326507024, %v1319
  %v1335 = vor.u32 %v1333, %v1334
  %vm1336 = vcmp.lt.s32.totalorder %v1317, 1
  %vm1337 = vcmp.lt.s32.totalorder %v1317, 2
  %vm1338 = vcmp.lt.s32.totalorder %v1317, 3
  %vm1339 = vcmp.lt.s32.totalorder %v1317, 4
  %v1340 = vsel %vm1336, %v1320, %v1323
  %v1341 = vsel %vm1339, %v1329, 2102212464
  %v1342 = vsel %vm1338, %v1326, %v1341
  %v1343 = vsel %vm1337, %v1340, %v1342
  %v1344 = vsel %vm1336, %v1323, %v1326
  %v1345 = vsel %vm1339, %v1332, 920167782
  %v1346 = vsel %vm1338, %v1329, %v1345
  %v1347 = vsel %vm1337, %v1344, %v1346
  %v1348 = vsel %vm1336, %v1326, %v1329
  %v1349 = vsel %vm1339, %v1335, 1326507024
  %v1350 = vsel %vm1338, %v1332, %v1349
  %v1351 = vsel %vm1337, %v1348, %v1350
  %v1352 = vshll.u32 %v1312, 8
  %v1353 = vmul.u32.u64.compose %v1352, %v1351
  %v1354 = vextract.low.u32 %v1353
  %v1355 = vextract.high.u32 %v1353
  %v1356 = vmul.u32.u64.compose %v1352, %v1347
  %v1357 = vextract.low.u32 %v1356
  %v1358 = vextract.high.u32 %v1356
  %v1359 = vmul.u32 %v1352, %v1343
  %v1360 = vadd.s32 %v1355, %v1357
  %vm1361 = vc.u32 %v1355, %v1357
  %v1362 = vadd.s32 %v1358, 1
  %v1363 = vsel %vm1361, %v1362, %v1358
  %v1364 = vadd.s32 %v1359, %v1363
  %v1365 = vadd.s32 %v1364, 536870912
  %v1366 = vshrl.u32 %v1365, 30
  %v1367 = vshll.u32 %v1366, 30
  %v1368 = vsub.s32 %v1364, %v1367
  %vm1369 = vcmp.lt.s32.totalorder %v1368, 0
  %v1370 = vsub.s32 0, %v1368
  %v1371 = vsel %vm1369, %v1370, %v1368
  %v1372 = vclz %v1371
  %v1373 = vsub.s32 %v1372, 2
  %vm1374 = vcmp.gt.s32.totalorder 0, %v1373
  %v1375 = vsel %vm1374, 0, %v1373
  %v1376 = vsub.s32 32, %v1375
  %v1377 = vshll.u32 %v1368, %v1375
  %v1378 = vshrl.u32 %v1360, %v1376
  %v1379 = vor.u32 %v1377, %v1378
  %v1380 = vsub.s32 4294967266, %v1375
  %v1381 = vadd.s32 %v1380, 127
  %v1382 = vshll.u32 %v1381, 23
  %v1383 = vor.u32 4788187, %v1382
  %v1384 = vand.u32 2147483647, %v1383
  %v1386 = vcvt.s32.f32 %v1379
  %v1387 = vmul.f32 %v1386, %v1384
  %v1388 = vxor.u32 %v1387, 2147483648
  %v1389 = vsel %vm1306, %v1388, %v1387
  %v1390 = vsub.s32 4, %v1366
  %v1391 = vsel %vm1306, %v1390, %v1366
  %v1392 = vsel %vm1305, %v614, %v1389
  %v1393 = vsel %vm1305, 0, %v1391
  %v1394 = vcosq.f32.pop %v1392
  %v1395 = vsinq.f32.pop %v1392
  %vm1396 = vweird.f32 %v614
  %v1397 = vadd.s32 %v1393, 3
  %v1398 = vand.u32 %v1397, 3
  %vm1399 = vcmp.lt.s32.totalorder %v1398, 2
  %vm1400 = vcmp.eq.s32.totalorder %v1398, 0
  %v1401 = vxor.u32 %v1395, 2147483648
  %v1402 = vsel %vm1400, %v1394, %v1401
  %vm1403 = vcmp.eq.s32.totalorder %v1398, 2
  %v1404 = vxor.u32 %v1394, 2147483648
  %v1405 = vsel %vm1403, %v1404, %v1395
  %v1406 = vsel %vm1399, %v1402, %v1405
  %v1407 = vsel %vm1396, nan, %v1406
  %v1408 = vand.u32 2147483647, %v615
  %vm1409 = vcmp.le.f32.partialorder %v1408, 0.7853982
  %vm1410 = vcmp.lt.s32.totalorder %v615, 0
  %v1411 = vand.u32 %v615, 2139095040
  %v1412 = vshrl.u32 %v1411, 23
  %v1413 = vsub.s32 %v1412, 127
  %v1414 = vand.u32 2147483647, %v615
  %v1415 = vand.u32 %v1414, 8388607
  %v1416 = vor.u32 %v1415, 8388608
  %v1417 = vsub.s32 0, %v1416
  %v1418 = vadd.s32 %v1413, 1
  %vm1419 = vcmp.gt.s32.totalorder %v1418, 0
  %v1420 = vsel %vm1419, %v1418, 0
  %v1421 = vshrl.u32 %v1420, 5
  %v1422 = vand.u32 %v1420, 31
  %v1423 = vsub.s32 32, %v1422
  %v1424 = vshrl.u32 683565275, %v1423
  %v1425 = vshll.u32 683565275, %v1422
  %v1426 = vshrl.u32 2475754826, %v1423
  %v1427 = vor.u32 %v1425, %v1426
  %v1428 = vshll.u32 2475754826, %v1422
  %v1429 = vshrl.u32 2131351028, %v1423
  %v1430 = vor.u32 %v1428, %v1429
  %v1431 = vshll.u32 2131351028, %v1422
  %v1432 = vshrl.u32 2102212464, %v1423
  %v1433 = vor.u32 %v1431, %v1432
  %v1434 = vshll.u32 2102212464, %v1422
  %v1435 = vshrl.u32 920167782, %v1423
  %v1436 = vor.u32 %v1434, %v1435
  %v1437 = vshll.u32 920167782, %v1422
  %v1438 = vshrl.u32 1326507024, %v1423
  %v1439 = vor.u32 %v1437, %v1438
  %vm1440 = vcmp.lt.s32.totalorder %v1421, 1
  %vm1441 = vcmp.lt.s32.totalorder %v1421, 2
  %vm1442 = vcmp.lt.s32.totalorder %v1421, 3
  %vm1443 = vcmp.lt.s32.totalorder %v1421, 4
  %v1444 = vsel %vm1440, %v1424, %v1427
  %v1445 = vsel %vm1443, %v1433, 2102212464
  %v1446 = vsel %vm1442, %v1430, %v1445
  %v1447 = vsel %vm1441, %v1444, %v1446
  %v1448 = vsel %vm1440, %v1427, %v1430
  %v1449 = vsel %vm1443, %v1436, 920167782
  %v1450 = vsel %vm1442, %v1433, %v1449
  %v1451 = vsel %vm1441, %v1448, %v1450
  %v1452 = vsel %vm1440, %v1430, %v1433
  %v1453 = vsel %vm1443, %v1439, 1326507024
  %v1454 = vsel %vm1442, %v1436, %v1453
  %v1455 = vsel %vm1441, %v1452, %v1454
  %v1456 = vshll.u32 %v1416, 8
  %v1457 = vmul.u32.u64.compose %v1456, %v1455
  %v1458 = vextract.low.u32 %v1457
  %v1459 = vextract.high.u32 %v1457
  %v1460 = vmul.u32.u64.compose %v1456, %v1451
  %v1461 = vextract.low.u32 %v1460
  %v1462 = vextract.high.u32 %v1460
  %v1463 = vmul.u32 %v1456, %v1447
  %v1464 = vadd.s32 %v1459, %v1461
  %vm1465 = vc.u32 %v1459, %v1461
  %v1466 = vadd.s32 %v1462, 1
  %v1467 = vsel %vm1465, %v1466, %v1462
  %v1468 = vadd.s32 %v1463, %v1467
  %v1469 = vadd.s32 %v1468, 536870912
  %v1470 = vshrl.u32 %v1469, 30
  %v1471 = vshll.u32 %v1470, 30
  %v1472 = vsub.s32 %v1468, %v1471
  %vm1473 = vcmp.lt.s32.totalorder %v1472, 0
  %v1474 = vsub.s32 0, %v1472
  %v1475 = vsel %vm1473, %v1474, %v1472
  %v1476 = vclz %v1475
  %v1477 = vsub.s32 %v1476, 2
  %vm1478 = vcmp.gt.s32.totalorder 0, %v1477
  %v1479 = vsel %vm1478, 0, %v1477
  %v1480 = vsub.s32 32, %v1479
  %v1481 = vshll.u32 %v1472, %v1479
  %v1482 = vshrl.u32 %v1464, %v1480
  %v1483 = vor.u32 %v1481, %v1482
  %v1484 = vsub.s32 4294967266, %v1479
  %v1485 = vadd.s32 %v1484, 127
  %v1486 = vshll.u32 %v1485, 23
  %v1487 = vor.u32 4788187, %v1486
  %v1488 = vand.u32 2147483647, %v1487
  %v1490 = vcvt.s32.f32 %v1483
  %v1491 = vmul.f32 %v1490, %v1488
  %v1492 = vxor.u32 %v1491, 2147483648
  %v1493 = vsel %vm1410, %v1492, %v1491
  %v1494 = vsub.s32 4, %v1470
  %v1495 = vsel %vm1410, %v1494, %v1470
  %v1496 = vsel %vm1409, %v615, %v1493
  %v1497 = vsel %vm1409, 0, %v1495
  %v1498 = vcosq.f32.pop %v1496
  %v1499 = vsinq.f32.pop %v1496
  %vm1500 = vweird.f32 %v615
  %v1501 = vadd.s32 %v1497, 3
  %v1502 = vand.u32 %v1501, 3
  %vm1503 = vcmp.lt.s32.totalorder %v1502, 2
  %vm1504 = vcmp.eq.s32.totalorder %v1502, 0
  %v1505 = vxor.u32 %v1499, 2147483648
  %v1506 = vsel %vm1504, %v1498, %v1505
  %vm1507 = vcmp.eq.s32.totalorder %v1502, 2
  %v1508 = vxor.u32 %v1498, 2147483648
  %v1509 = vsel %vm1507, %v1508, %v1499
  %v1510 = vsel %vm1503, %v1506, %v1509
  %v1511 = vsel %vm1500, nan, %v1510
  %v1512 = vand.u32 2147483647, %v616
  %vm1513 = vcmp.le.f32.partialorder %v1512, 0.7853982
  %vm1514 = vcmp.lt.s32.totalorder %v616, 0
  %v1515 = vand.u32 %v616, 2139095040
  %v1516 = vshrl.u32 %v1515, 23
  %v1517 = vsub.s32 %v1516, 127
  %v1518 = vand.u32 2147483647, %v616
  %v1519 = vand.u32 %v1518, 8388607
  %v1520 = vor.u32 %v1519, 8388608
  %v1521 = vsub.s32 0, %v1520
  %v1522 = vadd.s32 %v1517, 1
  %vm1523 = vcmp.gt.s32.totalorder %v1522, 0
  %v1524 = vsel %vm1523, %v1522, 0
  %v1525 = vshrl.u32 %v1524, 5
  %v1526 = vand.u32 %v1524, 31
  %v1527 = vsub.s32 32, %v1526
  %v1528 = vshrl.u32 683565275, %v1527
  %v1529 = vshll.u32 683565275, %v1526
  %v1530 = vshrl.u32 2475754826, %v1527
  %v1531 = vor.u32 %v1529, %v1530
  %v1532 = vshll.u32 2475754826, %v1526
  %v1533 = vshrl.u32 2131351028, %v1527
  %v1534 = vor.u32 %v1532, %v1533
  %v1535 = vshll.u32 2131351028, %v1526
  %v1536 = vshrl.u32 2102212464, %v1527
  %v1537 = vor.u32 %v1535, %v1536
  %v1538 = vshll.u32 2102212464, %v1526
  %v1539 = vshrl.u32 920167782, %v1527
  %v1540 = vor.u32 %v1538, %v1539
  %v1541 = vshll.u32 920167782, %v1526
  %v1542 = vshrl.u32 1326507024, %v1527
  %v1543 = vor.u32 %v1541, %v1542
  %vm1544 = vcmp.lt.s32.totalorder %v1525, 1
  %vm1545 = vcmp.lt.s32.totalorder %v1525, 2
  %vm1546 = vcmp.lt.s32.totalorder %v1525, 3
  %vm1547 = vcmp.lt.s32.totalorder %v1525, 4
  %v1548 = vsel %vm1544, %v1528, %v1531
  %v1549 = vsel %vm1547, %v1537, 2102212464
  %v1550 = vsel %vm1546, %v1534, %v1549
  %v1551 = vsel %vm1545, %v1548, %v1550
  %v1552 = vsel %vm1544, %v1531, %v1534
  %v1553 = vsel %vm1547, %v1540, 920167782
  %v1554 = vsel %vm1546, %v1537, %v1553
  %v1555 = vsel %vm1545, %v1552, %v1554
  %v1556 = vsel %vm1544, %v1534, %v1537
  %v1557 = vsel %vm1547, %v1543, 1326507024
  %v1558 = vsel %vm1546, %v1540, %v1557
  %v1559 = vsel %vm1545, %v1556, %v1558
  %v1560 = vshll.u32 %v1520, 8
  %v1561 = vmul.u32.u64.compose %v1560, %v1559
  %v1562 = vextract.low.u32 %v1561
  %v1563 = vextract.high.u32 %v1561
  %v1564 = vmul.u32.u64.compose %v1560, %v1555
  %v1565 = vextract.low.u32 %v1564
  %v1566 = vextract.high.u32 %v1564
  %v1567 = vmul.u32 %v1560, %v1551
  %v1568 = vadd.s32 %v1563, %v1565
  %vm1569 = vc.u32 %v1563, %v1565
  %v1570 = vadd.s32 %v1566, 1
  %v1571 = vsel %vm1569, %v1570, %v1566
  %v1572 = vadd.s32 %v1567, %v1571
  %v1573 = vadd.s32 %v1572, 536870912
  %v1574 = vshrl.u32 %v1573, 30
  %v1575 = vshll.u32 %v1574, 30
  %v1576 = vsub.s32 %v1572, %v1575
  %vm1577 = vcmp.lt.s32.totalorder %v1576, 0
  %v1578 = vsub.s32 0, %v1576
  %v1579 = vsel %vm1577, %v1578, %v1576
  %v1580 = vclz %v1579
  %v1581 = vsub.s32 %v1580, 2
  %vm1582 = vcmp.gt.s32.totalorder 0, %v1581
  %v1583 = vsel %vm1582, 0, %v1581
  %v1584 = vsub.s32 32, %v1583
  %v1585 = vshll.u32 %v1576, %v1583
  %v1586 = vshrl.u32 %v1568, %v1584
  %v1587 = vor.u32 %v1585, %v1586
  %v1588 = vsub.s32 4294967266, %v1583
  %v1589 = vadd.s32 %v1588, 127
  %v1590 = vshll.u32 %v1589, 23
  %v1591 = vor.u32 4788187, %v1590
  %v1592 = vand.u32 2147483647, %v1591
  %v1594 = vcvt.s32.f32 %v1587
  %v1595 = vmul.f32 %v1594, %v1592
  %v1596 = vxor.u32 %v1595, 2147483648
  %v1597 = vsel %vm1514, %v1596, %v1595
  %v1598 = vsub.s32 4, %v1574
  %v1599 = vsel %vm1514, %v1598, %v1574
  %v1600 = vsel %vm1513, %v616, %v1597
  %v1601 = vsel %vm1513, 0, %v1599
  %v1602 = vcosq.f32.pop %v1600
  %v1603 = vsinq.f32.pop %v1600
  %vm1604 = vweird.f32 %v616
  %v1605 = vadd.s32 %v1601, 3
  %v1606 = vand.u32 %v1605, 3
  %vm1607 = vcmp.lt.s32.totalorder %v1606, 2
  %vm1608 = vcmp.eq.s32.totalorder %v1606, 0
  %v1609 = vxor.u32 %v1603, 2147483648
  %v1610 = vsel %vm1608, %v1602, %v1609
  %vm1611 = vcmp.eq.s32.totalorder %v1606, 2
  %v1612 = vxor.u32 %v1602, 2147483648
  %v1613 = vsel %vm1611, %v1612, %v1603
  %v1614 = vsel %vm1607, %v1610, %v1613
  %v1615 = vsel %vm1604, nan, %v1614
  %v1616 = vand.u32 2147483647, %v617
  %vm1617 = vcmp.le.f32.partialorder %v1616, 0.7853982
  %vm1618 = vcmp.lt.s32.totalorder %v617, 0
  %v1619 = vand.u32 %v617, 2139095040
  %v1620 = vshrl.u32 %v1619, 23
  %v1621 = vsub.s32 %v1620, 127
  %v1622 = vand.u32 2147483647, %v617
  %v1623 = vand.u32 %v1622, 8388607
  %v1624 = vor.u32 %v1623, 8388608
  %v1625 = vsub.s32 0, %v1624
  %v1626 = vadd.s32 %v1621, 1
  %vm1627 = vcmp.gt.s32.totalorder %v1626, 0
  %v1628 = vsel %vm1627, %v1626, 0
  %v1629 = vshrl.u32 %v1628, 5
  %v1630 = vand.u32 %v1628, 31
  %v1631 = vsub.s32 32, %v1630
  %v1632 = vshrl.u32 683565275, %v1631
  %v1633 = vshll.u32 683565275, %v1630
  %v1634 = vshrl.u32 2475754826, %v1631
  %v1635 = vor.u32 %v1633, %v1634
  %v1636 = vshll.u32 2475754826, %v1630
  %v1637 = vshrl.u32 2131351028, %v1631
  %v1638 = vor.u32 %v1636, %v1637
  %v1639 = vshll.u32 2131351028, %v1630
  %v1640 = vshrl.u32 2102212464, %v1631
  %v1641 = vor.u32 %v1639, %v1640
  %v1642 = vshll.u32 2102212464, %v1630
  %v1643 = vshrl.u32 920167782, %v1631
  %v1644 = vor.u32 %v1642, %v1643
  %v1645 = vshll.u32 920167782, %v1630
  %v1646 = vshrl.u32 1326507024, %v1631
  %v1647 = vor.u32 %v1645, %v1646
  %vm1648 = vcmp.lt.s32.totalorder %v1629, 1
  %vm1649 = vcmp.lt.s32.totalorder %v1629, 2
  %vm1650 = vcmp.lt.s32.totalorder %v1629, 3
  %vm1651 = vcmp.lt.s32.totalorder %v1629, 4
  %v1652 = vsel %vm1648, %v1632, %v1635
  %v1653 = vsel %vm1651, %v1641, 2102212464
  %v1654 = vsel %vm1650, %v1638, %v1653
  %v1655 = vsel %vm1649, %v1652, %v1654
  %v1656 = vsel %vm1648, %v1635, %v1638
  %v1657 = vsel %vm1651, %v1644, 920167782
  %v1658 = vsel %vm1650, %v1641, %v1657
  %v1659 = vsel %vm1649, %v1656, %v1658
  %v1660 = vsel %vm1648, %v1638, %v1641
  %v1661 = vsel %vm1651, %v1647, 1326507024
  %v1662 = vsel %vm1650, %v1644, %v1661
  %v1663 = vsel %vm1649, %v1660, %v1662
  %v1664 = vshll.u32 %v1624, 8
  %v1665 = vmul.u32.u64.compose %v1664, %v1663
  %v1666 = vextract.low.u32 %v1665
  %v1667 = vextract.high.u32 %v1665
  %v1668 = vmul.u32.u64.compose %v1664, %v1659
  %v1669 = vextract.low.u32 %v1668
  %v1670 = vextract.high.u32 %v1668
  %v1671 = vmul.u32 %v1664, %v1655
  %v1672 = vadd.s32 %v1667, %v1669
  %vm1673 = vc.u32 %v1667, %v1669
  %v1674 = vadd.s32 %v1670, 1
  %v1675 = vsel %vm1673, %v1674, %v1670
  %v1676 = vadd.s32 %v1671, %v1675
  %v1677 = vadd.s32 %v1676, 536870912
  %v1678 = vshrl.u32 %v1677, 30
  %v1679 = vshll.u32 %v1678, 30
  %v1680 = vsub.s32 %v1676, %v1679
  %vm1681 = vcmp.lt.s32.totalorder %v1680, 0
  %v1682 = vsub.s32 0, %v1680
  %v1683 = vsel %vm1681, %v1682, %v1680
  %v1684 = vclz %v1683
  %v1685 = vsub.s32 %v1684, 2
  %vm1686 = vcmp.gt.s32.totalorder 0, %v1685
  %v1687 = vsel %vm1686, 0, %v1685
  %v1688 = vsub.s32 32, %v1687
  %v1689 = vshll.u32 %v1680, %v1687
  %v1690 = vshrl.u32 %v1672, %v1688
  %v1691 = vor.u32 %v1689, %v1690
  %v1692 = vsub.s32 4294967266, %v1687
  %v1693 = vadd.s32 %v1692, 127
  %v1694 = vshll.u32 %v1693, 23
  %v1695 = vor.u32 4788187, %v1694
  %v1696 = vand.u32 2147483647, %v1695
  %v1698 = vcvt.s32.f32 %v1691
  %v1699 = vmul.f32 %v1698, %v1696
  %v1700 = vxor.u32 %v1699, 2147483648
  %v1701 = vsel %vm1618, %v1700, %v1699
  %v1702 = vsub.s32 4, %v1678
  %v1703 = vsel %vm1618, %v1702, %v1678
  %v1704 = vsel %vm1617, %v617, %v1701
  %v1705 = vsel %vm1617, 0, %v1703
  %v1706 = vcosq.f32.pop %v1704
  %v1707 = vsinq.f32.pop %v1704
  %vm1708 = vweird.f32 %v617
  %v1709 = vadd.s32 %v1705, 3
  %v1710 = vand.u32 %v1709, 3
  %vm1711 = vcmp.lt.s32.totalorder %v1710, 2
  %vm1712 = vcmp.eq.s32.totalorder %v1710, 0
  %v1713 = vxor.u32 %v1707, 2147483648
  %v1714 = vsel %vm1712, %v1706, %v1713
  %vm1715 = vcmp.eq.s32.totalorder %v1710, 2
  %v1716 = vxor.u32 %v1706, 2147483648
  %v1717 = vsel %vm1715, %v1716, %v1707
  %v1718 = vsel %vm1711, %v1714, %v1717
  %v1719 = vsel %vm1708, nan, %v1718
  %v1720 = vand.u32 2147483647, %v618
  %vm1721 = vcmp.le.f32.partialorder %v1720, 0.7853982
  %vm1722 = vcmp.lt.s32.totalorder %v618, 0
  %v1723 = vand.u32 %v618, 2139095040
  %v1724 = vshrl.u32 %v1723, 23
  %v1725 = vsub.s32 %v1724, 127
  %v1726 = vand.u32 2147483647, %v618
  %v1727 = vand.u32 %v1726, 8388607
  %v1728 = vor.u32 %v1727, 8388608
  %v1729 = vsub.s32 0, %v1728
  %v1730 = vadd.s32 %v1725, 1
  %vm1731 = vcmp.gt.s32.totalorder %v1730, 0
  %v1732 = vsel %vm1731, %v1730, 0
  %v1733 = vshrl.u32 %v1732, 5
  %v1734 = vand.u32 %v1732, 31
  %v1735 = vsub.s32 32, %v1734
  %v1736 = vshrl.u32 683565275, %v1735
  %v1737 = vshll.u32 683565275, %v1734
  %v1738 = vshrl.u32 2475754826, %v1735
  %v1739 = vor.u32 %v1737, %v1738
  %v1740 = vshll.u32 2475754826, %v1734
  %v1741 = vshrl.u32 2131351028, %v1735
  %v1742 = vor.u32 %v1740, %v1741
  %v1743 = vshll.u32 2131351028, %v1734
  %v1744 = vshrl.u32 2102212464, %v1735
  %v1745 = vor.u32 %v1743, %v1744
  %v1746 = vshll.u32 2102212464, %v1734
  %v1747 = vshrl.u32 920167782, %v1735
  %v1748 = vor.u32 %v1746, %v1747
  %v1749 = vshll.u32 920167782, %v1734
  %v1750 = vshrl.u32 1326507024, %v1735
  %v1751 = vor.u32 %v1749, %v1750
  %vm1752 = vcmp.lt.s32.totalorder %v1733, 1
  %vm1753 = vcmp.lt.s32.totalorder %v1733, 2
  %vm1754 = vcmp.lt.s32.totalorder %v1733, 3
  %vm1755 = vcmp.lt.s32.totalorder %v1733, 4
  %v1756 = vsel %vm1752, %v1736, %v1739
  %v1757 = vsel %vm1755, %v1745, 2102212464
  %v1758 = vsel %vm1754, %v1742, %v1757
  %v1759 = vsel %vm1753, %v1756, %v1758
  %v1760 = vsel %vm1752, %v1739, %v1742
  %v1761 = vsel %vm1755, %v1748, 920167782
  %v1762 = vsel %vm1754, %v1745, %v1761
  %v1763 = vsel %vm1753, %v1760, %v1762
  %v1764 = vsel %vm1752, %v1742, %v1745
  %v1765 = vsel %vm1755, %v1751, 1326507024
  %v1766 = vsel %vm1754, %v1748, %v1765
  %v1767 = vsel %vm1753, %v1764, %v1766
  %v1768 = vshll.u32 %v1728, 8
  %v1769 = vmul.u32.u64.compose %v1768, %v1767
  %v1770 = vextract.low.u32 %v1769
  %v1771 = vextract.high.u32 %v1769
  %v1772 = vmul.u32.u64.compose %v1768, %v1763
  %v1773 = vextract.low.u32 %v1772
  %v1774 = vextract.high.u32 %v1772
  %v1775 = vmul.u32 %v1768, %v1759
  %v1776 = vadd.s32 %v1771, %v1773
  %vm1777 = vc.u32 %v1771, %v1773
  %v1778 = vadd.s32 %v1774, 1
  %v1779 = vsel %vm1777, %v1778, %v1774
  %v1780 = vadd.s32 %v1775, %v1779
  %v1781 = vadd.s32 %v1780, 536870912
  %v1782 = vshrl.u32 %v1781, 30
  %v1783 = vshll.u32 %v1782, 30
  %v1784 = vsub.s32 %v1780, %v1783
  %vm1785 = vcmp.lt.s32.totalorder %v1784, 0
  %v1786 = vsub.s32 0, %v1784
  %v1787 = vsel %vm1785, %v1786, %v1784
  %v1788 = vclz %v1787
  %v1789 = vsub.s32 %v1788, 2
  %vm1790 = vcmp.gt.s32.totalorder 0, %v1789
  %v1791 = vsel %vm1790, 0, %v1789
  %v1792 = vsub.s32 32, %v1791
  %v1793 = vshll.u32 %v1784, %v1791
  %v1794 = vshrl.u32 %v1776, %v1792
  %v1795 = vor.u32 %v1793, %v1794
  %v1796 = vsub.s32 4294967266, %v1791
  %v1797 = vadd.s32 %v1796, 127
  %v1798 = vshll.u32 %v1797, 23
  %v1799 = vor.u32 4788187, %v1798
  %v1800 = vand.u32 2147483647, %v1799
  %v1802 = vcvt.s32.f32 %v1795
  %v1803 = vmul.f32 %v1802, %v1800
  %v1804 = vxor.u32 %v1803, 2147483648
  %v1805 = vsel %vm1722, %v1804, %v1803
  %v1806 = vsub.s32 4, %v1782
  %v1807 = vsel %vm1722, %v1806, %v1782
  %v1808 = vsel %vm1721, %v618, %v1805
  %v1809 = vsel %vm1721, 0, %v1807
  %v1810 = vcosq.f32.pop %v1808
  %v1811 = vsinq.f32.pop %v1808
  %vm1812 = vweird.f32 %v618
  %v1813 = vadd.s32 %v1809, 3
  %v1814 = vand.u32 %v1813, 3
  %vm1815 = vcmp.lt.s32.totalorder %v1814, 2
  %vm1816 = vcmp.eq.s32.totalorder %v1814, 0
  %v1817 = vxor.u32 %v1811, 2147483648
  %v1818 = vsel %vm1816, %v1810, %v1817
  %vm1819 = vcmp.eq.s32.totalorder %v1814, 2
  %v1820 = vxor.u32 %v1810, 2147483648
  %v1821 = vsel %vm1819, %v1820, %v1811
  %v1822 = vsel %vm1815, %v1818, %v1821
  %v1823 = vsel %vm1812, nan, %v1822
  %v1824 = vand.u32 2147483647, %v619
  %vm1825 = vcmp.le.f32.partialorder %v1824, 0.7853982
  %vm1826 = vcmp.lt.s32.totalorder %v619, 0
  %v1827 = vand.u32 %v619, 2139095040
  %v1828 = vshrl.u32 %v1827, 23
  %v1829 = vsub.s32 %v1828, 127
  %v1830 = vand.u32 2147483647, %v619
  %v1831 = vand.u32 %v1830, 8388607
  %v1832 = vor.u32 %v1831, 8388608
  %v1833 = vsub.s32 0, %v1832
  %v1834 = vadd.s32 %v1829, 1
  %vm1835 = vcmp.gt.s32.totalorder %v1834, 0
  %v1836 = vsel %vm1835, %v1834, 0
  %v1837 = vshrl.u32 %v1836, 5
  %v1838 = vand.u32 %v1836, 31
  %v1839 = vsub.s32 32, %v1838
  %v1840 = vshrl.u32 683565275, %v1839
  %v1841 = vshll.u32 683565275, %v1838
  %v1842 = vshrl.u32 2475754826, %v1839
  %v1843 = vor.u32 %v1841, %v1842
  %v1844 = vshll.u32 2475754826, %v1838
  %v1845 = vshrl.u32 2131351028, %v1839
  %v1846 = vor.u32 %v1844, %v1845
  %v1847 = vshll.u32 2131351028, %v1838
  %v1848 = vshrl.u32 2102212464, %v1839
  %v1849 = vor.u32 %v1847, %v1848
  %v1850 = vshll.u32 2102212464, %v1838
  %v1851 = vshrl.u32 920167782, %v1839
  %v1852 = vor.u32 %v1850, %v1851
  %v1853 = vshll.u32 920167782, %v1838
  %v1854 = vshrl.u32 1326507024, %v1839
  %v1855 = vor.u32 %v1853, %v1854
  %vm1856 = vcmp.lt.s32.totalorder %v1837, 1
  %vm1857 = vcmp.lt.s32.totalorder %v1837, 2
  %vm1858 = vcmp.lt.s32.totalorder %v1837, 3
  %vm1859 = vcmp.lt.s32.totalorder %v1837, 4
  %v1860 = vsel %vm1856, %v1840, %v1843
  %v1861 = vsel %vm1859, %v1849, 2102212464
  %v1862 = vsel %vm1858, %v1846, %v1861
  %v1863 = vsel %vm1857, %v1860, %v1862
  %v1864 = vsel %vm1856, %v1843, %v1846
  %v1865 = vsel %vm1859, %v1852, 920167782
  %v1866 = vsel %vm1858, %v1849, %v1865
  %v1867 = vsel %vm1857, %v1864, %v1866
  %v1868 = vsel %vm1856, %v1846, %v1849
  %v1869 = vsel %vm1859, %v1855, 1326507024
  %v1870 = vsel %vm1858, %v1852, %v1869
  %v1871 = vsel %vm1857, %v1868, %v1870
  %v1872 = vshll.u32 %v1832, 8
  %v1873 = vmul.u32.u64.compose %v1872, %v1871
  %v1874 = vextract.low.u32 %v1873
  %v1875 = vextract.high.u32 %v1873
  %v1876 = vmul.u32.u64.compose %v1872, %v1867
  %v1877 = vextract.low.u32 %v1876
  %v1878 = vextract.high.u32 %v1876
  %v1879 = vmul.u32 %v1872, %v1863
  %v1880 = vadd.s32 %v1875, %v1877
  %vm1881 = vc.u32 %v1875, %v1877
  %v1882 = vadd.s32 %v1878, 1
  %v1883 = vsel %vm1881, %v1882, %v1878
  %v1884 = vadd.s32 %v1879, %v1883
  %v1885 = vadd.s32 %v1884, 536870912
  %v1886 = vshrl.u32 %v1885, 30
  %v1887 = vshll.u32 %v1886, 30
  %v1888 = vsub.s32 %v1884, %v1887
  %vm1889 = vcmp.lt.s32.totalorder %v1888, 0
  %v1890 = vsub.s32 0, %v1888
  %v1891 = vsel %vm1889, %v1890, %v1888
  %v1892 = vclz %v1891
  %v1893 = vsub.s32 %v1892, 2
  %vm1894 = vcmp.gt.s32.totalorder 0, %v1893
  %v1895 = vsel %vm1894, 0, %v1893
  %v1896 = vsub.s32 32, %v1895
  %v1897 = vshll.u32 %v1888, %v1895
  %v1898 = vshrl.u32 %v1880, %v1896
  %v1899 = vor.u32 %v1897, %v1898
  %v1900 = vsub.s32 4294967266, %v1895
  %v1901 = vadd.s32 %v1900, 127
  %v1902 = vshll.u32 %v1901, 23
  %v1903 = vor.u32 4788187, %v1902
  %v1904 = vand.u32 2147483647, %v1903
  %v1906 = vcvt.s32.f32 %v1899
  %v1907 = vmul.f32 %v1906, %v1904
  %v1908 = vxor.u32 %v1907, 2147483648
  %v1909 = vsel %vm1826, %v1908, %v1907
  %v1910 = vsub.s32 4, %v1886
  %v1911 = vsel %vm1826, %v1910, %v1886
  %v1912 = vsel %vm1825, %v619, %v1909
  %v1913 = vsel %vm1825, 0, %v1911
  %v1914 = vcosq.f32.pop %v1912
  %v1915 = vsinq.f32.pop %v1912
  %vm1916 = vweird.f32 %v619
  %v1917 = vadd.s32 %v1913, 3
  %v1918 = vand.u32 %v1917, 3
  %vm1919 = vcmp.lt.s32.totalorder %v1918, 2
  %vm1920 = vcmp.eq.s32.totalorder %v1918, 0
  %v1921 = vxor.u32 %v1915, 2147483648
  %v1922 = vsel %vm1920, %v1914, %v1921
  %vm1923 = vcmp.eq.s32.totalorder %v1918, 2
  %v1924 = vxor.u32 %v1914, 2147483648
  %v1925 = vsel %vm1923, %v1924, %v1915
  %v1926 = vsel %vm1919, %v1922, %v1925
  %v1927 = vsel %vm1916, nan, %v1926
  %v1928 = vand.u32 2147483647, %v620
  %vm1929 = vcmp.le.f32.partialorder %v1928, 0.7853982
  %vm1930 = vcmp.lt.s32.totalorder %v620, 0
  %v1931 = vand.u32 %v620, 2139095040
  %v1932 = vshrl.u32 %v1931, 23
  %v1933 = vsub.s32 %v1932, 127
  %v1934 = vand.u32 2147483647, %v620
  %v1935 = vand.u32 %v1934, 8388607
  %v1936 = vor.u32 %v1935, 8388608
  %v1937 = vsub.s32 0, %v1936
  %v1938 = vadd.s32 %v1933, 1
  %vm1939 = vcmp.gt.s32.totalorder %v1938, 0
  %v1940 = vsel %vm1939, %v1938, 0
  %v1941 = vshrl.u32 %v1940, 5
  %v1942 = vand.u32 %v1940, 31
  %v1943 = vsub.s32 32, %v1942
  %v1944 = vshrl.u32 683565275, %v1943
  %v1945 = vshll.u32 683565275, %v1942
  %v1946 = vshrl.u32 2475754826, %v1943
  %v1947 = vor.u32 %v1945, %v1946
  %v1948 = vshll.u32 2475754826, %v1942
  %v1949 = vshrl.u32 2131351028, %v1943
  %v1950 = vor.u32 %v1948, %v1949
  %v1951 = vshll.u32 2131351028, %v1942
  %v1952 = vshrl.u32 2102212464, %v1943
  %v1953 = vor.u32 %v1951, %v1952
  %v1954 = vshll.u32 2102212464, %v1942
  %v1955 = vshrl.u32 920167782, %v1943
  %v1956 = vor.u32 %v1954, %v1955
  %v1957 = vshll.u32 920167782, %v1942
  %v1958 = vshrl.u32 1326507024, %v1943
  %v1959 = vor.u32 %v1957, %v1958
  %vm1960 = vcmp.lt.s32.totalorder %v1941, 1
  %vm1961 = vcmp.lt.s32.totalorder %v1941, 2
  %vm1962 = vcmp.lt.s32.totalorder %v1941, 3
  %vm1963 = vcmp.lt.s32.totalorder %v1941, 4
  %v1964 = vsel %vm1960, %v1944, %v1947
  %v1965 = vsel %vm1963, %v1953, 2102212464
  %v1966 = vsel %vm1962, %v1950, %v1965
  %v1967 = vsel %vm1961, %v1964, %v1966
  %v1968 = vsel %vm1960, %v1947, %v1950
  %v1969 = vsel %vm1963, %v1956, 920167782
  %v1970 = vsel %vm1962, %v1953, %v1969
  %v1971 = vsel %vm1961, %v1968, %v1970
  %v1972 = vsel %vm1960, %v1950, %v1953
  %v1973 = vsel %vm1963, %v1959, 1326507024
  %v1974 = vsel %vm1962, %v1956, %v1973
  %v1975 = vsel %vm1961, %v1972, %v1974
  %v1976 = vshll.u32 %v1936, 8
  %v1977 = vmul.u32.u64.compose %v1976, %v1975
  %v1978 = vextract.low.u32 %v1977
  %v1979 = vextract.high.u32 %v1977
  %v1980 = vmul.u32.u64.compose %v1976, %v1971
  %v1981 = vextract.low.u32 %v1980
  %v1982 = vextract.high.u32 %v1980
  %v1983 = vmul.u32 %v1976, %v1967
  %v1984 = vadd.s32 %v1979, %v1981
  %vm1985 = vc.u32 %v1979, %v1981
  %v1986 = vadd.s32 %v1982, 1
  %v1987 = vsel %vm1985, %v1986, %v1982
  %v1988 = vadd.s32 %v1983, %v1987
  %v1989 = vadd.s32 %v1988, 536870912
  %v1990 = vshrl.u32 %v1989, 30
  %v1991 = vshll.u32 %v1990, 30
  %v1992 = vsub.s32 %v1988, %v1991
  %vm1993 = vcmp.lt.s32.totalorder %v1992, 0
  %v1994 = vsub.s32 0, %v1992
  %v1995 = vsel %vm1993, %v1994, %v1992
  %v1996 = vclz %v1995
  %v1997 = vsub.s32 %v1996, 2
  %vm1998 = vcmp.gt.s32.totalorder 0, %v1997
  %v1999 = vsel %vm1998, 0, %v1997
  %v2000 = vsub.s32 32, %v1999
  %v2001 = vshll.u32 %v1992, %v1999
  %v2002 = vshrl.u32 %v1984, %v2000
  %v2003 = vor.u32 %v2001, %v2002
  %v2004 = vsub.s32 4294967266, %v1999
  %v2005 = vadd.s32 %v2004, 127
  %v2006 = vshll.u32 %v2005, 23
  %v2007 = vor.u32 4788187, %v2006
  %v2008 = vand.u32 2147483647, %v2007
  %v2010 = vcvt.s32.f32 %v2003
  %v2011 = vmul.f32 %v2010, %v2008
  %v2012 = vxor.u32 %v2011, 2147483648
  %v2013 = vsel %vm1930, %v2012, %v2011
  %v2014 = vsub.s32 4, %v1990
  %v2015 = vsel %vm1930, %v2014, %v1990
  %v2016 = vsel %vm1929, %v620, %v2013
  %v2017 = vsel %vm1929, 0, %v2015
  %v2018 = vcosq.f32.pop %v2016
  %v2019 = vsinq.f32.pop %v2016
  %vm2020 = vweird.f32 %v620
  %v2021 = vadd.s32 %v2017, 3
  %v2022 = vand.u32 %v2021, 3
  %vm2023 = vcmp.lt.s32.totalorder %v2022, 2
  %vm2024 = vcmp.eq.s32.totalorder %v2022, 0
  %v2025 = vxor.u32 %v2019, 2147483648
  %v2026 = vsel %vm2024, %v2018, %v2025
  %vm2027 = vcmp.eq.s32.totalorder %v2022, 2
  %v2028 = vxor.u32 %v2018, 2147483648
  %v2029 = vsel %vm2027, %v2028, %v2019
  %v2030 = vsel %vm2023, %v2026, %v2029
  %v2031 = vsel %vm2020, nan, %v2030
  %v2032 = vand.u32 2147483647, %v621
  %vm2033 = vcmp.le.f32.partialorder %v2032, 0.7853982
  %vm2034 = vcmp.lt.s32.totalorder %v621, 0
  %v2035 = vand.u32 %v621, 2139095040
  %v2036 = vshrl.u32 %v2035, 23
  %v2037 = vsub.s32 %v2036, 127
  %v2038 = vand.u32 2147483647, %v621
  %v2039 = vand.u32 %v2038, 8388607
  %v2040 = vor.u32 %v2039, 8388608
  %v2041 = vsub.s32 0, %v2040
  %v2042 = vadd.s32 %v2037, 1
  %vm2043 = vcmp.gt.s32.totalorder %v2042, 0
  %v2044 = vsel %vm2043, %v2042, 0
  %v2045 = vshrl.u32 %v2044, 5
  %v2046 = vand.u32 %v2044, 31
  %v2047 = vsub.s32 32, %v2046
  %v2048 = vshrl.u32 683565275, %v2047
  %v2049 = vshll.u32 683565275, %v2046
  %v2050 = vshrl.u32 2475754826, %v2047
  %v2051 = vor.u32 %v2049, %v2050
  %v2052 = vshll.u32 2475754826, %v2046
  %v2053 = vshrl.u32 2131351028, %v2047
  %v2054 = vor.u32 %v2052, %v2053
  %v2055 = vshll.u32 2131351028, %v2046
  %v2056 = vshrl.u32 2102212464, %v2047
  %v2057 = vor.u32 %v2055, %v2056
  %v2058 = vshll.u32 2102212464, %v2046
  %v2059 = vshrl.u32 920167782, %v2047
  %v2060 = vor.u32 %v2058, %v2059
  %v2061 = vshll.u32 920167782, %v2046
  %v2062 = vshrl.u32 1326507024, %v2047
  %v2063 = vor.u32 %v2061, %v2062
  %vm2064 = vcmp.lt.s32.totalorder %v2045, 1
  %vm2065 = vcmp.lt.s32.totalorder %v2045, 2
  %vm2066 = vcmp.lt.s32.totalorder %v2045, 3
  %vm2067 = vcmp.lt.s32.totalorder %v2045, 4
  %v2068 = vsel %vm2064, %v2048, %v2051
  %v2069 = vsel %vm2067, %v2057, 2102212464
  %v2070 = vsel %vm2066, %v2054, %v2069
  %v2071 = vsel %vm2065, %v2068, %v2070
  %v2072 = vsel %vm2064, %v2051, %v2054
  %v2073 = vsel %vm2067, %v2060, 920167782
  %v2074 = vsel %vm2066, %v2057, %v2073
  %v2075 = vsel %vm2065, %v2072, %v2074
  %v2076 = vsel %vm2064, %v2054, %v2057
  %v2077 = vsel %vm2067, %v2063, 1326507024
  %v2078 = vsel %vm2066, %v2060, %v2077
  %v2079 = vsel %vm2065, %v2076, %v2078
  %v2080 = vshll.u32 %v2040, 8
  %v2081 = vmul.u32.u64.compose %v2080, %v2079
  %v2082 = vextract.low.u32 %v2081
  %v2083 = vextract.high.u32 %v2081
  %v2084 = vmul.u32.u64.compose %v2080, %v2075
  %v2085 = vextract.low.u32 %v2084
  %v2086 = vextract.high.u32 %v2084
  %v2087 = vmul.u32 %v2080, %v2071
  %v2088 = vadd.s32 %v2083, %v2085
  %vm2089 = vc.u32 %v2083, %v2085
  %v2090 = vadd.s32 %v2086, 1
  %v2091 = vsel %vm2089, %v2090, %v2086
  %v2092 = vadd.s32 %v2087, %v2091
  %v2093 = vadd.s32 %v2092, 536870912
  %v2094 = vshrl.u32 %v2093, 30
  %v2095 = vshll.u32 %v2094, 30
  %v2096 = vsub.s32 %v2092, %v2095
  %vm2097 = vcmp.lt.s32.totalorder %v2096, 0
  %v2098 = vsub.s32 0, %v2096
  %v2099 = vsel %vm2097, %v2098, %v2096
  %v2100 = vclz %v2099
  %v2101 = vsub.s32 %v2100, 2
  %vm2102 = vcmp.gt.s32.totalorder 0, %v2101
  %v2103 = vsel %vm2102, 0, %v2101
  %v2104 = vsub.s32 32, %v2103
  %v2105 = vshll.u32 %v2096, %v2103
  %v2106 = vshrl.u32 %v2088, %v2104
  %v2107 = vor.u32 %v2105, %v2106
  %v2108 = vsub.s32 4294967266, %v2103
  %v2109 = vadd.s32 %v2108, 127
  %v2110 = vshll.u32 %v2109, 23
  %v2111 = vor.u32 4788187, %v2110
  %v2112 = vand.u32 2147483647, %v2111
  %v2114 = vcvt.s32.f32 %v2107
  %v2115 = vmul.f32 %v2114, %v2112
  %v2116 = vxor.u32 %v2115, 2147483648
  %v2117 = vsel %vm2034, %v2116, %v2115
  %v2118 = vsub.s32 4, %v2094
  %v2119 = vsel %vm2034, %v2118, %v2094
  %v2120 = vsel %vm2033, %v621, %v2117
  %v2121 = vsel %vm2033, 0, %v2119
  %v2122 = vcosq.f32.pop %v2120
  %v2123 = vsinq.f32.pop %v2120
  %vm2124 = vweird.f32 %v621
  %v2125 = vadd.s32 %v2121, 3
  %v2126 = vand.u32 %v2125, 3
  %vm2127 = vcmp.lt.s32.totalorder %v2126, 2
  %vm2128 = vcmp.eq.s32.totalorder %v2126, 0
  %v2129 = vxor.u32 %v2123, 2147483648
  %v2130 = vsel %vm2128, %v2122, %v2129
  %vm2131 = vcmp.eq.s32.totalorder %v2126, 2
  %v2132 = vxor.u32 %v2122, 2147483648
  %v2133 = vsel %vm2131, %v2132, %v2123
  %v2134 = vsel %vm2127, %v2130, %v2133
  %v2135 = vsel %vm2124, nan, %v2134
  %v2136 = vand.u32 2147483647, %v622
  %vm2137 = vcmp.le.f32.partialorder %v2136, 0.7853982
  %vm2138 = vcmp.lt.s32.totalorder %v622, 0
  %v2139 = vand.u32 %v622, 2139095040
  %v2140 = vshrl.u32 %v2139, 23
  %v2141 = vsub.s32 %v2140, 127
  %v2142 = vand.u32 2147483647, %v622
  %v2143 = vand.u32 %v2142, 8388607
  %v2144 = vor.u32 %v2143, 8388608
  %v2145 = vsub.s32 0, %v2144
  %v2146 = vadd.s32 %v2141, 1
  %vm2147 = vcmp.gt.s32.totalorder %v2146, 0
  %v2148 = vsel %vm2147, %v2146, 0
  %v2149 = vshrl.u32 %v2148, 5
  %v2150 = vand.u32 %v2148, 31
  %v2151 = vsub.s32 32, %v2150
  %v2152 = vshrl.u32 683565275, %v2151
  %v2153 = vshll.u32 683565275, %v2150
  %v2154 = vshrl.u32 2475754826, %v2151
  %v2155 = vor.u32 %v2153, %v2154
  %v2156 = vshll.u32 2475754826, %v2150
  %v2157 = vshrl.u32 2131351028, %v2151
  %v2158 = vor.u32 %v2156, %v2157
  %v2159 = vshll.u32 2131351028, %v2150
  %v2160 = vshrl.u32 2102212464, %v2151
  %v2161 = vor.u32 %v2159, %v2160
  %v2162 = vshll.u32 2102212464, %v2150
  %v2163 = vshrl.u32 920167782, %v2151
  %v2164 = vor.u32 %v2162, %v2163
  %v2165 = vshll.u32 920167782, %v2150
  %v2166 = vshrl.u32 1326507024, %v2151
  %v2167 = vor.u32 %v2165, %v2166
  %vm2168 = vcmp.lt.s32.totalorder %v2149, 1
  %vm2169 = vcmp.lt.s32.totalorder %v2149, 2
  %vm2170 = vcmp.lt.s32.totalorder %v2149, 3
  %vm2171 = vcmp.lt.s32.totalorder %v2149, 4
  %v2172 = vsel %vm2168, %v2152, %v2155
  %v2173 = vsel %vm2171, %v2161, 2102212464
  %v2174 = vsel %vm2170, %v2158, %v2173
  %v2175 = vsel %vm2169, %v2172, %v2174
  %v2176 = vsel %vm2168, %v2155, %v2158
  %v2177 = vsel %vm2171, %v2164, 920167782
  %v2178 = vsel %vm2170, %v2161, %v2177
  %v2179 = vsel %vm2169, %v2176, %v2178
  %v2180 = vsel %vm2168, %v2158, %v2161
  %v2181 = vsel %vm2171, %v2167, 1326507024
  %v2182 = vsel %vm2170, %v2164, %v2181
  %v2183 = vsel %vm2169, %v2180, %v2182
  %v2184 = vshll.u32 %v2144, 8
  %v2185 = vmul.u32.u64.compose %v2184, %v2183
  %v2186 = vextract.low.u32 %v2185
  %v2187 = vextract.high.u32 %v2185
  %v2188 = vmul.u32.u64.compose %v2184, %v2179
  %v2189 = vextract.low.u32 %v2188
  %v2190 = vextract.high.u32 %v2188
  %v2191 = vmul.u32 %v2184, %v2175
  %v2192 = vadd.s32 %v2187, %v2189
  %vm2193 = vc.u32 %v2187, %v2189
  %v2194 = vadd.s32 %v2190, 1
  %v2195 = vsel %vm2193, %v2194, %v2190
  %v2196 = vadd.s32 %v2191, %v2195
  %v2197 = vadd.s32 %v2196, 536870912
  %v2198 = vshrl.u32 %v2197, 30
  %v2199 = vshll.u32 %v2198, 30
  %v2200 = vsub.s32 %v2196, %v2199
  %vm2201 = vcmp.lt.s32.totalorder %v2200, 0
  %v2202 = vsub.s32 0, %v2200
  %v2203 = vsel %vm2201, %v2202, %v2200
  %v2204 = vclz %v2203
  %v2205 = vsub.s32 %v2204, 2
  %vm2206 = vcmp.gt.s32.totalorder 0, %v2205
  %v2207 = vsel %vm2206, 0, %v2205
  %v2208 = vsub.s32 32, %v2207
  %v2209 = vshll.u32 %v2200, %v2207
  %v2210 = vshrl.u32 %v2192, %v2208
  %v2211 = vor.u32 %v2209, %v2210
  %v2212 = vsub.s32 4294967266, %v2207
  %v2213 = vadd.s32 %v2212, 127
  %v2214 = vshll.u32 %v2213, 23
  %v2215 = vor.u32 4788187, %v2214
  %v2216 = vand.u32 2147483647, %v2215
  %v2218 = vcvt.s32.f32 %v2211
  %v2219 = vmul.f32 %v2218, %v2216
  %v2220 = vxor.u32 %v2219, 2147483648
  %v2221 = vsel %vm2138, %v2220, %v2219
  %v2222 = vsub.s32 4, %v2198
  %v2223 = vsel %vm2138, %v2222, %v2198
  %v2224 = vsel %vm2137, %v622, %v2221
  %v2225 = vsel %vm2137, 0, %v2223
  %v2226 = vcosq.f32.pop %v2224
  %v2227 = vsinq.f32.pop %v2224
  %vm2228 = vweird.f32 %v622
  %v2229 = vadd.s32 %v2225, 3
  %v2230 = vand.u32 %v2229, 3
  %vm2231 = vcmp.lt.s32.totalorder %v2230, 2
  %vm2232 = vcmp.eq.s32.totalorder %v2230, 0
  %v2233 = vxor.u32 %v2227, 2147483648
  %v2234 = vsel %vm2232, %v2226, %v2233
  %vm2235 = vcmp.eq.s32.totalorder %v2230, 2
  %v2236 = vxor.u32 %v2226, 2147483648
  %v2237 = vsel %vm2235, %v2236, %v2227
  %v2238 = vsel %vm2231, %v2234, %v2237
  %v2239 = vsel %vm2228, nan, %v2238
  %v2240 = vand.u32 2147483647, %v623
  %vm2241 = vcmp.le.f32.partialorder %v2240, 0.7853982
  %vm2242 = vcmp.lt.s32.totalorder %v623, 0
  %v2243 = vand.u32 %v623, 2139095040
  %v2244 = vshrl.u32 %v2243, 23
  %v2245 = vsub.s32 %v2244, 127
  %v2246 = vand.u32 2147483647, %v623
  %v2247 = vand.u32 %v2246, 8388607
  %v2248 = vor.u32 %v2247, 8388608
  %v2249 = vsub.s32 0, %v2248
  %v2250 = vadd.s32 %v2245, 1
  %vm2251 = vcmp.gt.s32.totalorder %v2250, 0
  %v2252 = vsel %vm2251, %v2250, 0
  %v2253 = vshrl.u32 %v2252, 5
  %v2254 = vand.u32 %v2252, 31
  %v2255 = vsub.s32 32, %v2254
  %v2256 = vshrl.u32 683565275, %v2255
  %v2257 = vshll.u32 683565275, %v2254
  %v2258 = vshrl.u32 2475754826, %v2255
  %v2259 = vor.u32 %v2257, %v2258
  %v2260 = vshll.u32 2475754826, %v2254
  %v2261 = vshrl.u32 2131351028, %v2255
  %v2262 = vor.u32 %v2260, %v2261
  %v2263 = vshll.u32 2131351028, %v2254
  %v2264 = vshrl.u32 2102212464, %v2255
  %v2265 = vor.u32 %v2263, %v2264
  %v2266 = vshll.u32 2102212464, %v2254
  %v2267 = vshrl.u32 920167782, %v2255
  %v2268 = vor.u32 %v2266, %v2267
  %v2269 = vshll.u32 920167782, %v2254
  %v2270 = vshrl.u32 1326507024, %v2255
  %v2271 = vor.u32 %v2269, %v2270
  %vm2272 = vcmp.lt.s32.totalorder %v2253, 1
  %vm2273 = vcmp.lt.s32.totalorder %v2253, 2
  %vm2274 = vcmp.lt.s32.totalorder %v2253, 3
  %vm2275 = vcmp.lt.s32.totalorder %v2253, 4
  %v2276 = vsel %vm2272, %v2256, %v2259
  %v2277 = vsel %vm2275, %v2265, 2102212464
  %v2278 = vsel %vm2274, %v2262, %v2277
  %v2279 = vsel %vm2273, %v2276, %v2278
  %v2280 = vsel %vm2272, %v2259, %v2262
  %v2281 = vsel %vm2275, %v2268, 920167782
  %v2282 = vsel %vm2274, %v2265, %v2281
  %v2283 = vsel %vm2273, %v2280, %v2282
  %v2284 = vsel %vm2272, %v2262, %v2265
  %v2285 = vsel %vm2275, %v2271, 1326507024
  %v2286 = vsel %vm2274, %v2268, %v2285
  %v2287 = vsel %vm2273, %v2284, %v2286
  %v2288 = vshll.u32 %v2248, 8
  %v2289 = vmul.u32.u64.compose %v2288, %v2287
  %v2290 = vextract.low.u32 %v2289
  %v2291 = vextract.high.u32 %v2289
  %v2292 = vmul.u32.u64.compose %v2288, %v2283
  %v2293 = vextract.low.u32 %v2292
  %v2294 = vextract.high.u32 %v2292
  %v2295 = vmul.u32 %v2288, %v2279
  %v2296 = vadd.s32 %v2291, %v2293
  %vm2297 = vc.u32 %v2291, %v2293
  %v2298 = vadd.s32 %v2294, 1
  %v2299 = vsel %vm2297, %v2298, %v2294
  %v2300 = vadd.s32 %v2295, %v2299
  %v2301 = vadd.s32 %v2300, 536870912
  %v2302 = vshrl.u32 %v2301, 30
  %v2303 = vshll.u32 %v2302, 30
  %v2304 = vsub.s32 %v2300, %v2303
  %vm2305 = vcmp.lt.s32.totalorder %v2304, 0
  %v2306 = vsub.s32 0, %v2304
  %v2307 = vsel %vm2305, %v2306, %v2304
  %v2308 = vclz %v2307
  %v2309 = vsub.s32 %v2308, 2
  %vm2310 = vcmp.gt.s32.totalorder 0, %v2309
  %v2311 = vsel %vm2310, 0, %v2309
  %v2312 = vsub.s32 32, %v2311
  %v2313 = vshll.u32 %v2304, %v2311
  %v2314 = vshrl.u32 %v2296, %v2312
  %v2315 = vor.u32 %v2313, %v2314
  %v2316 = vsub.s32 4294967266, %v2311
  %v2317 = vadd.s32 %v2316, 127
  %v2318 = vshll.u32 %v2317, 23
  %v2319 = vor.u32 4788187, %v2318
  %v2320 = vand.u32 2147483647, %v2319
  %v2322 = vcvt.s32.f32 %v2315
  %v2323 = vmul.f32 %v2322, %v2320
  %v2324 = vxor.u32 %v2323, 2147483648
  %v2325 = vsel %vm2242, %v2324, %v2323
  %v2326 = vsub.s32 4, %v2302
  %v2327 = vsel %vm2242, %v2326, %v2302
  %v2328 = vsel %vm2241, %v623, %v2325
  %v2329 = vsel %vm2241, 0, %v2327
  %v2330 = vcosq.f32.pop %v2328
  %v2331 = vsinq.f32.pop %v2328
  %vm2332 = vweird.f32 %v623
  %v2333 = vadd.s32 %v2329, 3
  %v2334 = vand.u32 %v2333, 3
  %vm2335 = vcmp.lt.s32.totalorder %v2334, 2
  %vm2336 = vcmp.eq.s32.totalorder %v2334, 0
  %v2337 = vxor.u32 %v2331, 2147483648
  %v2338 = vsel %vm2336, %v2330, %v2337
  %vm2339 = vcmp.eq.s32.totalorder %v2334, 2
  %v2340 = vxor.u32 %v2330, 2147483648
  %v2341 = vsel %vm2339, %v2340, %v2331
  %v2342 = vsel %vm2335, %v2338, %v2341
  %v2343 = vsel %vm2332, nan, %v2342
  %v2344 = vand.u32 2147483647, %v624
  %vm2345 = vcmp.le.f32.partialorder %v2344, 0.7853982
  %vm2346 = vcmp.lt.s32.totalorder %v624, 0
  %v2347 = vand.u32 %v624, 2139095040
  %v2348 = vshrl.u32 %v2347, 23
  %v2349 = vsub.s32 %v2348, 127
  %v2350 = vand.u32 2147483647, %v624
  %v2351 = vand.u32 %v2350, 8388607
  %v2352 = vor.u32 %v2351, 8388608
  %v2353 = vsub.s32 0, %v2352
  %v2354 = vadd.s32 %v2349, 1
  %vm2355 = vcmp.gt.s32.totalorder %v2354, 0
  %v2356 = vsel %vm2355, %v2354, 0
  %v2357 = vshrl.u32 %v2356, 5
  %v2358 = vand.u32 %v2356, 31
  %v2359 = vsub.s32 32, %v2358
  %v2360 = vshrl.u32 683565275, %v2359
  %v2361 = vshll.u32 683565275, %v2358
  %v2362 = vshrl.u32 2475754826, %v2359
  %v2363 = vor.u32 %v2361, %v2362
  %v2364 = vshll.u32 2475754826, %v2358
  %v2365 = vshrl.u32 2131351028, %v2359
  %v2366 = vor.u32 %v2364, %v2365
  %v2367 = vshll.u32 2131351028, %v2358
  %v2368 = vshrl.u32 2102212464, %v2359
  %v2369 = vor.u32 %v2367, %v2368
  %v2370 = vshll.u32 2102212464, %v2358
  %v2371 = vshrl.u32 920167782, %v2359
  %v2372 = vor.u32 %v2370, %v2371
  %v2373 = vshll.u32 920167782, %v2358
  %v2374 = vshrl.u32 1326507024, %v2359
  %v2375 = vor.u32 %v2373, %v2374
  %vm2376 = vcmp.lt.s32.totalorder %v2357, 1
  %vm2377 = vcmp.lt.s32.totalorder %v2357, 2
  %vm2378 = vcmp.lt.s32.totalorder %v2357, 3
  %vm2379 = vcmp.lt.s32.totalorder %v2357, 4
  %v2380 = vsel %vm2376, %v2360, %v2363
  %v2381 = vsel %vm2379, %v2369, 2102212464
  %v2382 = vsel %vm2378, %v2366, %v2381
  %v2383 = vsel %vm2377, %v2380, %v2382
  %v2384 = vsel %vm2376, %v2363, %v2366
  %v2385 = vsel %vm2379, %v2372, 920167782
  %v2386 = vsel %vm2378, %v2369, %v2385
  %v2387 = vsel %vm2377, %v2384, %v2386
  %v2388 = vsel %vm2376, %v2366, %v2369
  %v2389 = vsel %vm2379, %v2375, 1326507024
  %v2390 = vsel %vm2378, %v2372, %v2389
  %v2391 = vsel %vm2377, %v2388, %v2390
  %v2392 = vshll.u32 %v2352, 8
  %v2393 = vmul.u32.u64.compose %v2392, %v2391
  %v2394 = vextract.low.u32 %v2393
  %v2395 = vextract.high.u32 %v2393
  %v2396 = vmul.u32.u64.compose %v2392, %v2387
  %v2397 = vextract.low.u32 %v2396
  %v2398 = vextract.high.u32 %v2396
  %v2399 = vmul.u32 %v2392, %v2383
  %v2400 = vadd.s32 %v2395, %v2397
  %vm2401 = vc.u32 %v2395, %v2397
  %v2402 = vadd.s32 %v2398, 1
  %v2403 = vsel %vm2401, %v2402, %v2398
  %v2404 = vadd.s32 %v2399, %v2403
  %v2405 = vadd.s32 %v2404, 536870912
  %v2406 = vshrl.u32 %v2405, 30
  %v2407 = vshll.u32 %v2406, 30
  %v2408 = vsub.s32 %v2404, %v2407
  %vm2409 = vcmp.lt.s32.totalorder %v2408, 0
  %v2410 = vsub.s32 0, %v2408
  %v2411 = vsel %vm2409, %v2410, %v2408
  %v2412 = vclz %v2411
  %v2413 = vsub.s32 %v2412, 2
  %vm2414 = vcmp.gt.s32.totalorder 0, %v2413
  %v2415 = vsel %vm2414, 0, %v2413
  %v2416 = vsub.s32 32, %v2415
  %v2417 = vshll.u32 %v2408, %v2415
  %v2418 = vshrl.u32 %v2400, %v2416
  %v2419 = vor.u32 %v2417, %v2418
  %v2420 = vsub.s32 4294967266, %v2415
  %v2421 = vadd.s32 %v2420, 127
  %v2422 = vshll.u32 %v2421, 23
  %v2423 = vor.u32 4788187, %v2422
  %v2424 = vand.u32 2147483647, %v2423
  %v2426 = vcvt.s32.f32 %v2419
  %v2427 = vmul.f32 %v2426, %v2424
  %v2428 = vxor.u32 %v2427, 2147483648
  %v2429 = vsel %vm2346, %v2428, %v2427
  %v2430 = vsub.s32 4, %v2406
  %v2431 = vsel %vm2346, %v2430, %v2406
  %v2432 = vsel %vm2345, %v624, %v2429
  %v2433 = vsel %vm2345, 0, %v2431
  %v2434 = vcosq.f32.pop %v2432
  %v2435 = vsinq.f32.pop %v2432
  %vm2436 = vweird.f32 %v624
  %v2437 = vadd.s32 %v2433, 3
  %v2438 = vand.u32 %v2437, 3
  %vm2439 = vcmp.lt.s32.totalorder %v2438, 2
  %vm2440 = vcmp.eq.s32.totalorder %v2438, 0
  %v2441 = vxor.u32 %v2435, 2147483648
  %v2442 = vsel %vm2440, %v2434, %v2441
  %vm2443 = vcmp.eq.s32.totalorder %v2438, 2
  %v2444 = vxor.u32 %v2434, 2147483648
  %v2445 = vsel %vm2443, %v2444, %v2435
  %v2446 = vsel %vm2439, %v2442, %v2445
  %v2447 = vsel %vm2436, nan, %v2446
  %v2448 = vand.u32 2147483647, %v625
  %vm2449 = vcmp.le.f32.partialorder %v2448, 0.7853982
  %vm2450 = vcmp.lt.s32.totalorder %v625, 0
  %v2451 = vand.u32 %v625, 2139095040
  %v2452 = vshrl.u32 %v2451, 23
  %v2453 = vsub.s32 %v2452, 127
  %v2454 = vand.u32 2147483647, %v625
  %v2455 = vand.u32 %v2454, 8388607
  %v2456 = vor.u32 %v2455, 8388608
  %v2457 = vsub.s32 0, %v2456
  %v2458 = vadd.s32 %v2453, 1
  %vm2459 = vcmp.gt.s32.totalorder %v2458, 0
  %v2460 = vsel %vm2459, %v2458, 0
  %v2461 = vshrl.u32 %v2460, 5
  %v2462 = vand.u32 %v2460, 31
  %v2463 = vsub.s32 32, %v2462
  %v2464 = vshrl.u32 683565275, %v2463
  %v2465 = vshll.u32 683565275, %v2462
  %v2466 = vshrl.u32 2475754826, %v2463
  %v2467 = vor.u32 %v2465, %v2466
  %v2468 = vshll.u32 2475754826, %v2462
  %v2469 = vshrl.u32 2131351028, %v2463
  %v2470 = vor.u32 %v2468, %v2469
  %v2471 = vshll.u32 2131351028, %v2462
  %v2472 = vshrl.u32 2102212464, %v2463
  %v2473 = vor.u32 %v2471, %v2472
  %v2474 = vshll.u32 2102212464, %v2462
  %v2475 = vshrl.u32 920167782, %v2463
  %v2476 = vor.u32 %v2474, %v2475
  %v2477 = vshll.u32 920167782, %v2462
  %v2478 = vshrl.u32 1326507024, %v2463
  %v2479 = vor.u32 %v2477, %v2478
  %vm2480 = vcmp.lt.s32.totalorder %v2461, 1
  %vm2481 = vcmp.lt.s32.totalorder %v2461, 2
  %vm2482 = vcmp.lt.s32.totalorder %v2461, 3
  %vm2483 = vcmp.lt.s32.totalorder %v2461, 4
  %v2484 = vsel %vm2480, %v2464, %v2467
  %v2485 = vsel %vm2483, %v2473, 2102212464
  %v2486 = vsel %vm2482, %v2470, %v2485
  %v2487 = vsel %vm2481, %v2484, %v2486
  %v2488 = vsel %vm2480, %v2467, %v2470
  %v2489 = vsel %vm2483, %v2476, 920167782
  %v2490 = vsel %vm2482, %v2473, %v2489
  %v2491 = vsel %vm2481, %v2488, %v2490
  %v2492 = vsel %vm2480, %v2470, %v2473
  %v2493 = vsel %vm2483, %v2479, 1326507024
  %v2494 = vsel %vm2482, %v2476, %v2493
  %v2495 = vsel %vm2481, %v2492, %v2494
  %v2496 = vshll.u32 %v2456, 8
  %v2497 = vmul.u32.u64.compose %v2496, %v2495
  %v2498 = vextract.low.u32 %v2497
  %v2499 = vextract.high.u32 %v2497
  %v2500 = vmul.u32.u64.compose %v2496, %v2491
  %v2501 = vextract.low.u32 %v2500
  %v2502 = vextract.high.u32 %v2500
  %v2503 = vmul.u32 %v2496, %v2487
  %v2504 = vadd.s32 %v2499, %v2501
  %vm2505 = vc.u32 %v2499, %v2501
  %v2506 = vadd.s32 %v2502, 1
  %v2507 = vsel %vm2505, %v2506, %v2502
  %v2508 = vadd.s32 %v2503, %v2507
  %v2509 = vadd.s32 %v2508, 536870912
  %v2510 = vshrl.u32 %v2509, 30
  %v2511 = vshll.u32 %v2510, 30
  %v2512 = vsub.s32 %v2508, %v2511
  %vm2513 = vcmp.lt.s32.totalorder %v2512, 0
  %v2514 = vsub.s32 0, %v2512
  %v2515 = vsel %vm2513, %v2514, %v2512
  %v2516 = vclz %v2515
  %v2517 = vsub.s32 %v2516, 2
  %vm2518 = vcmp.gt.s32.totalorder 0, %v2517
  %v2519 = vsel %vm2518, 0, %v2517
  %v2520 = vsub.s32 32, %v2519
  %v2521 = vshll.u32 %v2512, %v2519
  %v2522 = vshrl.u32 %v2504, %v2520
  %v2523 = vor.u32 %v2521, %v2522
  %v2524 = vsub.s32 4294967266, %v2519
  %v2525 = vadd.s32 %v2524, 127
  %v2526 = vshll.u32 %v2525, 23
  %v2527 = vor.u32 4788187, %v2526
  %v2528 = vand.u32 2147483647, %v2527
  %v2530 = vcvt.s32.f32 %v2523
  %v2531 = vmul.f32 %v2530, %v2528
  %v2532 = vxor.u32 %v2531, 2147483648
  %v2533 = vsel %vm2450, %v2532, %v2531
  %v2534 = vsub.s32 4, %v2510
  %v2535 = vsel %vm2450, %v2534, %v2510
  %v2536 = vsel %vm2449, %v625, %v2533
  %v2537 = vsel %vm2449, 0, %v2535
  %v2538 = vcosq.f32.pop %v2536
  %v2539 = vsinq.f32.pop %v2536
  %vm2540 = vweird.f32 %v625
  %v2541 = vadd.s32 %v2537, 3
  %v2542 = vand.u32 %v2541, 3
  %vm2543 = vcmp.lt.s32.totalorder %v2542, 2
  %vm2544 = vcmp.eq.s32.totalorder %v2542, 0
  %v2545 = vxor.u32 %v2539, 2147483648
  %v2546 = vsel %vm2544, %v2538, %v2545
  %vm2547 = vcmp.eq.s32.totalorder %v2542, 2
  %v2548 = vxor.u32 %v2538, 2147483648
  %v2549 = vsel %vm2547, %v2548, %v2539
  %v2550 = vsel %vm2543, %v2546, %v2549
  %v2551 = vsel %vm2540, nan, %v2550
  %v2552 = vand.u32 2147483647, %v626
  %vm2553 = vcmp.le.f32.partialorder %v2552, 0.7853982
  %vm2554 = vcmp.lt.s32.totalorder %v626, 0
  %v2555 = vand.u32 %v626, 2139095040
  %v2556 = vshrl.u32 %v2555, 23
  %v2557 = vsub.s32 %v2556, 127
  %v2558 = vand.u32 2147483647, %v626
  %v2559 = vand.u32 %v2558, 8388607
  %v2560 = vor.u32 %v2559, 8388608
  %v2561 = vsub.s32 0, %v2560
  %v2562 = vadd.s32 %v2557, 1
  %vm2563 = vcmp.gt.s32.totalorder %v2562, 0
  %v2564 = vsel %vm2563, %v2562, 0
  %v2565 = vshrl.u32 %v2564, 5
  %v2566 = vand.u32 %v2564, 31
  %v2567 = vsub.s32 32, %v2566
  %v2568 = vshrl.u32 683565275, %v2567
  %v2569 = vshll.u32 683565275, %v2566
  %v2570 = vshrl.u32 2475754826, %v2567
  %v2571 = vor.u32 %v2569, %v2570
  %v2572 = vshll.u32 2475754826, %v2566
  %v2573 = vshrl.u32 2131351028, %v2567
  %v2574 = vor.u32 %v2572, %v2573
  %v2575 = vshll.u32 2131351028, %v2566
  %v2576 = vshrl.u32 2102212464, %v2567
  %v2577 = vor.u32 %v2575, %v2576
  %v2578 = vshll.u32 2102212464, %v2566
  %v2579 = vshrl.u32 920167782, %v2567
  %v2580 = vor.u32 %v2578, %v2579
  %v2581 = vshll.u32 920167782, %v2566
  %v2582 = vshrl.u32 1326507024, %v2567
  %v2583 = vor.u32 %v2581, %v2582
  %vm2584 = vcmp.lt.s32.totalorder %v2565, 1
  %vm2585 = vcmp.lt.s32.totalorder %v2565, 2
  %vm2586 = vcmp.lt.s32.totalorder %v2565, 3
  %vm2587 = vcmp.lt.s32.totalorder %v2565, 4
  %v2588 = vsel %vm2584, %v2568, %v2571
  %v2589 = vsel %vm2587, %v2577, 2102212464
  %v2590 = vsel %vm2586, %v2574, %v2589
  %v2591 = vsel %vm2585, %v2588, %v2590
  %v2592 = vsel %vm2584, %v2571, %v2574
  %v2593 = vsel %vm2587, %v2580, 920167782
  %v2594 = vsel %vm2586, %v2577, %v2593
  %v2595 = vsel %vm2585, %v2592, %v2594
  %v2596 = vsel %vm2584, %v2574, %v2577
  %v2597 = vsel %vm2587, %v2583, 1326507024
  %v2598 = vsel %vm2586, %v2580, %v2597
  %v2599 = vsel %vm2585, %v2596, %v2598
  %v2600 = vshll.u32 %v2560, 8
  %v2601 = vmul.u32.u64.compose %v2600, %v2599
  %v2602 = vextract.low.u32 %v2601
  %v2603 = vextract.high.u32 %v2601
  %v2604 = vmul.u32.u64.compose %v2600, %v2595
  %v2605 = vextract.low.u32 %v2604
  %v2606 = vextract.high.u32 %v2604
  %v2607 = vmul.u32 %v2600, %v2591
  %v2608 = vadd.s32 %v2603, %v2605
  %vm2609 = vc.u32 %v2603, %v2605
  %v2610 = vadd.s32 %v2606, 1
  %v2611 = vsel %vm2609, %v2610, %v2606
  %v2612 = vadd.s32 %v2607, %v2611
  %v2613 = vadd.s32 %v2612, 536870912
  %v2614 = vshrl.u32 %v2613, 30
  %v2615 = vshll.u32 %v2614, 30
  %v2616 = vsub.s32 %v2612, %v2615
  %vm2617 = vcmp.lt.s32.totalorder %v2616, 0
  %v2618 = vsub.s32 0, %v2616
  %v2619 = vsel %vm2617, %v2618, %v2616
  %v2620 = vclz %v2619
  %v2621 = vsub.s32 %v2620, 2
  %vm2622 = vcmp.gt.s32.totalorder 0, %v2621
  %v2623 = vsel %vm2622, 0, %v2621
  %v2624 = vsub.s32 32, %v2623
  %v2625 = vshll.u32 %v2616, %v2623
  %v2626 = vshrl.u32 %v2608, %v2624
  %v2627 = vor.u32 %v2625, %v2626
  %v2628 = vsub.s32 4294967266, %v2623
  %v2629 = vadd.s32 %v2628, 127
  %v2630 = vshll.u32 %v2629, 23
  %v2631 = vor.u32 4788187, %v2630
  %v2632 = vand.u32 2147483647, %v2631
  %v2634 = vcvt.s32.f32 %v2627
  %v2635 = vmul.f32 %v2634, %v2632
  %v2636 = vxor.u32 %v2635, 2147483648
  %v2637 = vsel %vm2554, %v2636, %v2635
  %v2638 = vsub.s32 4, %v2614
  %v2639 = vsel %vm2554, %v2638, %v2614
  %v2640 = vsel %vm2553, %v626, %v2637
  %v2641 = vsel %vm2553, 0, %v2639
  %v2642 = vcosq.f32.pop %v2640
  %v2643 = vsinq.f32.pop %v2640
  %vm2644 = vweird.f32 %v626
  %v2645 = vadd.s32 %v2641, 3
  %v2646 = vand.u32 %v2645, 3
  %vm2647 = vcmp.lt.s32.totalorder %v2646, 2
  %vm2648 = vcmp.eq.s32.totalorder %v2646, 0
  %v2649 = vxor.u32 %v2643, 2147483648
  %v2650 = vsel %vm2648, %v2642, %v2649
  %vm2651 = vcmp.eq.s32.totalorder %v2646, 2
  %v2652 = vxor.u32 %v2642, 2147483648
  %v2653 = vsel %vm2651, %v2652, %v2643
  %v2654 = vsel %vm2647, %v2650, %v2653
  %v2655 = vsel %vm2644, nan, %v2654
  %v2656 = vand.u32 2147483647, %v627
  %vm2657 = vcmp.le.f32.partialorder %v2656, 0.7853982
  %vm2658 = vcmp.lt.s32.totalorder %v627, 0
  %v2659 = vand.u32 %v627, 2139095040
  %v2660 = vshrl.u32 %v2659, 23
  %v2661 = vsub.s32 %v2660, 127
  %v2662 = vand.u32 2147483647, %v627
  %v2663 = vand.u32 %v2662, 8388607
  %v2664 = vor.u32 %v2663, 8388608
  %v2665 = vsub.s32 0, %v2664
  %v2666 = vadd.s32 %v2661, 1
  %vm2667 = vcmp.gt.s32.totalorder %v2666, 0
  %v2668 = vsel %vm2667, %v2666, 0
  %v2669 = vshrl.u32 %v2668, 5
  %v2670 = vand.u32 %v2668, 31
  %v2671 = vsub.s32 32, %v2670
  %v2672 = vshrl.u32 683565275, %v2671
  %v2673 = vshll.u32 683565275, %v2670
  %v2674 = vshrl.u32 2475754826, %v2671
  %v2675 = vor.u32 %v2673, %v2674
  %v2676 = vshll.u32 2475754826, %v2670
  %v2677 = vshrl.u32 2131351028, %v2671
  %v2678 = vor.u32 %v2676, %v2677
  %v2679 = vshll.u32 2131351028, %v2670
  %v2680 = vshrl.u32 2102212464, %v2671
  %v2681 = vor.u32 %v2679, %v2680
  %v2682 = vshll.u32 2102212464, %v2670
  %v2683 = vshrl.u32 920167782, %v2671
  %v2684 = vor.u32 %v2682, %v2683
  %v2685 = vshll.u32 920167782, %v2670
  %v2686 = vshrl.u32 1326507024, %v2671
  %v2687 = vor.u32 %v2685, %v2686
  %vm2688 = vcmp.lt.s32.totalorder %v2669, 1
  %vm2689 = vcmp.lt.s32.totalorder %v2669, 2
  %vm2690 = vcmp.lt.s32.totalorder %v2669, 3
  %vm2691 = vcmp.lt.s32.totalorder %v2669, 4
  %v2692 = vsel %vm2688, %v2672, %v2675
  %v2693 = vsel %vm2691, %v2681, 2102212464
  %v2694 = vsel %vm2690, %v2678, %v2693
  %v2695 = vsel %vm2689, %v2692, %v2694
  %v2696 = vsel %vm2688, %v2675, %v2678
  %v2697 = vsel %vm2691, %v2684, 920167782
  %v2698 = vsel %vm2690, %v2681, %v2697
  %v2699 = vsel %vm2689, %v2696, %v2698
  %v2700 = vsel %vm2688, %v2678, %v2681
  %v2701 = vsel %vm2691, %v2687, 1326507024
  %v2702 = vsel %vm2690, %v2684, %v2701
  %v2703 = vsel %vm2689, %v2700, %v2702
  %v2704 = vshll.u32 %v2664, 8
  %v2705 = vmul.u32.u64.compose %v2704, %v2703
  %v2706 = vextract.low.u32 %v2705
  %v2707 = vextract.high.u32 %v2705
  %v2708 = vmul.u32.u64.compose %v2704, %v2699
  %v2709 = vextract.low.u32 %v2708
  %v2710 = vextract.high.u32 %v2708
  %v2711 = vmul.u32 %v2704, %v2695
  %v2712 = vadd.s32 %v2707, %v2709
  %vm2713 = vc.u32 %v2707, %v2709
  %v2714 = vadd.s32 %v2710, 1
  %v2715 = vsel %vm2713, %v2714, %v2710
  %v2716 = vadd.s32 %v2711, %v2715
  %v2717 = vadd.s32 %v2716, 536870912
  %v2718 = vshrl.u32 %v2717, 30
  %v2719 = vshll.u32 %v2718, 30
  %v2720 = vsub.s32 %v2716, %v2719
  %vm2721 = vcmp.lt.s32.totalorder %v2720, 0
  %v2722 = vsub.s32 0, %v2720
  %v2723 = vsel %vm2721, %v2722, %v2720
  %v2724 = vclz %v2723
  %v2725 = vsub.s32 %v2724, 2
  %vm2726 = vcmp.gt.s32.totalorder 0, %v2725
  %v2727 = vsel %vm2726, 0, %v2725
  %v2728 = vsub.s32 32, %v2727
  %v2729 = vshll.u32 %v2720, %v2727
  %v2730 = vshrl.u32 %v2712, %v2728
  %v2731 = vor.u32 %v2729, %v2730
  %v2732 = vsub.s32 4294967266, %v2727
  %v2733 = vadd.s32 %v2732, 127
  %v2734 = vshll.u32 %v2733, 23
  %v2735 = vor.u32 4788187, %v2734
  %v2736 = vand.u32 2147483647, %v2735
  %v2738 = vcvt.s32.f32 %v2731
  %v2739 = vmul.f32 %v2738, %v2736
  %v2740 = vxor.u32 %v2739, 2147483648
  %v2741 = vsel %vm2658, %v2740, %v2739
  %v2742 = vsub.s32 4, %v2718
  %v2743 = vsel %vm2658, %v2742, %v2718
  %v2744 = vsel %vm2657, %v627, %v2741
  %v2745 = vsel %vm2657, 0, %v2743
  %v2746 = vcosq.f32.pop %v2744
  %v2747 = vsinq.f32.pop %v2744
  %vm2748 = vweird.f32 %v627
  %v2749 = vadd.s32 %v2745, 3
  %v2750 = vand.u32 %v2749, 3
  %vm2751 = vcmp.lt.s32.totalorder %v2750, 2
  %vm2752 = vcmp.eq.s32.totalorder %v2750, 0
  %v2753 = vxor.u32 %v2747, 2147483648
  %v2754 = vsel %vm2752, %v2746, %v2753
  %vm2755 = vcmp.eq.s32.totalorder %v2750, 2
  %v2756 = vxor.u32 %v2746, 2147483648
  %v2757 = vsel %vm2755, %v2756, %v2747
  %v2758 = vsel %vm2751, %v2754, %v2757
  %v2759 = vsel %vm2748, nan, %v2758
  %v2760 = vand.u32 2147483647, %v628
  %vm2761 = vcmp.le.f32.partialorder %v2760, 0.7853982
  %vm2762 = vcmp.lt.s32.totalorder %v628, 0
  %v2763 = vand.u32 %v628, 2139095040
  %v2764 = vshrl.u32 %v2763, 23
  %v2765 = vsub.s32 %v2764, 127
  %v2766 = vand.u32 2147483647, %v628
  %v2767 = vand.u32 %v2766, 8388607
  %v2768 = vor.u32 %v2767, 8388608
  %v2769 = vsub.s32 0, %v2768
  %v2770 = vadd.s32 %v2765, 1
  %vm2771 = vcmp.gt.s32.totalorder %v2770, 0
  %v2772 = vsel %vm2771, %v2770, 0
  %v2773 = vshrl.u32 %v2772, 5
  %v2774 = vand.u32 %v2772, 31
  %v2775 = vsub.s32 32, %v2774
  %v2776 = vshrl.u32 683565275, %v2775
  %v2777 = vshll.u32 683565275, %v2774
  %v2778 = vshrl.u32 2475754826, %v2775
  %v2779 = vor.u32 %v2777, %v2778
  %v2780 = vshll.u32 2475754826, %v2774
  %v2781 = vshrl.u32 2131351028, %v2775
  %v2782 = vor.u32 %v2780, %v2781
  %v2783 = vshll.u32 2131351028, %v2774
  %v2784 = vshrl.u32 2102212464, %v2775
  %v2785 = vor.u32 %v2783, %v2784
  %v2786 = vshll.u32 2102212464, %v2774
  %v2787 = vshrl.u32 920167782, %v2775
  %v2788 = vor.u32 %v2786, %v2787
  %v2789 = vshll.u32 920167782, %v2774
  %v2790 = vshrl.u32 1326507024, %v2775
  %v2791 = vor.u32 %v2789, %v2790
  %vm2792 = vcmp.lt.s32.totalorder %v2773, 1
  %vm2793 = vcmp.lt.s32.totalorder %v2773, 2
  %vm2794 = vcmp.lt.s32.totalorder %v2773, 3
  %vm2795 = vcmp.lt.s32.totalorder %v2773, 4
  %v2796 = vsel %vm2792, %v2776, %v2779
  %v2797 = vsel %vm2795, %v2785, 2102212464
  %v2798 = vsel %vm2794, %v2782, %v2797
  %v2799 = vsel %vm2793, %v2796, %v2798
  %v2800 = vsel %vm2792, %v2779, %v2782
  %v2801 = vsel %vm2795, %v2788, 920167782
  %v2802 = vsel %vm2794, %v2785, %v2801
  %v2803 = vsel %vm2793, %v2800, %v2802
  %v2804 = vsel %vm2792, %v2782, %v2785
  %v2805 = vsel %vm2795, %v2791, 1326507024
  %v2806 = vsel %vm2794, %v2788, %v2805
  %v2807 = vsel %vm2793, %v2804, %v2806
  %v2808 = vshll.u32 %v2768, 8
  %v2809 = vmul.u32.u64.compose %v2808, %v2807
  %v2810 = vextract.low.u32 %v2809
  %v2811 = vextract.high.u32 %v2809
  %v2812 = vmul.u32.u64.compose %v2808, %v2803
  %v2813 = vextract.low.u32 %v2812
  %v2814 = vextract.high.u32 %v2812
  %v2815 = vmul.u32 %v2808, %v2799
  %v2816 = vadd.s32 %v2811, %v2813
  %vm2817 = vc.u32 %v2811, %v2813
  %v2818 = vadd.s32 %v2814, 1
  %v2819 = vsel %vm2817, %v2818, %v2814
  %v2820 = vadd.s32 %v2815, %v2819
  %v2821 = vadd.s32 %v2820, 536870912
  %v2822 = vshrl.u32 %v2821, 30
  %v2823 = vshll.u32 %v2822, 30
  %v2824 = vsub.s32 %v2820, %v2823
  %vm2825 = vcmp.lt.s32.totalorder %v2824, 0
  %v2826 = vsub.s32 0, %v2824
  %v2827 = vsel %vm2825, %v2826, %v2824
  %v2828 = vclz %v2827
  %v2829 = vsub.s32 %v2828, 2
  %vm2830 = vcmp.gt.s32.totalorder 0, %v2829
  %v2831 = vsel %vm2830, 0, %v2829
  %v2832 = vsub.s32 32, %v2831
  %v2833 = vshll.u32 %v2824, %v2831
  %v2834 = vshrl.u32 %v2816, %v2832
  %v2835 = vor.u32 %v2833, %v2834
  %v2836 = vsub.s32 4294967266, %v2831
  %v2837 = vadd.s32 %v2836, 127
  %v2838 = vshll.u32 %v2837, 23
  %v2839 = vor.u32 4788187, %v2838
  %v2840 = vand.u32 2147483647, %v2839
  %v2842 = vcvt.s32.f32 %v2835
  %v2843 = vmul.f32 %v2842, %v2840
  %v2844 = vxor.u32 %v2843, 2147483648
  %v2845 = vsel %vm2762, %v2844, %v2843
  %v2846 = vsub.s32 4, %v2822
  %v2847 = vsel %vm2762, %v2846, %v2822
  %v2848 = vsel %vm2761, %v628, %v2845
  %v2849 = vsel %vm2761, 0, %v2847
  %v2850 = vcosq.f32.pop %v2848
  %v2851 = vsinq.f32.pop %v2848
  %vm2852 = vweird.f32 %v628
  %v2853 = vadd.s32 %v2849, 3
  %v2854 = vand.u32 %v2853, 3
  %vm2855 = vcmp.lt.s32.totalorder %v2854, 2
  %vm2856 = vcmp.eq.s32.totalorder %v2854, 0
  %v2857 = vxor.u32 %v2851, 2147483648
  %v2858 = vsel %vm2856, %v2850, %v2857
  %vm2859 = vcmp.eq.s32.totalorder %v2854, 2
  %v2860 = vxor.u32 %v2850, 2147483648
  %v2861 = vsel %vm2859, %v2860, %v2851
  %v2862 = vsel %vm2855, %v2858, %v2861
  %v2863 = vsel %vm2852, nan, %v2862
  %v2864 = vand.u32 2147483647, %v629
  %vm2865 = vcmp.le.f32.partialorder %v2864, 0.7853982
  %vm2866 = vcmp.lt.s32.totalorder %v629, 0
  %v2867 = vand.u32 %v629, 2139095040
  %v2868 = vshrl.u32 %v2867, 23
  %v2869 = vsub.s32 %v2868, 127
  %v2870 = vand.u32 2147483647, %v629
  %v2871 = vand.u32 %v2870, 8388607
  %v2872 = vor.u32 %v2871, 8388608
  %v2873 = vsub.s32 0, %v2872
  %v2874 = vadd.s32 %v2869, 1
  %vm2875 = vcmp.gt.s32.totalorder %v2874, 0
  %v2876 = vsel %vm2875, %v2874, 0
  %v2877 = vshrl.u32 %v2876, 5
  %v2878 = vand.u32 %v2876, 31
  %v2879 = vsub.s32 32, %v2878
  %v2880 = vshrl.u32 683565275, %v2879
  %v2881 = vshll.u32 683565275, %v2878
  %v2882 = vshrl.u32 2475754826, %v2879
  %v2883 = vor.u32 %v2881, %v2882
  %v2884 = vshll.u32 2475754826, %v2878
  %v2885 = vshrl.u32 2131351028, %v2879
  %v2886 = vor.u32 %v2884, %v2885
  %v2887 = vshll.u32 2131351028, %v2878
  %v2888 = vshrl.u32 2102212464, %v2879
  %v2889 = vor.u32 %v2887, %v2888
  %v2890 = vshll.u32 2102212464, %v2878
  %v2891 = vshrl.u32 920167782, %v2879
  %v2892 = vor.u32 %v2890, %v2891
  %v2893 = vshll.u32 920167782, %v2878
  %v2894 = vshrl.u32 1326507024, %v2879
  %v2895 = vor.u32 %v2893, %v2894
  %vm2896 = vcmp.lt.s32.totalorder %v2877, 1
  %vm2897 = vcmp.lt.s32.totalorder %v2877, 2
  %vm2898 = vcmp.lt.s32.totalorder %v2877, 3
  %vm2899 = vcmp.lt.s32.totalorder %v2877, 4
  %v2900 = vsel %vm2896, %v2880, %v2883
  %v2901 = vsel %vm2899, %v2889, 2102212464
  %v2902 = vsel %vm2898, %v2886, %v2901
  %v2903 = vsel %vm2897, %v2900, %v2902
  %v2904 = vsel %vm2896, %v2883, %v2886
  %v2905 = vsel %vm2899, %v2892, 920167782
  %v2906 = vsel %vm2898, %v2889, %v2905
  %v2907 = vsel %vm2897, %v2904, %v2906
  %v2908 = vsel %vm2896, %v2886, %v2889
  %v2909 = vsel %vm2899, %v2895, 1326507024
  %v2910 = vsel %vm2898, %v2892, %v2909
  %v2911 = vsel %vm2897, %v2908, %v2910
  %v2912 = vshll.u32 %v2872, 8
  %v2913 = vmul.u32.u64.compose %v2912, %v2911
  %v2914 = vextract.low.u32 %v2913
  %v2915 = vextract.high.u32 %v2913
  %v2916 = vmul.u32.u64.compose %v2912, %v2907
  %v2917 = vextract.low.u32 %v2916
  %v2918 = vextract.high.u32 %v2916
  %v2919 = vmul.u32 %v2912, %v2903
  %v2920 = vadd.s32 %v2915, %v2917
  %vm2921 = vc.u32 %v2915, %v2917
  %v2922 = vadd.s32 %v2918, 1
  %v2923 = vsel %vm2921, %v2922, %v2918
  %v2924 = vadd.s32 %v2919, %v2923
  %v2925 = vadd.s32 %v2924, 536870912
  %v2926 = vshrl.u32 %v2925, 30
  %v2927 = vshll.u32 %v2926, 30
  %v2928 = vsub.s32 %v2924, %v2927
  %vm2929 = vcmp.lt.s32.totalorder %v2928, 0
  %v2930 = vsub.s32 0, %v2928
  %v2931 = vsel %vm2929, %v2930, %v2928
  %v2932 = vclz %v2931
  %v2933 = vsub.s32 %v2932, 2
  %vm2934 = vcmp.gt.s32.totalorder 0, %v2933
  %v2935 = vsel %vm2934, 0, %v2933
  %v2936 = vsub.s32 32, %v2935
  %v2937 = vshll.u32 %v2928, %v2935
  %v2938 = vshrl.u32 %v2920, %v2936
  %v2939 = vor.u32 %v2937, %v2938
  %v2940 = vsub.s32 4294967266, %v2935
  %v2941 = vadd.s32 %v2940, 127
  %v2942 = vshll.u32 %v2941, 23
  %v2943 = vor.u32 4788187, %v2942
  %v2944 = vand.u32 2147483647, %v2943
  %v2946 = vcvt.s32.f32 %v2939
  %v2947 = vmul.f32 %v2946, %v2944
  %v2948 = vxor.u32 %v2947, 2147483648
  %v2949 = vsel %vm2866, %v2948, %v2947
  %v2950 = vsub.s32 4, %v2926
  %v2951 = vsel %vm2866, %v2950, %v2926
  %v2952 = vsel %vm2865, %v629, %v2949
  %v2953 = vsel %vm2865, 0, %v2951
  %v2954 = vcosq.f32.pop %v2952
  %v2955 = vsinq.f32.pop %v2952
  %vm2956 = vweird.f32 %v629
  %v2957 = vadd.s32 %v2953, 3
  %v2958 = vand.u32 %v2957, 3
  %vm2959 = vcmp.lt.s32.totalorder %v2958, 2
  %vm2960 = vcmp.eq.s32.totalorder %v2958, 0
  %v2961 = vxor.u32 %v2955, 2147483648
  %v2962 = vsel %vm2960, %v2954, %v2961
  %vm2963 = vcmp.eq.s32.totalorder %v2958, 2
  %v2964 = vxor.u32 %v2954, 2147483648
  %v2965 = vsel %vm2963, %v2964, %v2955
  %v2966 = vsel %vm2959, %v2962, %v2965
  %v2967 = vsel %vm2956, nan, %v2966
  %v2968 = vand.u32 2147483647, %v630
  %vm2969 = vcmp.le.f32.partialorder %v2968, 0.7853982
  %vm2970 = vcmp.lt.s32.totalorder %v630, 0
  %v2971 = vand.u32 %v630, 2139095040
  %v2972 = vshrl.u32 %v2971, 23
  %v2973 = vsub.s32 %v2972, 127
  %v2974 = vand.u32 2147483647, %v630
  %v2975 = vand.u32 %v2974, 8388607
  %v2976 = vor.u32 %v2975, 8388608
  %v2977 = vsub.s32 0, %v2976
  %v2978 = vadd.s32 %v2973, 1
  %vm2979 = vcmp.gt.s32.totalorder %v2978, 0
  %v2980 = vsel %vm2979, %v2978, 0
  %v2981 = vshrl.u32 %v2980, 5
  %v2982 = vand.u32 %v2980, 31
  %v2983 = vsub.s32 32, %v2982
  %v2984 = vshrl.u32 683565275, %v2983
  %v2985 = vshll.u32 683565275, %v2982
  %v2986 = vshrl.u32 2475754826, %v2983
  %v2987 = vor.u32 %v2985, %v2986
  %v2988 = vshll.u32 2475754826, %v2982
  %v2989 = vshrl.u32 2131351028, %v2983
  %v2990 = vor.u32 %v2988, %v2989
  %v2991 = vshll.u32 2131351028, %v2982
  %v2992 = vshrl.u32 2102212464, %v2983
  %v2993 = vor.u32 %v2991, %v2992
  %v2994 = vshll.u32 2102212464, %v2982
  %v2995 = vshrl.u32 920167782, %v2983
  %v2996 = vor.u32 %v2994, %v2995
  %v2997 = vshll.u32 920167782, %v2982
  %v2998 = vshrl.u32 1326507024, %v2983
  %v2999 = vor.u32 %v2997, %v2998
  %vm3000 = vcmp.lt.s32.totalorder %v2981, 1
  %vm3001 = vcmp.lt.s32.totalorder %v2981, 2
  %vm3002 = vcmp.lt.s32.totalorder %v2981, 3
  %vm3003 = vcmp.lt.s32.totalorder %v2981, 4
  %v3004 = vsel %vm3000, %v2984, %v2987
  %v3005 = vsel %vm3003, %v2993, 2102212464
  %v3006 = vsel %vm3002, %v2990, %v3005
  %v3007 = vsel %vm3001, %v3004, %v3006
  %v3008 = vsel %vm3000, %v2987, %v2990
  %v3009 = vsel %vm3003, %v2996, 920167782
  %v3010 = vsel %vm3002, %v2993, %v3009
  %v3011 = vsel %vm3001, %v3008, %v3010
  %v3012 = vsel %vm3000, %v2990, %v2993
  %v3013 = vsel %vm3003, %v2999, 1326507024
  %v3014 = vsel %vm3002, %v2996, %v3013
  %v3015 = vsel %vm3001, %v3012, %v3014
  %v3016 = vshll.u32 %v2976, 8
  %v3017 = vmul.u32.u64.compose %v3016, %v3015
  %v3018 = vextract.low.u32 %v3017
  %v3019 = vextract.high.u32 %v3017
  %v3020 = vmul.u32.u64.compose %v3016, %v3011
  %v3021 = vextract.low.u32 %v3020
  %v3022 = vextract.high.u32 %v3020
  %v3023 = vmul.u32 %v3016, %v3007
  %v3024 = vadd.s32 %v3019, %v3021
  %vm3025 = vc.u32 %v3019, %v3021
  %v3026 = vadd.s32 %v3022, 1
  %v3027 = vsel %vm3025, %v3026, %v3022
  %v3028 = vadd.s32 %v3023, %v3027
  %v3029 = vadd.s32 %v3028, 536870912
  %v3030 = vshrl.u32 %v3029, 30
  %v3031 = vshll.u32 %v3030, 30
  %v3032 = vsub.s32 %v3028, %v3031
  %vm3033 = vcmp.lt.s32.totalorder %v3032, 0
  %v3034 = vsub.s32 0, %v3032
  %v3035 = vsel %vm3033, %v3034, %v3032
  %v3036 = vclz %v3035
  %v3037 = vsub.s32 %v3036, 2
  %vm3038 = vcmp.gt.s32.totalorder 0, %v3037
  %v3039 = vsel %vm3038, 0, %v3037
  %v3040 = vsub.s32 32, %v3039
  %v3041 = vshll.u32 %v3032, %v3039
  %v3042 = vshrl.u32 %v3024, %v3040
  %v3043 = vor.u32 %v3041, %v3042
  %v3044 = vsub.s32 4294967266, %v3039
  %v3045 = vadd.s32 %v3044, 127
  %v3046 = vshll.u32 %v3045, 23
  %v3047 = vor.u32 4788187, %v3046
  %v3048 = vand.u32 2147483647, %v3047
  %v3050 = vcvt.s32.f32 %v3043
  %v3051 = vmul.f32 %v3050, %v3048
  %v3052 = vxor.u32 %v3051, 2147483648
  %v3053 = vsel %vm2970, %v3052, %v3051
  %v3054 = vsub.s32 4, %v3030
  %v3055 = vsel %vm2970, %v3054, %v3030
  %v3056 = vsel %vm2969, %v630, %v3053
  %v3057 = vsel %vm2969, 0, %v3055
  %v3058 = vcosq.f32.pop %v3056
  %v3059 = vsinq.f32.pop %v3056
  %vm3060 = vweird.f32 %v630
  %v3061 = vadd.s32 %v3057, 3
  %v3062 = vand.u32 %v3061, 3
  %vm3063 = vcmp.lt.s32.totalorder %v3062, 2
  %vm3064 = vcmp.eq.s32.totalorder %v3062, 0
  %v3065 = vxor.u32 %v3059, 2147483648
  %v3066 = vsel %vm3064, %v3058, %v3065
  %vm3067 = vcmp.eq.s32.totalorder %v3062, 2
  %v3068 = vxor.u32 %v3058, 2147483648
  %v3069 = vsel %vm3067, %v3068, %v3059
  %v3070 = vsel %vm3063, %v3066, %v3069
  %v3071 = vsel %vm3060, nan, %v3070
  %v3072 = vand.u32 2147483647, %v631
  %vm3073 = vcmp.le.f32.partialorder %v3072, 0.7853982
  %vm3074 = vcmp.lt.s32.totalorder %v631, 0
  %v3075 = vand.u32 %v631, 2139095040
  %v3076 = vshrl.u32 %v3075, 23
  %v3077 = vsub.s32 %v3076, 127
  %v3078 = vand.u32 2147483647, %v631
  %v3079 = vand.u32 %v3078, 8388607
  %v3080 = vor.u32 %v3079, 8388608
  %v3081 = vsub.s32 0, %v3080
  %v3082 = vadd.s32 %v3077, 1
  %vm3083 = vcmp.gt.s32.totalorder %v3082, 0
  %v3084 = vsel %vm3083, %v3082, 0
  %v3085 = vshrl.u32 %v3084, 5
  %v3086 = vand.u32 %v3084, 31
  %v3087 = vsub.s32 32, %v3086
  %v3088 = vshrl.u32 683565275, %v3087
  %v3089 = vshll.u32 683565275, %v3086
  %v3090 = vshrl.u32 2475754826, %v3087
  %v3091 = vor.u32 %v3089, %v3090
  %v3092 = vshll.u32 2475754826, %v3086
  %v3093 = vshrl.u32 2131351028, %v3087
  %v3094 = vor.u32 %v3092, %v3093
  %v3095 = vshll.u32 2131351028, %v3086
  %v3096 = vshrl.u32 2102212464, %v3087
  %v3097 = vor.u32 %v3095, %v3096
  %v3098 = vshll.u32 2102212464, %v3086
  %v3099 = vshrl.u32 920167782, %v3087
  %v3100 = vor.u32 %v3098, %v3099
  %v3101 = vshll.u32 920167782, %v3086
  %v3102 = vshrl.u32 1326507024, %v3087
  %v3103 = vor.u32 %v3101, %v3102
  %vm3104 = vcmp.lt.s32.totalorder %v3085, 1
  %vm3105 = vcmp.lt.s32.totalorder %v3085, 2
  %vm3106 = vcmp.lt.s32.totalorder %v3085, 3
  %vm3107 = vcmp.lt.s32.totalorder %v3085, 4
  %v3108 = vsel %vm3104, %v3088, %v3091
  %v3109 = vsel %vm3107, %v3097, 2102212464
  %v3110 = vsel %vm3106, %v3094, %v3109
  %v3111 = vsel %vm3105, %v3108, %v3110
  %v3112 = vsel %vm3104, %v3091, %v3094
  %v3113 = vsel %vm3107, %v3100, 920167782
  %v3114 = vsel %vm3106, %v3097, %v3113
  %v3115 = vsel %vm3105, %v3112, %v3114
  %v3116 = vsel %vm3104, %v3094, %v3097
  %v3117 = vsel %vm3107, %v3103, 1326507024
  %v3118 = vsel %vm3106, %v3100, %v3117
  %v3119 = vsel %vm3105, %v3116, %v3118
  %v3120 = vshll.u32 %v3080, 8
  %v3121 = vmul.u32.u64.compose %v3120, %v3119
  %v3122 = vextract.low.u32 %v3121
  %v3123 = vextract.high.u32 %v3121
  %v3124 = vmul.u32.u64.compose %v3120, %v3115
  %v3125 = vextract.low.u32 %v3124
  %v3126 = vextract.high.u32 %v3124
  %v3127 = vmul.u32 %v3120, %v3111
  %v3128 = vadd.s32 %v3123, %v3125
  %vm3129 = vc.u32 %v3123, %v3125
  %v3130 = vadd.s32 %v3126, 1
  %v3131 = vsel %vm3129, %v3130, %v3126
  %v3132 = vadd.s32 %v3127, %v3131
  %v3133 = vadd.s32 %v3132, 536870912
  %v3134 = vshrl.u32 %v3133, 30
  %v3135 = vshll.u32 %v3134, 30
  %v3136 = vsub.s32 %v3132, %v3135
  %vm3137 = vcmp.lt.s32.totalorder %v3136, 0
  %v3138 = vsub.s32 0, %v3136
  %v3139 = vsel %vm3137, %v3138, %v3136
  %v3140 = vclz %v3139
  %v3141 = vsub.s32 %v3140, 2
  %vm3142 = vcmp.gt.s32.totalorder 0, %v3141
  %v3143 = vsel %vm3142, 0, %v3141
  %v3144 = vsub.s32 32, %v3143
  %v3145 = vshll.u32 %v3136, %v3143
  %v3146 = vshrl.u32 %v3128, %v3144
  %v3147 = vor.u32 %v3145, %v3146
  %v3148 = vsub.s32 4294967266, %v3143
  %v3149 = vadd.s32 %v3148, 127
  %v3150 = vshll.u32 %v3149, 23
  %v3151 = vor.u32 4788187, %v3150
  %v3152 = vand.u32 2147483647, %v3151
  %v3154 = vcvt.s32.f32 %v3147
  %v3155 = vmul.f32 %v3154, %v3152
  %v3156 = vxor.u32 %v3155, 2147483648
  %v3157 = vsel %vm3074, %v3156, %v3155
  %v3158 = vsub.s32 4, %v3134
  %v3159 = vsel %vm3074, %v3158, %v3134
  %v3160 = vsel %vm3073, %v631, %v3157
  %v3161 = vsel %vm3073, 0, %v3159
  %v3162 = vcosq.f32.pop %v3160
  %v3163 = vsinq.f32.pop %v3160
  %vm3164 = vweird.f32 %v631
  %v3165 = vadd.s32 %v3161, 3
  %v3166 = vand.u32 %v3165, 3
  %vm3167 = vcmp.lt.s32.totalorder %v3166, 2
  %vm3168 = vcmp.eq.s32.totalorder %v3166, 0
  %v3169 = vxor.u32 %v3163, 2147483648
  %v3170 = vsel %vm3168, %v3162, %v3169
  %vm3171 = vcmp.eq.s32.totalorder %v3166, 2
  %v3172 = vxor.u32 %v3162, 2147483648
  %v3173 = vsel %vm3171, %v3172, %v3163
  %v3174 = vsel %vm3167, %v3170, %v3173
  %v3175 = vsel %vm3164, nan, %v3174
  %v3176 = vand.u32 2147483647, %v632
  %vm3177 = vcmp.le.f32.partialorder %v3176, 0.7853982
  %vm3178 = vcmp.lt.s32.totalorder %v632, 0
  %v3179 = vand.u32 %v632, 2139095040
  %v3180 = vshrl.u32 %v3179, 23
  %v3181 = vsub.s32 %v3180, 127
  %v3182 = vand.u32 2147483647, %v632
  %v3183 = vand.u32 %v3182, 8388607
  %v3184 = vor.u32 %v3183, 8388608
  %v3185 = vsub.s32 0, %v3184
  %v3186 = vadd.s32 %v3181, 1
  %vm3187 = vcmp.gt.s32.totalorder %v3186, 0
  %v3188 = vsel %vm3187, %v3186, 0
  %v3189 = vshrl.u32 %v3188, 5
  %v3190 = vand.u32 %v3188, 31
  %v3191 = vsub.s32 32, %v3190
  %v3192 = vshrl.u32 683565275, %v3191
  %v3193 = vshll.u32 683565275, %v3190
  %v3194 = vshrl.u32 2475754826, %v3191
  %v3195 = vor.u32 %v3193, %v3194
  %v3196 = vshll.u32 2475754826, %v3190
  %v3197 = vshrl.u32 2131351028, %v3191
  %v3198 = vor.u32 %v3196, %v3197
  %v3199 = vshll.u32 2131351028, %v3190
  %v3200 = vshrl.u32 2102212464, %v3191
  %v3201 = vor.u32 %v3199, %v3200
  %v3202 = vshll.u32 2102212464, %v3190
  %v3203 = vshrl.u32 920167782, %v3191
  %v3204 = vor.u32 %v3202, %v3203
  %v3205 = vshll.u32 920167782, %v3190
  %v3206 = vshrl.u32 1326507024, %v3191
  %v3207 = vor.u32 %v3205, %v3206
  %vm3208 = vcmp.lt.s32.totalorder %v3189, 1
  %vm3209 = vcmp.lt.s32.totalorder %v3189, 2
  %vm3210 = vcmp.lt.s32.totalorder %v3189, 3
  %vm3211 = vcmp.lt.s32.totalorder %v3189, 4
  %v3212 = vsel %vm3208, %v3192, %v3195
  %v3213 = vsel %vm3211, %v3201, 2102212464
  %v3214 = vsel %vm3210, %v3198, %v3213
  %v3215 = vsel %vm3209, %v3212, %v3214
  %v3216 = vsel %vm3208, %v3195, %v3198
  %v3217 = vsel %vm3211, %v3204, 920167782
  %v3218 = vsel %vm3210, %v3201, %v3217
  %v3219 = vsel %vm3209, %v3216, %v3218
  %v3220 = vsel %vm3208, %v3198, %v3201
  %v3221 = vsel %vm3211, %v3207, 1326507024
  %v3222 = vsel %vm3210, %v3204, %v3221
  %v3223 = vsel %vm3209, %v3220, %v3222
  %v3224 = vshll.u32 %v3184, 8
  %v3225 = vmul.u32.u64.compose %v3224, %v3223
  %v3226 = vextract.low.u32 %v3225
  %v3227 = vextract.high.u32 %v3225
  %v3228 = vmul.u32.u64.compose %v3224, %v3219
  %v3229 = vextract.low.u32 %v3228
  %v3230 = vextract.high.u32 %v3228
  %v3231 = vmul.u32 %v3224, %v3215
  %v3232 = vadd.s32 %v3227, %v3229
  %vm3233 = vc.u32 %v3227, %v3229
  %v3234 = vadd.s32 %v3230, 1
  %v3235 = vsel %vm3233, %v3234, %v3230
  %v3236 = vadd.s32 %v3231, %v3235
  %v3237 = vadd.s32 %v3236, 536870912
  %v3238 = vshrl.u32 %v3237, 30
  %v3239 = vshll.u32 %v3238, 30
  %v3240 = vsub.s32 %v3236, %v3239
  %vm3241 = vcmp.lt.s32.totalorder %v3240, 0
  %v3242 = vsub.s32 0, %v3240
  %v3243 = vsel %vm3241, %v3242, %v3240
  %v3244 = vclz %v3243
  %v3245 = vsub.s32 %v3244, 2
  %vm3246 = vcmp.gt.s32.totalorder 0, %v3245
  %v3247 = vsel %vm3246, 0, %v3245
  %v3248 = vsub.s32 32, %v3247
  %v3249 = vshll.u32 %v3240, %v3247
  %v3250 = vshrl.u32 %v3232, %v3248
  %v3251 = vor.u32 %v3249, %v3250
  %v3252 = vsub.s32 4294967266, %v3247
  %v3253 = vadd.s32 %v3252, 127
  %v3254 = vshll.u32 %v3253, 23
  %v3255 = vor.u32 4788187, %v3254
  %v3256 = vand.u32 2147483647, %v3255
  %v3258 = vcvt.s32.f32 %v3251
  %v3259 = vmul.f32 %v3258, %v3256
  %v3260 = vxor.u32 %v3259, 2147483648
  %v3261 = vsel %vm3178, %v3260, %v3259
  %v3262 = vsub.s32 4, %v3238
  %v3263 = vsel %vm3178, %v3262, %v3238
  %v3264 = vsel %vm3177, %v632, %v3261
  %v3265 = vsel %vm3177, 0, %v3263
  %v3266 = vcosq.f32.pop %v3264
  %v3267 = vsinq.f32.pop %v3264
  %vm3268 = vweird.f32 %v632
  %v3269 = vadd.s32 %v3265, 3
  %v3270 = vand.u32 %v3269, 3
  %vm3271 = vcmp.lt.s32.totalorder %v3270, 2
  %vm3272 = vcmp.eq.s32.totalorder %v3270, 0
  %v3273 = vxor.u32 %v3267, 2147483648
  %v3274 = vsel %vm3272, %v3266, %v3273
  %vm3275 = vcmp.eq.s32.totalorder %v3270, 2
  %v3276 = vxor.u32 %v3266, 2147483648
  %v3277 = vsel %vm3275, %v3276, %v3267
  %v3278 = vsel %vm3271, %v3274, %v3277
  %v3279 = vsel %vm3268, nan, %v3278
  %v3280 = vand.u32 2147483647, %v633
  %vm3281 = vcmp.le.f32.partialorder %v3280, 0.7853982
  %vm3282 = vcmp.lt.s32.totalorder %v633, 0
  %v3283 = vand.u32 %v633, 2139095040
  %v3284 = vshrl.u32 %v3283, 23
  %v3285 = vsub.s32 %v3284, 127
  %v3286 = vand.u32 2147483647, %v633
  %v3287 = vand.u32 %v3286, 8388607
  %v3288 = vor.u32 %v3287, 8388608
  %v3289 = vsub.s32 0, %v3288
  %v3290 = vadd.s32 %v3285, 1
  %vm3291 = vcmp.gt.s32.totalorder %v3290, 0
  %v3292 = vsel %vm3291, %v3290, 0
  %v3293 = vshrl.u32 %v3292, 5
  %v3294 = vand.u32 %v3292, 31
  %v3295 = vsub.s32 32, %v3294
  %v3296 = vshrl.u32 683565275, %v3295
  %v3297 = vshll.u32 683565275, %v3294
  %v3298 = vshrl.u32 2475754826, %v3295
  %v3299 = vor.u32 %v3297, %v3298
  %v3300 = vshll.u32 2475754826, %v3294
  %v3301 = vshrl.u32 2131351028, %v3295
  %v3302 = vor.u32 %v3300, %v3301
  %v3303 = vshll.u32 2131351028, %v3294
  %v3304 = vshrl.u32 2102212464, %v3295
  %v3305 = vor.u32 %v3303, %v3304
  %v3306 = vshll.u32 2102212464, %v3294
  %v3307 = vshrl.u32 920167782, %v3295
  %v3308 = vor.u32 %v3306, %v3307
  %v3309 = vshll.u32 920167782, %v3294
  %v3310 = vshrl.u32 1326507024, %v3295
  %v3311 = vor.u32 %v3309, %v3310
  %vm3312 = vcmp.lt.s32.totalorder %v3293, 1
  %vm3313 = vcmp.lt.s32.totalorder %v3293, 2
  %vm3314 = vcmp.lt.s32.totalorder %v3293, 3
  %vm3315 = vcmp.lt.s32.totalorder %v3293, 4
  %v3316 = vsel %vm3312, %v3296, %v3299
  %v3317 = vsel %vm3315, %v3305, 2102212464
  %v3318 = vsel %vm3314, %v3302, %v3317
  %v3319 = vsel %vm3313, %v3316, %v3318
  %v3320 = vsel %vm3312, %v3299, %v3302
  %v3321 = vsel %vm3315, %v3308, 920167782
  %v3322 = vsel %vm3314, %v3305, %v3321
  %v3323 = vsel %vm3313, %v3320, %v3322
  %v3324 = vsel %vm3312, %v3302, %v3305
  %v3325 = vsel %vm3315, %v3311, 1326507024
  %v3326 = vsel %vm3314, %v3308, %v3325
  %v3327 = vsel %vm3313, %v3324, %v3326
  %v3328 = vshll.u32 %v3288, 8
  %v3329 = vmul.u32.u64.compose %v3328, %v3327
  %v3330 = vextract.low.u32 %v3329
  %v3331 = vextract.high.u32 %v3329
  %v3332 = vmul.u32.u64.compose %v3328, %v3323
  %v3333 = vextract.low.u32 %v3332
  %v3334 = vextract.high.u32 %v3332
  %v3335 = vmul.u32 %v3328, %v3319
  %v3336 = vadd.s32 %v3331, %v3333
  %vm3337 = vc.u32 %v3331, %v3333
  %v3338 = vadd.s32 %v3334, 1
  %v3339 = vsel %vm3337, %v3338, %v3334
  %v3340 = vadd.s32 %v3335, %v3339
  %v3341 = vadd.s32 %v3340, 536870912
  %v3342 = vshrl.u32 %v3341, 30
  %v3343 = vshll.u32 %v3342, 30
  %v3344 = vsub.s32 %v3340, %v3343
  %vm3345 = vcmp.lt.s32.totalorder %v3344, 0
  %v3346 = vsub.s32 0, %v3344
  %v3347 = vsel %vm3345, %v3346, %v3344
  %v3348 = vclz %v3347
  %v3349 = vsub.s32 %v3348, 2
  %vm3350 = vcmp.gt.s32.totalorder 0, %v3349
  %v3351 = vsel %vm3350, 0, %v3349
  %v3352 = vsub.s32 32, %v3351
  %v3353 = vshll.u32 %v3344, %v3351
  %v3354 = vshrl.u32 %v3336, %v3352
  %v3355 = vor.u32 %v3353, %v3354
  %v3356 = vsub.s32 4294967266, %v3351
  %v3357 = vadd.s32 %v3356, 127
  %v3358 = vshll.u32 %v3357, 23
  %v3359 = vor.u32 4788187, %v3358
  %v3360 = vand.u32 2147483647, %v3359
  %v3362 = vcvt.s32.f32 %v3355
  %v3363 = vmul.f32 %v3362, %v3360
  %v3364 = vxor.u32 %v3363, 2147483648
  %v3365 = vsel %vm3282, %v3364, %v3363
  %v3366 = vsub.s32 4, %v3342
  %v3367 = vsel %vm3282, %v3366, %v3342
  %v3368 = vsel %vm3281, %v633, %v3365
  %v3369 = vsel %vm3281, 0, %v3367
  %v3370 = vcosq.f32.pop %v3368
  %v3371 = vsinq.f32.pop %v3368
  %vm3372 = vweird.f32 %v633
  %v3373 = vadd.s32 %v3369, 3
  %v3374 = vand.u32 %v3373, 3
  %vm3375 = vcmp.lt.s32.totalorder %v3374, 2
  %vm3376 = vcmp.eq.s32.totalorder %v3374, 0
  %v3377 = vxor.u32 %v3371, 2147483648
  %v3378 = vsel %vm3376, %v3370, %v3377
  %vm3379 = vcmp.eq.s32.totalorder %v3374, 2
  %v3380 = vxor.u32 %v3370, 2147483648
  %v3381 = vsel %vm3379, %v3380, %v3371
  %v3382 = vsel %vm3375, %v3378, %v3381
  %v3383 = vsel %vm3372, nan, %v3382
  %v3384 = vand.u32 2147483647, %v634
  %vm3385 = vcmp.le.f32.partialorder %v3384, 0.7853982
  %vm3386 = vcmp.lt.s32.totalorder %v634, 0
  %v3387 = vand.u32 %v634, 2139095040
  %v3388 = vshrl.u32 %v3387, 23
  %v3389 = vsub.s32 %v3388, 127
  %v3390 = vand.u32 2147483647, %v634
  %v3391 = vand.u32 %v3390, 8388607
  %v3392 = vor.u32 %v3391, 8388608
  %v3393 = vsub.s32 0, %v3392
  %v3394 = vadd.s32 %v3389, 1
  %vm3395 = vcmp.gt.s32.totalorder %v3394, 0
  %v3396 = vsel %vm3395, %v3394, 0
  %v3397 = vshrl.u32 %v3396, 5
  %v3398 = vand.u32 %v3396, 31
  %v3399 = vsub.s32 32, %v3398
  %v3400 = vshrl.u32 683565275, %v3399
  %v3401 = vshll.u32 683565275, %v3398
  %v3402 = vshrl.u32 2475754826, %v3399
  %v3403 = vor.u32 %v3401, %v3402
  %v3404 = vshll.u32 2475754826, %v3398
  %v3405 = vshrl.u32 2131351028, %v3399
  %v3406 = vor.u32 %v3404, %v3405
  %v3407 = vshll.u32 2131351028, %v3398
  %v3408 = vshrl.u32 2102212464, %v3399
  %v3409 = vor.u32 %v3407, %v3408
  %v3410 = vshll.u32 2102212464, %v3398
  %v3411 = vshrl.u32 920167782, %v3399
  %v3412 = vor.u32 %v3410, %v3411
  %v3413 = vshll.u32 920167782, %v3398
  %v3414 = vshrl.u32 1326507024, %v3399
  %v3415 = vor.u32 %v3413, %v3414
  %vm3416 = vcmp.lt.s32.totalorder %v3397, 1
  %vm3417 = vcmp.lt.s32.totalorder %v3397, 2
  %vm3418 = vcmp.lt.s32.totalorder %v3397, 3
  %vm3419 = vcmp.lt.s32.totalorder %v3397, 4
  %v3420 = vsel %vm3416, %v3400, %v3403
  %v3421 = vsel %vm3419, %v3409, 2102212464
  %v3422 = vsel %vm3418, %v3406, %v3421
  %v3423 = vsel %vm3417, %v3420, %v3422
  %v3424 = vsel %vm3416, %v3403, %v3406
  %v3425 = vsel %vm3419, %v3412, 920167782
  %v3426 = vsel %vm3418, %v3409, %v3425
  %v3427 = vsel %vm3417, %v3424, %v3426
  %v3428 = vsel %vm3416, %v3406, %v3409
  %v3429 = vsel %vm3419, %v3415, 1326507024
  %v3430 = vsel %vm3418, %v3412, %v3429
  %v3431 = vsel %vm3417, %v3428, %v3430
  %v3432 = vshll.u32 %v3392, 8
  %v3433 = vmul.u32.u64.compose %v3432, %v3431
  %v3434 = vextract.low.u32 %v3433
  %v3435 = vextract.high.u32 %v3433
  %v3436 = vmul.u32.u64.compose %v3432, %v3427
  %v3437 = vextract.low.u32 %v3436
  %v3438 = vextract.high.u32 %v3436
  %v3439 = vmul.u32 %v3432, %v3423
  %v3440 = vadd.s32 %v3435, %v3437
  %vm3441 = vc.u32 %v3435, %v3437
  %v3442 = vadd.s32 %v3438, 1
  %v3443 = vsel %vm3441, %v3442, %v3438
  %v3444 = vadd.s32 %v3439, %v3443
  %v3445 = vadd.s32 %v3444, 536870912
  %v3446 = vshrl.u32 %v3445, 30
  %v3447 = vshll.u32 %v3446, 30
  %v3448 = vsub.s32 %v3444, %v3447
  %vm3449 = vcmp.lt.s32.totalorder %v3448, 0
  %v3450 = vsub.s32 0, %v3448
  %v3451 = vsel %vm3449, %v3450, %v3448
  %v3452 = vclz %v3451
  %v3453 = vsub.s32 %v3452, 2
  %vm3454 = vcmp.gt.s32.totalorder 0, %v3453
  %v3455 = vsel %vm3454, 0, %v3453
  %v3456 = vsub.s32 32, %v3455
  %v3457 = vshll.u32 %v3448, %v3455
  %v3458 = vshrl.u32 %v3440, %v3456
  %v3459 = vor.u32 %v3457, %v3458
  %v3460 = vsub.s32 4294967266, %v3455
  %v3461 = vadd.s32 %v3460, 127
  %v3462 = vshll.u32 %v3461, 23
  %v3463 = vor.u32 4788187, %v3462
  %v3464 = vand.u32 2147483647, %v3463
  %v3466 = vcvt.s32.f32 %v3459
  %v3467 = vmul.f32 %v3466, %v3464
  %v3468 = vxor.u32 %v3467, 2147483648
  %v3469 = vsel %vm3386, %v3468, %v3467
  %v3470 = vsub.s32 4, %v3446
  %v3471 = vsel %vm3386, %v3470, %v3446
  %v3472 = vsel %vm3385, %v634, %v3469
  %v3473 = vsel %vm3385, 0, %v3471
  %v3474 = vcosq.f32.pop %v3472
  %v3475 = vsinq.f32.pop %v3472
  %vm3476 = vweird.f32 %v634
  %v3477 = vadd.s32 %v3473, 3
  %v3478 = vand.u32 %v3477, 3
  %vm3479 = vcmp.lt.s32.totalorder %v3478, 2
  %vm3480 = vcmp.eq.s32.totalorder %v3478, 0
  %v3481 = vxor.u32 %v3475, 2147483648
  %v3482 = vsel %vm3480, %v3474, %v3481
  %vm3483 = vcmp.eq.s32.totalorder %v3478, 2
  %v3484 = vxor.u32 %v3474, 2147483648
  %v3485 = vsel %vm3483, %v3484, %v3475
  %v3486 = vsel %vm3479, %v3482, %v3485
  %v3487 = vsel %vm3476, nan, %v3486
  %v3488 = vand.u32 2147483647, %v635
  %vm3489 = vcmp.le.f32.partialorder %v3488, 0.7853982
  %vm3490 = vcmp.lt.s32.totalorder %v635, 0
  %v3491 = vand.u32 %v635, 2139095040
  %v3492 = vshrl.u32 %v3491, 23
  %v3493 = vsub.s32 %v3492, 127
  %v3494 = vand.u32 2147483647, %v635
  %v3495 = vand.u32 %v3494, 8388607
  %v3496 = vor.u32 %v3495, 8388608
  %v3497 = vsub.s32 0, %v3496
  %v3498 = vadd.s32 %v3493, 1
  %vm3499 = vcmp.gt.s32.totalorder %v3498, 0
  %v3500 = vsel %vm3499, %v3498, 0
  %v3501 = vshrl.u32 %v3500, 5
  %v3502 = vand.u32 %v3500, 31
  %v3503 = vsub.s32 32, %v3502
  %v3504 = vshrl.u32 683565275, %v3503
  %v3505 = vshll.u32 683565275, %v3502
  %v3506 = vshrl.u32 2475754826, %v3503
  %v3507 = vor.u32 %v3505, %v3506
  %v3508 = vshll.u32 2475754826, %v3502
  %v3509 = vshrl.u32 2131351028, %v3503
  %v3510 = vor.u32 %v3508, %v3509
  %v3511 = vshll.u32 2131351028, %v3502
  %v3512 = vshrl.u32 2102212464, %v3503
  %v3513 = vor.u32 %v3511, %v3512
  %v3514 = vshll.u32 2102212464, %v3502
  %v3515 = vshrl.u32 920167782, %v3503
  %v3516 = vor.u32 %v3514, %v3515
  %v3517 = vshll.u32 920167782, %v3502
  %v3518 = vshrl.u32 1326507024, %v3503
  %v3519 = vor.u32 %v3517, %v3518
  %vm3520 = vcmp.lt.s32.totalorder %v3501, 1
  %vm3521 = vcmp.lt.s32.totalorder %v3501, 2
  %vm3522 = vcmp.lt.s32.totalorder %v3501, 3
  %vm3523 = vcmp.lt.s32.totalorder %v3501, 4
  %v3524 = vsel %vm3520, %v3504, %v3507
  %v3525 = vsel %vm3523, %v3513, 2102212464
  %v3526 = vsel %vm3522, %v3510, %v3525
  %v3527 = vsel %vm3521, %v3524, %v3526
  %v3528 = vsel %vm3520, %v3507, %v3510
  %v3529 = vsel %vm3523, %v3516, 920167782
  %v3530 = vsel %vm3522, %v3513, %v3529
  %v3531 = vsel %vm3521, %v3528, %v3530
  %v3532 = vsel %vm3520, %v3510, %v3513
  %v3533 = vsel %vm3523, %v3519, 1326507024
  %v3534 = vsel %vm3522, %v3516, %v3533
  %v3535 = vsel %vm3521, %v3532, %v3534
  %v3536 = vshll.u32 %v3496, 8
  %v3537 = vmul.u32.u64.compose %v3536, %v3535
  %v3538 = vextract.low.u32 %v3537
  %v3539 = vextract.high.u32 %v3537
  %v3540 = vmul.u32.u64.compose %v3536, %v3531
  %v3541 = vextract.low.u32 %v3540
  %v3542 = vextract.high.u32 %v3540
  %v3543 = vmul.u32 %v3536, %v3527
  %v3544 = vadd.s32 %v3539, %v3541
  %vm3545 = vc.u32 %v3539, %v3541
  %v3546 = vadd.s32 %v3542, 1
  %v3547 = vsel %vm3545, %v3546, %v3542
  %v3548 = vadd.s32 %v3543, %v3547
  %v3549 = vadd.s32 %v3548, 536870912
  %v3550 = vshrl.u32 %v3549, 30
  %v3551 = vshll.u32 %v3550, 30
  %v3552 = vsub.s32 %v3548, %v3551
  %vm3553 = vcmp.lt.s32.totalorder %v3552, 0
  %v3554 = vsub.s32 0, %v3552
  %v3555 = vsel %vm3553, %v3554, %v3552
  %v3556 = vclz %v3555
  %v3557 = vsub.s32 %v3556, 2
  %vm3558 = vcmp.gt.s32.totalorder 0, %v3557
  %v3559 = vsel %vm3558, 0, %v3557
  %v3560 = vsub.s32 32, %v3559
  %v3561 = vshll.u32 %v3552, %v3559
  %v3562 = vshrl.u32 %v3544, %v3560
  %v3563 = vor.u32 %v3561, %v3562
  %v3564 = vsub.s32 4294967266, %v3559
  %v3565 = vadd.s32 %v3564, 127
  %v3566 = vshll.u32 %v3565, 23
  %v3567 = vor.u32 4788187, %v3566
  %v3568 = vand.u32 2147483647, %v3567
  %v3570 = vcvt.s32.f32 %v3563
  %v3571 = vmul.f32 %v3570, %v3568
  %v3572 = vxor.u32 %v3571, 2147483648
  %v3573 = vsel %vm3490, %v3572, %v3571
  %v3574 = vsub.s32 4, %v3550
  %v3575 = vsel %vm3490, %v3574, %v3550
  %v3576 = vsel %vm3489, %v635, %v3573
  %v3577 = vsel %vm3489, 0, %v3575
  %v3578 = vcosq.f32.pop %v3576
  %v3579 = vsinq.f32.pop %v3576
  %vm3580 = vweird.f32 %v635
  %v3581 = vadd.s32 %v3577, 3
  %v3582 = vand.u32 %v3581, 3
  %vm3583 = vcmp.lt.s32.totalorder %v3582, 2
  %vm3584 = vcmp.eq.s32.totalorder %v3582, 0
  %v3585 = vxor.u32 %v3579, 2147483648
  %v3586 = vsel %vm3584, %v3578, %v3585
  %vm3587 = vcmp.eq.s32.totalorder %v3582, 2
  %v3588 = vxor.u32 %v3578, 2147483648
  %v3589 = vsel %vm3587, %v3588, %v3579
  %v3590 = vsel %vm3583, %v3586, %v3589
  %v3591 = vsel %vm3580, nan, %v3590
  %v3592 = vand.u32 2147483647, %v636
  %vm3593 = vcmp.le.f32.partialorder %v3592, 0.7853982
  %vm3594 = vcmp.lt.s32.totalorder %v636, 0
  %v3595 = vand.u32 %v636, 2139095040
  %v3596 = vshrl.u32 %v3595, 23
  %v3597 = vsub.s32 %v3596, 127
  %v3598 = vand.u32 2147483647, %v636
  %v3599 = vand.u32 %v3598, 8388607
  %v3600 = vor.u32 %v3599, 8388608
  %v3601 = vsub.s32 0, %v3600
  %v3602 = vadd.s32 %v3597, 1
  %vm3603 = vcmp.gt.s32.totalorder %v3602, 0
  %v3604 = vsel %vm3603, %v3602, 0
  %v3605 = vshrl.u32 %v3604, 5
  %v3606 = vand.u32 %v3604, 31
  %v3607 = vsub.s32 32, %v3606
  %v3608 = vshrl.u32 683565275, %v3607
  %v3609 = vshll.u32 683565275, %v3606
  %v3610 = vshrl.u32 2475754826, %v3607
  %v3611 = vor.u32 %v3609, %v3610
  %v3612 = vshll.u32 2475754826, %v3606
  %v3613 = vshrl.u32 2131351028, %v3607
  %v3614 = vor.u32 %v3612, %v3613
  %v3615 = vshll.u32 2131351028, %v3606
  %v3616 = vshrl.u32 2102212464, %v3607
  %v3617 = vor.u32 %v3615, %v3616
  %v3618 = vshll.u32 2102212464, %v3606
  %v3619 = vshrl.u32 920167782, %v3607
  %v3620 = vor.u32 %v3618, %v3619
  %v3621 = vshll.u32 920167782, %v3606
  %v3622 = vshrl.u32 1326507024, %v3607
  %v3623 = vor.u32 %v3621, %v3622
  %vm3624 = vcmp.lt.s32.totalorder %v3605, 1
  %vm3625 = vcmp.lt.s32.totalorder %v3605, 2
  %vm3626 = vcmp.lt.s32.totalorder %v3605, 3
  %vm3627 = vcmp.lt.s32.totalorder %v3605, 4
  %v3628 = vsel %vm3624, %v3608, %v3611
  %v3629 = vsel %vm3627, %v3617, 2102212464
  %v3630 = vsel %vm3626, %v3614, %v3629
  %v3631 = vsel %vm3625, %v3628, %v3630
  %v3632 = vsel %vm3624, %v3611, %v3614
  %v3633 = vsel %vm3627, %v3620, 920167782
  %v3634 = vsel %vm3626, %v3617, %v3633
  %v3635 = vsel %vm3625, %v3632, %v3634
  %v3636 = vsel %vm3624, %v3614, %v3617
  %v3637 = vsel %vm3627, %v3623, 1326507024
  %v3638 = vsel %vm3626, %v3620, %v3637
  %v3639 = vsel %vm3625, %v3636, %v3638
  %v3640 = vshll.u32 %v3600, 8
  %v3641 = vmul.u32.u64.compose %v3640, %v3639
  %v3642 = vextract.low.u32 %v3641
  %v3643 = vextract.high.u32 %v3641
  %v3644 = vmul.u32.u64.compose %v3640, %v3635
  %v3645 = vextract.low.u32 %v3644
  %v3646 = vextract.high.u32 %v3644
  %v3647 = vmul.u32 %v3640, %v3631
  %v3648 = vadd.s32 %v3643, %v3645
  %vm3649 = vc.u32 %v3643, %v3645
  %v3650 = vadd.s32 %v3646, 1
  %v3651 = vsel %vm3649, %v3650, %v3646
  %v3652 = vadd.s32 %v3647, %v3651
  %v3653 = vadd.s32 %v3652, 536870912
  %v3654 = vshrl.u32 %v3653, 30
  %v3655 = vshll.u32 %v3654, 30
  %v3656 = vsub.s32 %v3652, %v3655
  %vm3657 = vcmp.lt.s32.totalorder %v3656, 0
  %v3658 = vsub.s32 0, %v3656
  %v3659 = vsel %vm3657, %v3658, %v3656
  %v3660 = vclz %v3659
  %v3661 = vsub.s32 %v3660, 2
  %vm3662 = vcmp.gt.s32.totalorder 0, %v3661
  %v3663 = vsel %vm3662, 0, %v3661
  %v3664 = vsub.s32 32, %v3663
  %v3665 = vshll.u32 %v3656, %v3663
  %v3666 = vshrl.u32 %v3648, %v3664
  %v3667 = vor.u32 %v3665, %v3666
  %v3668 = vsub.s32 4294967266, %v3663
  %v3669 = vadd.s32 %v3668, 127
  %v3670 = vshll.u32 %v3669, 23
  %v3671 = vor.u32 4788187, %v3670
  %v3672 = vand.u32 2147483647, %v3671
  %v3674 = vcvt.s32.f32 %v3667
  %v3675 = vmul.f32 %v3674, %v3672
  %v3676 = vxor.u32 %v3675, 2147483648
  %v3677 = vsel %vm3594, %v3676, %v3675
  %v3678 = vsub.s32 4, %v3654
  %v3679 = vsel %vm3594, %v3678, %v3654
  %v3680 = vsel %vm3593, %v636, %v3677
  %v3681 = vsel %vm3593, 0, %v3679
  %v3682 = vcosq.f32.pop %v3680
  %v3683 = vsinq.f32.pop %v3680
  %vm3684 = vweird.f32 %v636
  %v3685 = vadd.s32 %v3681, 3
  %v3686 = vand.u32 %v3685, 3
  %vm3687 = vcmp.lt.s32.totalorder %v3686, 2
  %vm3688 = vcmp.eq.s32.totalorder %v3686, 0
  %v3689 = vxor.u32 %v3683, 2147483648
  %v3690 = vsel %vm3688, %v3682, %v3689
  %vm3691 = vcmp.eq.s32.totalorder %v3686, 2
  %v3692 = vxor.u32 %v3682, 2147483648
  %v3693 = vsel %vm3691, %v3692, %v3683
  %v3694 = vsel %vm3687, %v3690, %v3693
  %v3695 = vsel %vm3684, nan, %v3694
  %v3696 = vand.u32 2147483647, %v637
  %vm3697 = vcmp.le.f32.partialorder %v3696, 0.7853982
  %vm3698 = vcmp.lt.s32.totalorder %v637, 0
  %v3699 = vand.u32 %v637, 2139095040
  %v3700 = vshrl.u32 %v3699, 23
  %v3701 = vsub.s32 %v3700, 127
  %v3702 = vand.u32 2147483647, %v637
  %v3703 = vand.u32 %v3702, 8388607
  %v3704 = vor.u32 %v3703, 8388608
  %v3705 = vsub.s32 0, %v3704
  %v3706 = vadd.s32 %v3701, 1
  %vm3707 = vcmp.gt.s32.totalorder %v3706, 0
  %v3708 = vsel %vm3707, %v3706, 0
  %v3709 = vshrl.u32 %v3708, 5
  %v3710 = vand.u32 %v3708, 31
  %v3711 = vsub.s32 32, %v3710
  %v3712 = vshrl.u32 683565275, %v3711
  %v3713 = vshll.u32 683565275, %v3710
  %v3714 = vshrl.u32 2475754826, %v3711
  %v3715 = vor.u32 %v3713, %v3714
  %v3716 = vshll.u32 2475754826, %v3710
  %v3717 = vshrl.u32 2131351028, %v3711
  %v3718 = vor.u32 %v3716, %v3717
  %v3719 = vshll.u32 2131351028, %v3710
  %v3720 = vshrl.u32 2102212464, %v3711
  %v3721 = vor.u32 %v3719, %v3720
  %v3722 = vshll.u32 2102212464, %v3710
  %v3723 = vshrl.u32 920167782, %v3711
  %v3724 = vor.u32 %v3722, %v3723
  %v3725 = vshll.u32 920167782, %v3710
  %v3726 = vshrl.u32 1326507024, %v3711
  %v3727 = vor.u32 %v3725, %v3726
  %vm3728 = vcmp.lt.s32.totalorder %v3709, 1
  %vm3729 = vcmp.lt.s32.totalorder %v3709, 2
  %vm3730 = vcmp.lt.s32.totalorder %v3709, 3
  %vm3731 = vcmp.lt.s32.totalorder %v3709, 4
  %v3732 = vsel %vm3728, %v3712, %v3715
  %v3733 = vsel %vm3731, %v3721, 2102212464
  %v3734 = vsel %vm3730, %v3718, %v3733
  %v3735 = vsel %vm3729, %v3732, %v3734
  %v3736 = vsel %vm3728, %v3715, %v3718
  %v3737 = vsel %vm3731, %v3724, 920167782
  %v3738 = vsel %vm3730, %v3721, %v3737
  %v3739 = vsel %vm3729, %v3736, %v3738
  %v3740 = vsel %vm3728, %v3718, %v3721
  %v3741 = vsel %vm3731, %v3727, 1326507024
  %v3742 = vsel %vm3730, %v3724, %v3741
  %v3743 = vsel %vm3729, %v3740, %v3742
  %v3744 = vshll.u32 %v3704, 8
  %v3745 = vmul.u32.u64.compose %v3744, %v3743
  %v3746 = vextract.low.u32 %v3745
  %v3747 = vextract.high.u32 %v3745
  %v3748 = vmul.u32.u64.compose %v3744, %v3739
  %v3749 = vextract.low.u32 %v3748
  %v3750 = vextract.high.u32 %v3748
  %v3751 = vmul.u32 %v3744, %v3735
  %v3752 = vadd.s32 %v3747, %v3749
  %vm3753 = vc.u32 %v3747, %v3749
  %v3754 = vadd.s32 %v3750, 1
  %v3755 = vsel %vm3753, %v3754, %v3750
  %v3756 = vadd.s32 %v3751, %v3755
  %v3757 = vadd.s32 %v3756, 536870912
  %v3758 = vshrl.u32 %v3757, 30
  %v3759 = vshll.u32 %v3758, 30
  %v3760 = vsub.s32 %v3756, %v3759
  %vm3761 = vcmp.lt.s32.totalorder %v3760, 0
  %v3762 = vsub.s32 0, %v3760
  %v3763 = vsel %vm3761, %v3762, %v3760
  %v3764 = vclz %v3763
  %v3765 = vsub.s32 %v3764, 2
  %vm3766 = vcmp.gt.s32.totalorder 0, %v3765
  %v3767 = vsel %vm3766, 0, %v3765
  %v3768 = vsub.s32 32, %v3767
  %v3769 = vshll.u32 %v3760, %v3767
  %v3770 = vshrl.u32 %v3752, %v3768
  %v3771 = vor.u32 %v3769, %v3770
  %v3772 = vsub.s32 4294967266, %v3767
  %v3773 = vadd.s32 %v3772, 127
  %v3774 = vshll.u32 %v3773, 23
  %v3775 = vor.u32 4788187, %v3774
  %v3776 = vand.u32 2147483647, %v3775
  %v3778 = vcvt.s32.f32 %v3771
  %v3779 = vmul.f32 %v3778, %v3776
  %v3780 = vxor.u32 %v3779, 2147483648
  %v3781 = vsel %vm3698, %v3780, %v3779
  %v3782 = vsub.s32 4, %v3758
  %v3783 = vsel %vm3698, %v3782, %v3758
  %v3784 = vsel %vm3697, %v637, %v3781
  %v3785 = vsel %vm3697, 0, %v3783
  %v3786 = vcosq.f32.pop %v3784
  %v3787 = vsinq.f32.pop %v3784
  %vm3788 = vweird.f32 %v637
  %v3789 = vadd.s32 %v3785, 3
  %v3790 = vand.u32 %v3789, 3
  %vm3791 = vcmp.lt.s32.totalorder %v3790, 2
  %vm3792 = vcmp.eq.s32.totalorder %v3790, 0
  %v3793 = vxor.u32 %v3787, 2147483648
  %v3794 = vsel %vm3792, %v3786, %v3793
  %vm3795 = vcmp.eq.s32.totalorder %v3790, 2
  %v3796 = vxor.u32 %v3786, 2147483648
  %v3797 = vsel %vm3795, %v3796, %v3787
  %v3798 = vsel %vm3791, %v3794, %v3797
  %v3799 = vsel %vm3788, nan, %v3798
  %v3800 = vand.u32 2147483647, %v638
  %vm3801 = vcmp.le.f32.partialorder %v3800, 0.7853982
  %vm3802 = vcmp.lt.s32.totalorder %v638, 0
  %v3803 = vand.u32 %v638, 2139095040
  %v3804 = vshrl.u32 %v3803, 23
  %v3805 = vsub.s32 %v3804, 127
  %v3806 = vand.u32 2147483647, %v638
  %v3807 = vand.u32 %v3806, 8388607
  %v3808 = vor.u32 %v3807, 8388608
  %v3809 = vsub.s32 0, %v3808
  %v3810 = vadd.s32 %v3805, 1
  %vm3811 = vcmp.gt.s32.totalorder %v3810, 0
  %v3812 = vsel %vm3811, %v3810, 0
  %v3813 = vshrl.u32 %v3812, 5
  %v3814 = vand.u32 %v3812, 31
  %v3815 = vsub.s32 32, %v3814
  %v3816 = vshrl.u32 683565275, %v3815
  %v3817 = vshll.u32 683565275, %v3814
  %v3818 = vshrl.u32 2475754826, %v3815
  %v3819 = vor.u32 %v3817, %v3818
  %v3820 = vshll.u32 2475754826, %v3814
  %v3821 = vshrl.u32 2131351028, %v3815
  %v3822 = vor.u32 %v3820, %v3821
  %v3823 = vshll.u32 2131351028, %v3814
  %v3824 = vshrl.u32 2102212464, %v3815
  %v3825 = vor.u32 %v3823, %v3824
  %v3826 = vshll.u32 2102212464, %v3814
  %v3827 = vshrl.u32 920167782, %v3815
  %v3828 = vor.u32 %v3826, %v3827
  %v3829 = vshll.u32 920167782, %v3814
  %v3830 = vshrl.u32 1326507024, %v3815
  %v3831 = vor.u32 %v3829, %v3830
  %vm3832 = vcmp.lt.s32.totalorder %v3813, 1
  %vm3833 = vcmp.lt.s32.totalorder %v3813, 2
  %vm3834 = vcmp.lt.s32.totalorder %v3813, 3
  %vm3835 = vcmp.lt.s32.totalorder %v3813, 4
  %v3836 = vsel %vm3832, %v3816, %v3819
  %v3837 = vsel %vm3835, %v3825, 2102212464
  %v3838 = vsel %vm3834, %v3822, %v3837
  %v3839 = vsel %vm3833, %v3836, %v3838
  %v3840 = vsel %vm3832, %v3819, %v3822
  %v3841 = vsel %vm3835, %v3828, 920167782
  %v3842 = vsel %vm3834, %v3825, %v3841
  %v3843 = vsel %vm3833, %v3840, %v3842
  %v3844 = vsel %vm3832, %v3822, %v3825
  %v3845 = vsel %vm3835, %v3831, 1326507024
  %v3846 = vsel %vm3834, %v3828, %v3845
  %v3847 = vsel %vm3833, %v3844, %v3846
  %v3848 = vshll.u32 %v3808, 8
  %v3849 = vmul.u32.u64.compose %v3848, %v3847
  %v3850 = vextract.low.u32 %v3849
  %v3851 = vextract.high.u32 %v3849
  %v3852 = vmul.u32.u64.compose %v3848, %v3843
  %v3853 = vextract.low.u32 %v3852
  %v3854 = vextract.high.u32 %v3852
  %v3855 = vmul.u32 %v3848, %v3839
  %v3856 = vadd.s32 %v3851, %v3853
  %vm3857 = vc.u32 %v3851, %v3853
  %v3858 = vadd.s32 %v3854, 1
  %v3859 = vsel %vm3857, %v3858, %v3854
  %v3860 = vadd.s32 %v3855, %v3859
  %v3861 = vadd.s32 %v3860, 536870912
  %v3862 = vshrl.u32 %v3861, 30
  %v3863 = vshll.u32 %v3862, 30
  %v3864 = vsub.s32 %v3860, %v3863
  %vm3865 = vcmp.lt.s32.totalorder %v3864, 0
  %v3866 = vsub.s32 0, %v3864
  %v3867 = vsel %vm3865, %v3866, %v3864
  %v3868 = vclz %v3867
  %v3869 = vsub.s32 %v3868, 2
  %vm3870 = vcmp.gt.s32.totalorder 0, %v3869
  %v3871 = vsel %vm3870, 0, %v3869
  %v3872 = vsub.s32 32, %v3871
  %v3873 = vshll.u32 %v3864, %v3871
  %v3874 = vshrl.u32 %v3856, %v3872
  %v3875 = vor.u32 %v3873, %v3874
  %v3876 = vsub.s32 4294967266, %v3871
  %v3877 = vadd.s32 %v3876, 127
  %v3878 = vshll.u32 %v3877, 23
  %v3879 = vor.u32 4788187, %v3878
  %v3880 = vand.u32 2147483647, %v3879
  %v3882 = vcvt.s32.f32 %v3875
  %v3883 = vmul.f32 %v3882, %v3880
  %v3884 = vxor.u32 %v3883, 2147483648
  %v3885 = vsel %vm3802, %v3884, %v3883
  %v3886 = vsub.s32 4, %v3862
  %v3887 = vsel %vm3802, %v3886, %v3862
  %v3888 = vsel %vm3801, %v638, %v3885
  %v3889 = vsel %vm3801, 0, %v3887
  %v3890 = vcosq.f32.pop %v3888
  %v3891 = vsinq.f32.pop %v3888
  %vm3892 = vweird.f32 %v638
  %v3893 = vadd.s32 %v3889, 3
  %v3894 = vand.u32 %v3893, 3
  %vm3895 = vcmp.lt.s32.totalorder %v3894, 2
  %vm3896 = vcmp.eq.s32.totalorder %v3894, 0
  %v3897 = vxor.u32 %v3891, 2147483648
  %v3898 = vsel %vm3896, %v3890, %v3897
  %vm3899 = vcmp.eq.s32.totalorder %v3894, 2
  %v3900 = vxor.u32 %v3890, 2147483648
  %v3901 = vsel %vm3899, %v3900, %v3891
  %v3902 = vsel %vm3895, %v3898, %v3901
  %v3903 = vsel %vm3892, nan, %v3902
  %v3904 = vand.u32 2147483647, %v639
  %vm3905 = vcmp.le.f32.partialorder %v3904, 0.7853982
  %vm3906 = vcmp.lt.s32.totalorder %v639, 0
  %v3907 = vand.u32 %v639, 2139095040
  %v3908 = vshrl.u32 %v3907, 23
  %v3909 = vsub.s32 %v3908, 127
  %v3910 = vand.u32 2147483647, %v639
  %v3911 = vand.u32 %v3910, 8388607
  %v3912 = vor.u32 %v3911, 8388608
  %v3913 = vsub.s32 0, %v3912
  %v3914 = vadd.s32 %v3909, 1
  %vm3915 = vcmp.gt.s32.totalorder %v3914, 0
  %v3916 = vsel %vm3915, %v3914, 0
  %v3917 = vshrl.u32 %v3916, 5
  %v3918 = vand.u32 %v3916, 31
  %v3919 = vsub.s32 32, %v3918
  %v3920 = vshrl.u32 683565275, %v3919
  %v3921 = vshll.u32 683565275, %v3918
  %v3922 = vshrl.u32 2475754826, %v3919
  %v3923 = vor.u32 %v3921, %v3922
  %v3924 = vshll.u32 2475754826, %v3918
  %v3925 = vshrl.u32 2131351028, %v3919
  %v3926 = vor.u32 %v3924, %v3925
  %v3927 = vshll.u32 2131351028, %v3918
  %v3928 = vshrl.u32 2102212464, %v3919
  %v3929 = vor.u32 %v3927, %v3928
  %v3930 = vshll.u32 2102212464, %v3918
  %v3931 = vshrl.u32 920167782, %v3919
  %v3932 = vor.u32 %v3930, %v3931
  %v3933 = vshll.u32 920167782, %v3918
  %v3934 = vshrl.u32 1326507024, %v3919
  %v3935 = vor.u32 %v3933, %v3934
  %vm3936 = vcmp.lt.s32.totalorder %v3917, 1
  %vm3937 = vcmp.lt.s32.totalorder %v3917, 2
  %vm3938 = vcmp.lt.s32.totalorder %v3917, 3
  %vm3939 = vcmp.lt.s32.totalorder %v3917, 4
  %v3940 = vsel %vm3936, %v3920, %v3923
  %v3941 = vsel %vm3939, %v3929, 2102212464
  %v3942 = vsel %vm3938, %v3926, %v3941
  %v3943 = vsel %vm3937, %v3940, %v3942
  %v3944 = vsel %vm3936, %v3923, %v3926
  %v3945 = vsel %vm3939, %v3932, 920167782
  %v3946 = vsel %vm3938, %v3929, %v3945
  %v3947 = vsel %vm3937, %v3944, %v3946
  %v3948 = vsel %vm3936, %v3926, %v3929
  %v3949 = vsel %vm3939, %v3935, 1326507024
  %v3950 = vsel %vm3938, %v3932, %v3949
  %v3951 = vsel %vm3937, %v3948, %v3950
  %v3952 = vshll.u32 %v3912, 8
  %v3953 = vmul.u32.u64.compose %v3952, %v3951
  %v3954 = vextract.low.u32 %v3953
  %v3955 = vextract.high.u32 %v3953
  %v3956 = vmul.u32.u64.compose %v3952, %v3947
  %v3957 = vextract.low.u32 %v3956
  %v3958 = vextract.high.u32 %v3956
  %v3959 = vmul.u32 %v3952, %v3943
  %v3960 = vadd.s32 %v3955, %v3957
  %vm3961 = vc.u32 %v3955, %v3957
  %v3962 = vadd.s32 %v3958, 1
  %v3963 = vsel %vm3961, %v3962, %v3958
  %v3964 = vadd.s32 %v3959, %v3963
  %v3965 = vadd.s32 %v3964, 536870912
  %v3966 = vshrl.u32 %v3965, 30
  %v3967 = vshll.u32 %v3966, 30
  %v3968 = vsub.s32 %v3964, %v3967
  %vm3969 = vcmp.lt.s32.totalorder %v3968, 0
  %v3970 = vsub.s32 0, %v3968
  %v3971 = vsel %vm3969, %v3970, %v3968
  %v3972 = vclz %v3971
  %v3973 = vsub.s32 %v3972, 2
  %vm3974 = vcmp.gt.s32.totalorder 0, %v3973
  %v3975 = vsel %vm3974, 0, %v3973
  %v3976 = vsub.s32 32, %v3975
  %v3977 = vshll.u32 %v3968, %v3975
  %v3978 = vshrl.u32 %v3960, %v3976
  %v3979 = vor.u32 %v3977, %v3978
  %v3980 = vsub.s32 4294967266, %v3975
  %v3981 = vadd.s32 %v3980, 127
  %v3982 = vshll.u32 %v3981, 23
  %v3983 = vor.u32 4788187, %v3982
  %v3984 = vand.u32 2147483647, %v3983
  %v3986 = vcvt.s32.f32 %v3979
  %v3987 = vmul.f32 %v3986, %v3984
  %v3988 = vxor.u32 %v3987, 2147483648
  %v3989 = vsel %vm3906, %v3988, %v3987
  %v3990 = vsub.s32 4, %v3966
  %v3991 = vsel %vm3906, %v3990, %v3966
  %v3992 = vsel %vm3905, %v639, %v3989
  %v3993 = vsel %vm3905, 0, %v3991
  %v3994 = vcosq.f32.pop %v3992
  %v3995 = vsinq.f32.pop %v3992
  %vm3996 = vweird.f32 %v639
  %v3997 = vadd.s32 %v3993, 3
  %v3998 = vand.u32 %v3997, 3
  %vm3999 = vcmp.lt.s32.totalorder %v3998, 2
  %vm4000 = vcmp.eq.s32.totalorder %v3998, 0
  %v4001 = vxor.u32 %v3995, 2147483648
  %v4002 = vsel %vm4000, %v3994, %v4001
  %vm4003 = vcmp.eq.s32.totalorder %v3998, 2
  %v4004 = vxor.u32 %v3994, 2147483648
  %v4005 = vsel %vm4003, %v4004, %v3995
  %v4006 = vsel %vm3999, %v4002, %v4005
  %v4007 = vsel %vm3996, nan, %v4006
  %v4008 = vand.u32 2147483647, %v640
  %vm4009 = vcmp.le.f32.partialorder %v4008, 0.7853982
  %vm4010 = vcmp.lt.s32.totalorder %v640, 0
  %v4011 = vand.u32 %v640, 2139095040
  %v4012 = vshrl.u32 %v4011, 23
  %v4013 = vsub.s32 %v4012, 127
  %v4014 = vand.u32 2147483647, %v640
  %v4015 = vand.u32 %v4014, 8388607
  %v4016 = vor.u32 %v4015, 8388608
  %v4017 = vsub.s32 0, %v4016
  %v4018 = vadd.s32 %v4013, 1
  %vm4019 = vcmp.gt.s32.totalorder %v4018, 0
  %v4020 = vsel %vm4019, %v4018, 0
  %v4021 = vshrl.u32 %v4020, 5
  %v4022 = vand.u32 %v4020, 31
  %v4023 = vsub.s32 32, %v4022
  %v4024 = vshrl.u32 683565275, %v4023
  %v4025 = vshll.u32 683565275, %v4022
  %v4026 = vshrl.u32 2475754826, %v4023
  %v4027 = vor.u32 %v4025, %v4026
  %v4028 = vshll.u32 2475754826, %v4022
  %v4029 = vshrl.u32 2131351028, %v4023
  %v4030 = vor.u32 %v4028, %v4029
  %v4031 = vshll.u32 2131351028, %v4022
  %v4032 = vshrl.u32 2102212464, %v4023
  %v4033 = vor.u32 %v4031, %v4032
  %v4034 = vshll.u32 2102212464, %v4022
  %v4035 = vshrl.u32 920167782, %v4023
  %v4036 = vor.u32 %v4034, %v4035
  %v4037 = vshll.u32 920167782, %v4022
  %v4038 = vshrl.u32 1326507024, %v4023
  %v4039 = vor.u32 %v4037, %v4038
  %vm4040 = vcmp.lt.s32.totalorder %v4021, 1
  %vm4041 = vcmp.lt.s32.totalorder %v4021, 2
  %vm4042 = vcmp.lt.s32.totalorder %v4021, 3
  %vm4043 = vcmp.lt.s32.totalorder %v4021, 4
  %v4044 = vsel %vm4040, %v4024, %v4027
  %v4045 = vsel %vm4043, %v4033, 2102212464
  %v4046 = vsel %vm4042, %v4030, %v4045
  %v4047 = vsel %vm4041, %v4044, %v4046
  %v4048 = vsel %vm4040, %v4027, %v4030
  %v4049 = vsel %vm4043, %v4036, 920167782
  %v4050 = vsel %vm4042, %v4033, %v4049
  %v4051 = vsel %vm4041, %v4048, %v4050
  %v4052 = vsel %vm4040, %v4030, %v4033
  %v4053 = vsel %vm4043, %v4039, 1326507024
  %v4054 = vsel %vm4042, %v4036, %v4053
  %v4055 = vsel %vm4041, %v4052, %v4054
  %v4056 = vshll.u32 %v4016, 8
  %v4057 = vmul.u32.u64.compose %v4056, %v4055
  %v4058 = vextract.low.u32 %v4057
  %v4059 = vextract.high.u32 %v4057
  %v4060 = vmul.u32.u64.compose %v4056, %v4051
  %v4061 = vextract.low.u32 %v4060
  %v4062 = vextract.high.u32 %v4060
  %v4063 = vmul.u32 %v4056, %v4047
  %v4064 = vadd.s32 %v4059, %v4061
  %vm4065 = vc.u32 %v4059, %v4061
  %v4066 = vadd.s32 %v4062, 1
  %v4067 = vsel %vm4065, %v4066, %v4062
  %v4068 = vadd.s32 %v4063, %v4067
  %v4069 = vadd.s32 %v4068, 536870912
  %v4070 = vshrl.u32 %v4069, 30
  %v4071 = vshll.u32 %v4070, 30
  %v4072 = vsub.s32 %v4068, %v4071
  %vm4073 = vcmp.lt.s32.totalorder %v4072, 0
  %v4074 = vsub.s32 0, %v4072
  %v4075 = vsel %vm4073, %v4074, %v4072
  %v4076 = vclz %v4075
  %v4077 = vsub.s32 %v4076, 2
  %vm4078 = vcmp.gt.s32.totalorder 0, %v4077
  %v4079 = vsel %vm4078, 0, %v4077
  %v4080 = vsub.s32 32, %v4079
  %v4081 = vshll.u32 %v4072, %v4079
  %v4082 = vshrl.u32 %v4064, %v4080
  %v4083 = vor.u32 %v4081, %v4082
  %v4084 = vsub.s32 4294967266, %v4079
  %v4085 = vadd.s32 %v4084, 127
  %v4086 = vshll.u32 %v4085, 23
  %v4087 = vor.u32 4788187, %v4086
  %v4088 = vand.u32 2147483647, %v4087
  %v4090 = vcvt.s32.f32 %v4083
  %v4091 = vmul.f32 %v4090, %v4088
  %v4092 = vxor.u32 %v4091, 2147483648
  %v4093 = vsel %vm4010, %v4092, %v4091
  %v4094 = vsub.s32 4, %v4070
  %v4095 = vsel %vm4010, %v4094, %v4070
  %v4096 = vsel %vm4009, %v640, %v4093
  %v4097 = vsel %vm4009, 0, %v4095
  %v4098 = vcosq.f32.pop %v4096
  %v4099 = vsinq.f32.pop %v4096
  %vm4100 = vweird.f32 %v640
  %v4101 = vadd.s32 %v4097, 3
  %v4102 = vand.u32 %v4101, 3
  %vm4103 = vcmp.lt.s32.totalorder %v4102, 2
  %vm4104 = vcmp.eq.s32.totalorder %v4102, 0
  %v4105 = vxor.u32 %v4099, 2147483648
  %v4106 = vsel %vm4104, %v4098, %v4105
  %vm4107 = vcmp.eq.s32.totalorder %v4102, 2
  %v4108 = vxor.u32 %v4098, 2147483648
  %v4109 = vsel %vm4107, %v4108, %v4099
  %v4110 = vsel %vm4103, %v4106, %v4109
  %v4111 = vsel %vm4100, nan, %v4110
  %v4112 = vand.u32 2147483647, %v641
  %vm4113 = vcmp.le.f32.partialorder %v4112, 0.7853982
  %vm4114 = vcmp.lt.s32.totalorder %v641, 0
  %v4115 = vand.u32 %v641, 2139095040
  %v4116 = vshrl.u32 %v4115, 23
  %v4117 = vsub.s32 %v4116, 127
  %v4118 = vand.u32 2147483647, %v641
  %v4119 = vand.u32 %v4118, 8388607
  %v4120 = vor.u32 %v4119, 8388608
  %v4121 = vsub.s32 0, %v4120
  %v4122 = vadd.s32 %v4117, 1
  %vm4123 = vcmp.gt.s32.totalorder %v4122, 0
  %v4124 = vsel %vm4123, %v4122, 0
  %v4125 = vshrl.u32 %v4124, 5
  %v4126 = vand.u32 %v4124, 31
  %v4127 = vsub.s32 32, %v4126
  %v4128 = vshrl.u32 683565275, %v4127
  %v4129 = vshll.u32 683565275, %v4126
  %v4130 = vshrl.u32 2475754826, %v4127
  %v4131 = vor.u32 %v4129, %v4130
  %v4132 = vshll.u32 2475754826, %v4126
  %v4133 = vshrl.u32 2131351028, %v4127
  %v4134 = vor.u32 %v4132, %v4133
  %v4135 = vshll.u32 2131351028, %v4126
  %v4136 = vshrl.u32 2102212464, %v4127
  %v4137 = vor.u32 %v4135, %v4136
  %v4138 = vshll.u32 2102212464, %v4126
  %v4139 = vshrl.u32 920167782, %v4127
  %v4140 = vor.u32 %v4138, %v4139
  %v4141 = vshll.u32 920167782, %v4126
  %v4142 = vshrl.u32 1326507024, %v4127
  %v4143 = vor.u32 %v4141, %v4142
  %vm4144 = vcmp.lt.s32.totalorder %v4125, 1
  %vm4145 = vcmp.lt.s32.totalorder %v4125, 2
  %vm4146 = vcmp.lt.s32.totalorder %v4125, 3
  %vm4147 = vcmp.lt.s32.totalorder %v4125, 4
  %v4148 = vsel %vm4144, %v4128, %v4131
  %v4149 = vsel %vm4147, %v4137, 2102212464
  %v4150 = vsel %vm4146, %v4134, %v4149
  %v4151 = vsel %vm4145, %v4148, %v4150
  %v4152 = vsel %vm4144, %v4131, %v4134
  %v4153 = vsel %vm4147, %v4140, 920167782
  %v4154 = vsel %vm4146, %v4137, %v4153
  %v4155 = vsel %vm4145, %v4152, %v4154
  %v4156 = vsel %vm4144, %v4134, %v4137
  %v4157 = vsel %vm4147, %v4143, 1326507024
  %v4158 = vsel %vm4146, %v4140, %v4157
  %v4159 = vsel %vm4145, %v4156, %v4158
  %v4160 = vshll.u32 %v4120, 8
  %v4161 = vmul.u32.u64.compose %v4160, %v4159
  %v4162 = vextract.low.u32 %v4161
  %v4163 = vextract.high.u32 %v4161
  %v4164 = vmul.u32.u64.compose %v4160, %v4155
  %v4165 = vextract.low.u32 %v4164
  %v4166 = vextract.high.u32 %v4164
  %v4167 = vmul.u32 %v4160, %v4151
  %v4168 = vadd.s32 %v4163, %v4165
  %vm4169 = vc.u32 %v4163, %v4165
  %v4170 = vadd.s32 %v4166, 1
  %v4171 = vsel %vm4169, %v4170, %v4166
  %v4172 = vadd.s32 %v4167, %v4171
  %v4173 = vadd.s32 %v4172, 536870912
  %v4174 = vshrl.u32 %v4173, 30
  %v4175 = vshll.u32 %v4174, 30
  %v4176 = vsub.s32 %v4172, %v4175
  %vm4177 = vcmp.lt.s32.totalorder %v4176, 0
  %v4178 = vsub.s32 0, %v4176
  %v4179 = vsel %vm4177, %v4178, %v4176
  %v4180 = vclz %v4179
  %v4181 = vsub.s32 %v4180, 2
  %vm4182 = vcmp.gt.s32.totalorder 0, %v4181
  %v4183 = vsel %vm4182, 0, %v4181
  %v4184 = vsub.s32 32, %v4183
  %v4185 = vshll.u32 %v4176, %v4183
  %v4186 = vshrl.u32 %v4168, %v4184
  %v4187 = vor.u32 %v4185, %v4186
  %v4188 = vsub.s32 4294967266, %v4183
  %v4189 = vadd.s32 %v4188, 127
  %v4190 = vshll.u32 %v4189, 23
  %v4191 = vor.u32 4788187, %v4190
  %v4192 = vand.u32 2147483647, %v4191
  %v4194 = vcvt.s32.f32 %v4187
  %v4195 = vmul.f32 %v4194, %v4192
  %v4196 = vxor.u32 %v4195, 2147483648
  %v4197 = vsel %vm4114, %v4196, %v4195
  %v4198 = vsub.s32 4, %v4174
  %v4199 = vsel %vm4114, %v4198, %v4174
  %v4200 = vsel %vm4113, %v641, %v4197
  %v4201 = vsel %vm4113, 0, %v4199
  %v4202 = vcosq.f32.pop %v4200
  %v4203 = vsinq.f32.pop %v4200
  %vm4204 = vweird.f32 %v641
  %v4205 = vadd.s32 %v4201, 3
  %v4206 = vand.u32 %v4205, 3
  %vm4207 = vcmp.lt.s32.totalorder %v4206, 2
  %vm4208 = vcmp.eq.s32.totalorder %v4206, 0
  %v4209 = vxor.u32 %v4203, 2147483648
  %v4210 = vsel %vm4208, %v4202, %v4209
  %vm4211 = vcmp.eq.s32.totalorder %v4206, 2
  %v4212 = vxor.u32 %v4202, 2147483648
  %v4213 = vsel %vm4211, %v4212, %v4203
  %v4214 = vsel %vm4207, %v4210, %v4213
  %v4215 = vsel %vm4204, nan, %v4214
  %v4216 = vand.u32 2147483647, %v642
  %vm4217 = vcmp.le.f32.partialorder %v4216, 0.7853982
  %vm4218 = vcmp.lt.s32.totalorder %v642, 0
  %v4219 = vand.u32 %v642, 2139095040
  %v4220 = vshrl.u32 %v4219, 23
  %v4221 = vsub.s32 %v4220, 127
  %v4222 = vand.u32 2147483647, %v642
  %v4223 = vand.u32 %v4222, 8388607
  %v4224 = vor.u32 %v4223, 8388608
  %v4225 = vsub.s32 0, %v4224
  %v4226 = vadd.s32 %v4221, 1
  %vm4227 = vcmp.gt.s32.totalorder %v4226, 0
  %v4228 = vsel %vm4227, %v4226, 0
  %v4229 = vshrl.u32 %v4228, 5
  %v4230 = vand.u32 %v4228, 31
  %v4231 = vsub.s32 32, %v4230
  %v4232 = vshrl.u32 683565275, %v4231
  %v4233 = vshll.u32 683565275, %v4230
  %v4234 = vshrl.u32 2475754826, %v4231
  %v4235 = vor.u32 %v4233, %v4234
  %v4236 = vshll.u32 2475754826, %v4230
  %v4237 = vshrl.u32 2131351028, %v4231
  %v4238 = vor.u32 %v4236, %v4237
  %v4239 = vshll.u32 2131351028, %v4230
  %v4240 = vshrl.u32 2102212464, %v4231
  %v4241 = vor.u32 %v4239, %v4240
  %v4242 = vshll.u32 2102212464, %v4230
  %v4243 = vshrl.u32 920167782, %v4231
  %v4244 = vor.u32 %v4242, %v4243
  %v4245 = vshll.u32 920167782, %v4230
  %v4246 = vshrl.u32 1326507024, %v4231
  %v4247 = vor.u32 %v4245, %v4246
  %vm4248 = vcmp.lt.s32.totalorder %v4229, 1
  %vm4249 = vcmp.lt.s32.totalorder %v4229, 2
  %vm4250 = vcmp.lt.s32.totalorder %v4229, 3
  %vm4251 = vcmp.lt.s32.totalorder %v4229, 4
  %v4252 = vsel %vm4248, %v4232, %v4235
  %v4253 = vsel %vm4251, %v4241, 2102212464
  %v4254 = vsel %vm4250, %v4238, %v4253
  %v4255 = vsel %vm4249, %v4252, %v4254
  %v4256 = vsel %vm4248, %v4235, %v4238
  %v4257 = vsel %vm4251, %v4244, 920167782
  %v4258 = vsel %vm4250, %v4241, %v4257
  %v4259 = vsel %vm4249, %v4256, %v4258
  %v4260 = vsel %vm4248, %v4238, %v4241
  %v4261 = vsel %vm4251, %v4247, 1326507024
  %v4262 = vsel %vm4250, %v4244, %v4261
  %v4263 = vsel %vm4249, %v4260, %v4262
  %v4264 = vshll.u32 %v4224, 8
  %v4265 = vmul.u32.u64.compose %v4264, %v4263
  %v4266 = vextract.low.u32 %v4265
  %v4267 = vextract.high.u32 %v4265
  %v4268 = vmul.u32.u64.compose %v4264, %v4259
  %v4269 = vextract.low.u32 %v4268
  %v4270 = vextract.high.u32 %v4268
  %v4271 = vmul.u32 %v4264, %v4255
  %v4272 = vadd.s32 %v4267, %v4269
  %vm4273 = vc.u32 %v4267, %v4269
  %v4274 = vadd.s32 %v4270, 1
  %v4275 = vsel %vm4273, %v4274, %v4270
  %v4276 = vadd.s32 %v4271, %v4275
  %v4277 = vadd.s32 %v4276, 536870912
  %v4278 = vshrl.u32 %v4277, 30
  %v4279 = vshll.u32 %v4278, 30
  %v4280 = vsub.s32 %v4276, %v4279
  %vm4281 = vcmp.lt.s32.totalorder %v4280, 0
  %v4282 = vsub.s32 0, %v4280
  %v4283 = vsel %vm4281, %v4282, %v4280
  %v4284 = vclz %v4283
  %v4285 = vsub.s32 %v4284, 2
  %vm4286 = vcmp.gt.s32.totalorder 0, %v4285
  %v4287 = vsel %vm4286, 0, %v4285
  %v4288 = vsub.s32 32, %v4287
  %v4289 = vshll.u32 %v4280, %v4287
  %v4290 = vshrl.u32 %v4272, %v4288
  %v4291 = vor.u32 %v4289, %v4290
  %v4292 = vsub.s32 4294967266, %v4287
  %v4293 = vadd.s32 %v4292, 127
  %v4294 = vshll.u32 %v4293, 23
  %v4295 = vor.u32 4788187, %v4294
  %v4296 = vand.u32 2147483647, %v4295
  %v4298 = vcvt.s32.f32 %v4291
  %v4299 = vmul.f32 %v4298, %v4296
  %v4300 = vxor.u32 %v4299, 2147483648
  %v4301 = vsel %vm4218, %v4300, %v4299
  %v4302 = vsub.s32 4, %v4278
  %v4303 = vsel %vm4218, %v4302, %v4278
  %v4304 = vsel %vm4217, %v642, %v4301
  %v4305 = vsel %vm4217, 0, %v4303
  %v4306 = vcosq.f32.pop %v4304
  %v4307 = vsinq.f32.pop %v4304
  %vm4308 = vweird.f32 %v642
  %v4309 = vadd.s32 %v4305, 3
  %v4310 = vand.u32 %v4309, 3
  %vm4311 = vcmp.lt.s32.totalorder %v4310, 2
  %vm4312 = vcmp.eq.s32.totalorder %v4310, 0
  %v4313 = vxor.u32 %v4307, 2147483648
  %v4314 = vsel %vm4312, %v4306, %v4313
  %vm4315 = vcmp.eq.s32.totalorder %v4310, 2
  %v4316 = vxor.u32 %v4306, 2147483648
  %v4317 = vsel %vm4315, %v4316, %v4307
  %v4318 = vsel %vm4311, %v4314, %v4317
  %v4319 = vsel %vm4308, nan, %v4318
  %v4320 = vand.u32 2147483647, %v643
  %vm4321 = vcmp.le.f32.partialorder %v4320, 0.7853982
  %vm4322 = vcmp.lt.s32.totalorder %v643, 0
  %v4323 = vand.u32 %v643, 2139095040
  %v4324 = vshrl.u32 %v4323, 23
  %v4325 = vsub.s32 %v4324, 127
  %v4326 = vand.u32 2147483647, %v643
  %v4327 = vand.u32 %v4326, 8388607
  %v4328 = vor.u32 %v4327, 8388608
  %v4329 = vsub.s32 0, %v4328
  %v4330 = vadd.s32 %v4325, 1
  %vm4331 = vcmp.gt.s32.totalorder %v4330, 0
  %v4332 = vsel %vm4331, %v4330, 0
  %v4333 = vshrl.u32 %v4332, 5
  %v4334 = vand.u32 %v4332, 31
  %v4335 = vsub.s32 32, %v4334
  %v4336 = vshrl.u32 683565275, %v4335
  %v4337 = vshll.u32 683565275, %v4334
  %v4338 = vshrl.u32 2475754826, %v4335
  %v4339 = vor.u32 %v4337, %v4338
  %v4340 = vshll.u32 2475754826, %v4334
  %v4341 = vshrl.u32 2131351028, %v4335
  %v4342 = vor.u32 %v4340, %v4341
  %v4343 = vshll.u32 2131351028, %v4334
  %v4344 = vshrl.u32 2102212464, %v4335
  %v4345 = vor.u32 %v4343, %v4344
  %v4346 = vshll.u32 2102212464, %v4334
  %v4347 = vshrl.u32 920167782, %v4335
  %v4348 = vor.u32 %v4346, %v4347
  %v4349 = vshll.u32 920167782, %v4334
  %v4350 = vshrl.u32 1326507024, %v4335
  %v4351 = vor.u32 %v4349, %v4350
  %vm4352 = vcmp.lt.s32.totalorder %v4333, 1
  %vm4353 = vcmp.lt.s32.totalorder %v4333, 2
  %vm4354 = vcmp.lt.s32.totalorder %v4333, 3
  %vm4355 = vcmp.lt.s32.totalorder %v4333, 4
  %v4356 = vsel %vm4352, %v4336, %v4339
  %v4357 = vsel %vm4355, %v4345, 2102212464
  %v4358 = vsel %vm4354, %v4342, %v4357
  %v4359 = vsel %vm4353, %v4356, %v4358
  %v4360 = vsel %vm4352, %v4339, %v4342
  %v4361 = vsel %vm4355, %v4348, 920167782
  %v4362 = vsel %vm4354, %v4345, %v4361
  %v4363 = vsel %vm4353, %v4360, %v4362
  %v4364 = vsel %vm4352, %v4342, %v4345
  %v4365 = vsel %vm4355, %v4351, 1326507024
  %v4366 = vsel %vm4354, %v4348, %v4365
  %v4367 = vsel %vm4353, %v4364, %v4366
  %v4368 = vshll.u32 %v4328, 8
  %v4369 = vmul.u32.u64.compose %v4368, %v4367
  %v4370 = vextract.low.u32 %v4369
  %v4371 = vextract.high.u32 %v4369
  %v4372 = vmul.u32.u64.compose %v4368, %v4363
  %v4373 = vextract.low.u32 %v4372
  %v4374 = vextract.high.u32 %v4372
  %v4375 = vmul.u32 %v4368, %v4359
  %v4376 = vadd.s32 %v4371, %v4373
  %vm4377 = vc.u32 %v4371, %v4373
  %v4378 = vadd.s32 %v4374, 1
  %v4379 = vsel %vm4377, %v4378, %v4374
  %v4380 = vadd.s32 %v4375, %v4379
  %v4381 = vadd.s32 %v4380, 536870912
  %v4382 = vshrl.u32 %v4381, 30
  %v4383 = vshll.u32 %v4382, 30
  %v4384 = vsub.s32 %v4380, %v4383
  %vm4385 = vcmp.lt.s32.totalorder %v4384, 0
  %v4386 = vsub.s32 0, %v4384
  %v4387 = vsel %vm4385, %v4386, %v4384
  %v4388 = vclz %v4387
  %v4389 = vsub.s32 %v4388, 2
  %vm4390 = vcmp.gt.s32.totalorder 0, %v4389
  %v4391 = vsel %vm4390, 0, %v4389
  %v4392 = vsub.s32 32, %v4391
  %v4393 = vshll.u32 %v4384, %v4391
  %v4394 = vshrl.u32 %v4376, %v4392
  %v4395 = vor.u32 %v4393, %v4394
  %v4396 = vsub.s32 4294967266, %v4391
  %v4397 = vadd.s32 %v4396, 127
  %v4398 = vshll.u32 %v4397, 23
  %v4399 = vor.u32 4788187, %v4398
  %v4400 = vand.u32 2147483647, %v4399
  %v4402 = vcvt.s32.f32 %v4395
  %v4403 = vmul.f32 %v4402, %v4400
  %v4404 = vxor.u32 %v4403, 2147483648
  %v4405 = vsel %vm4322, %v4404, %v4403
  %v4406 = vsub.s32 4, %v4382
  %v4407 = vsel %vm4322, %v4406, %v4382
  %v4408 = vsel %vm4321, %v643, %v4405
  %v4409 = vsel %vm4321, 0, %v4407
  %v4410 = vcosq.f32.pop %v4408
  %v4411 = vsinq.f32.pop %v4408
  %vm4412 = vweird.f32 %v643
  %v4413 = vadd.s32 %v4409, 3
  %v4414 = vand.u32 %v4413, 3
  %vm4415 = vcmp.lt.s32.totalorder %v4414, 2
  %vm4416 = vcmp.eq.s32.totalorder %v4414, 0
  %v4417 = vxor.u32 %v4411, 2147483648
  %v4418 = vsel %vm4416, %v4410, %v4417
  %vm4419 = vcmp.eq.s32.totalorder %v4414, 2
  %v4420 = vxor.u32 %v4410, 2147483648
  %v4421 = vsel %vm4419, %v4420, %v4411
  %v4422 = vsel %vm4415, %v4418, %v4421
  %v4423 = vsel %vm4412, nan, %v4422
  %v4424 = vand.u32 2147483647, %v644
  %vm4425 = vcmp.le.f32.partialorder %v4424, 0.7853982
  %vm4426 = vcmp.lt.s32.totalorder %v644, 0
  %v4427 = vand.u32 %v644, 2139095040
  %v4428 = vshrl.u32 %v4427, 23
  %v4429 = vsub.s32 %v4428, 127
  %v4430 = vand.u32 2147483647, %v644
  %v4431 = vand.u32 %v4430, 8388607
  %v4432 = vor.u32 %v4431, 8388608
  %v4433 = vsub.s32 0, %v4432
  %v4434 = vadd.s32 %v4429, 1
  %vm4435 = vcmp.gt.s32.totalorder %v4434, 0
  %v4436 = vsel %vm4435, %v4434, 0
  %v4437 = vshrl.u32 %v4436, 5
  %v4438 = vand.u32 %v4436, 31
  %v4439 = vsub.s32 32, %v4438
  %v4440 = vshrl.u32 683565275, %v4439
  %v4441 = vshll.u32 683565275, %v4438
  %v4442 = vshrl.u32 2475754826, %v4439
  %v4443 = vor.u32 %v4441, %v4442
  %v4444 = vshll.u32 2475754826, %v4438
  %v4445 = vshrl.u32 2131351028, %v4439
  %v4446 = vor.u32 %v4444, %v4445
  %v4447 = vshll.u32 2131351028, %v4438
  %v4448 = vshrl.u32 2102212464, %v4439
  %v4449 = vor.u32 %v4447, %v4448
  %v4450 = vshll.u32 2102212464, %v4438
  %v4451 = vshrl.u32 920167782, %v4439
  %v4452 = vor.u32 %v4450, %v4451
  %v4453 = vshll.u32 920167782, %v4438
  %v4454 = vshrl.u32 1326507024, %v4439
  %v4455 = vor.u32 %v4453, %v4454
  %vm4456 = vcmp.lt.s32.totalorder %v4437, 1
  %vm4457 = vcmp.lt.s32.totalorder %v4437, 2
  %vm4458 = vcmp.lt.s32.totalorder %v4437, 3
  %vm4459 = vcmp.lt.s32.totalorder %v4437, 4
  %v4460 = vsel %vm4456, %v4440, %v4443
  %v4461 = vsel %vm4459, %v4449, 2102212464
  %v4462 = vsel %vm4458, %v4446, %v4461
  %v4463 = vsel %vm4457, %v4460, %v4462
  %v4464 = vsel %vm4456, %v4443, %v4446
  %v4465 = vsel %vm4459, %v4452, 920167782
  %v4466 = vsel %vm4458, %v4449, %v4465
  %v4467 = vsel %vm4457, %v4464, %v4466
  %v4468 = vsel %vm4456, %v4446, %v4449
  %v4469 = vsel %vm4459, %v4455, 1326507024
  %v4470 = vsel %vm4458, %v4452, %v4469
  %v4471 = vsel %vm4457, %v4468, %v4470
  %v4472 = vshll.u32 %v4432, 8
  %v4473 = vmul.u32.u64.compose %v4472, %v4471
  %v4474 = vextract.low.u32 %v4473
  %v4475 = vextract.high.u32 %v4473
  %v4476 = vmul.u32.u64.compose %v4472, %v4467
  %v4477 = vextract.low.u32 %v4476
  %v4478 = vextract.high.u32 %v4476
  %v4479 = vmul.u32 %v4472, %v4463
  %v4480 = vadd.s32 %v4475, %v4477
  %vm4481 = vc.u32 %v4475, %v4477
  %v4482 = vadd.s32 %v4478, 1
  %v4483 = vsel %vm4481, %v4482, %v4478
  %v4484 = vadd.s32 %v4479, %v4483
  %v4485 = vadd.s32 %v4484, 536870912
  %v4486 = vshrl.u32 %v4485, 30
  %v4487 = vshll.u32 %v4486, 30
  %v4488 = vsub.s32 %v4484, %v4487
  %vm4489 = vcmp.lt.s32.totalorder %v4488, 0
  %v4490 = vsub.s32 0, %v4488
  %v4491 = vsel %vm4489, %v4490, %v4488
  %v4492 = vclz %v4491
  %v4493 = vsub.s32 %v4492, 2
  %vm4494 = vcmp.gt.s32.totalorder 0, %v4493
  %v4495 = vsel %vm4494, 0, %v4493
  %v4496 = vsub.s32 32, %v4495
  %v4497 = vshll.u32 %v4488, %v4495
  %v4498 = vshrl.u32 %v4480, %v4496
  %v4499 = vor.u32 %v4497, %v4498
  %v4500 = vsub.s32 4294967266, %v4495
  %v4501 = vadd.s32 %v4500, 127
  %v4502 = vshll.u32 %v4501, 23
  %v4503 = vor.u32 4788187, %v4502
  %v4504 = vand.u32 2147483647, %v4503
  %v4506 = vcvt.s32.f32 %v4499
  %v4507 = vmul.f32 %v4506, %v4504
  %v4508 = vxor.u32 %v4507, 2147483648
  %v4509 = vsel %vm4426, %v4508, %v4507
  %v4510 = vsub.s32 4, %v4486
  %v4511 = vsel %vm4426, %v4510, %v4486
  %v4512 = vsel %vm4425, %v644, %v4509
  %v4513 = vsel %vm4425, 0, %v4511
  %v4514 = vcosq.f32.pop %v4512
  %v4515 = vsinq.f32.pop %v4512
  %vm4516 = vweird.f32 %v644
  %v4517 = vadd.s32 %v4513, 3
  %v4518 = vand.u32 %v4517, 3
  %vm4519 = vcmp.lt.s32.totalorder %v4518, 2
  %vm4520 = vcmp.eq.s32.totalorder %v4518, 0
  %v4521 = vxor.u32 %v4515, 2147483648
  %v4522 = vsel %vm4520, %v4514, %v4521
  %vm4523 = vcmp.eq.s32.totalorder %v4518, 2
  %v4524 = vxor.u32 %v4514, 2147483648
  %v4525 = vsel %vm4523, %v4524, %v4515
  %v4526 = vsel %vm4519, %v4522, %v4525
  %v4527 = vsel %vm4516, nan, %v4526
  %v4528 = vand.u32 2147483647, %v645
  %vm4529 = vcmp.le.f32.partialorder %v4528, 0.7853982
  %vm4530 = vcmp.lt.s32.totalorder %v645, 0
  %v4531 = vand.u32 %v645, 2139095040
  %v4532 = vshrl.u32 %v4531, 23
  %v4533 = vsub.s32 %v4532, 127
  %v4534 = vand.u32 2147483647, %v645
  %v4535 = vand.u32 %v4534, 8388607
  %v4536 = vor.u32 %v4535, 8388608
  %v4537 = vsub.s32 0, %v4536
  %v4538 = vadd.s32 %v4533, 1
  %vm4539 = vcmp.gt.s32.totalorder %v4538, 0
  %v4540 = vsel %vm4539, %v4538, 0
  %v4541 = vshrl.u32 %v4540, 5
  %v4542 = vand.u32 %v4540, 31
  %v4543 = vsub.s32 32, %v4542
  %v4544 = vshrl.u32 683565275, %v4543
  %v4545 = vshll.u32 683565275, %v4542
  %v4546 = vshrl.u32 2475754826, %v4543
  %v4547 = vor.u32 %v4545, %v4546
  %v4548 = vshll.u32 2475754826, %v4542
  %v4549 = vshrl.u32 2131351028, %v4543
  %v4550 = vor.u32 %v4548, %v4549
  %v4551 = vshll.u32 2131351028, %v4542
  %v4552 = vshrl.u32 2102212464, %v4543
  %v4553 = vor.u32 %v4551, %v4552
  %v4554 = vshll.u32 2102212464, %v4542
  %v4555 = vshrl.u32 920167782, %v4543
  %v4556 = vor.u32 %v4554, %v4555
  %v4557 = vshll.u32 920167782, %v4542
  %v4558 = vshrl.u32 1326507024, %v4543
  %v4559 = vor.u32 %v4557, %v4558
  %vm4560 = vcmp.lt.s32.totalorder %v4541, 1
  %vm4561 = vcmp.lt.s32.totalorder %v4541, 2
  %vm4562 = vcmp.lt.s32.totalorder %v4541, 3
  %vm4563 = vcmp.lt.s32.totalorder %v4541, 4
  %v4564 = vsel %vm4560, %v4544, %v4547
  %v4565 = vsel %vm4563, %v4553, 2102212464
  %v4566 = vsel %vm4562, %v4550, %v4565
  %v4567 = vsel %vm4561, %v4564, %v4566
  %v4568 = vsel %vm4560, %v4547, %v4550
  %v4569 = vsel %vm4563, %v4556, 920167782
  %v4570 = vsel %vm4562, %v4553, %v4569
  %v4571 = vsel %vm4561, %v4568, %v4570
  %v4572 = vsel %vm4560, %v4550, %v4553
  %v4573 = vsel %vm4563, %v4559, 1326507024
  %v4574 = vsel %vm4562, %v4556, %v4573
  %v4575 = vsel %vm4561, %v4572, %v4574
  %v4576 = vshll.u32 %v4536, 8
  %v4577 = vmul.u32.u64.compose %v4576, %v4575
  %v4578 = vextract.low.u32 %v4577
  %v4579 = vextract.high.u32 %v4577
  %v4580 = vmul.u32.u64.compose %v4576, %v4571
  %v4581 = vextract.low.u32 %v4580
  %v4582 = vextract.high.u32 %v4580
  %v4583 = vmul.u32 %v4576, %v4567
  %v4584 = vadd.s32 %v4579, %v4581
  %vm4585 = vc.u32 %v4579, %v4581
  %v4586 = vadd.s32 %v4582, 1
  %v4587 = vsel %vm4585, %v4586, %v4582
  %v4588 = vadd.s32 %v4583, %v4587
  %v4589 = vadd.s32 %v4588, 536870912
  %v4590 = vshrl.u32 %v4589, 30
  %v4591 = vshll.u32 %v4590, 30
  %v4592 = vsub.s32 %v4588, %v4591
  %vm4593 = vcmp.lt.s32.totalorder %v4592, 0
  %v4594 = vsub.s32 0, %v4592
  %v4595 = vsel %vm4593, %v4594, %v4592
  %v4596 = vclz %v4595
  %v4597 = vsub.s32 %v4596, 2
  %vm4598 = vcmp.gt.s32.totalorder 0, %v4597
  %v4599 = vsel %vm4598, 0, %v4597
  %v4600 = vsub.s32 32, %v4599
  %v4601 = vshll.u32 %v4592, %v4599
  %v4602 = vshrl.u32 %v4584, %v4600
  %v4603 = vor.u32 %v4601, %v4602
  %v4604 = vsub.s32 4294967266, %v4599
  %v4605 = vadd.s32 %v4604, 127
  %v4606 = vshll.u32 %v4605, 23
  %v4607 = vor.u32 4788187, %v4606
  %v4608 = vand.u32 2147483647, %v4607
  %v4610 = vcvt.s32.f32 %v4603
  %v4611 = vmul.f32 %v4610, %v4608
  %v4612 = vxor.u32 %v4611, 2147483648
  %v4613 = vsel %vm4530, %v4612, %v4611
  %v4614 = vsub.s32 4, %v4590
  %v4615 = vsel %vm4530, %v4614, %v4590
  %v4616 = vsel %vm4529, %v645, %v4613
  %v4617 = vsel %vm4529, 0, %v4615
  %v4618 = vcosq.f32.pop %v4616
  %v4619 = vsinq.f32.pop %v4616
  %vm4620 = vweird.f32 %v645
  %v4621 = vadd.s32 %v4617, 3
  %v4622 = vand.u32 %v4621, 3
  %vm4623 = vcmp.lt.s32.totalorder %v4622, 2
  %vm4624 = vcmp.eq.s32.totalorder %v4622, 0
  %v4625 = vxor.u32 %v4619, 2147483648
  %v4626 = vsel %vm4624, %v4618, %v4625
  %vm4627 = vcmp.eq.s32.totalorder %v4622, 2
  %v4628 = vxor.u32 %v4618, 2147483648
  %v4629 = vsel %vm4627, %v4628, %v4619
  %v4630 = vsel %vm4623, %v4626, %v4629
  %v4631 = vsel %vm4620, nan, %v4630
  %v4632 = vand.u32 2147483647, %v646
  %vm4633 = vcmp.le.f32.partialorder %v4632, 0.7853982
  %vm4634 = vcmp.lt.s32.totalorder %v646, 0
  %v4635 = vand.u32 %v646, 2139095040
  %v4636 = vshrl.u32 %v4635, 23
  %v4637 = vsub.s32 %v4636, 127
  %v4638 = vand.u32 2147483647, %v646
  %v4639 = vand.u32 %v4638, 8388607
  %v4640 = vor.u32 %v4639, 8388608
  %v4641 = vsub.s32 0, %v4640
  %v4642 = vadd.s32 %v4637, 1
  %vm4643 = vcmp.gt.s32.totalorder %v4642, 0
  %v4644 = vsel %vm4643, %v4642, 0
  %v4645 = vshrl.u32 %v4644, 5
  %v4646 = vand.u32 %v4644, 31
  %v4647 = vsub.s32 32, %v4646
  %v4648 = vshrl.u32 683565275, %v4647
  %v4649 = vshll.u32 683565275, %v4646
  %v4650 = vshrl.u32 2475754826, %v4647
  %v4651 = vor.u32 %v4649, %v4650
  %v4652 = vshll.u32 2475754826, %v4646
  %v4653 = vshrl.u32 2131351028, %v4647
  %v4654 = vor.u32 %v4652, %v4653
  %v4655 = vshll.u32 2131351028, %v4646
  %v4656 = vshrl.u32 2102212464, %v4647
  %v4657 = vor.u32 %v4655, %v4656
  %v4658 = vshll.u32 2102212464, %v4646
  %v4659 = vshrl.u32 920167782, %v4647
  %v4660 = vor.u32 %v4658, %v4659
  %v4661 = vshll.u32 920167782, %v4646
  %v4662 = vshrl.u32 1326507024, %v4647
  %v4663 = vor.u32 %v4661, %v4662
  %vm4664 = vcmp.lt.s32.totalorder %v4645, 1
  %vm4665 = vcmp.lt.s32.totalorder %v4645, 2
  %vm4666 = vcmp.lt.s32.totalorder %v4645, 3
  %vm4667 = vcmp.lt.s32.totalorder %v4645, 4
  %v4668 = vsel %vm4664, %v4648, %v4651
  %v4669 = vsel %vm4667, %v4657, 2102212464
  %v4670 = vsel %vm4666, %v4654, %v4669
  %v4671 = vsel %vm4665, %v4668, %v4670
  %v4672 = vsel %vm4664, %v4651, %v4654
  %v4673 = vsel %vm4667, %v4660, 920167782
  %v4674 = vsel %vm4666, %v4657, %v4673
  %v4675 = vsel %vm4665, %v4672, %v4674
  %v4676 = vsel %vm4664, %v4654, %v4657
  %v4677 = vsel %vm4667, %v4663, 1326507024
  %v4678 = vsel %vm4666, %v4660, %v4677
  %v4679 = vsel %vm4665, %v4676, %v4678
  %v4680 = vshll.u32 %v4640, 8
  %v4681 = vmul.u32.u64.compose %v4680, %v4679
  %v4682 = vextract.low.u32 %v4681
  %v4683 = vextract.high.u32 %v4681
  %v4684 = vmul.u32.u64.compose %v4680, %v4675
  %v4685 = vextract.low.u32 %v4684
  %v4686 = vextract.high.u32 %v4684
  %v4687 = vmul.u32 %v4680, %v4671
  %v4688 = vadd.s32 %v4683, %v4685
  %vm4689 = vc.u32 %v4683, %v4685
  %v4690 = vadd.s32 %v4686, 1
  %v4691 = vsel %vm4689, %v4690, %v4686
  %v4692 = vadd.s32 %v4687, %v4691
  %v4693 = vadd.s32 %v4692, 536870912
  %v4694 = vshrl.u32 %v4693, 30
  %v4695 = vshll.u32 %v4694, 30
  %v4696 = vsub.s32 %v4692, %v4695
  %vm4697 = vcmp.lt.s32.totalorder %v4696, 0
  %v4698 = vsub.s32 0, %v4696
  %v4699 = vsel %vm4697, %v4698, %v4696
  %v4700 = vclz %v4699
  %v4701 = vsub.s32 %v4700, 2
  %vm4702 = vcmp.gt.s32.totalorder 0, %v4701
  %v4703 = vsel %vm4702, 0, %v4701
  %v4704 = vsub.s32 32, %v4703
  %v4705 = vshll.u32 %v4696, %v4703
  %v4706 = vshrl.u32 %v4688, %v4704
  %v4707 = vor.u32 %v4705, %v4706
  %v4708 = vsub.s32 4294967266, %v4703
  %v4709 = vadd.s32 %v4708, 127
  %v4710 = vshll.u32 %v4709, 23
  %v4711 = vor.u32 4788187, %v4710
  %v4712 = vand.u32 2147483647, %v4711
  %v4714 = vcvt.s32.f32 %v4707
  %v4715 = vmul.f32 %v4714, %v4712
  %v4716 = vxor.u32 %v4715, 2147483648
  %v4717 = vsel %vm4634, %v4716, %v4715
  %v4718 = vsub.s32 4, %v4694
  %v4719 = vsel %vm4634, %v4718, %v4694
  %v4720 = vsel %vm4633, %v646, %v4717
  %v4721 = vsel %vm4633, 0, %v4719
  %v4722 = vcosq.f32.pop %v4720
  %v4723 = vsinq.f32.pop %v4720
  %vm4724 = vweird.f32 %v646
  %v4725 = vadd.s32 %v4721, 3
  %v4726 = vand.u32 %v4725, 3
  %vm4727 = vcmp.lt.s32.totalorder %v4726, 2
  %vm4728 = vcmp.eq.s32.totalorder %v4726, 0
  %v4729 = vxor.u32 %v4723, 2147483648
  %v4730 = vsel %vm4728, %v4722, %v4729
  %vm4731 = vcmp.eq.s32.totalorder %v4726, 2
  %v4732 = vxor.u32 %v4722, 2147483648
  %v4733 = vsel %vm4731, %v4732, %v4723
  %v4734 = vsel %vm4727, %v4730, %v4733
  %v4735 = vsel %vm4724, nan, %v4734
  %v4736 = vand.u32 2147483647, %v647
  %vm4737 = vcmp.le.f32.partialorder %v4736, 0.7853982
  %vm4738 = vcmp.lt.s32.totalorder %v647, 0
  %v4739 = vand.u32 %v647, 2139095040
  %v4740 = vshrl.u32 %v4739, 23
  %v4741 = vsub.s32 %v4740, 127
  %v4742 = vand.u32 2147483647, %v647
  %v4743 = vand.u32 %v4742, 8388607
  %v4744 = vor.u32 %v4743, 8388608
  %v4745 = vsub.s32 0, %v4744
  %v4746 = vadd.s32 %v4741, 1
  %vm4747 = vcmp.gt.s32.totalorder %v4746, 0
  %v4748 = vsel %vm4747, %v4746, 0
  %v4749 = vshrl.u32 %v4748, 5
  %v4750 = vand.u32 %v4748, 31
  %v4751 = vsub.s32 32, %v4750
  %v4752 = vshrl.u32 683565275, %v4751
  %v4753 = vshll.u32 683565275, %v4750
  %v4754 = vshrl.u32 2475754826, %v4751
  %v4755 = vor.u32 %v4753, %v4754
  %v4756 = vshll.u32 2475754826, %v4750
  %v4757 = vshrl.u32 2131351028, %v4751
  %v4758 = vor.u32 %v4756, %v4757
  %v4759 = vshll.u32 2131351028, %v4750
  %v4760 = vshrl.u32 2102212464, %v4751
  %v4761 = vor.u32 %v4759, %v4760
  %v4762 = vshll.u32 2102212464, %v4750
  %v4763 = vshrl.u32 920167782, %v4751
  %v4764 = vor.u32 %v4762, %v4763
  %v4765 = vshll.u32 920167782, %v4750
  %v4766 = vshrl.u32 1326507024, %v4751
  %v4767 = vor.u32 %v4765, %v4766
  %vm4768 = vcmp.lt.s32.totalorder %v4749, 1
  %vm4769 = vcmp.lt.s32.totalorder %v4749, 2
  %vm4770 = vcmp.lt.s32.totalorder %v4749, 3
  %vm4771 = vcmp.lt.s32.totalorder %v4749, 4
  %v4772 = vsel %vm4768, %v4752, %v4755
  %v4773 = vsel %vm4771, %v4761, 2102212464
  %v4774 = vsel %vm4770, %v4758, %v4773
  %v4775 = vsel %vm4769, %v4772, %v4774
  %v4776 = vsel %vm4768, %v4755, %v4758
  %v4777 = vsel %vm4771, %v4764, 920167782
  %v4778 = vsel %vm4770, %v4761, %v4777
  %v4779 = vsel %vm4769, %v4776, %v4778
  %v4780 = vsel %vm4768, %v4758, %v4761
  %v4781 = vsel %vm4771, %v4767, 1326507024
  %v4782 = vsel %vm4770, %v4764, %v4781
  %v4783 = vsel %vm4769, %v4780, %v4782
  %v4784 = vshll.u32 %v4744, 8
  %v4785 = vmul.u32.u64.compose %v4784, %v4783
  %v4786 = vextract.low.u32 %v4785
  %v4787 = vextract.high.u32 %v4785
  %v4788 = vmul.u32.u64.compose %v4784, %v4779
  %v4789 = vextract.low.u32 %v4788
  %v4790 = vextract.high.u32 %v4788
  %v4791 = vmul.u32 %v4784, %v4775
  %v4792 = vadd.s32 %v4787, %v4789
  %vm4793 = vc.u32 %v4787, %v4789
  %v4794 = vadd.s32 %v4790, 1
  %v4795 = vsel %vm4793, %v4794, %v4790
  %v4796 = vadd.s32 %v4791, %v4795
  %v4797 = vadd.s32 %v4796, 536870912
  %v4798 = vshrl.u32 %v4797, 30
  %v4799 = vshll.u32 %v4798, 30
  %v4800 = vsub.s32 %v4796, %v4799
  %vm4801 = vcmp.lt.s32.totalorder %v4800, 0
  %v4802 = vsub.s32 0, %v4800
  %v4803 = vsel %vm4801, %v4802, %v4800
  %v4804 = vclz %v4803
  %v4805 = vsub.s32 %v4804, 2
  %vm4806 = vcmp.gt.s32.totalorder 0, %v4805
  %v4807 = vsel %vm4806, 0, %v4805
  %v4808 = vsub.s32 32, %v4807
  %v4809 = vshll.u32 %v4800, %v4807
  %v4810 = vshrl.u32 %v4792, %v4808
  %v4811 = vor.u32 %v4809, %v4810
  %v4812 = vsub.s32 4294967266, %v4807
  %v4813 = vadd.s32 %v4812, 127
  %v4814 = vshll.u32 %v4813, 23
  %v4815 = vor.u32 4788187, %v4814
  %v4816 = vand.u32 2147483647, %v4815
  %v4818 = vcvt.s32.f32 %v4811
  %v4819 = vmul.f32 %v4818, %v4816
  %v4820 = vxor.u32 %v4819, 2147483648
  %v4821 = vsel %vm4738, %v4820, %v4819
  %v4822 = vsub.s32 4, %v4798
  %v4823 = vsel %vm4738, %v4822, %v4798
  %v4824 = vsel %vm4737, %v647, %v4821
  %v4825 = vsel %vm4737, 0, %v4823
  %v4826 = vcosq.f32.pop %v4824
  %v4827 = vsinq.f32.pop %v4824
  %vm4828 = vweird.f32 %v647
  %v4829 = vadd.s32 %v4825, 3
  %v4830 = vand.u32 %v4829, 3
  %vm4831 = vcmp.lt.s32.totalorder %v4830, 2
  %vm4832 = vcmp.eq.s32.totalorder %v4830, 0
  %v4833 = vxor.u32 %v4827, 2147483648
  %v4834 = vsel %vm4832, %v4826, %v4833
  %vm4835 = vcmp.eq.s32.totalorder %v4830, 2
  %v4836 = vxor.u32 %v4826, 2147483648
  %v4837 = vsel %vm4835, %v4836, %v4827
  %v4838 = vsel %vm4831, %v4834, %v4837
  %v4839 = vsel %vm4828, nan, %v4838
  %v4840 = vand.u32 2147483647, %v648
  %vm4841 = vcmp.le.f32.partialorder %v4840, 0.7853982
  %vm4842 = vcmp.lt.s32.totalorder %v648, 0
  %v4843 = vand.u32 %v648, 2139095040
  %v4844 = vshrl.u32 %v4843, 23
  %v4845 = vsub.s32 %v4844, 127
  %v4846 = vand.u32 2147483647, %v648
  %v4847 = vand.u32 %v4846, 8388607
  %v4848 = vor.u32 %v4847, 8388608
  %v4849 = vsub.s32 0, %v4848
  %v4850 = vadd.s32 %v4845, 1
  %vm4851 = vcmp.gt.s32.totalorder %v4850, 0
  %v4852 = vsel %vm4851, %v4850, 0
  %v4853 = vshrl.u32 %v4852, 5
  %v4854 = vand.u32 %v4852, 31
  %v4855 = vsub.s32 32, %v4854
  %v4856 = vshrl.u32 683565275, %v4855
  %v4857 = vshll.u32 683565275, %v4854
  %v4858 = vshrl.u32 2475754826, %v4855
  %v4859 = vor.u32 %v4857, %v4858
  %v4860 = vshll.u32 2475754826, %v4854
  %v4861 = vshrl.u32 2131351028, %v4855
  %v4862 = vor.u32 %v4860, %v4861
  %v4863 = vshll.u32 2131351028, %v4854
  %v4864 = vshrl.u32 2102212464, %v4855
  %v4865 = vor.u32 %v4863, %v4864
  %v4866 = vshll.u32 2102212464, %v4854
  %v4867 = vshrl.u32 920167782, %v4855
  %v4868 = vor.u32 %v4866, %v4867
  %v4869 = vshll.u32 920167782, %v4854
  %v4870 = vshrl.u32 1326507024, %v4855
  %v4871 = vor.u32 %v4869, %v4870
  %vm4872 = vcmp.lt.s32.totalorder %v4853, 1
  %vm4873 = vcmp.lt.s32.totalorder %v4853, 2
  %vm4874 = vcmp.lt.s32.totalorder %v4853, 3
  %vm4875 = vcmp.lt.s32.totalorder %v4853, 4
  %v4876 = vsel %vm4872, %v4856, %v4859
  %v4877 = vsel %vm4875, %v4865, 2102212464
  %v4878 = vsel %vm4874, %v4862, %v4877
  %v4879 = vsel %vm4873, %v4876, %v4878
  %v4880 = vsel %vm4872, %v4859, %v4862
  %v4881 = vsel %vm4875, %v4868, 920167782
  %v4882 = vsel %vm4874, %v4865, %v4881
  %v4883 = vsel %vm4873, %v4880, %v4882
  %v4884 = vsel %vm4872, %v4862, %v4865
  %v4885 = vsel %vm4875, %v4871, 1326507024
  %v4886 = vsel %vm4874, %v4868, %v4885
  %v4887 = vsel %vm4873, %v4884, %v4886
  %v4888 = vshll.u32 %v4848, 8
  %v4889 = vmul.u32.u64.compose %v4888, %v4887
  %v4890 = vextract.low.u32 %v4889
  %v4891 = vextract.high.u32 %v4889
  %v4892 = vmul.u32.u64.compose %v4888, %v4883
  %v4893 = vextract.low.u32 %v4892
  %v4894 = vextract.high.u32 %v4892
  %v4895 = vmul.u32 %v4888, %v4879
  %v4896 = vadd.s32 %v4891, %v4893
  %vm4897 = vc.u32 %v4891, %v4893
  %v4898 = vadd.s32 %v4894, 1
  %v4899 = vsel %vm4897, %v4898, %v4894
  %v4900 = vadd.s32 %v4895, %v4899
  %v4901 = vadd.s32 %v4900, 536870912
  %v4902 = vshrl.u32 %v4901, 30
  %v4903 = vshll.u32 %v4902, 30
  %v4904 = vsub.s32 %v4900, %v4903
  %vm4905 = vcmp.lt.s32.totalorder %v4904, 0
  %v4906 = vsub.s32 0, %v4904
  %v4907 = vsel %vm4905, %v4906, %v4904
  %v4908 = vclz %v4907
  %v4909 = vsub.s32 %v4908, 2
  %vm4910 = vcmp.gt.s32.totalorder 0, %v4909
  %v4911 = vsel %vm4910, 0, %v4909
  %v4912 = vsub.s32 32, %v4911
  %v4913 = vshll.u32 %v4904, %v4911
  %v4914 = vshrl.u32 %v4896, %v4912
  %v4915 = vor.u32 %v4913, %v4914
  %v4916 = vsub.s32 4294967266, %v4911
  %v4917 = vadd.s32 %v4916, 127
  %v4918 = vshll.u32 %v4917, 23
  %v4919 = vor.u32 4788187, %v4918
  %v4920 = vand.u32 2147483647, %v4919
  %v4922 = vcvt.s32.f32 %v4915
  %v4923 = vmul.f32 %v4922, %v4920
  %v4924 = vxor.u32 %v4923, 2147483648
  %v4925 = vsel %vm4842, %v4924, %v4923
  %v4926 = vsub.s32 4, %v4902
  %v4927 = vsel %vm4842, %v4926, %v4902
  %v4928 = vsel %vm4841, %v648, %v4925
  %v4929 = vsel %vm4841, 0, %v4927
  %v4930 = vcosq.f32.pop %v4928
  %v4931 = vsinq.f32.pop %v4928
  %vm4932 = vweird.f32 %v648
  %v4933 = vadd.s32 %v4929, 3
  %v4934 = vand.u32 %v4933, 3
  %vm4935 = vcmp.lt.s32.totalorder %v4934, 2
  %vm4936 = vcmp.eq.s32.totalorder %v4934, 0
  %v4937 = vxor.u32 %v4931, 2147483648
  %v4938 = vsel %vm4936, %v4930, %v4937
  %vm4939 = vcmp.eq.s32.totalorder %v4934, 2
  %v4940 = vxor.u32 %v4930, 2147483648
  %v4941 = vsel %vm4939, %v4940, %v4931
  %v4942 = vsel %vm4935, %v4938, %v4941
  %v4943 = vsel %vm4932, nan, %v4942
  %v4944 = vand.u32 2147483647, %v649
  %vm4945 = vcmp.le.f32.partialorder %v4944, 0.7853982
  %vm4946 = vcmp.lt.s32.totalorder %v649, 0
  %v4947 = vand.u32 %v649, 2139095040
  %v4948 = vshrl.u32 %v4947, 23
  %v4949 = vsub.s32 %v4948, 127
  %v4950 = vand.u32 2147483647, %v649
  %v4951 = vand.u32 %v4950, 8388607
  %v4952 = vor.u32 %v4951, 8388608
  %v4953 = vsub.s32 0, %v4952
  %v4954 = vadd.s32 %v4949, 1
  %vm4955 = vcmp.gt.s32.totalorder %v4954, 0
  %v4956 = vsel %vm4955, %v4954, 0
  %v4957 = vshrl.u32 %v4956, 5
  %v4958 = vand.u32 %v4956, 31
  %v4959 = vsub.s32 32, %v4958
  %v4960 = vshrl.u32 683565275, %v4959
  %v4961 = vshll.u32 683565275, %v4958
  %v4962 = vshrl.u32 2475754826, %v4959
  %v4963 = vor.u32 %v4961, %v4962
  %v4964 = vshll.u32 2475754826, %v4958
  %v4965 = vshrl.u32 2131351028, %v4959
  %v4966 = vor.u32 %v4964, %v4965
  %v4967 = vshll.u32 2131351028, %v4958
  %v4968 = vshrl.u32 2102212464, %v4959
  %v4969 = vor.u32 %v4967, %v4968
  %v4970 = vshll.u32 2102212464, %v4958
  %v4971 = vshrl.u32 920167782, %v4959
  %v4972 = vor.u32 %v4970, %v4971
  %v4973 = vshll.u32 920167782, %v4958
  %v4974 = vshrl.u32 1326507024, %v4959
  %v4975 = vor.u32 %v4973, %v4974
  %vm4976 = vcmp.lt.s32.totalorder %v4957, 1
  %vm4977 = vcmp.lt.s32.totalorder %v4957, 2
  %vm4978 = vcmp.lt.s32.totalorder %v4957, 3
  %vm4979 = vcmp.lt.s32.totalorder %v4957, 4
  %v4980 = vsel %vm4976, %v4960, %v4963
  %v4981 = vsel %vm4979, %v4969, 2102212464
  %v4982 = vsel %vm4978, %v4966, %v4981
  %v4983 = vsel %vm4977, %v4980, %v4982
  %v4984 = vsel %vm4976, %v4963, %v4966
  %v4985 = vsel %vm4979, %v4972, 920167782
  %v4986 = vsel %vm4978, %v4969, %v4985
  %v4987 = vsel %vm4977, %v4984, %v4986
  %v4988 = vsel %vm4976, %v4966, %v4969
  %v4989 = vsel %vm4979, %v4975, 1326507024
  %v4990 = vsel %vm4978, %v4972, %v4989
  %v4991 = vsel %vm4977, %v4988, %v4990
  %v4992 = vshll.u32 %v4952, 8
  %v4993 = vmul.u32.u64.compose %v4992, %v4991
  %v4994 = vextract.low.u32 %v4993
  %v4995 = vextract.high.u32 %v4993
  %v4996 = vmul.u32.u64.compose %v4992, %v4987
  %v4997 = vextract.low.u32 %v4996
  %v4998 = vextract.high.u32 %v4996
  %v4999 = vmul.u32 %v4992, %v4983
  %v5000 = vadd.s32 %v4995, %v4997
  %vm5001 = vc.u32 %v4995, %v4997
  %v5002 = vadd.s32 %v4998, 1
  %v5003 = vsel %vm5001, %v5002, %v4998
  %v5004 = vadd.s32 %v4999, %v5003
  %v5005 = vadd.s32 %v5004, 536870912
  %v5006 = vshrl.u32 %v5005, 30
  %v5007 = vshll.u32 %v5006, 30
  %v5008 = vsub.s32 %v5004, %v5007
  %vm5009 = vcmp.lt.s32.totalorder %v5008, 0
  %v5010 = vsub.s32 0, %v5008
  %v5011 = vsel %vm5009, %v5010, %v5008
  %v5012 = vclz %v5011
  %v5013 = vsub.s32 %v5012, 2
  %vm5014 = vcmp.gt.s32.totalorder 0, %v5013
  %v5015 = vsel %vm5014, 0, %v5013
  %v5016 = vsub.s32 32, %v5015
  %v5017 = vshll.u32 %v5008, %v5015
  %v5018 = vshrl.u32 %v5000, %v5016
  %v5019 = vor.u32 %v5017, %v5018
  %v5020 = vsub.s32 4294967266, %v5015
  %v5021 = vadd.s32 %v5020, 127
  %v5022 = vshll.u32 %v5021, 23
  %v5023 = vor.u32 4788187, %v5022
  %v5024 = vand.u32 2147483647, %v5023
  %v5026 = vcvt.s32.f32 %v5019
  %v5027 = vmul.f32 %v5026, %v5024
  %v5028 = vxor.u32 %v5027, 2147483648
  %v5029 = vsel %vm4946, %v5028, %v5027
  %v5030 = vsub.s32 4, %v5006
  %v5031 = vsel %vm4946, %v5030, %v5006
  %v5032 = vsel %vm4945, %v649, %v5029
  %v5033 = vsel %vm4945, 0, %v5031
  %v5034 = vcosq.f32.pop %v5032
  %v5035 = vsinq.f32.pop %v5032
  %vm5036 = vweird.f32 %v649
  %v5037 = vadd.s32 %v5033, 3
  %v5038 = vand.u32 %v5037, 3
  %vm5039 = vcmp.lt.s32.totalorder %v5038, 2
  %vm5040 = vcmp.eq.s32.totalorder %v5038, 0
  %v5041 = vxor.u32 %v5035, 2147483648
  %v5042 = vsel %vm5040, %v5034, %v5041
  %vm5043 = vcmp.eq.s32.totalorder %v5038, 2
  %v5044 = vxor.u32 %v5034, 2147483648
  %v5045 = vsel %vm5043, %v5044, %v5035
  %v5046 = vsel %vm5039, %v5042, %v5045
  %v5047 = vsel %vm5036, nan, %v5046
  %v5048 = vand.u32 2147483647, %v650
  %vm5049 = vcmp.le.f32.partialorder %v5048, 0.7853982
  %vm5050 = vcmp.lt.s32.totalorder %v650, 0
  %v5051 = vand.u32 %v650, 2139095040
  %v5052 = vshrl.u32 %v5051, 23
  %v5053 = vsub.s32 %v5052, 127
  %v5054 = vand.u32 2147483647, %v650
  %v5055 = vand.u32 %v5054, 8388607
  %v5056 = vor.u32 %v5055, 8388608
  %v5057 = vsub.s32 0, %v5056
  %v5058 = vadd.s32 %v5053, 1
  %vm5059 = vcmp.gt.s32.totalorder %v5058, 0
  %v5060 = vsel %vm5059, %v5058, 0
  %v5061 = vshrl.u32 %v5060, 5
  %v5062 = vand.u32 %v5060, 31
  %v5063 = vsub.s32 32, %v5062
  %v5064 = vshrl.u32 683565275, %v5063
  %v5065 = vshll.u32 683565275, %v5062
  %v5066 = vshrl.u32 2475754826, %v5063
  %v5067 = vor.u32 %v5065, %v5066
  %v5068 = vshll.u32 2475754826, %v5062
  %v5069 = vshrl.u32 2131351028, %v5063
  %v5070 = vor.u32 %v5068, %v5069
  %v5071 = vshll.u32 2131351028, %v5062
  %v5072 = vshrl.u32 2102212464, %v5063
  %v5073 = vor.u32 %v5071, %v5072
  %v5074 = vshll.u32 2102212464, %v5062
  %v5075 = vshrl.u32 920167782, %v5063
  %v5076 = vor.u32 %v5074, %v5075
  %v5077 = vshll.u32 920167782, %v5062
  %v5078 = vshrl.u32 1326507024, %v5063
  %v5079 = vor.u32 %v5077, %v5078
  %vm5080 = vcmp.lt.s32.totalorder %v5061, 1
  %vm5081 = vcmp.lt.s32.totalorder %v5061, 2
  %vm5082 = vcmp.lt.s32.totalorder %v5061, 3
  %vm5083 = vcmp.lt.s32.totalorder %v5061, 4
  %v5084 = vsel %vm5080, %v5064, %v5067
  %v5085 = vsel %vm5083, %v5073, 2102212464
  %v5086 = vsel %vm5082, %v5070, %v5085
  %v5087 = vsel %vm5081, %v5084, %v5086
  %v5088 = vsel %vm5080, %v5067, %v5070
  %v5089 = vsel %vm5083, %v5076, 920167782
  %v5090 = vsel %vm5082, %v5073, %v5089
  %v5091 = vsel %vm5081, %v5088, %v5090
  %v5092 = vsel %vm5080, %v5070, %v5073
  %v5093 = vsel %vm5083, %v5079, 1326507024
  %v5094 = vsel %vm5082, %v5076, %v5093
  %v5095 = vsel %vm5081, %v5092, %v5094
  %v5096 = vshll.u32 %v5056, 8
  %v5097 = vmul.u32.u64.compose %v5096, %v5095
  %v5098 = vextract.low.u32 %v5097
  %v5099 = vextract.high.u32 %v5097
  %v5100 = vmul.u32.u64.compose %v5096, %v5091
  %v5101 = vextract.low.u32 %v5100
  %v5102 = vextract.high.u32 %v5100
  %v5103 = vmul.u32 %v5096, %v5087
  %v5104 = vadd.s32 %v5099, %v5101
  %vm5105 = vc.u32 %v5099, %v5101
  %v5106 = vadd.s32 %v5102, 1
  %v5107 = vsel %vm5105, %v5106, %v5102
  %v5108 = vadd.s32 %v5103, %v5107
  %v5109 = vadd.s32 %v5108, 536870912
  %v5110 = vshrl.u32 %v5109, 30
  %v5111 = vshll.u32 %v5110, 30
  %v5112 = vsub.s32 %v5108, %v5111
  %vm5113 = vcmp.lt.s32.totalorder %v5112, 0
  %v5114 = vsub.s32 0, %v5112
  %v5115 = vsel %vm5113, %v5114, %v5112
  %v5116 = vclz %v5115
  %v5117 = vsub.s32 %v5116, 2
  %vm5118 = vcmp.gt.s32.totalorder 0, %v5117
  %v5119 = vsel %vm5118, 0, %v5117
  %v5120 = vsub.s32 32, %v5119
  %v5121 = vshll.u32 %v5112, %v5119
  %v5122 = vshrl.u32 %v5104, %v5120
  %v5123 = vor.u32 %v5121, %v5122
  %v5124 = vsub.s32 4294967266, %v5119
  %v5125 = vadd.s32 %v5124, 127
  %v5126 = vshll.u32 %v5125, 23
  %v5127 = vor.u32 4788187, %v5126
  %v5128 = vand.u32 2147483647, %v5127
  %v5130 = vcvt.s32.f32 %v5123
  %v5131 = vmul.f32 %v5130, %v5128
  %v5132 = vxor.u32 %v5131, 2147483648
  %v5133 = vsel %vm5050, %v5132, %v5131
  %v5134 = vsub.s32 4, %v5110
  %v5135 = vsel %vm5050, %v5134, %v5110
  %v5136 = vsel %vm5049, %v650, %v5133
  %v5137 = vsel %vm5049, 0, %v5135
  %v5138 = vcosq.f32.pop %v5136
  %v5139 = vsinq.f32.pop %v5136
  %vm5140 = vweird.f32 %v650
  %v5141 = vadd.s32 %v5137, 3
  %v5142 = vand.u32 %v5141, 3
  %vm5143 = vcmp.lt.s32.totalorder %v5142, 2
  %vm5144 = vcmp.eq.s32.totalorder %v5142, 0
  %v5145 = vxor.u32 %v5139, 2147483648
  %v5146 = vsel %vm5144, %v5138, %v5145
  %vm5147 = vcmp.eq.s32.totalorder %v5142, 2
  %v5148 = vxor.u32 %v5138, 2147483648
  %v5149 = vsel %vm5147, %v5148, %v5139
  %v5150 = vsel %vm5143, %v5146, %v5149
  %v5151 = vsel %vm5140, nan, %v5150
  %v5152 = vand.u32 2147483647, %v651
  %vm5153 = vcmp.le.f32.partialorder %v5152, 0.7853982
  %vm5154 = vcmp.lt.s32.totalorder %v651, 0
  %v5155 = vand.u32 %v651, 2139095040
  %v5156 = vshrl.u32 %v5155, 23
  %v5157 = vsub.s32 %v5156, 127
  %v5158 = vand.u32 2147483647, %v651
  %v5159 = vand.u32 %v5158, 8388607
  %v5160 = vor.u32 %v5159, 8388608
  %v5161 = vsub.s32 0, %v5160
  %v5162 = vadd.s32 %v5157, 1
  %vm5163 = vcmp.gt.s32.totalorder %v5162, 0
  %v5164 = vsel %vm5163, %v5162, 0
  %v5165 = vshrl.u32 %v5164, 5
  %v5166 = vand.u32 %v5164, 31
  %v5167 = vsub.s32 32, %v5166
  %v5168 = vshrl.u32 683565275, %v5167
  %v5169 = vshll.u32 683565275, %v5166
  %v5170 = vshrl.u32 2475754826, %v5167
  %v5171 = vor.u32 %v5169, %v5170
  %v5172 = vshll.u32 2475754826, %v5166
  %v5173 = vshrl.u32 2131351028, %v5167
  %v5174 = vor.u32 %v5172, %v5173
  %v5175 = vshll.u32 2131351028, %v5166
  %v5176 = vshrl.u32 2102212464, %v5167
  %v5177 = vor.u32 %v5175, %v5176
  %v5178 = vshll.u32 2102212464, %v5166
  %v5179 = vshrl.u32 920167782, %v5167
  %v5180 = vor.u32 %v5178, %v5179
  %v5181 = vshll.u32 920167782, %v5166
  %v5182 = vshrl.u32 1326507024, %v5167
  %v5183 = vor.u32 %v5181, %v5182
  %vm5184 = vcmp.lt.s32.totalorder %v5165, 1
  %vm5185 = vcmp.lt.s32.totalorder %v5165, 2
  %vm5186 = vcmp.lt.s32.totalorder %v5165, 3
  %vm5187 = vcmp.lt.s32.totalorder %v5165, 4
  %v5188 = vsel %vm5184, %v5168, %v5171
  %v5189 = vsel %vm5187, %v5177, 2102212464
  %v5190 = vsel %vm5186, %v5174, %v5189
  %v5191 = vsel %vm5185, %v5188, %v5190
  %v5192 = vsel %vm5184, %v5171, %v5174
  %v5193 = vsel %vm5187, %v5180, 920167782
  %v5194 = vsel %vm5186, %v5177, %v5193
  %v5195 = vsel %vm5185, %v5192, %v5194
  %v5196 = vsel %vm5184, %v5174, %v5177
  %v5197 = vsel %vm5187, %v5183, 1326507024
  %v5198 = vsel %vm5186, %v5180, %v5197
  %v5199 = vsel %vm5185, %v5196, %v5198
  %v5200 = vshll.u32 %v5160, 8
  %v5201 = vmul.u32.u64.compose %v5200, %v5199
  %v5202 = vextract.low.u32 %v5201
  %v5203 = vextract.high.u32 %v5201
  %v5204 = vmul.u32.u64.compose %v5200, %v5195
  %v5205 = vextract.low.u32 %v5204
  %v5206 = vextract.high.u32 %v5204
  %v5207 = vmul.u32 %v5200, %v5191
  %v5208 = vadd.s32 %v5203, %v5205
  %vm5209 = vc.u32 %v5203, %v5205
  %v5210 = vadd.s32 %v5206, 1
  %v5211 = vsel %vm5209, %v5210, %v5206
  %v5212 = vadd.s32 %v5207, %v5211
  %v5213 = vadd.s32 %v5212, 536870912
  %v5214 = vshrl.u32 %v5213, 30
  %v5215 = vshll.u32 %v5214, 30
  %v5216 = vsub.s32 %v5212, %v5215
  %vm5217 = vcmp.lt.s32.totalorder %v5216, 0
  %v5218 = vsub.s32 0, %v5216
  %v5219 = vsel %vm5217, %v5218, %v5216
  %v5220 = vclz %v5219
  %v5221 = vsub.s32 %v5220, 2
  %vm5222 = vcmp.gt.s32.totalorder 0, %v5221
  %v5223 = vsel %vm5222, 0, %v5221
  %v5224 = vsub.s32 32, %v5223
  %v5225 = vshll.u32 %v5216, %v5223
  %v5226 = vshrl.u32 %v5208, %v5224
  %v5227 = vor.u32 %v5225, %v5226
  %v5228 = vsub.s32 4294967266, %v5223
  %v5229 = vadd.s32 %v5228, 127
  %v5230 = vshll.u32 %v5229, 23
  %v5231 = vor.u32 4788187, %v5230
  %v5232 = vand.u32 2147483647, %v5231
  %v5234 = vcvt.s32.f32 %v5227
  %v5235 = vmul.f32 %v5234, %v5232
  %v5236 = vxor.u32 %v5235, 2147483648
  %v5237 = vsel %vm5154, %v5236, %v5235
  %v5238 = vsub.s32 4, %v5214
  %v5239 = vsel %vm5154, %v5238, %v5214
  %v5240 = vsel %vm5153, %v651, %v5237
  %v5241 = vsel %vm5153, 0, %v5239
  %v5242 = vcosq.f32.pop %v5240
  %v5243 = vsinq.f32.pop %v5240
  %vm5244 = vweird.f32 %v651
  %v5245 = vadd.s32 %v5241, 3
  %v5246 = vand.u32 %v5245, 3
  %vm5247 = vcmp.lt.s32.totalorder %v5246, 2
  %vm5248 = vcmp.eq.s32.totalorder %v5246, 0
  %v5249 = vxor.u32 %v5243, 2147483648
  %v5250 = vsel %vm5248, %v5242, %v5249
  %vm5251 = vcmp.eq.s32.totalorder %v5246, 2
  %v5252 = vxor.u32 %v5242, 2147483648
  %v5253 = vsel %vm5251, %v5252, %v5243
  %v5254 = vsel %vm5247, %v5250, %v5253
  %v5255 = vsel %vm5244, nan, %v5254
  %v5256 = vand.u32 2147483647, %v652
  %vm5257 = vcmp.le.f32.partialorder %v5256, 0.7853982
  %vm5258 = vcmp.lt.s32.totalorder %v652, 0
  %v5259 = vand.u32 %v652, 2139095040
  %v5260 = vshrl.u32 %v5259, 23
  %v5261 = vsub.s32 %v5260, 127
  %v5262 = vand.u32 2147483647, %v652
  %v5263 = vand.u32 %v5262, 8388607
  %v5264 = vor.u32 %v5263, 8388608
  %v5265 = vsub.s32 0, %v5264
  %v5266 = vadd.s32 %v5261, 1
  %vm5267 = vcmp.gt.s32.totalorder %v5266, 0
  %v5268 = vsel %vm5267, %v5266, 0
  %v5269 = vshrl.u32 %v5268, 5
  %v5270 = vand.u32 %v5268, 31
  %v5271 = vsub.s32 32, %v5270
  %v5272 = vshrl.u32 683565275, %v5271
  %v5273 = vshll.u32 683565275, %v5270
  %v5274 = vshrl.u32 2475754826, %v5271
  %v5275 = vor.u32 %v5273, %v5274
  %v5276 = vshll.u32 2475754826, %v5270
  %v5277 = vshrl.u32 2131351028, %v5271
  %v5278 = vor.u32 %v5276, %v5277
  %v5279 = vshll.u32 2131351028, %v5270
  %v5280 = vshrl.u32 2102212464, %v5271
  %v5281 = vor.u32 %v5279, %v5280
  %v5282 = vshll.u32 2102212464, %v5270
  %v5283 = vshrl.u32 920167782, %v5271
  %v5284 = vor.u32 %v5282, %v5283
  %v5285 = vshll.u32 920167782, %v5270
  %v5286 = vshrl.u32 1326507024, %v5271
  %v5287 = vor.u32 %v5285, %v5286
  %vm5288 = vcmp.lt.s32.totalorder %v5269, 1
  %vm5289 = vcmp.lt.s32.totalorder %v5269, 2
  %vm5290 = vcmp.lt.s32.totalorder %v5269, 3
  %vm5291 = vcmp.lt.s32.totalorder %v5269, 4
  %v5292 = vsel %vm5288, %v5272, %v5275
  %v5293 = vsel %vm5291, %v5281, 2102212464
  %v5294 = vsel %vm5290, %v5278, %v5293
  %v5295 = vsel %vm5289, %v5292, %v5294
  %v5296 = vsel %vm5288, %v5275, %v5278
  %v5297 = vsel %vm5291, %v5284, 920167782
  %v5298 = vsel %vm5290, %v5281, %v5297
  %v5299 = vsel %vm5289, %v5296, %v5298
  %v5300 = vsel %vm5288, %v5278, %v5281
  %v5301 = vsel %vm5291, %v5287, 1326507024
  %v5302 = vsel %vm5290, %v5284, %v5301
  %v5303 = vsel %vm5289, %v5300, %v5302
  %v5304 = vshll.u32 %v5264, 8
  %v5305 = vmul.u32.u64.compose %v5304, %v5303
  %v5306 = vextract.low.u32 %v5305
  %v5307 = vextract.high.u32 %v5305
  %v5308 = vmul.u32.u64.compose %v5304, %v5299
  %v5309 = vextract.low.u32 %v5308
  %v5310 = vextract.high.u32 %v5308
  %v5311 = vmul.u32 %v5304, %v5295
  %v5312 = vadd.s32 %v5307, %v5309
  %vm5313 = vc.u32 %v5307, %v5309
  %v5314 = vadd.s32 %v5310, 1
  %v5315 = vsel %vm5313, %v5314, %v5310
  %v5316 = vadd.s32 %v5311, %v5315
  %v5317 = vadd.s32 %v5316, 536870912
  %v5318 = vshrl.u32 %v5317, 30
  %v5319 = vshll.u32 %v5318, 30
  %v5320 = vsub.s32 %v5316, %v5319
  %vm5321 = vcmp.lt.s32.totalorder %v5320, 0
  %v5322 = vsub.s32 0, %v5320
  %v5323 = vsel %vm5321, %v5322, %v5320
  %v5324 = vclz %v5323
  %v5325 = vsub.s32 %v5324, 2
  %vm5326 = vcmp.gt.s32.totalorder 0, %v5325
  %v5327 = vsel %vm5326, 0, %v5325
  %v5328 = vsub.s32 32, %v5327
  %v5329 = vshll.u32 %v5320, %v5327
  %v5330 = vshrl.u32 %v5312, %v5328
  %v5331 = vor.u32 %v5329, %v5330
  %v5332 = vsub.s32 4294967266, %v5327
  %v5333 = vadd.s32 %v5332, 127
  %v5334 = vshll.u32 %v5333, 23
  %v5335 = vor.u32 4788187, %v5334
  %v5336 = vand.u32 2147483647, %v5335
  %v5338 = vcvt.s32.f32 %v5331
  %v5339 = vmul.f32 %v5338, %v5336
  %v5340 = vxor.u32 %v5339, 2147483648
  %v5341 = vsel %vm5258, %v5340, %v5339
  %v5342 = vsub.s32 4, %v5318
  %v5343 = vsel %vm5258, %v5342, %v5318
  %v5344 = vsel %vm5257, %v652, %v5341
  %v5345 = vsel %vm5257, 0, %v5343
  %v5346 = vcosq.f32.pop %v5344
  %v5347 = vsinq.f32.pop %v5344
  %vm5348 = vweird.f32 %v652
  %v5349 = vadd.s32 %v5345, 3
  %v5350 = vand.u32 %v5349, 3
  %vm5351 = vcmp.lt.s32.totalorder %v5350, 2
  %vm5352 = vcmp.eq.s32.totalorder %v5350, 0
  %v5353 = vxor.u32 %v5347, 2147483648
  %v5354 = vsel %vm5352, %v5346, %v5353
  %vm5355 = vcmp.eq.s32.totalorder %v5350, 2
  %v5356 = vxor.u32 %v5346, 2147483648
  %v5357 = vsel %vm5355, %v5356, %v5347
  %v5358 = vsel %vm5351, %v5354, %v5357
  %v5359 = vsel %vm5348, nan, %v5358
  %v5360 = vand.u32 2147483647, %v653
  %vm5361 = vcmp.le.f32.partialorder %v5360, 0.7853982
  %vm5362 = vcmp.lt.s32.totalorder %v653, 0
  %v5363 = vand.u32 %v653, 2139095040
  %v5364 = vshrl.u32 %v5363, 23
  %v5365 = vsub.s32 %v5364, 127
  %v5366 = vand.u32 2147483647, %v653
  %v5367 = vand.u32 %v5366, 8388607
  %v5368 = vor.u32 %v5367, 8388608
  %v5369 = vsub.s32 0, %v5368
  %v5370 = vadd.s32 %v5365, 1
  %vm5371 = vcmp.gt.s32.totalorder %v5370, 0
  %v5372 = vsel %vm5371, %v5370, 0
  %v5373 = vshrl.u32 %v5372, 5
  %v5374 = vand.u32 %v5372, 31
  %v5375 = vsub.s32 32, %v5374
  %v5376 = vshrl.u32 683565275, %v5375
  %v5377 = vshll.u32 683565275, %v5374
  %v5378 = vshrl.u32 2475754826, %v5375
  %v5379 = vor.u32 %v5377, %v5378
  %v5380 = vshll.u32 2475754826, %v5374
  %v5381 = vshrl.u32 2131351028, %v5375
  %v5382 = vor.u32 %v5380, %v5381
  %v5383 = vshll.u32 2131351028, %v5374
  %v5384 = vshrl.u32 2102212464, %v5375
  %v5385 = vor.u32 %v5383, %v5384
  %v5386 = vshll.u32 2102212464, %v5374
  %v5387 = vshrl.u32 920167782, %v5375
  %v5388 = vor.u32 %v5386, %v5387
  %v5389 = vshll.u32 920167782, %v5374
  %v5390 = vshrl.u32 1326507024, %v5375
  %v5391 = vor.u32 %v5389, %v5390
  %vm5392 = vcmp.lt.s32.totalorder %v5373, 1
  %vm5393 = vcmp.lt.s32.totalorder %v5373, 2
  %vm5394 = vcmp.lt.s32.totalorder %v5373, 3
  %vm5395 = vcmp.lt.s32.totalorder %v5373, 4
  %v5396 = vsel %vm5392, %v5376, %v5379
  %v5397 = vsel %vm5395, %v5385, 2102212464
  %v5398 = vsel %vm5394, %v5382, %v5397
  %v5399 = vsel %vm5393, %v5396, %v5398
  %v5400 = vsel %vm5392, %v5379, %v5382
  %v5401 = vsel %vm5395, %v5388, 920167782
  %v5402 = vsel %vm5394, %v5385, %v5401
  %v5403 = vsel %vm5393, %v5400, %v5402
  %v5404 = vsel %vm5392, %v5382, %v5385
  %v5405 = vsel %vm5395, %v5391, 1326507024
  %v5406 = vsel %vm5394, %v5388, %v5405
  %v5407 = vsel %vm5393, %v5404, %v5406
  %v5408 = vshll.u32 %v5368, 8
  %v5409 = vmul.u32.u64.compose %v5408, %v5407
  %v5410 = vextract.low.u32 %v5409
  %v5411 = vextract.high.u32 %v5409
  %v5412 = vmul.u32.u64.compose %v5408, %v5403
  %v5413 = vextract.low.u32 %v5412
  %v5414 = vextract.high.u32 %v5412
  %v5415 = vmul.u32 %v5408, %v5399
  %v5416 = vadd.s32 %v5411, %v5413
  %vm5417 = vc.u32 %v5411, %v5413
  %v5418 = vadd.s32 %v5414, 1
  %v5419 = vsel %vm5417, %v5418, %v5414
  %v5420 = vadd.s32 %v5415, %v5419
  %v5421 = vadd.s32 %v5420, 536870912
  %v5422 = vshrl.u32 %v5421, 30
  %v5423 = vshll.u32 %v5422, 30
  %v5424 = vsub.s32 %v5420, %v5423
  %vm5425 = vcmp.lt.s32.totalorder %v5424, 0
  %v5426 = vsub.s32 0, %v5424
  %v5427 = vsel %vm5425, %v5426, %v5424
  %v5428 = vclz %v5427
  %v5429 = vsub.s32 %v5428, 2
  %vm5430 = vcmp.gt.s32.totalorder 0, %v5429
  %v5431 = vsel %vm5430, 0, %v5429
  %v5432 = vsub.s32 32, %v5431
  %v5433 = vshll.u32 %v5424, %v5431
  %v5434 = vshrl.u32 %v5416, %v5432
  %v5435 = vor.u32 %v5433, %v5434
  %v5436 = vsub.s32 4294967266, %v5431
  %v5437 = vadd.s32 %v5436, 127
  %v5438 = vshll.u32 %v5437, 23
  %v5439 = vor.u32 4788187, %v5438
  %v5440 = vand.u32 2147483647, %v5439
  %v5442 = vcvt.s32.f32 %v5435
  %v5443 = vmul.f32 %v5442, %v5440
  %v5444 = vxor.u32 %v5443, 2147483648
  %v5445 = vsel %vm5362, %v5444, %v5443
  %v5446 = vsub.s32 4, %v5422
  %v5447 = vsel %vm5362, %v5446, %v5422
  %v5448 = vsel %vm5361, %v653, %v5445
  %v5449 = vsel %vm5361, 0, %v5447
  %v5450 = vcosq.f32.pop %v5448
  %v5451 = vsinq.f32.pop %v5448
  %vm5452 = vweird.f32 %v653
  %v5453 = vadd.s32 %v5449, 3
  %v5454 = vand.u32 %v5453, 3
  %vm5455 = vcmp.lt.s32.totalorder %v5454, 2
  %vm5456 = vcmp.eq.s32.totalorder %v5454, 0
  %v5457 = vxor.u32 %v5451, 2147483648
  %v5458 = vsel %vm5456, %v5450, %v5457
  %vm5459 = vcmp.eq.s32.totalorder %v5454, 2
  %v5460 = vxor.u32 %v5450, 2147483648
  %v5461 = vsel %vm5459, %v5460, %v5451
  %v5462 = vsel %vm5455, %v5458, %v5461
  %v5463 = vsel %vm5452, nan, %v5462
  %v5464 = vand.u32 2147483647, %v654
  %vm5465 = vcmp.le.f32.partialorder %v5464, 0.7853982
  %vm5466 = vcmp.lt.s32.totalorder %v654, 0
  %v5467 = vand.u32 %v654, 2139095040
  %v5468 = vshrl.u32 %v5467, 23
  %v5469 = vsub.s32 %v5468, 127
  %v5470 = vand.u32 2147483647, %v654
  %v5471 = vand.u32 %v5470, 8388607
  %v5472 = vor.u32 %v5471, 8388608
  %v5473 = vsub.s32 0, %v5472
  %v5474 = vadd.s32 %v5469, 1
  %vm5475 = vcmp.gt.s32.totalorder %v5474, 0
  %v5476 = vsel %vm5475, %v5474, 0
  %v5477 = vshrl.u32 %v5476, 5
  %v5478 = vand.u32 %v5476, 31
  %v5479 = vsub.s32 32, %v5478
  %v5480 = vshrl.u32 683565275, %v5479
  %v5481 = vshll.u32 683565275, %v5478
  %v5482 = vshrl.u32 2475754826, %v5479
  %v5483 = vor.u32 %v5481, %v5482
  %v5484 = vshll.u32 2475754826, %v5478
  %v5485 = vshrl.u32 2131351028, %v5479
  %v5486 = vor.u32 %v5484, %v5485
  %v5487 = vshll.u32 2131351028, %v5478
  %v5488 = vshrl.u32 2102212464, %v5479
  %v5489 = vor.u32 %v5487, %v5488
  %v5490 = vshll.u32 2102212464, %v5478
  %v5491 = vshrl.u32 920167782, %v5479
  %v5492 = vor.u32 %v5490, %v5491
  %v5493 = vshll.u32 920167782, %v5478
  %v5494 = vshrl.u32 1326507024, %v5479
  %v5495 = vor.u32 %v5493, %v5494
  %vm5496 = vcmp.lt.s32.totalorder %v5477, 1
  %vm5497 = vcmp.lt.s32.totalorder %v5477, 2
  %vm5498 = vcmp.lt.s32.totalorder %v5477, 3
  %vm5499 = vcmp.lt.s32.totalorder %v5477, 4
  %v5500 = vsel %vm5496, %v5480, %v5483
  %v5501 = vsel %vm5499, %v5489, 2102212464
  %v5502 = vsel %vm5498, %v5486, %v5501
  %v5503 = vsel %vm5497, %v5500, %v5502
  %v5504 = vsel %vm5496, %v5483, %v5486
  %v5505 = vsel %vm5499, %v5492, 920167782
  %v5506 = vsel %vm5498, %v5489, %v5505
  %v5507 = vsel %vm5497, %v5504, %v5506
  %v5508 = vsel %vm5496, %v5486, %v5489
  %v5509 = vsel %vm5499, %v5495, 1326507024
  %v5510 = vsel %vm5498, %v5492, %v5509
  %v5511 = vsel %vm5497, %v5508, %v5510
  %v5512 = vshll.u32 %v5472, 8
  %v5513 = vmul.u32.u64.compose %v5512, %v5511
  %v5514 = vextract.low.u32 %v5513
  %v5515 = vextract.high.u32 %v5513
  %v5516 = vmul.u32.u64.compose %v5512, %v5507
  %v5517 = vextract.low.u32 %v5516
  %v5518 = vextract.high.u32 %v5516
  %v5519 = vmul.u32 %v5512, %v5503
  %v5520 = vadd.s32 %v5515, %v5517
  %vm5521 = vc.u32 %v5515, %v5517
  %v5522 = vadd.s32 %v5518, 1
  %v5523 = vsel %vm5521, %v5522, %v5518
  %v5524 = vadd.s32 %v5519, %v5523
  %v5525 = vadd.s32 %v5524, 536870912
  %v5526 = vshrl.u32 %v5525, 30
  %v5527 = vshll.u32 %v5526, 30
  %v5528 = vsub.s32 %v5524, %v5527
  %vm5529 = vcmp.lt.s32.totalorder %v5528, 0
  %v5530 = vsub.s32 0, %v5528
  %v5531 = vsel %vm5529, %v5530, %v5528
  %v5532 = vclz %v5531
  %v5533 = vsub.s32 %v5532, 2
  %vm5534 = vcmp.gt.s32.totalorder 0, %v5533
  %v5535 = vsel %vm5534, 0, %v5533
  %v5536 = vsub.s32 32, %v5535
  %v5537 = vshll.u32 %v5528, %v5535
  %v5538 = vshrl.u32 %v5520, %v5536
  %v5539 = vor.u32 %v5537, %v5538
  %v5540 = vsub.s32 4294967266, %v5535
  %v5541 = vadd.s32 %v5540, 127
  %v5542 = vshll.u32 %v5541, 23
  %v5543 = vor.u32 4788187, %v5542
  %v5544 = vand.u32 2147483647, %v5543
  %v5546 = vcvt.s32.f32 %v5539
  %v5547 = vmul.f32 %v5546, %v5544
  %v5548 = vxor.u32 %v5547, 2147483648
  %v5549 = vsel %vm5466, %v5548, %v5547
  %v5550 = vsub.s32 4, %v5526
  %v5551 = vsel %vm5466, %v5550, %v5526
  %v5552 = vsel %vm5465, %v654, %v5549
  %v5553 = vsel %vm5465, 0, %v5551
  %v5554 = vcosq.f32.pop %v5552
  %v5555 = vsinq.f32.pop %v5552
  %vm5556 = vweird.f32 %v654
  %v5557 = vadd.s32 %v5553, 3
  %v5558 = vand.u32 %v5557, 3
  %vm5559 = vcmp.lt.s32.totalorder %v5558, 2
  %vm5560 = vcmp.eq.s32.totalorder %v5558, 0
  %v5561 = vxor.u32 %v5555, 2147483648
  %v5562 = vsel %vm5560, %v5554, %v5561
  %vm5563 = vcmp.eq.s32.totalorder %v5558, 2
  %v5564 = vxor.u32 %v5554, 2147483648
  %v5565 = vsel %vm5563, %v5564, %v5555
  %v5566 = vsel %vm5559, %v5562, %v5565
  %v5567 = vsel %vm5556, nan, %v5566
  %v5568 = vand.u32 2147483647, %v655
  %vm5569 = vcmp.le.f32.partialorder %v5568, 0.7853982
  %vm5570 = vcmp.lt.s32.totalorder %v655, 0
  %v5571 = vand.u32 %v655, 2139095040
  %v5572 = vshrl.u32 %v5571, 23
  %v5573 = vsub.s32 %v5572, 127
  %v5574 = vand.u32 2147483647, %v655
  %v5575 = vand.u32 %v5574, 8388607
  %v5576 = vor.u32 %v5575, 8388608
  %v5577 = vsub.s32 0, %v5576
  %v5578 = vadd.s32 %v5573, 1
  %vm5579 = vcmp.gt.s32.totalorder %v5578, 0
  %v5580 = vsel %vm5579, %v5578, 0
  %v5581 = vshrl.u32 %v5580, 5
  %v5582 = vand.u32 %v5580, 31
  %v5583 = vsub.s32 32, %v5582
  %v5584 = vshrl.u32 683565275, %v5583
  %v5585 = vshll.u32 683565275, %v5582
  %v5586 = vshrl.u32 2475754826, %v5583
  %v5587 = vor.u32 %v5585, %v5586
  %v5588 = vshll.u32 2475754826, %v5582
  %v5589 = vshrl.u32 2131351028, %v5583
  %v5590 = vor.u32 %v5588, %v5589
  %v5591 = vshll.u32 2131351028, %v5582
  %v5592 = vshrl.u32 2102212464, %v5583
  %v5593 = vor.u32 %v5591, %v5592
  %v5594 = vshll.u32 2102212464, %v5582
  %v5595 = vshrl.u32 920167782, %v5583
  %v5596 = vor.u32 %v5594, %v5595
  %v5597 = vshll.u32 920167782, %v5582
  %v5598 = vshrl.u32 1326507024, %v5583
  %v5599 = vor.u32 %v5597, %v5598
  %vm5600 = vcmp.lt.s32.totalorder %v5581, 1
  %vm5601 = vcmp.lt.s32.totalorder %v5581, 2
  %vm5602 = vcmp.lt.s32.totalorder %v5581, 3
  %vm5603 = vcmp.lt.s32.totalorder %v5581, 4
  %v5604 = vsel %vm5600, %v5584, %v5587
  %v5605 = vsel %vm5603, %v5593, 2102212464
  %v5606 = vsel %vm5602, %v5590, %v5605
  %v5607 = vsel %vm5601, %v5604, %v5606
  %v5608 = vsel %vm5600, %v5587, %v5590
  %v5609 = vsel %vm5603, %v5596, 920167782
  %v5610 = vsel %vm5602, %v5593, %v5609
  %v5611 = vsel %vm5601, %v5608, %v5610
  %v5612 = vsel %vm5600, %v5590, %v5593
  %v5613 = vsel %vm5603, %v5599, 1326507024
  %v5614 = vsel %vm5602, %v5596, %v5613
  %v5615 = vsel %vm5601, %v5612, %v5614
  %v5616 = vshll.u32 %v5576, 8
  %v5617 = vmul.u32.u64.compose %v5616, %v5615
  %v5618 = vextract.low.u32 %v5617
  %v5619 = vextract.high.u32 %v5617
  %v5620 = vmul.u32.u64.compose %v5616, %v5611
  %v5621 = vextract.low.u32 %v5620
  %v5622 = vextract.high.u32 %v5620
  %v5623 = vmul.u32 %v5616, %v5607
  %v5624 = vadd.s32 %v5619, %v5621
  %vm5625 = vc.u32 %v5619, %v5621
  %v5626 = vadd.s32 %v5622, 1
  %v5627 = vsel %vm5625, %v5626, %v5622
  %v5628 = vadd.s32 %v5623, %v5627
  %v5629 = vadd.s32 %v5628, 536870912
  %v5630 = vshrl.u32 %v5629, 30
  %v5631 = vshll.u32 %v5630, 30
  %v5632 = vsub.s32 %v5628, %v5631
  %vm5633 = vcmp.lt.s32.totalorder %v5632, 0
  %v5634 = vsub.s32 0, %v5632
  %v5635 = vsel %vm5633, %v5634, %v5632
  %v5636 = vclz %v5635
  %v5637 = vsub.s32 %v5636, 2
  %vm5638 = vcmp.gt.s32.totalorder 0, %v5637
  %v5639 = vsel %vm5638, 0, %v5637
  %v5640 = vsub.s32 32, %v5639
  %v5641 = vshll.u32 %v5632, %v5639
  %v5642 = vshrl.u32 %v5624, %v5640
  %v5643 = vor.u32 %v5641, %v5642
  %v5644 = vsub.s32 4294967266, %v5639
  %v5645 = vadd.s32 %v5644, 127
  %v5646 = vshll.u32 %v5645, 23
  %v5647 = vor.u32 4788187, %v5646
  %v5648 = vand.u32 2147483647, %v5647
  %v5650 = vcvt.s32.f32 %v5643
  %v5651 = vmul.f32 %v5650, %v5648
  %v5652 = vxor.u32 %v5651, 2147483648
  %v5653 = vsel %vm5570, %v5652, %v5651
  %v5654 = vsub.s32 4, %v5630
  %v5655 = vsel %vm5570, %v5654, %v5630
  %v5656 = vsel %vm5569, %v655, %v5653
  %v5657 = vsel %vm5569, 0, %v5655
  %v5658 = vcosq.f32.pop %v5656
  %v5659 = vsinq.f32.pop %v5656
  %vm5660 = vweird.f32 %v655
  %v5661 = vadd.s32 %v5657, 3
  %v5662 = vand.u32 %v5661, 3
  %vm5663 = vcmp.lt.s32.totalorder %v5662, 2
  %vm5664 = vcmp.eq.s32.totalorder %v5662, 0
  %v5665 = vxor.u32 %v5659, 2147483648
  %v5666 = vsel %vm5664, %v5658, %v5665
  %vm5667 = vcmp.eq.s32.totalorder %v5662, 2
  %v5668 = vxor.u32 %v5658, 2147483648
  %v5669 = vsel %vm5667, %v5668, %v5659
  %v5670 = vsel %vm5663, %v5666, %v5669
  %v5671 = vsel %vm5660, nan, %v5670
  %v5672 = vand.u32 2147483647, %v656
  %vm5673 = vcmp.le.f32.partialorder %v5672, 0.7853982
  %vm5674 = vcmp.lt.s32.totalorder %v656, 0
  %v5675 = vand.u32 %v656, 2139095040
  %v5676 = vshrl.u32 %v5675, 23
  %v5677 = vsub.s32 %v5676, 127
  %v5678 = vand.u32 2147483647, %v656
  %v5679 = vand.u32 %v5678, 8388607
  %v5680 = vor.u32 %v5679, 8388608
  %v5681 = vsub.s32 0, %v5680
  %v5682 = vadd.s32 %v5677, 1
  %vm5683 = vcmp.gt.s32.totalorder %v5682, 0
  %v5684 = vsel %vm5683, %v5682, 0
  %v5685 = vshrl.u32 %v5684, 5
  %v5686 = vand.u32 %v5684, 31
  %v5687 = vsub.s32 32, %v5686
  %v5688 = vshrl.u32 683565275, %v5687
  %v5689 = vshll.u32 683565275, %v5686
  %v5690 = vshrl.u32 2475754826, %v5687
  %v5691 = vor.u32 %v5689, %v5690
  %v5692 = vshll.u32 2475754826, %v5686
  %v5693 = vshrl.u32 2131351028, %v5687
  %v5694 = vor.u32 %v5692, %v5693
  %v5695 = vshll.u32 2131351028, %v5686
  %v5696 = vshrl.u32 2102212464, %v5687
  %v5697 = vor.u32 %v5695, %v5696
  %v5698 = vshll.u32 2102212464, %v5686
  %v5699 = vshrl.u32 920167782, %v5687
  %v5700 = vor.u32 %v5698, %v5699
  %v5701 = vshll.u32 920167782, %v5686
  %v5702 = vshrl.u32 1326507024, %v5687
  %v5703 = vor.u32 %v5701, %v5702
  %vm5704 = vcmp.lt.s32.totalorder %v5685, 1
  %vm5705 = vcmp.lt.s32.totalorder %v5685, 2
  %vm5706 = vcmp.lt.s32.totalorder %v5685, 3
  %vm5707 = vcmp.lt.s32.totalorder %v5685, 4
  %v5708 = vsel %vm5704, %v5688, %v5691
  %v5709 = vsel %vm5707, %v5697, 2102212464
  %v5710 = vsel %vm5706, %v5694, %v5709
  %v5711 = vsel %vm5705, %v5708, %v5710
  %v5712 = vsel %vm5704, %v5691, %v5694
  %v5713 = vsel %vm5707, %v5700, 920167782
  %v5714 = vsel %vm5706, %v5697, %v5713
  %v5715 = vsel %vm5705, %v5712, %v5714
  %v5716 = vsel %vm5704, %v5694, %v5697
  %v5717 = vsel %vm5707, %v5703, 1326507024
  %v5718 = vsel %vm5706, %v5700, %v5717
  %v5719 = vsel %vm5705, %v5716, %v5718
  %v5720 = vshll.u32 %v5680, 8
  %v5721 = vmul.u32.u64.compose %v5720, %v5719
  %v5722 = vextract.low.u32 %v5721
  %v5723 = vextract.high.u32 %v5721
  %v5724 = vmul.u32.u64.compose %v5720, %v5715
  %v5725 = vextract.low.u32 %v5724
  %v5726 = vextract.high.u32 %v5724
  %v5727 = vmul.u32 %v5720, %v5711
  %v5728 = vadd.s32 %v5723, %v5725
  %vm5729 = vc.u32 %v5723, %v5725
  %v5730 = vadd.s32 %v5726, 1
  %v5731 = vsel %vm5729, %v5730, %v5726
  %v5732 = vadd.s32 %v5727, %v5731
  %v5733 = vadd.s32 %v5732, 536870912
  %v5734 = vshrl.u32 %v5733, 30
  %v5735 = vshll.u32 %v5734, 30
  %v5736 = vsub.s32 %v5732, %v5735
  %vm5737 = vcmp.lt.s32.totalorder %v5736, 0
  %v5738 = vsub.s32 0, %v5736
  %v5739 = vsel %vm5737, %v5738, %v5736
  %v5740 = vclz %v5739
  %v5741 = vsub.s32 %v5740, 2
  %vm5742 = vcmp.gt.s32.totalorder 0, %v5741
  %v5743 = vsel %vm5742, 0, %v5741
  %v5744 = vsub.s32 32, %v5743
  %v5745 = vshll.u32 %v5736, %v5743
  %v5746 = vshrl.u32 %v5728, %v5744
  %v5747 = vor.u32 %v5745, %v5746
  %v5748 = vsub.s32 4294967266, %v5743
  %v5749 = vadd.s32 %v5748, 127
  %v5750 = vshll.u32 %v5749, 23
  %v5751 = vor.u32 4788187, %v5750
  %v5752 = vand.u32 2147483647, %v5751
  %v5754 = vcvt.s32.f32 %v5747
  %v5755 = vmul.f32 %v5754, %v5752
  %v5756 = vxor.u32 %v5755, 2147483648
  %v5757 = vsel %vm5674, %v5756, %v5755
  %v5758 = vsub.s32 4, %v5734
  %v5759 = vsel %vm5674, %v5758, %v5734
  %v5760 = vsel %vm5673, %v656, %v5757
  %v5761 = vsel %vm5673, 0, %v5759
  %v5762 = vcosq.f32.pop %v5760
  %v5763 = vsinq.f32.pop %v5760
  %vm5764 = vweird.f32 %v656
  %v5765 = vadd.s32 %v5761, 3
  %v5766 = vand.u32 %v5765, 3
  %vm5767 = vcmp.lt.s32.totalorder %v5766, 2
  %vm5768 = vcmp.eq.s32.totalorder %v5766, 0
  %v5769 = vxor.u32 %v5763, 2147483648
  %v5770 = vsel %vm5768, %v5762, %v5769
  %vm5771 = vcmp.eq.s32.totalorder %v5766, 2
  %v5772 = vxor.u32 %v5762, 2147483648
  %v5773 = vsel %vm5771, %v5772, %v5763
  %v5774 = vsel %vm5767, %v5770, %v5773
  %v5775 = vsel %vm5764, nan, %v5774
  %v5776 = vand.u32 2147483647, %v657
  %vm5777 = vcmp.le.f32.partialorder %v5776, 0.7853982
  %vm5778 = vcmp.lt.s32.totalorder %v657, 0
  %v5779 = vand.u32 %v657, 2139095040
  %v5780 = vshrl.u32 %v5779, 23
  %v5781 = vsub.s32 %v5780, 127
  %v5782 = vand.u32 2147483647, %v657
  %v5783 = vand.u32 %v5782, 8388607
  %v5784 = vor.u32 %v5783, 8388608
  %v5785 = vsub.s32 0, %v5784
  %v5786 = vadd.s32 %v5781, 1
  %vm5787 = vcmp.gt.s32.totalorder %v5786, 0
  %v5788 = vsel %vm5787, %v5786, 0
  %v5789 = vshrl.u32 %v5788, 5
  %v5790 = vand.u32 %v5788, 31
  %v5791 = vsub.s32 32, %v5790
  %v5792 = vshrl.u32 683565275, %v5791
  %v5793 = vshll.u32 683565275, %v5790
  %v5794 = vshrl.u32 2475754826, %v5791
  %v5795 = vor.u32 %v5793, %v5794
  %v5796 = vshll.u32 2475754826, %v5790
  %v5797 = vshrl.u32 2131351028, %v5791
  %v5798 = vor.u32 %v5796, %v5797
  %v5799 = vshll.u32 2131351028, %v5790
  %v5800 = vshrl.u32 2102212464, %v5791
  %v5801 = vor.u32 %v5799, %v5800
  %v5802 = vshll.u32 2102212464, %v5790
  %v5803 = vshrl.u32 920167782, %v5791
  %v5804 = vor.u32 %v5802, %v5803
  %v5805 = vshll.u32 920167782, %v5790
  %v5806 = vshrl.u32 1326507024, %v5791
  %v5807 = vor.u32 %v5805, %v5806
  %vm5808 = vcmp.lt.s32.totalorder %v5789, 1
  %vm5809 = vcmp.lt.s32.totalorder %v5789, 2
  %vm5810 = vcmp.lt.s32.totalorder %v5789, 3
  %vm5811 = vcmp.lt.s32.totalorder %v5789, 4
  %v5812 = vsel %vm5808, %v5792, %v5795
  %v5813 = vsel %vm5811, %v5801, 2102212464
  %v5814 = vsel %vm5810, %v5798, %v5813
  %v5815 = vsel %vm5809, %v5812, %v5814
  %v5816 = vsel %vm5808, %v5795, %v5798
  %v5817 = vsel %vm5811, %v5804, 920167782
  %v5818 = vsel %vm5810, %v5801, %v5817
  %v5819 = vsel %vm5809, %v5816, %v5818
  %v5820 = vsel %vm5808, %v5798, %v5801
  %v5821 = vsel %vm5811, %v5807, 1326507024
  %v5822 = vsel %vm5810, %v5804, %v5821
  %v5823 = vsel %vm5809, %v5820, %v5822
  %v5824 = vshll.u32 %v5784, 8
  %v5825 = vmul.u32.u64.compose %v5824, %v5823
  %v5826 = vextract.low.u32 %v5825
  %v5827 = vextract.high.u32 %v5825
  %v5828 = vmul.u32.u64.compose %v5824, %v5819
  %v5829 = vextract.low.u32 %v5828
  %v5830 = vextract.high.u32 %v5828
  %v5831 = vmul.u32 %v5824, %v5815
  %v5832 = vadd.s32 %v5827, %v5829
  %vm5833 = vc.u32 %v5827, %v5829
  %v5834 = vadd.s32 %v5830, 1
  %v5835 = vsel %vm5833, %v5834, %v5830
  %v5836 = vadd.s32 %v5831, %v5835
  %v5837 = vadd.s32 %v5836, 536870912
  %v5838 = vshrl.u32 %v5837, 30
  %v5839 = vshll.u32 %v5838, 30
  %v5840 = vsub.s32 %v5836, %v5839
  %vm5841 = vcmp.lt.s32.totalorder %v5840, 0
  %v5842 = vsub.s32 0, %v5840
  %v5843 = vsel %vm5841, %v5842, %v5840
  %v5844 = vclz %v5843
  %v5845 = vsub.s32 %v5844, 2
  %vm5846 = vcmp.gt.s32.totalorder 0, %v5845
  %v5847 = vsel %vm5846, 0, %v5845
  %v5848 = vsub.s32 32, %v5847
  %v5849 = vshll.u32 %v5840, %v5847
  %v5850 = vshrl.u32 %v5832, %v5848
  %v5851 = vor.u32 %v5849, %v5850
  %v5852 = vsub.s32 4294967266, %v5847
  %v5853 = vadd.s32 %v5852, 127
  %v5854 = vshll.u32 %v5853, 23
  %v5855 = vor.u32 4788187, %v5854
  %v5856 = vand.u32 2147483647, %v5855
  %v5858 = vcvt.s32.f32 %v5851
  %v5859 = vmul.f32 %v5858, %v5856
  %v5860 = vxor.u32 %v5859, 2147483648
  %v5861 = vsel %vm5778, %v5860, %v5859
  %v5862 = vsub.s32 4, %v5838
  %v5863 = vsel %vm5778, %v5862, %v5838
  %v5864 = vsel %vm5777, %v657, %v5861
  %v5865 = vsel %vm5777, 0, %v5863
  %v5866 = vcosq.f32.pop %v5864
  %v5867 = vsinq.f32.pop %v5864
  %vm5868 = vweird.f32 %v657
  %v5869 = vadd.s32 %v5865, 3
  %v5870 = vand.u32 %v5869, 3
  %vm5871 = vcmp.lt.s32.totalorder %v5870, 2
  %vm5872 = vcmp.eq.s32.totalorder %v5870, 0
  %v5873 = vxor.u32 %v5867, 2147483648
  %v5874 = vsel %vm5872, %v5866, %v5873
  %vm5875 = vcmp.eq.s32.totalorder %v5870, 2
  %v5876 = vxor.u32 %v5866, 2147483648
  %v5877 = vsel %vm5875, %v5876, %v5867
  %v5878 = vsel %vm5871, %v5874, %v5877
  %v5879 = vsel %vm5868, nan, %v5878
  %v5880 = vand.u32 2147483647, %v658
  %vm5881 = vcmp.le.f32.partialorder %v5880, 0.7853982
  %vm5882 = vcmp.lt.s32.totalorder %v658, 0
  %v5883 = vand.u32 %v658, 2139095040
  %v5884 = vshrl.u32 %v5883, 23
  %v5885 = vsub.s32 %v5884, 127
  %v5886 = vand.u32 2147483647, %v658
  %v5887 = vand.u32 %v5886, 8388607
  %v5888 = vor.u32 %v5887, 8388608
  %v5889 = vsub.s32 0, %v5888
  %v5890 = vadd.s32 %v5885, 1
  %vm5891 = vcmp.gt.s32.totalorder %v5890, 0
  %v5892 = vsel %vm5891, %v5890, 0
  %v5893 = vshrl.u32 %v5892, 5
  %v5894 = vand.u32 %v5892, 31
  %v5895 = vsub.s32 32, %v5894
  %v5896 = vshrl.u32 683565275, %v5895
  %v5897 = vshll.u32 683565275, %v5894
  %v5898 = vshrl.u32 2475754826, %v5895
  %v5899 = vor.u32 %v5897, %v5898
  %v5900 = vshll.u32 2475754826, %v5894
  %v5901 = vshrl.u32 2131351028, %v5895
  %v5902 = vor.u32 %v5900, %v5901
  %v5903 = vshll.u32 2131351028, %v5894
  %v5904 = vshrl.u32 2102212464, %v5895
  %v5905 = vor.u32 %v5903, %v5904
  %v5906 = vshll.u32 2102212464, %v5894
  %v5907 = vshrl.u32 920167782, %v5895
  %v5908 = vor.u32 %v5906, %v5907
  %v5909 = vshll.u32 920167782, %v5894
  %v5910 = vshrl.u32 1326507024, %v5895
  %v5911 = vor.u32 %v5909, %v5910
  %vm5912 = vcmp.lt.s32.totalorder %v5893, 1
  %vm5913 = vcmp.lt.s32.totalorder %v5893, 2
  %vm5914 = vcmp.lt.s32.totalorder %v5893, 3
  %vm5915 = vcmp.lt.s32.totalorder %v5893, 4
  %v5916 = vsel %vm5912, %v5896, %v5899
  %v5917 = vsel %vm5915, %v5905, 2102212464
  %v5918 = vsel %vm5914, %v5902, %v5917
  %v5919 = vsel %vm5913, %v5916, %v5918
  %v5920 = vsel %vm5912, %v5899, %v5902
  %v5921 = vsel %vm5915, %v5908, 920167782
  %v5922 = vsel %vm5914, %v5905, %v5921
  %v5923 = vsel %vm5913, %v5920, %v5922
  %v5924 = vsel %vm5912, %v5902, %v5905
  %v5925 = vsel %vm5915, %v5911, 1326507024
  %v5926 = vsel %vm5914, %v5908, %v5925
  %v5927 = vsel %vm5913, %v5924, %v5926
  %v5928 = vshll.u32 %v5888, 8
  %v5929 = vmul.u32.u64.compose %v5928, %v5927
  %v5930 = vextract.low.u32 %v5929
  %v5931 = vextract.high.u32 %v5929
  %v5932 = vmul.u32.u64.compose %v5928, %v5923
  %v5933 = vextract.low.u32 %v5932
  %v5934 = vextract.high.u32 %v5932
  %v5935 = vmul.u32 %v5928, %v5919
  %v5936 = vadd.s32 %v5931, %v5933
  %vm5937 = vc.u32 %v5931, %v5933
  %v5938 = vadd.s32 %v5934, 1
  %v5939 = vsel %vm5937, %v5938, %v5934
  %v5940 = vadd.s32 %v5935, %v5939
  %v5941 = vadd.s32 %v5940, 536870912
  %v5942 = vshrl.u32 %v5941, 30
  %v5943 = vshll.u32 %v5942, 30
  %v5944 = vsub.s32 %v5940, %v5943
  %vm5945 = vcmp.lt.s32.totalorder %v5944, 0
  %v5946 = vsub.s32 0, %v5944
  %v5947 = vsel %vm5945, %v5946, %v5944
  %v5948 = vclz %v5947
  %v5949 = vsub.s32 %v5948, 2
  %vm5950 = vcmp.gt.s32.totalorder 0, %v5949
  %v5951 = vsel %vm5950, 0, %v5949
  %v5952 = vsub.s32 32, %v5951
  %v5953 = vshll.u32 %v5944, %v5951
  %v5954 = vshrl.u32 %v5936, %v5952
  %v5955 = vor.u32 %v5953, %v5954
  %v5956 = vsub.s32 4294967266, %v5951
  %v5957 = vadd.s32 %v5956, 127
  %v5958 = vshll.u32 %v5957, 23
  %v5959 = vor.u32 4788187, %v5958
  %v5960 = vand.u32 2147483647, %v5959
  %v5962 = vcvt.s32.f32 %v5955
  %v5963 = vmul.f32 %v5962, %v5960
  %v5964 = vxor.u32 %v5963, 2147483648
  %v5965 = vsel %vm5882, %v5964, %v5963
  %v5966 = vsub.s32 4, %v5942
  %v5967 = vsel %vm5882, %v5966, %v5942
  %v5968 = vsel %vm5881, %v658, %v5965
  %v5969 = vsel %vm5881, 0, %v5967
  %v5970 = vcosq.f32.pop %v5968
  %v5971 = vsinq.f32.pop %v5968
  %vm5972 = vweird.f32 %v658
  %v5973 = vadd.s32 %v5969, 3
  %v5974 = vand.u32 %v5973, 3
  %vm5975 = vcmp.lt.s32.totalorder %v5974, 2
  %vm5976 = vcmp.eq.s32.totalorder %v5974, 0
  %v5977 = vxor.u32 %v5971, 2147483648
  %v5978 = vsel %vm5976, %v5970, %v5977
  %vm5979 = vcmp.eq.s32.totalorder %v5974, 2
  %v5980 = vxor.u32 %v5970, 2147483648
  %v5981 = vsel %vm5979, %v5980, %v5971
  %v5982 = vsel %vm5975, %v5978, %v5981
  %v5983 = vsel %vm5972, nan, %v5982
  %v5984 = vand.u32 2147483647, %v659
  %vm5985 = vcmp.le.f32.partialorder %v5984, 0.7853982
  %vm5986 = vcmp.lt.s32.totalorder %v659, 0
  %v5987 = vand.u32 %v659, 2139095040
  %v5988 = vshrl.u32 %v5987, 23
  %v5989 = vsub.s32 %v5988, 127
  %v5990 = vand.u32 2147483647, %v659
  %v5991 = vand.u32 %v5990, 8388607
  %v5992 = vor.u32 %v5991, 8388608
  %v5993 = vsub.s32 0, %v5992
  %v5994 = vadd.s32 %v5989, 1
  %vm5995 = vcmp.gt.s32.totalorder %v5994, 0
  %v5996 = vsel %vm5995, %v5994, 0
  %v5997 = vshrl.u32 %v5996, 5
  %v5998 = vand.u32 %v5996, 31
  %v5999 = vsub.s32 32, %v5998
  %v6000 = vshrl.u32 683565275, %v5999
  %v6001 = vshll.u32 683565275, %v5998
  %v6002 = vshrl.u32 2475754826, %v5999
  %v6003 = vor.u32 %v6001, %v6002
  %v6004 = vshll.u32 2475754826, %v5998
  %v6005 = vshrl.u32 2131351028, %v5999
  %v6006 = vor.u32 %v6004, %v6005
  %v6007 = vshll.u32 2131351028, %v5998
  %v6008 = vshrl.u32 2102212464, %v5999
  %v6009 = vor.u32 %v6007, %v6008
  %v6010 = vshll.u32 2102212464, %v5998
  %v6011 = vshrl.u32 920167782, %v5999
  %v6012 = vor.u32 %v6010, %v6011
  %v6013 = vshll.u32 920167782, %v5998
  %v6014 = vshrl.u32 1326507024, %v5999
  %v6015 = vor.u32 %v6013, %v6014
  %vm6016 = vcmp.lt.s32.totalorder %v5997, 1
  %vm6017 = vcmp.lt.s32.totalorder %v5997, 2
  %vm6018 = vcmp.lt.s32.totalorder %v5997, 3
  %vm6019 = vcmp.lt.s32.totalorder %v5997, 4
  %v6020 = vsel %vm6016, %v6000, %v6003
  %v6021 = vsel %vm6019, %v6009, 2102212464
  %v6022 = vsel %vm6018, %v6006, %v6021
  %v6023 = vsel %vm6017, %v6020, %v6022
  %v6024 = vsel %vm6016, %v6003, %v6006
  %v6025 = vsel %vm6019, %v6012, 920167782
  %v6026 = vsel %vm6018, %v6009, %v6025
  %v6027 = vsel %vm6017, %v6024, %v6026
  %v6028 = vsel %vm6016, %v6006, %v6009
  %v6029 = vsel %vm6019, %v6015, 1326507024
  %v6030 = vsel %vm6018, %v6012, %v6029
  %v6031 = vsel %vm6017, %v6028, %v6030
  %v6032 = vshll.u32 %v5992, 8
  %v6033 = vmul.u32.u64.compose %v6032, %v6031
  %v6034 = vextract.low.u32 %v6033
  %v6035 = vextract.high.u32 %v6033
  %v6036 = vmul.u32.u64.compose %v6032, %v6027
  %v6037 = vextract.low.u32 %v6036
  %v6038 = vextract.high.u32 %v6036
  %v6039 = vmul.u32 %v6032, %v6023
  %v6040 = vadd.s32 %v6035, %v6037
  %vm6041 = vc.u32 %v6035, %v6037
  %v6042 = vadd.s32 %v6038, 1
  %v6043 = vsel %vm6041, %v6042, %v6038
  %v6044 = vadd.s32 %v6039, %v6043
  %v6045 = vadd.s32 %v6044, 536870912
  %v6046 = vshrl.u32 %v6045, 30
  %v6047 = vshll.u32 %v6046, 30
  %v6048 = vsub.s32 %v6044, %v6047
  %vm6049 = vcmp.lt.s32.totalorder %v6048, 0
  %v6050 = vsub.s32 0, %v6048
  %v6051 = vsel %vm6049, %v6050, %v6048
  %v6052 = vclz %v6051
  %v6053 = vsub.s32 %v6052, 2
  %vm6054 = vcmp.gt.s32.totalorder 0, %v6053
  %v6055 = vsel %vm6054, 0, %v6053
  %v6056 = vsub.s32 32, %v6055
  %v6057 = vshll.u32 %v6048, %v6055
  %v6058 = vshrl.u32 %v6040, %v6056
  %v6059 = vor.u32 %v6057, %v6058
  %v6060 = vsub.s32 4294967266, %v6055
  %v6061 = vadd.s32 %v6060, 127
  %v6062 = vshll.u32 %v6061, 23
  %v6063 = vor.u32 4788187, %v6062
  %v6064 = vand.u32 2147483647, %v6063
  %v6066 = vcvt.s32.f32 %v6059
  %v6067 = vmul.f32 %v6066, %v6064
  %v6068 = vxor.u32 %v6067, 2147483648
  %v6069 = vsel %vm5986, %v6068, %v6067
  %v6070 = vsub.s32 4, %v6046
  %v6071 = vsel %vm5986, %v6070, %v6046
  %v6072 = vsel %vm5985, %v659, %v6069
  %v6073 = vsel %vm5985, 0, %v6071
  %v6074 = vcosq.f32.pop %v6072
  %v6075 = vsinq.f32.pop %v6072
  %vm6076 = vweird.f32 %v659
  %v6077 = vadd.s32 %v6073, 3
  %v6078 = vand.u32 %v6077, 3
  %vm6079 = vcmp.lt.s32.totalorder %v6078, 2
  %vm6080 = vcmp.eq.s32.totalorder %v6078, 0
  %v6081 = vxor.u32 %v6075, 2147483648
  %v6082 = vsel %vm6080, %v6074, %v6081
  %vm6083 = vcmp.eq.s32.totalorder %v6078, 2
  %v6084 = vxor.u32 %v6074, 2147483648
  %v6085 = vsel %vm6083, %v6084, %v6075
  %v6086 = vsel %vm6079, %v6082, %v6085
  %v6087 = vsel %vm6076, nan, %v6086
  %v6088 = vand.u32 2147483647, %v660
  %vm6089 = vcmp.le.f32.partialorder %v6088, 0.7853982
  %vm6090 = vcmp.lt.s32.totalorder %v660, 0
  %v6091 = vand.u32 %v660, 2139095040
  %v6092 = vshrl.u32 %v6091, 23
  %v6093 = vsub.s32 %v6092, 127
  %v6094 = vand.u32 2147483647, %v660
  %v6095 = vand.u32 %v6094, 8388607
  %v6096 = vor.u32 %v6095, 8388608
  %v6097 = vsub.s32 0, %v6096
  %v6098 = vadd.s32 %v6093, 1
  %vm6099 = vcmp.gt.s32.totalorder %v6098, 0
  %v6100 = vsel %vm6099, %v6098, 0
  %v6101 = vshrl.u32 %v6100, 5
  %v6102 = vand.u32 %v6100, 31
  %v6103 = vsub.s32 32, %v6102
  %v6104 = vshrl.u32 683565275, %v6103
  %v6105 = vshll.u32 683565275, %v6102
  %v6106 = vshrl.u32 2475754826, %v6103
  %v6107 = vor.u32 %v6105, %v6106
  %v6108 = vshll.u32 2475754826, %v6102
  %v6109 = vshrl.u32 2131351028, %v6103
  %v6110 = vor.u32 %v6108, %v6109
  %v6111 = vshll.u32 2131351028, %v6102
  %v6112 = vshrl.u32 2102212464, %v6103
  %v6113 = vor.u32 %v6111, %v6112
  %v6114 = vshll.u32 2102212464, %v6102
  %v6115 = vshrl.u32 920167782, %v6103
  %v6116 = vor.u32 %v6114, %v6115
  %v6117 = vshll.u32 920167782, %v6102
  %v6118 = vshrl.u32 1326507024, %v6103
  %v6119 = vor.u32 %v6117, %v6118
  %vm6120 = vcmp.lt.s32.totalorder %v6101, 1
  %vm6121 = vcmp.lt.s32.totalorder %v6101, 2
  %vm6122 = vcmp.lt.s32.totalorder %v6101, 3
  %vm6123 = vcmp.lt.s32.totalorder %v6101, 4
  %v6124 = vsel %vm6120, %v6104, %v6107
  %v6125 = vsel %vm6123, %v6113, 2102212464
  %v6126 = vsel %vm6122, %v6110, %v6125
  %v6127 = vsel %vm6121, %v6124, %v6126
  %v6128 = vsel %vm6120, %v6107, %v6110
  %v6129 = vsel %vm6123, %v6116, 920167782
  %v6130 = vsel %vm6122, %v6113, %v6129
  %v6131 = vsel %vm6121, %v6128, %v6130
  %v6132 = vsel %vm6120, %v6110, %v6113
  %v6133 = vsel %vm6123, %v6119, 1326507024
  %v6134 = vsel %vm6122, %v6116, %v6133
  %v6135 = vsel %vm6121, %v6132, %v6134
  %v6136 = vshll.u32 %v6096, 8
  %v6137 = vmul.u32.u64.compose %v6136, %v6135
  %v6138 = vextract.low.u32 %v6137
  %v6139 = vextract.high.u32 %v6137
  %v6140 = vmul.u32.u64.compose %v6136, %v6131
  %v6141 = vextract.low.u32 %v6140
  %v6142 = vextract.high.u32 %v6140
  %v6143 = vmul.u32 %v6136, %v6127
  %v6144 = vadd.s32 %v6139, %v6141
  %vm6145 = vc.u32 %v6139, %v6141
  %v6146 = vadd.s32 %v6142, 1
  %v6147 = vsel %vm6145, %v6146, %v6142
  %v6148 = vadd.s32 %v6143, %v6147
  %v6149 = vadd.s32 %v6148, 536870912
  %v6150 = vshrl.u32 %v6149, 30
  %v6151 = vshll.u32 %v6150, 30
  %v6152 = vsub.s32 %v6148, %v6151
  %vm6153 = vcmp.lt.s32.totalorder %v6152, 0
  %v6154 = vsub.s32 0, %v6152
  %v6155 = vsel %vm6153, %v6154, %v6152
  %v6156 = vclz %v6155
  %v6157 = vsub.s32 %v6156, 2
  %vm6158 = vcmp.gt.s32.totalorder 0, %v6157
  %v6159 = vsel %vm6158, 0, %v6157
  %v6160 = vsub.s32 32, %v6159
  %v6161 = vshll.u32 %v6152, %v6159
  %v6162 = vshrl.u32 %v6144, %v6160
  %v6163 = vor.u32 %v6161, %v6162
  %v6164 = vsub.s32 4294967266, %v6159
  %v6165 = vadd.s32 %v6164, 127
  %v6166 = vshll.u32 %v6165, 23
  %v6167 = vor.u32 4788187, %v6166
  %v6168 = vand.u32 2147483647, %v6167
  %v6170 = vcvt.s32.f32 %v6163
  %v6171 = vmul.f32 %v6170, %v6168
  %v6172 = vxor.u32 %v6171, 2147483648
  %v6173 = vsel %vm6090, %v6172, %v6171
  %v6174 = vsub.s32 4, %v6150
  %v6175 = vsel %vm6090, %v6174, %v6150
  %v6176 = vsel %vm6089, %v660, %v6173
  %v6177 = vsel %vm6089, 0, %v6175
  %v6178 = vcosq.f32.pop %v6176
  %v6179 = vsinq.f32.pop %v6176
  %vm6180 = vweird.f32 %v660
  %v6181 = vadd.s32 %v6177, 3
  %v6182 = vand.u32 %v6181, 3
  %vm6183 = vcmp.lt.s32.totalorder %v6182, 2
  %vm6184 = vcmp.eq.s32.totalorder %v6182, 0
  %v6185 = vxor.u32 %v6179, 2147483648
  %v6186 = vsel %vm6184, %v6178, %v6185
  %vm6187 = vcmp.eq.s32.totalorder %v6182, 2
  %v6188 = vxor.u32 %v6178, 2147483648
  %v6189 = vsel %vm6187, %v6188, %v6179
  %v6190 = vsel %vm6183, %v6186, %v6189
  %v6191 = vsel %vm6180, nan, %v6190
  %v6192 = vand.u32 2147483647, %v661
  %vm6193 = vcmp.le.f32.partialorder %v6192, 0.7853982
  %vm6194 = vcmp.lt.s32.totalorder %v661, 0
  %v6195 = vand.u32 %v661, 2139095040
  %v6196 = vshrl.u32 %v6195, 23
  %v6197 = vsub.s32 %v6196, 127
  %v6198 = vand.u32 2147483647, %v661
  %v6199 = vand.u32 %v6198, 8388607
  %v6200 = vor.u32 %v6199, 8388608
  %v6201 = vsub.s32 0, %v6200
  %v6202 = vadd.s32 %v6197, 1
  %vm6203 = vcmp.gt.s32.totalorder %v6202, 0
  %v6204 = vsel %vm6203, %v6202, 0
  %v6205 = vshrl.u32 %v6204, 5
  %v6206 = vand.u32 %v6204, 31
  %v6207 = vsub.s32 32, %v6206
  %v6208 = vshrl.u32 683565275, %v6207
  %v6209 = vshll.u32 683565275, %v6206
  %v6210 = vshrl.u32 2475754826, %v6207
  %v6211 = vor.u32 %v6209, %v6210
  %v6212 = vshll.u32 2475754826, %v6206
  %v6213 = vshrl.u32 2131351028, %v6207
  %v6214 = vor.u32 %v6212, %v6213
  %v6215 = vshll.u32 2131351028, %v6206
  %v6216 = vshrl.u32 2102212464, %v6207
  %v6217 = vor.u32 %v6215, %v6216
  %v6218 = vshll.u32 2102212464, %v6206
  %v6219 = vshrl.u32 920167782, %v6207
  %v6220 = vor.u32 %v6218, %v6219
  %v6221 = vshll.u32 920167782, %v6206
  %v6222 = vshrl.u32 1326507024, %v6207
  %v6223 = vor.u32 %v6221, %v6222
  %vm6224 = vcmp.lt.s32.totalorder %v6205, 1
  %vm6225 = vcmp.lt.s32.totalorder %v6205, 2
  %vm6226 = vcmp.lt.s32.totalorder %v6205, 3
  %vm6227 = vcmp.lt.s32.totalorder %v6205, 4
  %v6228 = vsel %vm6224, %v6208, %v6211
  %v6229 = vsel %vm6227, %v6217, 2102212464
  %v6230 = vsel %vm6226, %v6214, %v6229
  %v6231 = vsel %vm6225, %v6228, %v6230
  %v6232 = vsel %vm6224, %v6211, %v6214
  %v6233 = vsel %vm6227, %v6220, 920167782
  %v6234 = vsel %vm6226, %v6217, %v6233
  %v6235 = vsel %vm6225, %v6232, %v6234
  %v6236 = vsel %vm6224, %v6214, %v6217
  %v6237 = vsel %vm6227, %v6223, 1326507024
  %v6238 = vsel %vm6226, %v6220, %v6237
  %v6239 = vsel %vm6225, %v6236, %v6238
  %v6240 = vshll.u32 %v6200, 8
  %v6241 = vmul.u32.u64.compose %v6240, %v6239
  %v6242 = vextract.low.u32 %v6241
  %v6243 = vextract.high.u32 %v6241
  %v6244 = vmul.u32.u64.compose %v6240, %v6235
  %v6245 = vextract.low.u32 %v6244
  %v6246 = vextract.high.u32 %v6244
  %v6247 = vmul.u32 %v6240, %v6231
  %v6248 = vadd.s32 %v6243, %v6245
  %vm6249 = vc.u32 %v6243, %v6245
  %v6250 = vadd.s32 %v6246, 1
  %v6251 = vsel %vm6249, %v6250, %v6246
  %v6252 = vadd.s32 %v6247, %v6251
  %v6253 = vadd.s32 %v6252, 536870912
  %v6254 = vshrl.u32 %v6253, 30
  %v6255 = vshll.u32 %v6254, 30
  %v6256 = vsub.s32 %v6252, %v6255
  %vm6257 = vcmp.lt.s32.totalorder %v6256, 0
  %v6258 = vsub.s32 0, %v6256
  %v6259 = vsel %vm6257, %v6258, %v6256
  %v6260 = vclz %v6259
  %v6261 = vsub.s32 %v6260, 2
  %vm6262 = vcmp.gt.s32.totalorder 0, %v6261
  %v6263 = vsel %vm6262, 0, %v6261
  %v6264 = vsub.s32 32, %v6263
  %v6265 = vshll.u32 %v6256, %v6263
  %v6266 = vshrl.u32 %v6248, %v6264
  %v6267 = vor.u32 %v6265, %v6266
  %v6268 = vsub.s32 4294967266, %v6263
  %v6269 = vadd.s32 %v6268, 127
  %v6270 = vshll.u32 %v6269, 23
  %v6271 = vor.u32 4788187, %v6270
  %v6272 = vand.u32 2147483647, %v6271
  %v6274 = vcvt.s32.f32 %v6267
  %v6275 = vmul.f32 %v6274, %v6272
  %v6276 = vxor.u32 %v6275, 2147483648
  %v6277 = vsel %vm6194, %v6276, %v6275
  %v6278 = vsub.s32 4, %v6254
  %v6279 = vsel %vm6194, %v6278, %v6254
  %v6280 = vsel %vm6193, %v661, %v6277
  %v6281 = vsel %vm6193, 0, %v6279
  %v6282 = vcosq.f32.pop %v6280
  %v6283 = vsinq.f32.pop %v6280
  %vm6284 = vweird.f32 %v661
  %v6285 = vadd.s32 %v6281, 3
  %v6286 = vand.u32 %v6285, 3
  %vm6287 = vcmp.lt.s32.totalorder %v6286, 2
  %vm6288 = vcmp.eq.s32.totalorder %v6286, 0
  %v6289 = vxor.u32 %v6283, 2147483648
  %v6290 = vsel %vm6288, %v6282, %v6289
  %vm6291 = vcmp.eq.s32.totalorder %v6286, 2
  %v6292 = vxor.u32 %v6282, 2147483648
  %v6293 = vsel %vm6291, %v6292, %v6283
  %v6294 = vsel %vm6287, %v6290, %v6293
  %v6295 = vsel %vm6284, nan, %v6294
  %v6296 = vand.u32 2147483647, %v662
  %vm6297 = vcmp.le.f32.partialorder %v6296, 0.7853982
  %vm6298 = vcmp.lt.s32.totalorder %v662, 0
  %v6299 = vand.u32 %v662, 2139095040
  %v6300 = vshrl.u32 %v6299, 23
  %v6301 = vsub.s32 %v6300, 127
  %v6302 = vand.u32 2147483647, %v662
  %v6303 = vand.u32 %v6302, 8388607
  %v6304 = vor.u32 %v6303, 8388608
  %v6305 = vsub.s32 0, %v6304
  %v6306 = vadd.s32 %v6301, 1
  %vm6307 = vcmp.gt.s32.totalorder %v6306, 0
  %v6308 = vsel %vm6307, %v6306, 0
  %v6309 = vshrl.u32 %v6308, 5
  %v6310 = vand.u32 %v6308, 31
  %v6311 = vsub.s32 32, %v6310
  %v6312 = vshrl.u32 683565275, %v6311
  %v6313 = vshll.u32 683565275, %v6310
  %v6314 = vshrl.u32 2475754826, %v6311
  %v6315 = vor.u32 %v6313, %v6314
  %v6316 = vshll.u32 2475754826, %v6310
  %v6317 = vshrl.u32 2131351028, %v6311
  %v6318 = vor.u32 %v6316, %v6317
  %v6319 = vshll.u32 2131351028, %v6310
  %v6320 = vshrl.u32 2102212464, %v6311
  %v6321 = vor.u32 %v6319, %v6320
  %v6322 = vshll.u32 2102212464, %v6310
  %v6323 = vshrl.u32 920167782, %v6311
  %v6324 = vor.u32 %v6322, %v6323
  %v6325 = vshll.u32 920167782, %v6310
  %v6326 = vshrl.u32 1326507024, %v6311
  %v6327 = vor.u32 %v6325, %v6326
  %vm6328 = vcmp.lt.s32.totalorder %v6309, 1
  %vm6329 = vcmp.lt.s32.totalorder %v6309, 2
  %vm6330 = vcmp.lt.s32.totalorder %v6309, 3
  %vm6331 = vcmp.lt.s32.totalorder %v6309, 4
  %v6332 = vsel %vm6328, %v6312, %v6315
  %v6333 = vsel %vm6331, %v6321, 2102212464
  %v6334 = vsel %vm6330, %v6318, %v6333
  %v6335 = vsel %vm6329, %v6332, %v6334
  %v6336 = vsel %vm6328, %v6315, %v6318
  %v6337 = vsel %vm6331, %v6324, 920167782
  %v6338 = vsel %vm6330, %v6321, %v6337
  %v6339 = vsel %vm6329, %v6336, %v6338
  %v6340 = vsel %vm6328, %v6318, %v6321
  %v6341 = vsel %vm6331, %v6327, 1326507024
  %v6342 = vsel %vm6330, %v6324, %v6341
  %v6343 = vsel %vm6329, %v6340, %v6342
  %v6344 = vshll.u32 %v6304, 8
  %v6345 = vmul.u32.u64.compose %v6344, %v6343
  %v6346 = vextract.low.u32 %v6345
  %v6347 = vextract.high.u32 %v6345
  %v6348 = vmul.u32.u64.compose %v6344, %v6339
  %v6349 = vextract.low.u32 %v6348
  %v6350 = vextract.high.u32 %v6348
  %v6351 = vmul.u32 %v6344, %v6335
  %v6352 = vadd.s32 %v6347, %v6349
  %vm6353 = vc.u32 %v6347, %v6349
  %v6354 = vadd.s32 %v6350, 1
  %v6355 = vsel %vm6353, %v6354, %v6350
  %v6356 = vadd.s32 %v6351, %v6355
  %v6357 = vadd.s32 %v6356, 536870912
  %v6358 = vshrl.u32 %v6357, 30
  %v6359 = vshll.u32 %v6358, 30
  %v6360 = vsub.s32 %v6356, %v6359
  %vm6361 = vcmp.lt.s32.totalorder %v6360, 0
  %v6362 = vsub.s32 0, %v6360
  %v6363 = vsel %vm6361, %v6362, %v6360
  %v6364 = vclz %v6363
  %v6365 = vsub.s32 %v6364, 2
  %vm6366 = vcmp.gt.s32.totalorder 0, %v6365
  %v6367 = vsel %vm6366, 0, %v6365
  %v6368 = vsub.s32 32, %v6367
  %v6369 = vshll.u32 %v6360, %v6367
  %v6370 = vshrl.u32 %v6352, %v6368
  %v6371 = vor.u32 %v6369, %v6370
  %v6372 = vsub.s32 4294967266, %v6367
  %v6373 = vadd.s32 %v6372, 127
  %v6374 = vshll.u32 %v6373, 23
  %v6375 = vor.u32 4788187, %v6374
  %v6376 = vand.u32 2147483647, %v6375
  %v6378 = vcvt.s32.f32 %v6371
  %v6379 = vmul.f32 %v6378, %v6376
  %v6380 = vxor.u32 %v6379, 2147483648
  %v6381 = vsel %vm6298, %v6380, %v6379
  %v6382 = vsub.s32 4, %v6358
  %v6383 = vsel %vm6298, %v6382, %v6358
  %v6384 = vsel %vm6297, %v662, %v6381
  %v6385 = vsel %vm6297, 0, %v6383
  %v6386 = vcosq.f32.pop %v6384
  %v6387 = vsinq.f32.pop %v6384
  %vm6388 = vweird.f32 %v662
  %v6389 = vadd.s32 %v6385, 3
  %v6390 = vand.u32 %v6389, 3
  %vm6391 = vcmp.lt.s32.totalorder %v6390, 2
  %vm6392 = vcmp.eq.s32.totalorder %v6390, 0
  %v6393 = vxor.u32 %v6387, 2147483648
  %v6394 = vsel %vm6392, %v6386, %v6393
  %vm6395 = vcmp.eq.s32.totalorder %v6390, 2
  %v6396 = vxor.u32 %v6386, 2147483648
  %v6397 = vsel %vm6395, %v6396, %v6387
  %v6398 = vsel %vm6391, %v6394, %v6397
  %v6399 = vsel %vm6388, nan, %v6398
  %v6400 = vand.u32 2147483647, %v663
  %vm6401 = vcmp.le.f32.partialorder %v6400, 0.7853982
  %vm6402 = vcmp.lt.s32.totalorder %v663, 0
  %v6403 = vand.u32 %v663, 2139095040
  %v6404 = vshrl.u32 %v6403, 23
  %v6405 = vsub.s32 %v6404, 127
  %v6406 = vand.u32 2147483647, %v663
  %v6407 = vand.u32 %v6406, 8388607
  %v6408 = vor.u32 %v6407, 8388608
  %v6409 = vsub.s32 0, %v6408
  %v6410 = vadd.s32 %v6405, 1
  %vm6411 = vcmp.gt.s32.totalorder %v6410, 0
  %v6412 = vsel %vm6411, %v6410, 0
  %v6413 = vshrl.u32 %v6412, 5
  %v6414 = vand.u32 %v6412, 31
  %v6415 = vsub.s32 32, %v6414
  %v6416 = vshrl.u32 683565275, %v6415
  %v6417 = vshll.u32 683565275, %v6414
  %v6418 = vshrl.u32 2475754826, %v6415
  %v6419 = vor.u32 %v6417, %v6418
  %v6420 = vshll.u32 2475754826, %v6414
  %v6421 = vshrl.u32 2131351028, %v6415
  %v6422 = vor.u32 %v6420, %v6421
  %v6423 = vshll.u32 2131351028, %v6414
  %v6424 = vshrl.u32 2102212464, %v6415
  %v6425 = vor.u32 %v6423, %v6424
  %v6426 = vshll.u32 2102212464, %v6414
  %v6427 = vshrl.u32 920167782, %v6415
  %v6428 = vor.u32 %v6426, %v6427
  %v6429 = vshll.u32 920167782, %v6414
  %v6430 = vshrl.u32 1326507024, %v6415
  %v6431 = vor.u32 %v6429, %v6430
  %vm6432 = vcmp.lt.s32.totalorder %v6413, 1
  %vm6433 = vcmp.lt.s32.totalorder %v6413, 2
  %vm6434 = vcmp.lt.s32.totalorder %v6413, 3
  %vm6435 = vcmp.lt.s32.totalorder %v6413, 4
  %v6436 = vsel %vm6432, %v6416, %v6419
  %v6437 = vsel %vm6435, %v6425, 2102212464
  %v6438 = vsel %vm6434, %v6422, %v6437
  %v6439 = vsel %vm6433, %v6436, %v6438
  %v6440 = vsel %vm6432, %v6419, %v6422
  %v6441 = vsel %vm6435, %v6428, 920167782
  %v6442 = vsel %vm6434, %v6425, %v6441
  %v6443 = vsel %vm6433, %v6440, %v6442
  %v6444 = vsel %vm6432, %v6422, %v6425
  %v6445 = vsel %vm6435, %v6431, 1326507024
  %v6446 = vsel %vm6434, %v6428, %v6445
  %v6447 = vsel %vm6433, %v6444, %v6446
  %v6448 = vshll.u32 %v6408, 8
  %v6449 = vmul.u32.u64.compose %v6448, %v6447
  %v6450 = vextract.low.u32 %v6449
  %v6451 = vextract.high.u32 %v6449
  %v6452 = vmul.u32.u64.compose %v6448, %v6443
  %v6453 = vextract.low.u32 %v6452
  %v6454 = vextract.high.u32 %v6452
  %v6455 = vmul.u32 %v6448, %v6439
  %v6456 = vadd.s32 %v6451, %v6453
  %vm6457 = vc.u32 %v6451, %v6453
  %v6458 = vadd.s32 %v6454, 1
  %v6459 = vsel %vm6457, %v6458, %v6454
  %v6460 = vadd.s32 %v6455, %v6459
  %v6461 = vadd.s32 %v6460, 536870912
  %v6462 = vshrl.u32 %v6461, 30
  %v6463 = vshll.u32 %v6462, 30
  %v6464 = vsub.s32 %v6460, %v6463
  %vm6465 = vcmp.lt.s32.totalorder %v6464, 0
  %v6466 = vsub.s32 0, %v6464
  %v6467 = vsel %vm6465, %v6466, %v6464
  %v6468 = vclz %v6467
  %v6469 = vsub.s32 %v6468, 2
  %vm6470 = vcmp.gt.s32.totalorder 0, %v6469
  %v6471 = vsel %vm6470, 0, %v6469
  %v6472 = vsub.s32 32, %v6471
  %v6473 = vshll.u32 %v6464, %v6471
  %v6474 = vshrl.u32 %v6456, %v6472
  %v6475 = vor.u32 %v6473, %v6474
  %v6476 = vsub.s32 4294967266, %v6471
  %v6477 = vadd.s32 %v6476, 127
  %v6478 = vshll.u32 %v6477, 23
  %v6479 = vor.u32 4788187, %v6478
  %v6480 = vand.u32 2147483647, %v6479
  %v6482 = vcvt.s32.f32 %v6475
  %v6483 = vmul.f32 %v6482, %v6480
  %v6484 = vxor.u32 %v6483, 2147483648
  %v6485 = vsel %vm6402, %v6484, %v6483
  %v6486 = vsub.s32 4, %v6462
  %v6487 = vsel %vm6402, %v6486, %v6462
  %v6488 = vsel %vm6401, %v663, %v6485
  %v6489 = vsel %vm6401, 0, %v6487
  %v6490 = vcosq.f32.pop %v6488
  %v6491 = vsinq.f32.pop %v6488
  %vm6492 = vweird.f32 %v663
  %v6493 = vadd.s32 %v6489, 3
  %v6494 = vand.u32 %v6493, 3
  %vm6495 = vcmp.lt.s32.totalorder %v6494, 2
  %vm6496 = vcmp.eq.s32.totalorder %v6494, 0
  %v6497 = vxor.u32 %v6491, 2147483648
  %v6498 = vsel %vm6496, %v6490, %v6497
  %vm6499 = vcmp.eq.s32.totalorder %v6494, 2
  %v6500 = vxor.u32 %v6490, 2147483648
  %v6501 = vsel %vm6499, %v6500, %v6491
  %v6502 = vsel %vm6495, %v6498, %v6501
  %v6503 = vsel %vm6492, nan, %v6502
  %v6504 = vand.u32 2147483647, %v664
  %vm6505 = vcmp.le.f32.partialorder %v6504, 0.7853982
  %vm6506 = vcmp.lt.s32.totalorder %v664, 0
  %v6507 = vand.u32 %v664, 2139095040
  %v6508 = vshrl.u32 %v6507, 23
  %v6509 = vsub.s32 %v6508, 127
  %v6510 = vand.u32 2147483647, %v664
  %v6511 = vand.u32 %v6510, 8388607
  %v6512 = vor.u32 %v6511, 8388608
  %v6513 = vsub.s32 0, %v6512
  %v6514 = vadd.s32 %v6509, 1
  %vm6515 = vcmp.gt.s32.totalorder %v6514, 0
  %v6516 = vsel %vm6515, %v6514, 0
  %v6517 = vshrl.u32 %v6516, 5
  %v6518 = vand.u32 %v6516, 31
  %v6519 = vsub.s32 32, %v6518
  %v6520 = vshrl.u32 683565275, %v6519
  %v6521 = vshll.u32 683565275, %v6518
  %v6522 = vshrl.u32 2475754826, %v6519
  %v6523 = vor.u32 %v6521, %v6522
  %v6524 = vshll.u32 2475754826, %v6518
  %v6525 = vshrl.u32 2131351028, %v6519
  %v6526 = vor.u32 %v6524, %v6525
  %v6527 = vshll.u32 2131351028, %v6518
  %v6528 = vshrl.u32 2102212464, %v6519
  %v6529 = vor.u32 %v6527, %v6528
  %v6530 = vshll.u32 2102212464, %v6518
  %v6531 = vshrl.u32 920167782, %v6519
  %v6532 = vor.u32 %v6530, %v6531
  %v6533 = vshll.u32 920167782, %v6518
  %v6534 = vshrl.u32 1326507024, %v6519
  %v6535 = vor.u32 %v6533, %v6534
  %vm6536 = vcmp.lt.s32.totalorder %v6517, 1
  %vm6537 = vcmp.lt.s32.totalorder %v6517, 2
  %vm6538 = vcmp.lt.s32.totalorder %v6517, 3
  %vm6539 = vcmp.lt.s32.totalorder %v6517, 4
  %v6540 = vsel %vm6536, %v6520, %v6523
  %v6541 = vsel %vm6539, %v6529, 2102212464
  %v6542 = vsel %vm6538, %v6526, %v6541
  %v6543 = vsel %vm6537, %v6540, %v6542
  %v6544 = vsel %vm6536, %v6523, %v6526
  %v6545 = vsel %vm6539, %v6532, 920167782
  %v6546 = vsel %vm6538, %v6529, %v6545
  %v6547 = vsel %vm6537, %v6544, %v6546
  %v6548 = vsel %vm6536, %v6526, %v6529
  %v6549 = vsel %vm6539, %v6535, 1326507024
  %v6550 = vsel %vm6538, %v6532, %v6549
  %v6551 = vsel %vm6537, %v6548, %v6550
  %v6552 = vshll.u32 %v6512, 8
  %v6553 = vmul.u32.u64.compose %v6552, %v6551
  %v6554 = vextract.low.u32 %v6553
  %v6555 = vextract.high.u32 %v6553
  %v6556 = vmul.u32.u64.compose %v6552, %v6547
  %v6557 = vextract.low.u32 %v6556
  %v6558 = vextract.high.u32 %v6556
  %v6559 = vmul.u32 %v6552, %v6543
  %v6560 = vadd.s32 %v6555, %v6557
  %vm6561 = vc.u32 %v6555, %v6557
  %v6562 = vadd.s32 %v6558, 1
  %v6563 = vsel %vm6561, %v6562, %v6558
  %v6564 = vadd.s32 %v6559, %v6563
  %v6565 = vadd.s32 %v6564, 536870912
  %v6566 = vshrl.u32 %v6565, 30
  %v6567 = vshll.u32 %v6566, 30
  %v6568 = vsub.s32 %v6564, %v6567
  %vm6569 = vcmp.lt.s32.totalorder %v6568, 0
  %v6570 = vsub.s32 0, %v6568
  %v6571 = vsel %vm6569, %v6570, %v6568
  %v6572 = vclz %v6571
  %v6573 = vsub.s32 %v6572, 2
  %vm6574 = vcmp.gt.s32.totalorder 0, %v6573
  %v6575 = vsel %vm6574, 0, %v6573
  %v6576 = vsub.s32 32, %v6575
  %v6577 = vshll.u32 %v6568, %v6575
  %v6578 = vshrl.u32 %v6560, %v6576
  %v6579 = vor.u32 %v6577, %v6578
  %v6580 = vsub.s32 4294967266, %v6575
  %v6581 = vadd.s32 %v6580, 127
  %v6582 = vshll.u32 %v6581, 23
  %v6583 = vor.u32 4788187, %v6582
  %v6584 = vand.u32 2147483647, %v6583
  %v6586 = vcvt.s32.f32 %v6579
  %v6587 = vmul.f32 %v6586, %v6584
  %v6588 = vxor.u32 %v6587, 2147483648
  %v6589 = vsel %vm6506, %v6588, %v6587
  %v6590 = vsub.s32 4, %v6566
  %v6591 = vsel %vm6506, %v6590, %v6566
  %v6592 = vsel %vm6505, %v664, %v6589
  %v6593 = vsel %vm6505, 0, %v6591
  %v6594 = vcosq.f32.pop %v6592
  %v6595 = vsinq.f32.pop %v6592
  %vm6596 = vweird.f32 %v664
  %v6597 = vadd.s32 %v6593, 3
  %v6598 = vand.u32 %v6597, 3
  %vm6599 = vcmp.lt.s32.totalorder %v6598, 2
  %vm6600 = vcmp.eq.s32.totalorder %v6598, 0
  %v6601 = vxor.u32 %v6595, 2147483648
  %v6602 = vsel %vm6600, %v6594, %v6601
  %vm6603 = vcmp.eq.s32.totalorder %v6598, 2
  %v6604 = vxor.u32 %v6594, 2147483648
  %v6605 = vsel %vm6603, %v6604, %v6595
  %v6606 = vsel %vm6599, %v6602, %v6605
  %v6607 = vsel %vm6596, nan, %v6606
  %v6608 = vand.u32 2147483647, %v665
  %vm6609 = vcmp.le.f32.partialorder %v6608, 0.7853982
  %vm6610 = vcmp.lt.s32.totalorder %v665, 0
  %v6611 = vand.u32 %v665, 2139095040
  %v6612 = vshrl.u32 %v6611, 23
  %v6613 = vsub.s32 %v6612, 127
  %v6614 = vand.u32 2147483647, %v665
  %v6615 = vand.u32 %v6614, 8388607
  %v6616 = vor.u32 %v6615, 8388608
  %v6617 = vsub.s32 0, %v6616
  %v6618 = vadd.s32 %v6613, 1
  %vm6619 = vcmp.gt.s32.totalorder %v6618, 0
  %v6620 = vsel %vm6619, %v6618, 0
  %v6621 = vshrl.u32 %v6620, 5
  %v6622 = vand.u32 %v6620, 31
  %v6623 = vsub.s32 32, %v6622
  %v6624 = vshrl.u32 683565275, %v6623
  %v6625 = vshll.u32 683565275, %v6622
  %v6626 = vshrl.u32 2475754826, %v6623
  %v6627 = vor.u32 %v6625, %v6626
  %v6628 = vshll.u32 2475754826, %v6622
  %v6629 = vshrl.u32 2131351028, %v6623
  %v6630 = vor.u32 %v6628, %v6629
  %v6631 = vshll.u32 2131351028, %v6622
  %v6632 = vshrl.u32 2102212464, %v6623
  %v6633 = vor.u32 %v6631, %v6632
  %v6634 = vshll.u32 2102212464, %v6622
  %v6635 = vshrl.u32 920167782, %v6623
  %v6636 = vor.u32 %v6634, %v6635
  %v6637 = vshll.u32 920167782, %v6622
  %v6638 = vshrl.u32 1326507024, %v6623
  %v6639 = vor.u32 %v6637, %v6638
  %vm6640 = vcmp.lt.s32.totalorder %v6621, 1
  %vm6641 = vcmp.lt.s32.totalorder %v6621, 2
  %vm6642 = vcmp.lt.s32.totalorder %v6621, 3
  %vm6643 = vcmp.lt.s32.totalorder %v6621, 4
  %v6644 = vsel %vm6640, %v6624, %v6627
  %v6645 = vsel %vm6643, %v6633, 2102212464
  %v6646 = vsel %vm6642, %v6630, %v6645
  %v6647 = vsel %vm6641, %v6644, %v6646
  %v6648 = vsel %vm6640, %v6627, %v6630
  %v6649 = vsel %vm6643, %v6636, 920167782
  %v6650 = vsel %vm6642, %v6633, %v6649
  %v6651 = vsel %vm6641, %v6648, %v6650
  %v6652 = vsel %vm6640, %v6630, %v6633
  %v6653 = vsel %vm6643, %v6639, 1326507024
  %v6654 = vsel %vm6642, %v6636, %v6653
  %v6655 = vsel %vm6641, %v6652, %v6654
  %v6656 = vshll.u32 %v6616, 8
  %v6657 = vmul.u32.u64.compose %v6656, %v6655
  %v6658 = vextract.low.u32 %v6657
  %v6659 = vextract.high.u32 %v6657
  %v6660 = vmul.u32.u64.compose %v6656, %v6651
  %v6661 = vextract.low.u32 %v6660
  %v6662 = vextract.high.u32 %v6660
  %v6663 = vmul.u32 %v6656, %v6647
  %v6664 = vadd.s32 %v6659, %v6661
  %vm6665 = vc.u32 %v6659, %v6661
  %v6666 = vadd.s32 %v6662, 1
  %v6667 = vsel %vm6665, %v6666, %v6662
  %v6668 = vadd.s32 %v6663, %v6667
  %v6669 = vadd.s32 %v6668, 536870912
  %v6670 = vshrl.u32 %v6669, 30
  %v6671 = vshll.u32 %v6670, 30
  %v6672 = vsub.s32 %v6668, %v6671
  %vm6673 = vcmp.lt.s32.totalorder %v6672, 0
  %v6674 = vsub.s32 0, %v6672
  %v6675 = vsel %vm6673, %v6674, %v6672
  %v6676 = vclz %v6675
  %v6677 = vsub.s32 %v6676, 2
  %vm6678 = vcmp.gt.s32.totalorder 0, %v6677
  %v6679 = vsel %vm6678, 0, %v6677
  %v6680 = vsub.s32 32, %v6679
  %v6681 = vshll.u32 %v6672, %v6679
  %v6682 = vshrl.u32 %v6664, %v6680
  %v6683 = vor.u32 %v6681, %v6682
  %v6684 = vsub.s32 4294967266, %v6679
  %v6685 = vadd.s32 %v6684, 127
  %v6686 = vshll.u32 %v6685, 23
  %v6687 = vor.u32 4788187, %v6686
  %v6688 = vand.u32 2147483647, %v6687
  %v6690 = vcvt.s32.f32 %v6683
  %v6691 = vmul.f32 %v6690, %v6688
  %v6692 = vxor.u32 %v6691, 2147483648
  %v6693 = vsel %vm6610, %v6692, %v6691
  %v6694 = vsub.s32 4, %v6670
  %v6695 = vsel %vm6610, %v6694, %v6670
  %v6696 = vsel %vm6609, %v665, %v6693
  %v6697 = vsel %vm6609, 0, %v6695
  %v6698 = vcosq.f32.pop %v6696
  %v6699 = vsinq.f32.pop %v6696
  %vm6700 = vweird.f32 %v665
  %v6701 = vadd.s32 %v6697, 3
  %v6702 = vand.u32 %v6701, 3
  %vm6703 = vcmp.lt.s32.totalorder %v6702, 2
  %vm6704 = vcmp.eq.s32.totalorder %v6702, 0
  %v6705 = vxor.u32 %v6699, 2147483648
  %v6706 = vsel %vm6704, %v6698, %v6705
  %vm6707 = vcmp.eq.s32.totalorder %v6702, 2
  %v6708 = vxor.u32 %v6698, 2147483648
  %v6709 = vsel %vm6707, %v6708, %v6699
  %v6710 = vsel %vm6703, %v6706, %v6709
  %v6711 = vsel %vm6700, nan, %v6710
  %v6712 = vand.u32 2147483647, %v666
  %vm6713 = vcmp.le.f32.partialorder %v6712, 0.7853982
  %vm6714 = vcmp.lt.s32.totalorder %v666, 0
  %v6715 = vand.u32 %v666, 2139095040
  %v6716 = vshrl.u32 %v6715, 23
  %v6717 = vsub.s32 %v6716, 127
  %v6718 = vand.u32 2147483647, %v666
  %v6719 = vand.u32 %v6718, 8388607
  %v6720 = vor.u32 %v6719, 8388608
  %v6721 = vsub.s32 0, %v6720
  %v6722 = vadd.s32 %v6717, 1
  %vm6723 = vcmp.gt.s32.totalorder %v6722, 0
  %v6724 = vsel %vm6723, %v6722, 0
  %v6725 = vshrl.u32 %v6724, 5
  %v6726 = vand.u32 %v6724, 31
  %v6727 = vsub.s32 32, %v6726
  %v6728 = vshrl.u32 683565275, %v6727
  %v6729 = vshll.u32 683565275, %v6726
  %v6730 = vshrl.u32 2475754826, %v6727
  %v6731 = vor.u32 %v6729, %v6730
  %v6732 = vshll.u32 2475754826, %v6726
  %v6733 = vshrl.u32 2131351028, %v6727
  %v6734 = vor.u32 %v6732, %v6733
  %v6735 = vshll.u32 2131351028, %v6726
  %v6736 = vshrl.u32 2102212464, %v6727
  %v6737 = vor.u32 %v6735, %v6736
  %v6738 = vshll.u32 2102212464, %v6726
  %v6739 = vshrl.u32 920167782, %v6727
  %v6740 = vor.u32 %v6738, %v6739
  %v6741 = vshll.u32 920167782, %v6726
  %v6742 = vshrl.u32 1326507024, %v6727
  %v6743 = vor.u32 %v6741, %v6742
  %vm6744 = vcmp.lt.s32.totalorder %v6725, 1
  %vm6745 = vcmp.lt.s32.totalorder %v6725, 2
  %vm6746 = vcmp.lt.s32.totalorder %v6725, 3
  %vm6747 = vcmp.lt.s32.totalorder %v6725, 4
  %v6748 = vsel %vm6744, %v6728, %v6731
  %v6749 = vsel %vm6747, %v6737, 2102212464
  %v6750 = vsel %vm6746, %v6734, %v6749
  %v6751 = vsel %vm6745, %v6748, %v6750
  %v6752 = vsel %vm6744, %v6731, %v6734
  %v6753 = vsel %vm6747, %v6740, 920167782
  %v6754 = vsel %vm6746, %v6737, %v6753
  %v6755 = vsel %vm6745, %v6752, %v6754
  %v6756 = vsel %vm6744, %v6734, %v6737
  %v6757 = vsel %vm6747, %v6743, 1326507024
  %v6758 = vsel %vm6746, %v6740, %v6757
  %v6759 = vsel %vm6745, %v6756, %v6758
  %v6760 = vshll.u32 %v6720, 8
  %v6761 = vmul.u32.u64.compose %v6760, %v6759
  %v6762 = vextract.low.u32 %v6761
  %v6763 = vextract.high.u32 %v6761
  %v6764 = vmul.u32.u64.compose %v6760, %v6755
  %v6765 = vextract.low.u32 %v6764
  %v6766 = vextract.high.u32 %v6764
  %v6767 = vmul.u32 %v6760, %v6751
  %v6768 = vadd.s32 %v6763, %v6765
  %vm6769 = vc.u32 %v6763, %v6765
  %v6770 = vadd.s32 %v6766, 1
  %v6771 = vsel %vm6769, %v6770, %v6766
  %v6772 = vadd.s32 %v6767, %v6771
  %v6773 = vadd.s32 %v6772, 536870912
  %v6774 = vshrl.u32 %v6773, 30
  %v6775 = vshll.u32 %v6774, 30
  %v6776 = vsub.s32 %v6772, %v6775
  %vm6777 = vcmp.lt.s32.totalorder %v6776, 0
  %v6778 = vsub.s32 0, %v6776
  %v6779 = vsel %vm6777, %v6778, %v6776
  %v6780 = vclz %v6779
  %v6781 = vsub.s32 %v6780, 2
  %vm6782 = vcmp.gt.s32.totalorder 0, %v6781
  %v6783 = vsel %vm6782, 0, %v6781
  %v6784 = vsub.s32 32, %v6783
  %v6785 = vshll.u32 %v6776, %v6783
  %v6786 = vshrl.u32 %v6768, %v6784
  %v6787 = vor.u32 %v6785, %v6786
  %v6788 = vsub.s32 4294967266, %v6783
  %v6789 = vadd.s32 %v6788, 127
  %v6790 = vshll.u32 %v6789, 23
  %v6791 = vor.u32 4788187, %v6790
  %v6792 = vand.u32 2147483647, %v6791
  %v6794 = vcvt.s32.f32 %v6787
  %v6795 = vmul.f32 %v6794, %v6792
  %v6796 = vxor.u32 %v6795, 2147483648
  %v6797 = vsel %vm6714, %v6796, %v6795
  %v6798 = vsub.s32 4, %v6774
  %v6799 = vsel %vm6714, %v6798, %v6774
  %v6800 = vsel %vm6713, %v666, %v6797
  %v6801 = vsel %vm6713, 0, %v6799
  %v6802 = vcosq.f32.pop %v6800
  %v6803 = vsinq.f32.pop %v6800
  %vm6804 = vweird.f32 %v666
  %v6805 = vadd.s32 %v6801, 3
  %v6806 = vand.u32 %v6805, 3
  %vm6807 = vcmp.lt.s32.totalorder %v6806, 2
  %vm6808 = vcmp.eq.s32.totalorder %v6806, 0
  %v6809 = vxor.u32 %v6803, 2147483648
  %v6810 = vsel %vm6808, %v6802, %v6809
  %vm6811 = vcmp.eq.s32.totalorder %v6806, 2
  %v6812 = vxor.u32 %v6802, 2147483648
  %v6813 = vsel %vm6811, %v6812, %v6803
  %v6814 = vsel %vm6807, %v6810, %v6813
  %v6815 = vsel %vm6804, nan, %v6814
  %v6816 = vand.u32 2147483647, %v667
  %vm6817 = vcmp.le.f32.partialorder %v6816, 0.7853982
  %vm6818 = vcmp.lt.s32.totalorder %v667, 0
  %v6819 = vand.u32 %v667, 2139095040
  %v6820 = vshrl.u32 %v6819, 23
  %v6821 = vsub.s32 %v6820, 127
  %v6822 = vand.u32 2147483647, %v667
  %v6823 = vand.u32 %v6822, 8388607
  %v6824 = vor.u32 %v6823, 8388608
  %v6825 = vsub.s32 0, %v6824
  %v6826 = vadd.s32 %v6821, 1
  %vm6827 = vcmp.gt.s32.totalorder %v6826, 0
  %v6828 = vsel %vm6827, %v6826, 0
  %v6829 = vshrl.u32 %v6828, 5
  %v6830 = vand.u32 %v6828, 31
  %v6831 = vsub.s32 32, %v6830
  %v6832 = vshrl.u32 683565275, %v6831
  %v6833 = vshll.u32 683565275, %v6830
  %v6834 = vshrl.u32 2475754826, %v6831
  %v6835 = vor.u32 %v6833, %v6834
  %v6836 = vshll.u32 2475754826, %v6830
  %v6837 = vshrl.u32 2131351028, %v6831
  %v6838 = vor.u32 %v6836, %v6837
  %v6839 = vshll.u32 2131351028, %v6830
  %v6840 = vshrl.u32 2102212464, %v6831
  %v6841 = vor.u32 %v6839, %v6840
  %v6842 = vshll.u32 2102212464, %v6830
  %v6843 = vshrl.u32 920167782, %v6831
  %v6844 = vor.u32 %v6842, %v6843
  %v6845 = vshll.u32 920167782, %v6830
  %v6846 = vshrl.u32 1326507024, %v6831
  %v6847 = vor.u32 %v6845, %v6846
  %vm6848 = vcmp.lt.s32.totalorder %v6829, 1
  %vm6849 = vcmp.lt.s32.totalorder %v6829, 2
  %vm6850 = vcmp.lt.s32.totalorder %v6829, 3
  %vm6851 = vcmp.lt.s32.totalorder %v6829, 4
  %v6852 = vsel %vm6848, %v6832, %v6835
  %v6853 = vsel %vm6851, %v6841, 2102212464
  %v6854 = vsel %vm6850, %v6838, %v6853
  %v6855 = vsel %vm6849, %v6852, %v6854
  %v6856 = vsel %vm6848, %v6835, %v6838
  %v6857 = vsel %vm6851, %v6844, 920167782
  %v6858 = vsel %vm6850, %v6841, %v6857
  %v6859 = vsel %vm6849, %v6856, %v6858
  %v6860 = vsel %vm6848, %v6838, %v6841
  %v6861 = vsel %vm6851, %v6847, 1326507024
  %v6862 = vsel %vm6850, %v6844, %v6861
  %v6863 = vsel %vm6849, %v6860, %v6862
  %v6864 = vshll.u32 %v6824, 8
  %v6865 = vmul.u32.u64.compose %v6864, %v6863
  %v6866 = vextract.low.u32 %v6865
  %v6867 = vextract.high.u32 %v6865
  %v6868 = vmul.u32.u64.compose %v6864, %v6859
  %v6869 = vextract.low.u32 %v6868
  %v6870 = vextract.high.u32 %v6868
  %v6871 = vmul.u32 %v6864, %v6855
  %v6872 = vadd.s32 %v6867, %v6869
  %vm6873 = vc.u32 %v6867, %v6869
  %v6874 = vadd.s32 %v6870, 1
  %v6875 = vsel %vm6873, %v6874, %v6870
  %v6876 = vadd.s32 %v6871, %v6875
  %v6877 = vadd.s32 %v6876, 536870912
  %v6878 = vshrl.u32 %v6877, 30
  %v6879 = vshll.u32 %v6878, 30
  %v6880 = vsub.s32 %v6876, %v6879
  %vm6881 = vcmp.lt.s32.totalorder %v6880, 0
  %v6882 = vsub.s32 0, %v6880
  %v6883 = vsel %vm6881, %v6882, %v6880
  %v6884 = vclz %v6883
  %v6885 = vsub.s32 %v6884, 2
  %vm6886 = vcmp.gt.s32.totalorder 0, %v6885
  %v6887 = vsel %vm6886, 0, %v6885
  %v6888 = vsub.s32 32, %v6887
  %v6889 = vshll.u32 %v6880, %v6887
  %v6890 = vshrl.u32 %v6872, %v6888
  %v6891 = vor.u32 %v6889, %v6890
  %v6892 = vsub.s32 4294967266, %v6887
  %v6893 = vadd.s32 %v6892, 127
  %v6894 = vshll.u32 %v6893, 23
  %v6895 = vor.u32 4788187, %v6894
  %v6896 = vand.u32 2147483647, %v6895
  %v6898 = vcvt.s32.f32 %v6891
  %v6899 = vmul.f32 %v6898, %v6896
  %v6900 = vxor.u32 %v6899, 2147483648
  %v6901 = vsel %vm6818, %v6900, %v6899
  %v6902 = vsub.s32 4, %v6878
  %v6903 = vsel %vm6818, %v6902, %v6878
  %v6904 = vsel %vm6817, %v667, %v6901
  %v6905 = vsel %vm6817, 0, %v6903
  %v6906 = vcosq.f32.pop %v6904
  %v6907 = vsinq.f32.pop %v6904
  %vm6908 = vweird.f32 %v667
  %v6909 = vadd.s32 %v6905, 3
  %v6910 = vand.u32 %v6909, 3
  %vm6911 = vcmp.lt.s32.totalorder %v6910, 2
  %vm6912 = vcmp.eq.s32.totalorder %v6910, 0
  %v6913 = vxor.u32 %v6907, 2147483648
  %v6914 = vsel %vm6912, %v6906, %v6913
  %vm6915 = vcmp.eq.s32.totalorder %v6910, 2
  %v6916 = vxor.u32 %v6906, 2147483648
  %v6917 = vsel %vm6915, %v6916, %v6907
  %v6918 = vsel %vm6911, %v6914, %v6917
  %v6919 = vsel %vm6908, nan, %v6918
  %v6920 = vand.u32 2147483647, %v668
  %vm6921 = vcmp.le.f32.partialorder %v6920, 0.7853982
  %vm6922 = vcmp.lt.s32.totalorder %v668, 0
  %v6923 = vand.u32 %v668, 2139095040
  %v6924 = vshrl.u32 %v6923, 23
  %v6925 = vsub.s32 %v6924, 127
  %v6926 = vand.u32 2147483647, %v668
  %v6927 = vand.u32 %v6926, 8388607
  %v6928 = vor.u32 %v6927, 8388608
  %v6929 = vsub.s32 0, %v6928
  %v6930 = vadd.s32 %v6925, 1
  %vm6931 = vcmp.gt.s32.totalorder %v6930, 0
  %v6932 = vsel %vm6931, %v6930, 0
  %v6933 = vshrl.u32 %v6932, 5
  %v6934 = vand.u32 %v6932, 31
  %v6935 = vsub.s32 32, %v6934
  %v6936 = vshrl.u32 683565275, %v6935
  %v6937 = vshll.u32 683565275, %v6934
  %v6938 = vshrl.u32 2475754826, %v6935
  %v6939 = vor.u32 %v6937, %v6938
  %v6940 = vshll.u32 2475754826, %v6934
  %v6941 = vshrl.u32 2131351028, %v6935
  %v6942 = vor.u32 %v6940, %v6941
  %v6943 = vshll.u32 2131351028, %v6934
  %v6944 = vshrl.u32 2102212464, %v6935
  %v6945 = vor.u32 %v6943, %v6944
  %v6946 = vshll.u32 2102212464, %v6934
  %v6947 = vshrl.u32 920167782, %v6935
  %v6948 = vor.u32 %v6946, %v6947
  %v6949 = vshll.u32 920167782, %v6934
  %v6950 = vshrl.u32 1326507024, %v6935
  %v6951 = vor.u32 %v6949, %v6950
  %vm6952 = vcmp.lt.s32.totalorder %v6933, 1
  %vm6953 = vcmp.lt.s32.totalorder %v6933, 2
  %vm6954 = vcmp.lt.s32.totalorder %v6933, 3
  %vm6955 = vcmp.lt.s32.totalorder %v6933, 4
  %v6956 = vsel %vm6952, %v6936, %v6939
  %v6957 = vsel %vm6955, %v6945, 2102212464
  %v6958 = vsel %vm6954, %v6942, %v6957
  %v6959 = vsel %vm6953, %v6956, %v6958
  %v6960 = vsel %vm6952, %v6939, %v6942
  %v6961 = vsel %vm6955, %v6948, 920167782
  %v6962 = vsel %vm6954, %v6945, %v6961
  %v6963 = vsel %vm6953, %v6960, %v6962
  %v6964 = vsel %vm6952, %v6942, %v6945
  %v6965 = vsel %vm6955, %v6951, 1326507024
  %v6966 = vsel %vm6954, %v6948, %v6965
  %v6967 = vsel %vm6953, %v6964, %v6966
  %v6968 = vshll.u32 %v6928, 8
  %v6969 = vmul.u32.u64.compose %v6968, %v6967
  %v6970 = vextract.low.u32 %v6969
  %v6971 = vextract.high.u32 %v6969
  %v6972 = vmul.u32.u64.compose %v6968, %v6963
  %v6973 = vextract.low.u32 %v6972
  %v6974 = vextract.high.u32 %v6972
  %v6975 = vmul.u32 %v6968, %v6959
  %v6976 = vadd.s32 %v6971, %v6973
  %vm6977 = vc.u32 %v6971, %v6973
  %v6978 = vadd.s32 %v6974, 1
  %v6979 = vsel %vm6977, %v6978, %v6974
  %v6980 = vadd.s32 %v6975, %v6979
  %v6981 = vadd.s32 %v6980, 536870912
  %v6982 = vshrl.u32 %v6981, 30
  %v6983 = vshll.u32 %v6982, 30
  %v6984 = vsub.s32 %v6980, %v6983
  %vm6985 = vcmp.lt.s32.totalorder %v6984, 0
  %v6986 = vsub.s32 0, %v6984
  %v6987 = vsel %vm6985, %v6986, %v6984
  %v6988 = vclz %v6987
  %v6989 = vsub.s32 %v6988, 2
  %vm6990 = vcmp.gt.s32.totalorder 0, %v6989
  %v6991 = vsel %vm6990, 0, %v6989
  %v6992 = vsub.s32 32, %v6991
  %v6993 = vshll.u32 %v6984, %v6991
  %v6994 = vshrl.u32 %v6976, %v6992
  %v6995 = vor.u32 %v6993, %v6994
  %v6996 = vsub.s32 4294967266, %v6991
  %v6997 = vadd.s32 %v6996, 127
  %v6998 = vshll.u32 %v6997, 23
  %v6999 = vor.u32 4788187, %v6998
  %v7000 = vand.u32 2147483647, %v6999
  %v7002 = vcvt.s32.f32 %v6995
  %v7003 = vmul.f32 %v7002, %v7000
  %v7004 = vxor.u32 %v7003, 2147483648
  %v7005 = vsel %vm6922, %v7004, %v7003
  %v7006 = vsub.s32 4, %v6982
  %v7007 = vsel %vm6922, %v7006, %v6982
  %v7008 = vsel %vm6921, %v668, %v7005
  %v7009 = vsel %vm6921, 0, %v7007
  %v7010 = vcosq.f32.pop %v7008
  %v7011 = vsinq.f32.pop %v7008
  %vm7012 = vweird.f32 %v668
  %v7013 = vadd.s32 %v7009, 3
  %v7014 = vand.u32 %v7013, 3
  %vm7015 = vcmp.lt.s32.totalorder %v7014, 2
  %vm7016 = vcmp.eq.s32.totalorder %v7014, 0
  %v7017 = vxor.u32 %v7011, 2147483648
  %v7018 = vsel %vm7016, %v7010, %v7017
  %vm7019 = vcmp.eq.s32.totalorder %v7014, 2
  %v7020 = vxor.u32 %v7010, 2147483648
  %v7021 = vsel %vm7019, %v7020, %v7011
  %v7022 = vsel %vm7015, %v7018, %v7021
  %v7023 = vsel %vm7012, nan, %v7022
  %v7024 = vand.u32 2147483647, %v669
  %vm7025 = vcmp.le.f32.partialorder %v7024, 0.7853982
  %vm7026 = vcmp.lt.s32.totalorder %v669, 0
  %v7027 = vand.u32 %v669, 2139095040
  %v7028 = vshrl.u32 %v7027, 23
  %v7029 = vsub.s32 %v7028, 127
  %v7030 = vand.u32 2147483647, %v669
  %v7031 = vand.u32 %v7030, 8388607
  %v7032 = vor.u32 %v7031, 8388608
  %v7033 = vsub.s32 0, %v7032
  %v7034 = vadd.s32 %v7029, 1
  %vm7035 = vcmp.gt.s32.totalorder %v7034, 0
  %v7036 = vsel %vm7035, %v7034, 0
  %v7037 = vshrl.u32 %v7036, 5
  %v7038 = vand.u32 %v7036, 31
  %v7039 = vsub.s32 32, %v7038
  %v7040 = vshrl.u32 683565275, %v7039
  %v7041 = vshll.u32 683565275, %v7038
  %v7042 = vshrl.u32 2475754826, %v7039
  %v7043 = vor.u32 %v7041, %v7042
  %v7044 = vshll.u32 2475754826, %v7038
  %v7045 = vshrl.u32 2131351028, %v7039
  %v7046 = vor.u32 %v7044, %v7045
  %v7047 = vshll.u32 2131351028, %v7038
  %v7048 = vshrl.u32 2102212464, %v7039
  %v7049 = vor.u32 %v7047, %v7048
  %v7050 = vshll.u32 2102212464, %v7038
  %v7051 = vshrl.u32 920167782, %v7039
  %v7052 = vor.u32 %v7050, %v7051
  %v7053 = vshll.u32 920167782, %v7038
  %v7054 = vshrl.u32 1326507024, %v7039
  %v7055 = vor.u32 %v7053, %v7054
  %vm7056 = vcmp.lt.s32.totalorder %v7037, 1
  %vm7057 = vcmp.lt.s32.totalorder %v7037, 2
  %vm7058 = vcmp.lt.s32.totalorder %v7037, 3
  %vm7059 = vcmp.lt.s32.totalorder %v7037, 4
  %v7060 = vsel %vm7056, %v7040, %v7043
  %v7061 = vsel %vm7059, %v7049, 2102212464
  %v7062 = vsel %vm7058, %v7046, %v7061
  %v7063 = vsel %vm7057, %v7060, %v7062
  %v7064 = vsel %vm7056, %v7043, %v7046
  %v7065 = vsel %vm7059, %v7052, 920167782
  %v7066 = vsel %vm7058, %v7049, %v7065
  %v7067 = vsel %vm7057, %v7064, %v7066
  %v7068 = vsel %vm7056, %v7046, %v7049
  %v7069 = vsel %vm7059, %v7055, 1326507024
  %v7070 = vsel %vm7058, %v7052, %v7069
  %v7071 = vsel %vm7057, %v7068, %v7070
  %v7072 = vshll.u32 %v7032, 8
  %v7073 = vmul.u32.u64.compose %v7072, %v7071
  %v7074 = vextract.low.u32 %v7073
  %v7075 = vextract.high.u32 %v7073
  %v7076 = vmul.u32.u64.compose %v7072, %v7067
  %v7077 = vextract.low.u32 %v7076
  %v7078 = vextract.high.u32 %v7076
  %v7079 = vmul.u32 %v7072, %v7063
  %v7080 = vadd.s32 %v7075, %v7077
  %vm7081 = vc.u32 %v7075, %v7077
  %v7082 = vadd.s32 %v7078, 1
  %v7083 = vsel %vm7081, %v7082, %v7078
  %v7084 = vadd.s32 %v7079, %v7083
  %v7085 = vadd.s32 %v7084, 536870912
  %v7086 = vshrl.u32 %v7085, 30
  %v7087 = vshll.u32 %v7086, 30
  %v7088 = vsub.s32 %v7084, %v7087
  %vm7089 = vcmp.lt.s32.totalorder %v7088, 0
  %v7090 = vsub.s32 0, %v7088
  %v7091 = vsel %vm7089, %v7090, %v7088
  %v7092 = vclz %v7091
  %v7093 = vsub.s32 %v7092, 2
  %vm7094 = vcmp.gt.s32.totalorder 0, %v7093
  %v7095 = vsel %vm7094, 0, %v7093
  %v7096 = vsub.s32 32, %v7095
  %v7097 = vshll.u32 %v7088, %v7095
  %v7098 = vshrl.u32 %v7080, %v7096
  %v7099 = vor.u32 %v7097, %v7098
  %v7100 = vsub.s32 4294967266, %v7095
  %v7101 = vadd.s32 %v7100, 127
  %v7102 = vshll.u32 %v7101, 23
  %v7103 = vor.u32 4788187, %v7102
  %v7104 = vand.u32 2147483647, %v7103
  %v7106 = vcvt.s32.f32 %v7099
  %v7107 = vmul.f32 %v7106, %v7104
  %v7108 = vxor.u32 %v7107, 2147483648
  %v7109 = vsel %vm7026, %v7108, %v7107
  %v7110 = vsub.s32 4, %v7086
  %v7111 = vsel %vm7026, %v7110, %v7086
  %v7112 = vsel %vm7025, %v669, %v7109
  %v7113 = vsel %vm7025, 0, %v7111
  %v7114 = vcosq.f32.pop %v7112
  %v7115 = vsinq.f32.pop %v7112
  %vm7116 = vweird.f32 %v669
  %v7117 = vadd.s32 %v7113, 3
  %v7118 = vand.u32 %v7117, 3
  %vm7119 = vcmp.lt.s32.totalorder %v7118, 2
  %vm7120 = vcmp.eq.s32.totalorder %v7118, 0
  %v7121 = vxor.u32 %v7115, 2147483648
  %v7122 = vsel %vm7120, %v7114, %v7121
  %vm7123 = vcmp.eq.s32.totalorder %v7118, 2
  %v7124 = vxor.u32 %v7114, 2147483648
  %v7125 = vsel %vm7123, %v7124, %v7115
  %v7126 = vsel %vm7119, %v7122, %v7125
  %v7127 = vsel %vm7116, nan, %v7126
  %v7128 = vand.u32 2147483647, %v670
  %vm7129 = vcmp.le.f32.partialorder %v7128, 0.7853982
  %vm7130 = vcmp.lt.s32.totalorder %v670, 0
  %v7131 = vand.u32 %v670, 2139095040
  %v7132 = vshrl.u32 %v7131, 23
  %v7133 = vsub.s32 %v7132, 127
  %v7134 = vand.u32 2147483647, %v670
  %v7135 = vand.u32 %v7134, 8388607
  %v7136 = vor.u32 %v7135, 8388608
  %v7137 = vsub.s32 0, %v7136
  %v7138 = vadd.s32 %v7133, 1
  %vm7139 = vcmp.gt.s32.totalorder %v7138, 0
  %v7140 = vsel %vm7139, %v7138, 0
  %v7141 = vshrl.u32 %v7140, 5
  %v7142 = vand.u32 %v7140, 31
  %v7143 = vsub.s32 32, %v7142
  %v7144 = vshrl.u32 683565275, %v7143
  %v7145 = vshll.u32 683565275, %v7142
  %v7146 = vshrl.u32 2475754826, %v7143
  %v7147 = vor.u32 %v7145, %v7146
  %v7148 = vshll.u32 2475754826, %v7142
  %v7149 = vshrl.u32 2131351028, %v7143
  %v7150 = vor.u32 %v7148, %v7149
  %v7151 = vshll.u32 2131351028, %v7142
  %v7152 = vshrl.u32 2102212464, %v7143
  %v7153 = vor.u32 %v7151, %v7152
  %v7154 = vshll.u32 2102212464, %v7142
  %v7155 = vshrl.u32 920167782, %v7143
  %v7156 = vor.u32 %v7154, %v7155
  %v7157 = vshll.u32 920167782, %v7142
  %v7158 = vshrl.u32 1326507024, %v7143
  %v7159 = vor.u32 %v7157, %v7158
  %vm7160 = vcmp.lt.s32.totalorder %v7141, 1
  %vm7161 = vcmp.lt.s32.totalorder %v7141, 2
  %vm7162 = vcmp.lt.s32.totalorder %v7141, 3
  %vm7163 = vcmp.lt.s32.totalorder %v7141, 4
  %v7164 = vsel %vm7160, %v7144, %v7147
  %v7165 = vsel %vm7163, %v7153, 2102212464
  %v7166 = vsel %vm7162, %v7150, %v7165
  %v7167 = vsel %vm7161, %v7164, %v7166
  %v7168 = vsel %vm7160, %v7147, %v7150
  %v7169 = vsel %vm7163, %v7156, 920167782
  %v7170 = vsel %vm7162, %v7153, %v7169
  %v7171 = vsel %vm7161, %v7168, %v7170
  %v7172 = vsel %vm7160, %v7150, %v7153
  %v7173 = vsel %vm7163, %v7159, 1326507024
  %v7174 = vsel %vm7162, %v7156, %v7173
  %v7175 = vsel %vm7161, %v7172, %v7174
  %v7176 = vshll.u32 %v7136, 8
  %v7177 = vmul.u32.u64.compose %v7176, %v7175
  %v7178 = vextract.low.u32 %v7177
  %v7179 = vextract.high.u32 %v7177
  %v7180 = vmul.u32.u64.compose %v7176, %v7171
  %v7181 = vextract.low.u32 %v7180
  %v7182 = vextract.high.u32 %v7180
  %v7183 = vmul.u32 %v7176, %v7167
  %v7184 = vadd.s32 %v7179, %v7181
  %vm7185 = vc.u32 %v7179, %v7181
  %v7186 = vadd.s32 %v7182, 1
  %v7187 = vsel %vm7185, %v7186, %v7182
  %v7188 = vadd.s32 %v7183, %v7187
  %v7189 = vadd.s32 %v7188, 536870912
  %v7190 = vshrl.u32 %v7189, 30
  %v7191 = vshll.u32 %v7190, 30
  %v7192 = vsub.s32 %v7188, %v7191
  %vm7193 = vcmp.lt.s32.totalorder %v7192, 0
  %v7194 = vsub.s32 0, %v7192
  %v7195 = vsel %vm7193, %v7194, %v7192
  %v7196 = vclz %v7195
  %v7197 = vsub.s32 %v7196, 2
  %vm7198 = vcmp.gt.s32.totalorder 0, %v7197
  %v7199 = vsel %vm7198, 0, %v7197
  %v7200 = vsub.s32 32, %v7199
  %v7201 = vshll.u32 %v7192, %v7199
  %v7202 = vshrl.u32 %v7184, %v7200
  %v7203 = vor.u32 %v7201, %v7202
  %v7204 = vsub.s32 4294967266, %v7199
  %v7205 = vadd.s32 %v7204, 127
  %v7206 = vshll.u32 %v7205, 23
  %v7207 = vor.u32 4788187, %v7206
  %v7208 = vand.u32 2147483647, %v7207
  %v7210 = vcvt.s32.f32 %v7203
  %v7211 = vmul.f32 %v7210, %v7208
  %v7212 = vxor.u32 %v7211, 2147483648
  %v7213 = vsel %vm7130, %v7212, %v7211
  %v7214 = vsub.s32 4, %v7190
  %v7215 = vsel %vm7130, %v7214, %v7190
  %v7216 = vsel %vm7129, %v670, %v7213
  %v7217 = vsel %vm7129, 0, %v7215
  %v7218 = vcosq.f32.pop %v7216
  %v7219 = vsinq.f32.pop %v7216
  %vm7220 = vweird.f32 %v670
  %v7221 = vadd.s32 %v7217, 3
  %v7222 = vand.u32 %v7221, 3
  %vm7223 = vcmp.lt.s32.totalorder %v7222, 2
  %vm7224 = vcmp.eq.s32.totalorder %v7222, 0
  %v7225 = vxor.u32 %v7219, 2147483648
  %v7226 = vsel %vm7224, %v7218, %v7225
  %vm7227 = vcmp.eq.s32.totalorder %v7222, 2
  %v7228 = vxor.u32 %v7218, 2147483648
  %v7229 = vsel %vm7227, %v7228, %v7219
  %v7230 = vsel %vm7223, %v7226, %v7229
  %v7231 = vsel %vm7220, nan, %v7230
  %v7232 = vand.u32 2147483647, %v671
  %vm7233 = vcmp.le.f32.partialorder %v7232, 0.7853982
  %vm7234 = vcmp.lt.s32.totalorder %v671, 0
  %v7235 = vand.u32 %v671, 2139095040
  %v7236 = vshrl.u32 %v7235, 23
  %v7237 = vsub.s32 %v7236, 127
  %v7238 = vand.u32 2147483647, %v671
  %v7239 = vand.u32 %v7238, 8388607
  %v7240 = vor.u32 %v7239, 8388608
  %v7241 = vsub.s32 0, %v7240
  %v7242 = vadd.s32 %v7237, 1
  %vm7243 = vcmp.gt.s32.totalorder %v7242, 0
  %v7244 = vsel %vm7243, %v7242, 0
  %v7245 = vshrl.u32 %v7244, 5
  %v7246 = vand.u32 %v7244, 31
  %v7247 = vsub.s32 32, %v7246
  %v7248 = vshrl.u32 683565275, %v7247
  %v7249 = vshll.u32 683565275, %v7246
  %v7250 = vshrl.u32 2475754826, %v7247
  %v7251 = vor.u32 %v7249, %v7250
  %v7252 = vshll.u32 2475754826, %v7246
  %v7253 = vshrl.u32 2131351028, %v7247
  %v7254 = vor.u32 %v7252, %v7253
  %v7255 = vshll.u32 2131351028, %v7246
  %v7256 = vshrl.u32 2102212464, %v7247
  %v7257 = vor.u32 %v7255, %v7256
  %v7258 = vshll.u32 2102212464, %v7246
  %v7259 = vshrl.u32 920167782, %v7247
  %v7260 = vor.u32 %v7258, %v7259
  %v7261 = vshll.u32 920167782, %v7246
  %v7262 = vshrl.u32 1326507024, %v7247
  %v7263 = vor.u32 %v7261, %v7262
  %vm7264 = vcmp.lt.s32.totalorder %v7245, 1
  %vm7265 = vcmp.lt.s32.totalorder %v7245, 2
  %vm7266 = vcmp.lt.s32.totalorder %v7245, 3
  %vm7267 = vcmp.lt.s32.totalorder %v7245, 4
  %v7268 = vsel %vm7264, %v7248, %v7251
  %v7269 = vsel %vm7267, %v7257, 2102212464
  %v7270 = vsel %vm7266, %v7254, %v7269
  %v7271 = vsel %vm7265, %v7268, %v7270
  %v7272 = vsel %vm7264, %v7251, %v7254
  %v7273 = vsel %vm7267, %v7260, 920167782
  %v7274 = vsel %vm7266, %v7257, %v7273
  %v7275 = vsel %vm7265, %v7272, %v7274
  %v7276 = vsel %vm7264, %v7254, %v7257
  %v7277 = vsel %vm7267, %v7263, 1326507024
  %v7278 = vsel %vm7266, %v7260, %v7277
  %v7279 = vsel %vm7265, %v7276, %v7278
  %v7280 = vshll.u32 %v7240, 8
  %v7281 = vmul.u32.u64.compose %v7280, %v7279
  %v7282 = vextract.low.u32 %v7281
  %v7283 = vextract.high.u32 %v7281
  %v7284 = vmul.u32.u64.compose %v7280, %v7275
  %v7285 = vextract.low.u32 %v7284
  %v7286 = vextract.high.u32 %v7284
  %v7287 = vmul.u32 %v7280, %v7271
  %v7288 = vadd.s32 %v7283, %v7285
  %vm7289 = vc.u32 %v7283, %v7285
  %v7290 = vadd.s32 %v7286, 1
  %v7291 = vsel %vm7289, %v7290, %v7286
  %v7292 = vadd.s32 %v7287, %v7291
  %v7293 = vadd.s32 %v7292, 536870912
  %v7294 = vshrl.u32 %v7293, 30
  %v7295 = vshll.u32 %v7294, 30
  %v7296 = vsub.s32 %v7292, %v7295
  %vm7297 = vcmp.lt.s32.totalorder %v7296, 0
  %v7298 = vsub.s32 0, %v7296
  %v7299 = vsel %vm7297, %v7298, %v7296
  %v7300 = vclz %v7299
  %v7301 = vsub.s32 %v7300, 2
  %vm7302 = vcmp.gt.s32.totalorder 0, %v7301
  %v7303 = vsel %vm7302, 0, %v7301
  %v7304 = vsub.s32 32, %v7303
  %v7305 = vshll.u32 %v7296, %v7303
  %v7306 = vshrl.u32 %v7288, %v7304
  %v7307 = vor.u32 %v7305, %v7306
  %v7308 = vsub.s32 4294967266, %v7303
  %v7309 = vadd.s32 %v7308, 127
  %v7310 = vshll.u32 %v7309, 23
  %v7311 = vor.u32 4788187, %v7310
  %v7312 = vand.u32 2147483647, %v7311
  %v7314 = vcvt.s32.f32 %v7307
  %v7315 = vmul.f32 %v7314, %v7312
  %v7316 = vxor.u32 %v7315, 2147483648
  %v7317 = vsel %vm7234, %v7316, %v7315
  %v7318 = vsub.s32 4, %v7294
  %v7319 = vsel %vm7234, %v7318, %v7294
  %v7320 = vsel %vm7233, %v671, %v7317
  %v7321 = vsel %vm7233, 0, %v7319
  %v7322 = vcosq.f32.pop %v7320
  %v7323 = vsinq.f32.pop %v7320
  %vm7324 = vweird.f32 %v671
  %v7325 = vadd.s32 %v7321, 3
  %v7326 = vand.u32 %v7325, 3
  %vm7327 = vcmp.lt.s32.totalorder %v7326, 2
  %vm7328 = vcmp.eq.s32.totalorder %v7326, 0
  %v7329 = vxor.u32 %v7323, 2147483648
  %v7330 = vsel %vm7328, %v7322, %v7329
  %vm7331 = vcmp.eq.s32.totalorder %v7326, 2
  %v7332 = vxor.u32 %v7322, 2147483648
  %v7333 = vsel %vm7331, %v7332, %v7323
  %v7334 = vsel %vm7327, %v7330, %v7333
  %v7335 = vsel %vm7324, nan, %v7334
  %v7336 = vand.u32 2147483647, %v672
  %vm7337 = vcmp.le.f32.partialorder %v7336, 0.7853982
  %vm7338 = vcmp.lt.s32.totalorder %v672, 0
  %v7339 = vand.u32 %v672, 2139095040
  %v7340 = vshrl.u32 %v7339, 23
  %v7341 = vsub.s32 %v7340, 127
  %v7342 = vand.u32 2147483647, %v672
  %v7343 = vand.u32 %v7342, 8388607
  %v7344 = vor.u32 %v7343, 8388608
  %v7345 = vsub.s32 0, %v7344
  %v7346 = vadd.s32 %v7341, 1
  %vm7347 = vcmp.gt.s32.totalorder %v7346, 0
  %v7348 = vsel %vm7347, %v7346, 0
  %v7349 = vshrl.u32 %v7348, 5
  %v7350 = vand.u32 %v7348, 31
  %v7351 = vsub.s32 32, %v7350
  %v7352 = vshrl.u32 683565275, %v7351
  %v7353 = vshll.u32 683565275, %v7350
  %v7354 = vshrl.u32 2475754826, %v7351
  %v7355 = vor.u32 %v7353, %v7354
  %v7356 = vshll.u32 2475754826, %v7350
  %v7357 = vshrl.u32 2131351028, %v7351
  %v7358 = vor.u32 %v7356, %v7357
  %v7359 = vshll.u32 2131351028, %v7350
  %v7360 = vshrl.u32 2102212464, %v7351
  %v7361 = vor.u32 %v7359, %v7360
  %v7362 = vshll.u32 2102212464, %v7350
  %v7363 = vshrl.u32 920167782, %v7351
  %v7364 = vor.u32 %v7362, %v7363
  %v7365 = vshll.u32 920167782, %v7350
  %v7366 = vshrl.u32 1326507024, %v7351
  %v7367 = vor.u32 %v7365, %v7366
  %vm7368 = vcmp.lt.s32.totalorder %v7349, 1
  %vm7369 = vcmp.lt.s32.totalorder %v7349, 2
  %vm7370 = vcmp.lt.s32.totalorder %v7349, 3
  %vm7371 = vcmp.lt.s32.totalorder %v7349, 4
  %v7372 = vsel %vm7368, %v7352, %v7355
  %v7373 = vsel %vm7371, %v7361, 2102212464
  %v7374 = vsel %vm7370, %v7358, %v7373
  %v7375 = vsel %vm7369, %v7372, %v7374
  %v7376 = vsel %vm7368, %v7355, %v7358
  %v7377 = vsel %vm7371, %v7364, 920167782
  %v7378 = vsel %vm7370, %v7361, %v7377
  %v7379 = vsel %vm7369, %v7376, %v7378
  %v7380 = vsel %vm7368, %v7358, %v7361
  %v7381 = vsel %vm7371, %v7367, 1326507024
  %v7382 = vsel %vm7370, %v7364, %v7381
  %v7383 = vsel %vm7369, %v7380, %v7382
  %v7384 = vshll.u32 %v7344, 8
  %v7385 = vmul.u32.u64.compose %v7384, %v7383
  %v7386 = vextract.low.u32 %v7385
  %v7387 = vextract.high.u32 %v7385
  %v7388 = vmul.u32.u64.compose %v7384, %v7379
  %v7389 = vextract.low.u32 %v7388
  %v7390 = vextract.high.u32 %v7388
  %v7391 = vmul.u32 %v7384, %v7375
  %v7392 = vadd.s32 %v7387, %v7389
  %vm7393 = vc.u32 %v7387, %v7389
  %v7394 = vadd.s32 %v7390, 1
  %v7395 = vsel %vm7393, %v7394, %v7390
  %v7396 = vadd.s32 %v7391, %v7395
  %v7397 = vadd.s32 %v7396, 536870912
  %v7398 = vshrl.u32 %v7397, 30
  %v7399 = vshll.u32 %v7398, 30
  %v7400 = vsub.s32 %v7396, %v7399
  %vm7401 = vcmp.lt.s32.totalorder %v7400, 0
  %v7402 = vsub.s32 0, %v7400
  %v7403 = vsel %vm7401, %v7402, %v7400
  %v7404 = vclz %v7403
  %v7405 = vsub.s32 %v7404, 2
  %vm7406 = vcmp.gt.s32.totalorder 0, %v7405
  %v7407 = vsel %vm7406, 0, %v7405
  %v7408 = vsub.s32 32, %v7407
  %v7409 = vshll.u32 %v7400, %v7407
  %v7410 = vshrl.u32 %v7392, %v7408
  %v7411 = vor.u32 %v7409, %v7410
  %v7412 = vsub.s32 4294967266, %v7407
  %v7413 = vadd.s32 %v7412, 127
  %v7414 = vshll.u32 %v7413, 23
  %v7415 = vor.u32 4788187, %v7414
  %v7416 = vand.u32 2147483647, %v7415
  %v7418 = vcvt.s32.f32 %v7411
  %v7419 = vmul.f32 %v7418, %v7416
  %v7420 = vxor.u32 %v7419, 2147483648
  %v7421 = vsel %vm7338, %v7420, %v7419
  %v7422 = vsub.s32 4, %v7398
  %v7423 = vsel %vm7338, %v7422, %v7398
  %v7424 = vsel %vm7337, %v672, %v7421
  %v7425 = vsel %vm7337, 0, %v7423
  %v7426 = vcosq.f32.pop %v7424
  %v7427 = vsinq.f32.pop %v7424
  %vm7428 = vweird.f32 %v672
  %v7429 = vadd.s32 %v7425, 3
  %v7430 = vand.u32 %v7429, 3
  %vm7431 = vcmp.lt.s32.totalorder %v7430, 2
  %vm7432 = vcmp.eq.s32.totalorder %v7430, 0
  %v7433 = vxor.u32 %v7427, 2147483648
  %v7434 = vsel %vm7432, %v7426, %v7433
  %vm7435 = vcmp.eq.s32.totalorder %v7430, 2
  %v7436 = vxor.u32 %v7426, 2147483648
  %v7437 = vsel %vm7435, %v7436, %v7427
  %v7438 = vsel %vm7431, %v7434, %v7437
  %v7439 = vsel %vm7428, nan, %v7438
  %v7440 = vand.u32 2147483647, %v673
  %vm7441 = vcmp.le.f32.partialorder %v7440, 0.7853982
  %vm7442 = vcmp.lt.s32.totalorder %v673, 0
  %v7443 = vand.u32 %v673, 2139095040
  %v7444 = vshrl.u32 %v7443, 23
  %v7445 = vsub.s32 %v7444, 127
  %v7446 = vand.u32 2147483647, %v673
  %v7447 = vand.u32 %v7446, 8388607
  %v7448 = vor.u32 %v7447, 8388608
  %v7449 = vsub.s32 0, %v7448
  %v7450 = vadd.s32 %v7445, 1
  %vm7451 = vcmp.gt.s32.totalorder %v7450, 0
  %v7452 = vsel %vm7451, %v7450, 0
  %v7453 = vshrl.u32 %v7452, 5
  %v7454 = vand.u32 %v7452, 31
  %v7455 = vsub.s32 32, %v7454
  %v7456 = vshrl.u32 683565275, %v7455
  %v7457 = vshll.u32 683565275, %v7454
  %v7458 = vshrl.u32 2475754826, %v7455
  %v7459 = vor.u32 %v7457, %v7458
  %v7460 = vshll.u32 2475754826, %v7454
  %v7461 = vshrl.u32 2131351028, %v7455
  %v7462 = vor.u32 %v7460, %v7461
  %v7463 = vshll.u32 2131351028, %v7454
  %v7464 = vshrl.u32 2102212464, %v7455
  %v7465 = vor.u32 %v7463, %v7464
  %v7466 = vshll.u32 2102212464, %v7454
  %v7467 = vshrl.u32 920167782, %v7455
  %v7468 = vor.u32 %v7466, %v7467
  %v7469 = vshll.u32 920167782, %v7454
  %v7470 = vshrl.u32 1326507024, %v7455
  %v7471 = vor.u32 %v7469, %v7470
  %vm7472 = vcmp.lt.s32.totalorder %v7453, 1
  %vm7473 = vcmp.lt.s32.totalorder %v7453, 2
  %vm7474 = vcmp.lt.s32.totalorder %v7453, 3
  %vm7475 = vcmp.lt.s32.totalorder %v7453, 4
  %v7476 = vsel %vm7472, %v7456, %v7459
  %v7477 = vsel %vm7475, %v7465, 2102212464
  %v7478 = vsel %vm7474, %v7462, %v7477
  %v7479 = vsel %vm7473, %v7476, %v7478
  %v7480 = vsel %vm7472, %v7459, %v7462
  %v7481 = vsel %vm7475, %v7468, 920167782
  %v7482 = vsel %vm7474, %v7465, %v7481
  %v7483 = vsel %vm7473, %v7480, %v7482
  %v7484 = vsel %vm7472, %v7462, %v7465
  %v7485 = vsel %vm7475, %v7471, 1326507024
  %v7486 = vsel %vm7474, %v7468, %v7485
  %v7487 = vsel %vm7473, %v7484, %v7486
  %v7488 = vshll.u32 %v7448, 8
  %v7489 = vmul.u32.u64.compose %v7488, %v7487
  %v7490 = vextract.low.u32 %v7489
  %v7491 = vextract.high.u32 %v7489
  %v7492 = vmul.u32.u64.compose %v7488, %v7483
  %v7493 = vextract.low.u32 %v7492
  %v7494 = vextract.high.u32 %v7492
  %v7495 = vmul.u32 %v7488, %v7479
  %v7496 = vadd.s32 %v7491, %v7493
  %vm7497 = vc.u32 %v7491, %v7493
  %v7498 = vadd.s32 %v7494, 1
  %v7499 = vsel %vm7497, %v7498, %v7494
  %v7500 = vadd.s32 %v7495, %v7499
  %v7501 = vadd.s32 %v7500, 536870912
  %v7502 = vshrl.u32 %v7501, 30
  %v7503 = vshll.u32 %v7502, 30
  %v7504 = vsub.s32 %v7500, %v7503
  %vm7505 = vcmp.lt.s32.totalorder %v7504, 0
  %v7506 = vsub.s32 0, %v7504
  %v7507 = vsel %vm7505, %v7506, %v7504
  %v7508 = vclz %v7507
  %v7509 = vsub.s32 %v7508, 2
  %vm7510 = vcmp.gt.s32.totalorder 0, %v7509
  %v7511 = vsel %vm7510, 0, %v7509
  %v7512 = vsub.s32 32, %v7511
  %v7513 = vshll.u32 %v7504, %v7511
  %v7514 = vshrl.u32 %v7496, %v7512
  %v7515 = vor.u32 %v7513, %v7514
  %v7516 = vsub.s32 4294967266, %v7511
  %v7517 = vadd.s32 %v7516, 127
  %v7518 = vshll.u32 %v7517, 23
  %v7519 = vor.u32 4788187, %v7518
  %v7520 = vand.u32 2147483647, %v7519
  %v7522 = vcvt.s32.f32 %v7515
  %v7523 = vmul.f32 %v7522, %v7520
  %v7524 = vxor.u32 %v7523, 2147483648
  %v7525 = vsel %vm7442, %v7524, %v7523
  %v7526 = vsub.s32 4, %v7502
  %v7527 = vsel %vm7442, %v7526, %v7502
  %v7528 = vsel %vm7441, %v673, %v7525
  %v7529 = vsel %vm7441, 0, %v7527
  %v7530 = vcosq.f32.pop %v7528
  %v7531 = vsinq.f32.pop %v7528
  %vm7532 = vweird.f32 %v673
  %v7533 = vadd.s32 %v7529, 3
  %v7534 = vand.u32 %v7533, 3
  %vm7535 = vcmp.lt.s32.totalorder %v7534, 2
  %vm7536 = vcmp.eq.s32.totalorder %v7534, 0
  %v7537 = vxor.u32 %v7531, 2147483648
  %v7538 = vsel %vm7536, %v7530, %v7537
  %vm7539 = vcmp.eq.s32.totalorder %v7534, 2
  %v7540 = vxor.u32 %v7530, 2147483648
  %v7541 = vsel %vm7539, %v7540, %v7531
  %v7542 = vsel %vm7535, %v7538, %v7541
  %v7543 = vsel %vm7532, nan, %v7542
  %v7544 = vand.u32 2147483647, %v674
  %vm7545 = vcmp.le.f32.partialorder %v7544, 0.7853982
  %vm7546 = vcmp.lt.s32.totalorder %v674, 0
  %v7547 = vand.u32 %v674, 2139095040
  %v7548 = vshrl.u32 %v7547, 23
  %v7549 = vsub.s32 %v7548, 127
  %v7550 = vand.u32 2147483647, %v674
  %v7551 = vand.u32 %v7550, 8388607
  %v7552 = vor.u32 %v7551, 8388608
  %v7553 = vsub.s32 0, %v7552
  %v7554 = vadd.s32 %v7549, 1
  %vm7555 = vcmp.gt.s32.totalorder %v7554, 0
  %v7556 = vsel %vm7555, %v7554, 0
  %v7557 = vshrl.u32 %v7556, 5
  %v7558 = vand.u32 %v7556, 31
  %v7559 = vsub.s32 32, %v7558
  %v7560 = vshrl.u32 683565275, %v7559
  %v7561 = vshll.u32 683565275, %v7558
  %v7562 = vshrl.u32 2475754826, %v7559
  %v7563 = vor.u32 %v7561, %v7562
  %v7564 = vshll.u32 2475754826, %v7558
  %v7565 = vshrl.u32 2131351028, %v7559
  %v7566 = vor.u32 %v7564, %v7565
  %v7567 = vshll.u32 2131351028, %v7558
  %v7568 = vshrl.u32 2102212464, %v7559
  %v7569 = vor.u32 %v7567, %v7568
  %v7570 = vshll.u32 2102212464, %v7558
  %v7571 = vshrl.u32 920167782, %v7559
  %v7572 = vor.u32 %v7570, %v7571
  %v7573 = vshll.u32 920167782, %v7558
  %v7574 = vshrl.u32 1326507024, %v7559
  %v7575 = vor.u32 %v7573, %v7574
  %vm7576 = vcmp.lt.s32.totalorder %v7557, 1
  %vm7577 = vcmp.lt.s32.totalorder %v7557, 2
  %vm7578 = vcmp.lt.s32.totalorder %v7557, 3
  %vm7579 = vcmp.lt.s32.totalorder %v7557, 4
  %v7580 = vsel %vm7576, %v7560, %v7563
  %v7581 = vsel %vm7579, %v7569, 2102212464
  %v7582 = vsel %vm7578, %v7566, %v7581
  %v7583 = vsel %vm7577, %v7580, %v7582
  %v7584 = vsel %vm7576, %v7563, %v7566
  %v7585 = vsel %vm7579, %v7572, 920167782
  %v7586 = vsel %vm7578, %v7569, %v7585
  %v7587 = vsel %vm7577, %v7584, %v7586
  %v7588 = vsel %vm7576, %v7566, %v7569
  %v7589 = vsel %vm7579, %v7575, 1326507024
  %v7590 = vsel %vm7578, %v7572, %v7589
  %v7591 = vsel %vm7577, %v7588, %v7590
  %v7592 = vshll.u32 %v7552, 8
  %v7593 = vmul.u32.u64.compose %v7592, %v7591
  %v7594 = vextract.low.u32 %v7593
  %v7595 = vextract.high.u32 %v7593
  %v7596 = vmul.u32.u64.compose %v7592, %v7587
  %v7597 = vextract.low.u32 %v7596
  %v7598 = vextract.high.u32 %v7596
  %v7599 = vmul.u32 %v7592, %v7583
  %v7600 = vadd.s32 %v7595, %v7597
  %vm7601 = vc.u32 %v7595, %v7597
  %v7602 = vadd.s32 %v7598, 1
  %v7603 = vsel %vm7601, %v7602, %v7598
  %v7604 = vadd.s32 %v7599, %v7603
  %v7605 = vadd.s32 %v7604, 536870912
  %v7606 = vshrl.u32 %v7605, 30
  %v7607 = vshll.u32 %v7606, 30
  %v7608 = vsub.s32 %v7604, %v7607
  %vm7609 = vcmp.lt.s32.totalorder %v7608, 0
  %v7610 = vsub.s32 0, %v7608
  %v7611 = vsel %vm7609, %v7610, %v7608
  %v7612 = vclz %v7611
  %v7613 = vsub.s32 %v7612, 2
  %vm7614 = vcmp.gt.s32.totalorder 0, %v7613
  %v7615 = vsel %vm7614, 0, %v7613
  %v7616 = vsub.s32 32, %v7615
  %v7617 = vshll.u32 %v7608, %v7615
  %v7618 = vshrl.u32 %v7600, %v7616
  %v7619 = vor.u32 %v7617, %v7618
  %v7620 = vsub.s32 4294967266, %v7615
  %v7621 = vadd.s32 %v7620, 127
  %v7622 = vshll.u32 %v7621, 23
  %v7623 = vor.u32 4788187, %v7622
  %v7624 = vand.u32 2147483647, %v7623
  %v7626 = vcvt.s32.f32 %v7619
  %v7627 = vmul.f32 %v7626, %v7624
  %v7628 = vxor.u32 %v7627, 2147483648
  %v7629 = vsel %vm7546, %v7628, %v7627
  %v7630 = vsub.s32 4, %v7606
  %v7631 = vsel %vm7546, %v7630, %v7606
  %v7632 = vsel %vm7545, %v674, %v7629
  %v7633 = vsel %vm7545, 0, %v7631
  %v7634 = vcosq.f32.pop %v7632
  %v7635 = vsinq.f32.pop %v7632
  %vm7636 = vweird.f32 %v674
  %v7637 = vadd.s32 %v7633, 3
  %v7638 = vand.u32 %v7637, 3
  %vm7639 = vcmp.lt.s32.totalorder %v7638, 2
  %vm7640 = vcmp.eq.s32.totalorder %v7638, 0
  %v7641 = vxor.u32 %v7635, 2147483648
  %v7642 = vsel %vm7640, %v7634, %v7641
  %vm7643 = vcmp.eq.s32.totalorder %v7638, 2
  %v7644 = vxor.u32 %v7634, 2147483648
  %v7645 = vsel %vm7643, %v7644, %v7635
  %v7646 = vsel %vm7639, %v7642, %v7645
  %v7647 = vsel %vm7636, nan, %v7646
  %v7648 = vand.u32 2147483647, %v675
  %vm7649 = vcmp.le.f32.partialorder %v7648, 0.7853982
  %vm7650 = vcmp.lt.s32.totalorder %v675, 0
  %v7651 = vand.u32 %v675, 2139095040
  %v7652 = vshrl.u32 %v7651, 23
  %v7653 = vsub.s32 %v7652, 127
  %v7654 = vand.u32 2147483647, %v675
  %v7655 = vand.u32 %v7654, 8388607
  %v7656 = vor.u32 %v7655, 8388608
  %v7657 = vsub.s32 0, %v7656
  %v7658 = vadd.s32 %v7653, 1
  %vm7659 = vcmp.gt.s32.totalorder %v7658, 0
  %v7660 = vsel %vm7659, %v7658, 0
  %v7661 = vshrl.u32 %v7660, 5
  %v7662 = vand.u32 %v7660, 31
  %v7663 = vsub.s32 32, %v7662
  %v7664 = vshrl.u32 683565275, %v7663
  %v7665 = vshll.u32 683565275, %v7662
  %v7666 = vshrl.u32 2475754826, %v7663
  %v7667 = vor.u32 %v7665, %v7666
  %v7668 = vshll.u32 2475754826, %v7662
  %v7669 = vshrl.u32 2131351028, %v7663
  %v7670 = vor.u32 %v7668, %v7669
  %v7671 = vshll.u32 2131351028, %v7662
  %v7672 = vshrl.u32 2102212464, %v7663
  %v7673 = vor.u32 %v7671, %v7672
  %v7674 = vshll.u32 2102212464, %v7662
  %v7675 = vshrl.u32 920167782, %v7663
  %v7676 = vor.u32 %v7674, %v7675
  %v7677 = vshll.u32 920167782, %v7662
  %v7678 = vshrl.u32 1326507024, %v7663
  %v7679 = vor.u32 %v7677, %v7678
  %vm7680 = vcmp.lt.s32.totalorder %v7661, 1
  %vm7681 = vcmp.lt.s32.totalorder %v7661, 2
  %vm7682 = vcmp.lt.s32.totalorder %v7661, 3
  %vm7683 = vcmp.lt.s32.totalorder %v7661, 4
  %v7684 = vsel %vm7680, %v7664, %v7667
  %v7685 = vsel %vm7683, %v7673, 2102212464
  %v7686 = vsel %vm7682, %v7670, %v7685
  %v7687 = vsel %vm7681, %v7684, %v7686
  %v7688 = vsel %vm7680, %v7667, %v7670
  %v7689 = vsel %vm7683, %v7676, 920167782
  %v7690 = vsel %vm7682, %v7673, %v7689
  %v7691 = vsel %vm7681, %v7688, %v7690
  %v7692 = vsel %vm7680, %v7670, %v7673
  %v7693 = vsel %vm7683, %v7679, 1326507024
  %v7694 = vsel %vm7682, %v7676, %v7693
  %v7695 = vsel %vm7681, %v7692, %v7694
  %v7696 = vshll.u32 %v7656, 8
  %v7697 = vmul.u32.u64.compose %v7696, %v7695
  %v7698 = vextract.low.u32 %v7697
  %v7699 = vextract.high.u32 %v7697
  %v7700 = vmul.u32.u64.compose %v7696, %v7691
  %v7701 = vextract.low.u32 %v7700
  %v7702 = vextract.high.u32 %v7700
  %v7703 = vmul.u32 %v7696, %v7687
  %v7704 = vadd.s32 %v7699, %v7701
  %vm7705 = vc.u32 %v7699, %v7701
  %v7706 = vadd.s32 %v7702, 1
  %v7707 = vsel %vm7705, %v7706, %v7702
  %v7708 = vadd.s32 %v7703, %v7707
  %v7709 = vadd.s32 %v7708, 536870912
  %v7710 = vshrl.u32 %v7709, 30
  %v7711 = vshll.u32 %v7710, 30
  %v7712 = vsub.s32 %v7708, %v7711
  %vm7713 = vcmp.lt.s32.totalorder %v7712, 0
  %v7714 = vsub.s32 0, %v7712
  %v7715 = vsel %vm7713, %v7714, %v7712
  %v7716 = vclz %v7715
  %v7717 = vsub.s32 %v7716, 2
  %vm7718 = vcmp.gt.s32.totalorder 0, %v7717
  %v7719 = vsel %vm7718, 0, %v7717
  %v7720 = vsub.s32 32, %v7719
  %v7721 = vshll.u32 %v7712, %v7719
  %v7722 = vshrl.u32 %v7704, %v7720
  %v7723 = vor.u32 %v7721, %v7722
  %v7724 = vsub.s32 4294967266, %v7719
  %v7725 = vadd.s32 %v7724, 127
  %v7726 = vshll.u32 %v7725, 23
  %v7727 = vor.u32 4788187, %v7726
  %v7728 = vand.u32 2147483647, %v7727
  %v7730 = vcvt.s32.f32 %v7723
  %v7731 = vmul.f32 %v7730, %v7728
  %v7732 = vxor.u32 %v7731, 2147483648
  %v7733 = vsel %vm7650, %v7732, %v7731
  %v7734 = vsub.s32 4, %v7710
  %v7735 = vsel %vm7650, %v7734, %v7710
  %v7736 = vsel %vm7649, %v675, %v7733
  %v7737 = vsel %vm7649, 0, %v7735
  %v7738 = vcosq.f32.pop %v7736
  %v7739 = vsinq.f32.pop %v7736
  %vm7740 = vweird.f32 %v675
  %v7741 = vadd.s32 %v7737, 3
  %v7742 = vand.u32 %v7741, 3
  %vm7743 = vcmp.lt.s32.totalorder %v7742, 2
  %vm7744 = vcmp.eq.s32.totalorder %v7742, 0
  %v7745 = vxor.u32 %v7739, 2147483648
  %v7746 = vsel %vm7744, %v7738, %v7745
  %vm7747 = vcmp.eq.s32.totalorder %v7742, 2
  %v7748 = vxor.u32 %v7738, 2147483648
  %v7749 = vsel %vm7747, %v7748, %v7739
  %v7750 = vsel %vm7743, %v7746, %v7749
  %v7751 = vsel %vm7740, nan, %v7750
  %v7752 = vand.u32 2147483647, %v676
  %vm7753 = vcmp.le.f32.partialorder %v7752, 0.7853982
  %vm7754 = vcmp.lt.s32.totalorder %v676, 0
  %v7755 = vand.u32 %v676, 2139095040
  %v7756 = vshrl.u32 %v7755, 23
  %v7757 = vsub.s32 %v7756, 127
  %v7758 = vand.u32 2147483647, %v676
  %v7759 = vand.u32 %v7758, 8388607
  %v7760 = vor.u32 %v7759, 8388608
  %v7761 = vsub.s32 0, %v7760
  %v7762 = vadd.s32 %v7757, 1
  %vm7763 = vcmp.gt.s32.totalorder %v7762, 0
  %v7764 = vsel %vm7763, %v7762, 0
  %v7765 = vshrl.u32 %v7764, 5
  %v7766 = vand.u32 %v7764, 31
  %v7767 = vsub.s32 32, %v7766
  %v7768 = vshrl.u32 683565275, %v7767
  %v7769 = vshll.u32 683565275, %v7766
  %v7770 = vshrl.u32 2475754826, %v7767
  %v7771 = vor.u32 %v7769, %v7770
  %v7772 = vshll.u32 2475754826, %v7766
  %v7773 = vshrl.u32 2131351028, %v7767
  %v7774 = vor.u32 %v7772, %v7773
  %v7775 = vshll.u32 2131351028, %v7766
  %v7776 = vshrl.u32 2102212464, %v7767
  %v7777 = vor.u32 %v7775, %v7776
  %v7778 = vshll.u32 2102212464, %v7766
  %v7779 = vshrl.u32 920167782, %v7767
  %v7780 = vor.u32 %v7778, %v7779
  %v7781 = vshll.u32 920167782, %v7766
  %v7782 = vshrl.u32 1326507024, %v7767
  %v7783 = vor.u32 %v7781, %v7782
  %vm7784 = vcmp.lt.s32.totalorder %v7765, 1
  %vm7785 = vcmp.lt.s32.totalorder %v7765, 2
  %vm7786 = vcmp.lt.s32.totalorder %v7765, 3
  %vm7787 = vcmp.lt.s32.totalorder %v7765, 4
  %v7788 = vsel %vm7784, %v7768, %v7771
  %v7789 = vsel %vm7787, %v7777, 2102212464
  %v7790 = vsel %vm7786, %v7774, %v7789
  %v7791 = vsel %vm7785, %v7788, %v7790
  %v7792 = vsel %vm7784, %v7771, %v7774
  %v7793 = vsel %vm7787, %v7780, 920167782
  %v7794 = vsel %vm7786, %v7777, %v7793
  %v7795 = vsel %vm7785, %v7792, %v7794
  %v7796 = vsel %vm7784, %v7774, %v7777
  %v7797 = vsel %vm7787, %v7783, 1326507024
  %v7798 = vsel %vm7786, %v7780, %v7797
  %v7799 = vsel %vm7785, %v7796, %v7798
  %v7800 = vshll.u32 %v7760, 8
  %v7801 = vmul.u32.u64.compose %v7800, %v7799
  %v7802 = vextract.low.u32 %v7801
  %v7803 = vextract.high.u32 %v7801
  %v7804 = vmul.u32.u64.compose %v7800, %v7795
  %v7805 = vextract.low.u32 %v7804
  %v7806 = vextract.high.u32 %v7804
  %v7807 = vmul.u32 %v7800, %v7791
  %v7808 = vadd.s32 %v7803, %v7805
  %vm7809 = vc.u32 %v7803, %v7805
  %v7810 = vadd.s32 %v7806, 1
  %v7811 = vsel %vm7809, %v7810, %v7806
  %v7812 = vadd.s32 %v7807, %v7811
  %v7813 = vadd.s32 %v7812, 536870912
  %v7814 = vshrl.u32 %v7813, 30
  %v7815 = vshll.u32 %v7814, 30
  %v7816 = vsub.s32 %v7812, %v7815
  %vm7817 = vcmp.lt.s32.totalorder %v7816, 0
  %v7818 = vsub.s32 0, %v7816
  %v7819 = vsel %vm7817, %v7818, %v7816
  %v7820 = vclz %v7819
  %v7821 = vsub.s32 %v7820, 2
  %vm7822 = vcmp.gt.s32.totalorder 0, %v7821
  %v7823 = vsel %vm7822, 0, %v7821
  %v7824 = vsub.s32 32, %v7823
  %v7825 = vshll.u32 %v7816, %v7823
  %v7826 = vshrl.u32 %v7808, %v7824
  %v7827 = vor.u32 %v7825, %v7826
  %v7828 = vsub.s32 4294967266, %v7823
  %v7829 = vadd.s32 %v7828, 127
  %v7830 = vshll.u32 %v7829, 23
  %v7831 = vor.u32 4788187, %v7830
  %v7832 = vand.u32 2147483647, %v7831
  %v7834 = vcvt.s32.f32 %v7827
  %v7835 = vmul.f32 %v7834, %v7832
  %v7836 = vxor.u32 %v7835, 2147483648
  %v7837 = vsel %vm7754, %v7836, %v7835
  %v7838 = vsub.s32 4, %v7814
  %v7839 = vsel %vm7754, %v7838, %v7814
  %v7840 = vsel %vm7753, %v676, %v7837
  %v7841 = vsel %vm7753, 0, %v7839
  %v7842 = vcosq.f32.pop %v7840
  %v7843 = vsinq.f32.pop %v7840
  %vm7844 = vweird.f32 %v676
  %v7845 = vadd.s32 %v7841, 3
  %v7846 = vand.u32 %v7845, 3
  %vm7847 = vcmp.lt.s32.totalorder %v7846, 2
  %vm7848 = vcmp.eq.s32.totalorder %v7846, 0
  %v7849 = vxor.u32 %v7843, 2147483648
  %v7850 = vsel %vm7848, %v7842, %v7849
  %vm7851 = vcmp.eq.s32.totalorder %v7846, 2
  %v7852 = vxor.u32 %v7842, 2147483648
  %v7853 = vsel %vm7851, %v7852, %v7843
  %v7854 = vsel %vm7847, %v7850, %v7853
  %v7855 = vsel %vm7844, nan, %v7854
  %v7856 = vand.u32 2147483647, %v677
  %vm7857 = vcmp.le.f32.partialorder %v7856, 0.7853982
  %vm7858 = vcmp.lt.s32.totalorder %v677, 0
  %v7859 = vand.u32 %v677, 2139095040
  %v7860 = vshrl.u32 %v7859, 23
  %v7861 = vsub.s32 %v7860, 127
  %v7862 = vand.u32 2147483647, %v677
  %v7863 = vand.u32 %v7862, 8388607
  %v7864 = vor.u32 %v7863, 8388608
  %v7865 = vsub.s32 0, %v7864
  %v7866 = vadd.s32 %v7861, 1
  %vm7867 = vcmp.gt.s32.totalorder %v7866, 0
  %v7868 = vsel %vm7867, %v7866, 0
  %v7869 = vshrl.u32 %v7868, 5
  %v7870 = vand.u32 %v7868, 31
  %v7871 = vsub.s32 32, %v7870
  %v7872 = vshrl.u32 683565275, %v7871
  %v7873 = vshll.u32 683565275, %v7870
  %v7874 = vshrl.u32 2475754826, %v7871
  %v7875 = vor.u32 %v7873, %v7874
  %v7876 = vshll.u32 2475754826, %v7870
  %v7877 = vshrl.u32 2131351028, %v7871
  %v7878 = vor.u32 %v7876, %v7877
  %v7879 = vshll.u32 2131351028, %v7870
  %v7880 = vshrl.u32 2102212464, %v7871
  %v7881 = vor.u32 %v7879, %v7880
  %v7882 = vshll.u32 2102212464, %v7870
  %v7883 = vshrl.u32 920167782, %v7871
  %v7884 = vor.u32 %v7882, %v7883
  %v7885 = vshll.u32 920167782, %v7870
  %v7886 = vshrl.u32 1326507024, %v7871
  %v7887 = vor.u32 %v7885, %v7886
  %vm7888 = vcmp.lt.s32.totalorder %v7869, 1
  %vm7889 = vcmp.lt.s32.totalorder %v7869, 2
  %vm7890 = vcmp.lt.s32.totalorder %v7869, 3
  %vm7891 = vcmp.lt.s32.totalorder %v7869, 4
  %v7892 = vsel %vm7888, %v7872, %v7875
  %v7893 = vsel %vm7891, %v7881, 2102212464
  %v7894 = vsel %vm7890, %v7878, %v7893
  %v7895 = vsel %vm7889, %v7892, %v7894
  %v7896 = vsel %vm7888, %v7875, %v7878
  %v7897 = vsel %vm7891, %v7884, 920167782
  %v7898 = vsel %vm7890, %v7881, %v7897
  %v7899 = vsel %vm7889, %v7896, %v7898
  %v7900 = vsel %vm7888, %v7878, %v7881
  %v7901 = vsel %vm7891, %v7887, 1326507024
  %v7902 = vsel %vm7890, %v7884, %v7901
  %v7903 = vsel %vm7889, %v7900, %v7902
  %v7904 = vshll.u32 %v7864, 8
  %v7905 = vmul.u32.u64.compose %v7904, %v7903
  %v7906 = vextract.low.u32 %v7905
  %v7907 = vextract.high.u32 %v7905
  %v7908 = vmul.u32.u64.compose %v7904, %v7899
  %v7909 = vextract.low.u32 %v7908
  %v7910 = vextract.high.u32 %v7908
  %v7911 = vmul.u32 %v7904, %v7895
  %v7912 = vadd.s32 %v7907, %v7909
  %vm7913 = vc.u32 %v7907, %v7909
  %v7914 = vadd.s32 %v7910, 1
  %v7915 = vsel %vm7913, %v7914, %v7910
  %v7916 = vadd.s32 %v7911, %v7915
  %v7917 = vadd.s32 %v7916, 536870912
  %v7918 = vshrl.u32 %v7917, 30
  %v7919 = vshll.u32 %v7918, 30
  %v7920 = vsub.s32 %v7916, %v7919
  %vm7921 = vcmp.lt.s32.totalorder %v7920, 0
  %v7922 = vsub.s32 0, %v7920
  %v7923 = vsel %vm7921, %v7922, %v7920
  %v7924 = vclz %v7923
  %v7925 = vsub.s32 %v7924, 2
  %vm7926 = vcmp.gt.s32.totalorder 0, %v7925
  %v7927 = vsel %vm7926, 0, %v7925
  %v7928 = vsub.s32 32, %v7927
  %v7929 = vshll.u32 %v7920, %v7927
  %v7930 = vshrl.u32 %v7912, %v7928
  %v7931 = vor.u32 %v7929, %v7930
  %v7932 = vsub.s32 4294967266, %v7927
  %v7933 = vadd.s32 %v7932, 127
  %v7934 = vshll.u32 %v7933, 23
  %v7935 = vor.u32 4788187, %v7934
  %v7936 = vand.u32 2147483647, %v7935
  %v7938 = vcvt.s32.f32 %v7931
  %v7939 = vmul.f32 %v7938, %v7936
  %v7940 = vxor.u32 %v7939, 2147483648
  %v7941 = vsel %vm7858, %v7940, %v7939
  %v7942 = vsub.s32 4, %v7918
  %v7943 = vsel %vm7858, %v7942, %v7918
  %v7944 = vsel %vm7857, %v677, %v7941
  %v7945 = vsel %vm7857, 0, %v7943
  %v7946 = vcosq.f32.pop %v7944
  %v7947 = vsinq.f32.pop %v7944
  %vm7948 = vweird.f32 %v677
  %v7949 = vadd.s32 %v7945, 3
  %v7950 = vand.u32 %v7949, 3
  %vm7951 = vcmp.lt.s32.totalorder %v7950, 2
  %vm7952 = vcmp.eq.s32.totalorder %v7950, 0
  %v7953 = vxor.u32 %v7947, 2147483648
  %v7954 = vsel %vm7952, %v7946, %v7953
  %vm7955 = vcmp.eq.s32.totalorder %v7950, 2
  %v7956 = vxor.u32 %v7946, 2147483648
  %v7957 = vsel %vm7955, %v7956, %v7947
  %v7958 = vsel %vm7951, %v7954, %v7957
  %v7959 = vsel %vm7948, nan, %v7958
  %v7960 = vand.u32 2147483647, %v678
  %vm7961 = vcmp.le.f32.partialorder %v7960, 0.7853982
  %vm7962 = vcmp.lt.s32.totalorder %v678, 0
  %v7963 = vand.u32 %v678, 2139095040
  %v7964 = vshrl.u32 %v7963, 23
  %v7965 = vsub.s32 %v7964, 127
  %v7966 = vand.u32 2147483647, %v678
  %v7967 = vand.u32 %v7966, 8388607
  %v7968 = vor.u32 %v7967, 8388608
  %v7969 = vsub.s32 0, %v7968
  %v7970 = vadd.s32 %v7965, 1
  %vm7971 = vcmp.gt.s32.totalorder %v7970, 0
  %v7972 = vsel %vm7971, %v7970, 0
  %v7973 = vshrl.u32 %v7972, 5
  %v7974 = vand.u32 %v7972, 31
  %v7975 = vsub.s32 32, %v7974
  %v7976 = vshrl.u32 683565275, %v7975
  %v7977 = vshll.u32 683565275, %v7974
  %v7978 = vshrl.u32 2475754826, %v7975
  %v7979 = vor.u32 %v7977, %v7978
  %v7980 = vshll.u32 2475754826, %v7974
  %v7981 = vshrl.u32 2131351028, %v7975
  %v7982 = vor.u32 %v7980, %v7981
  %v7983 = vshll.u32 2131351028, %v7974
  %v7984 = vshrl.u32 2102212464, %v7975
  %v7985 = vor.u32 %v7983, %v7984
  %v7986 = vshll.u32 2102212464, %v7974
  %v7987 = vshrl.u32 920167782, %v7975
  %v7988 = vor.u32 %v7986, %v7987
  %v7989 = vshll.u32 920167782, %v7974
  %v7990 = vshrl.u32 1326507024, %v7975
  %v7991 = vor.u32 %v7989, %v7990
  %vm7992 = vcmp.lt.s32.totalorder %v7973, 1
  %vm7993 = vcmp.lt.s32.totalorder %v7973, 2
  %vm7994 = vcmp.lt.s32.totalorder %v7973, 3
  %vm7995 = vcmp.lt.s32.totalorder %v7973, 4
  %v7996 = vsel %vm7992, %v7976, %v7979
  %v7997 = vsel %vm7995, %v7985, 2102212464
  %v7998 = vsel %vm7994, %v7982, %v7997
  %v7999 = vsel %vm7993, %v7996, %v7998
  %v8000 = vsel %vm7992, %v7979, %v7982
  %v8001 = vsel %vm7995, %v7988, 920167782
  %v8002 = vsel %vm7994, %v7985, %v8001
  %v8003 = vsel %vm7993, %v8000, %v8002
  %v8004 = vsel %vm7992, %v7982, %v7985
  %v8005 = vsel %vm7995, %v7991, 1326507024
  %v8006 = vsel %vm7994, %v7988, %v8005
  %v8007 = vsel %vm7993, %v8004, %v8006
  %v8008 = vshll.u32 %v7968, 8
  %v8009 = vmul.u32.u64.compose %v8008, %v8007
  %v8010 = vextract.low.u32 %v8009
  %v8011 = vextract.high.u32 %v8009
  %v8012 = vmul.u32.u64.compose %v8008, %v8003
  %v8013 = vextract.low.u32 %v8012
  %v8014 = vextract.high.u32 %v8012
  %v8015 = vmul.u32 %v8008, %v7999
  %v8016 = vadd.s32 %v8011, %v8013
  %vm8017 = vc.u32 %v8011, %v8013
  %v8018 = vadd.s32 %v8014, 1
  %v8019 = vsel %vm8017, %v8018, %v8014
  %v8020 = vadd.s32 %v8015, %v8019
  %v8021 = vadd.s32 %v8020, 536870912
  %v8022 = vshrl.u32 %v8021, 30
  %v8023 = vshll.u32 %v8022, 30
  %v8024 = vsub.s32 %v8020, %v8023
  %vm8025 = vcmp.lt.s32.totalorder %v8024, 0
  %v8026 = vsub.s32 0, %v8024
  %v8027 = vsel %vm8025, %v8026, %v8024
  %v8028 = vclz %v8027
  %v8029 = vsub.s32 %v8028, 2
  %vm8030 = vcmp.gt.s32.totalorder 0, %v8029
  %v8031 = vsel %vm8030, 0, %v8029
  %v8032 = vsub.s32 32, %v8031
  %v8033 = vshll.u32 %v8024, %v8031
  %v8034 = vshrl.u32 %v8016, %v8032
  %v8035 = vor.u32 %v8033, %v8034
  %v8036 = vsub.s32 4294967266, %v8031
  %v8037 = vadd.s32 %v8036, 127
  %v8038 = vshll.u32 %v8037, 23
  %v8039 = vor.u32 4788187, %v8038
  %v8040 = vand.u32 2147483647, %v8039
  %v8042 = vcvt.s32.f32 %v8035
  %v8043 = vmul.f32 %v8042, %v8040
  %v8044 = vxor.u32 %v8043, 2147483648
  %v8045 = vsel %vm7962, %v8044, %v8043
  %v8046 = vsub.s32 4, %v8022
  %v8047 = vsel %vm7962, %v8046, %v8022
  %v8048 = vsel %vm7961, %v678, %v8045
  %v8049 = vsel %vm7961, 0, %v8047
  %v8050 = vcosq.f32.pop %v8048
  %v8051 = vsinq.f32.pop %v8048
  %vm8052 = vweird.f32 %v678
  %v8053 = vadd.s32 %v8049, 3
  %v8054 = vand.u32 %v8053, 3
  %vm8055 = vcmp.lt.s32.totalorder %v8054, 2
  %vm8056 = vcmp.eq.s32.totalorder %v8054, 0
  %v8057 = vxor.u32 %v8051, 2147483648
  %v8058 = vsel %vm8056, %v8050, %v8057
  %vm8059 = vcmp.eq.s32.totalorder %v8054, 2
  %v8060 = vxor.u32 %v8050, 2147483648
  %v8061 = vsel %vm8059, %v8060, %v8051
  %v8062 = vsel %vm8055, %v8058, %v8061
  %v8063 = vsel %vm8052, nan, %v8062
  %v8064 = vand.u32 2147483647, %v679
  %vm8065 = vcmp.le.f32.partialorder %v8064, 0.7853982
  %vm8066 = vcmp.lt.s32.totalorder %v679, 0
  %v8067 = vand.u32 %v679, 2139095040
  %v8068 = vshrl.u32 %v8067, 23
  %v8069 = vsub.s32 %v8068, 127
  %v8070 = vand.u32 2147483647, %v679
  %v8071 = vand.u32 %v8070, 8388607
  %v8072 = vor.u32 %v8071, 8388608
  %v8073 = vsub.s32 0, %v8072
  %v8074 = vadd.s32 %v8069, 1
  %vm8075 = vcmp.gt.s32.totalorder %v8074, 0
  %v8076 = vsel %vm8075, %v8074, 0
  %v8077 = vshrl.u32 %v8076, 5
  %v8078 = vand.u32 %v8076, 31
  %v8079 = vsub.s32 32, %v8078
  %v8080 = vshrl.u32 683565275, %v8079
  %v8081 = vshll.u32 683565275, %v8078
  %v8082 = vshrl.u32 2475754826, %v8079
  %v8083 = vor.u32 %v8081, %v8082
  %v8084 = vshll.u32 2475754826, %v8078
  %v8085 = vshrl.u32 2131351028, %v8079
  %v8086 = vor.u32 %v8084, %v8085
  %v8087 = vshll.u32 2131351028, %v8078
  %v8088 = vshrl.u32 2102212464, %v8079
  %v8089 = vor.u32 %v8087, %v8088
  %v8090 = vshll.u32 2102212464, %v8078
  %v8091 = vshrl.u32 920167782, %v8079
  %v8092 = vor.u32 %v8090, %v8091
  %v8093 = vshll.u32 920167782, %v8078
  %v8094 = vshrl.u32 1326507024, %v8079
  %v8095 = vor.u32 %v8093, %v8094
  %vm8096 = vcmp.lt.s32.totalorder %v8077, 1
  %vm8097 = vcmp.lt.s32.totalorder %v8077, 2
  %vm8098 = vcmp.lt.s32.totalorder %v8077, 3
  %vm8099 = vcmp.lt.s32.totalorder %v8077, 4
  %v8100 = vsel %vm8096, %v8080, %v8083
  %v8101 = vsel %vm8099, %v8089, 2102212464
  %v8102 = vsel %vm8098, %v8086, %v8101
  %v8103 = vsel %vm8097, %v8100, %v8102
  %v8104 = vsel %vm8096, %v8083, %v8086
  %v8105 = vsel %vm8099, %v8092, 920167782
  %v8106 = vsel %vm8098, %v8089, %v8105
  %v8107 = vsel %vm8097, %v8104, %v8106
  %v8108 = vsel %vm8096, %v8086, %v8089
  %v8109 = vsel %vm8099, %v8095, 1326507024
  %v8110 = vsel %vm8098, %v8092, %v8109
  %v8111 = vsel %vm8097, %v8108, %v8110
  %v8112 = vshll.u32 %v8072, 8
  %v8113 = vmul.u32.u64.compose %v8112, %v8111
  %v8114 = vextract.low.u32 %v8113
  %v8115 = vextract.high.u32 %v8113
  %v8116 = vmul.u32.u64.compose %v8112, %v8107
  %v8117 = vextract.low.u32 %v8116
  %v8118 = vextract.high.u32 %v8116
  %v8119 = vmul.u32 %v8112, %v8103
  %v8120 = vadd.s32 %v8115, %v8117
  %vm8121 = vc.u32 %v8115, %v8117
  %v8122 = vadd.s32 %v8118, 1
  %v8123 = vsel %vm8121, %v8122, %v8118
  %v8124 = vadd.s32 %v8119, %v8123
  %v8125 = vadd.s32 %v8124, 536870912
  %v8126 = vshrl.u32 %v8125, 30
  %v8127 = vshll.u32 %v8126, 30
  %v8128 = vsub.s32 %v8124, %v8127
  %vm8129 = vcmp.lt.s32.totalorder %v8128, 0
  %v8130 = vsub.s32 0, %v8128
  %v8131 = vsel %vm8129, %v8130, %v8128
  %v8132 = vclz %v8131
  %v8133 = vsub.s32 %v8132, 2
  %vm8134 = vcmp.gt.s32.totalorder 0, %v8133
  %v8135 = vsel %vm8134, 0, %v8133
  %v8136 = vsub.s32 32, %v8135
  %v8137 = vshll.u32 %v8128, %v8135
  %v8138 = vshrl.u32 %v8120, %v8136
  %v8139 = vor.u32 %v8137, %v8138
  %v8140 = vsub.s32 4294967266, %v8135
  %v8141 = vadd.s32 %v8140, 127
  %v8142 = vshll.u32 %v8141, 23
  %v8143 = vor.u32 4788187, %v8142
  %v8144 = vand.u32 2147483647, %v8143
  %v8146 = vcvt.s32.f32 %v8139
  %v8147 = vmul.f32 %v8146, %v8144
  %v8148 = vxor.u32 %v8147, 2147483648
  %v8149 = vsel %vm8066, %v8148, %v8147
  %v8150 = vsub.s32 4, %v8126
  %v8151 = vsel %vm8066, %v8150, %v8126
  %v8152 = vsel %vm8065, %v679, %v8149
  %v8153 = vsel %vm8065, 0, %v8151
  %v8154 = vcosq.f32.pop %v8152
  %v8155 = vsinq.f32.pop %v8152
  %vm8156 = vweird.f32 %v679
  %v8157 = vadd.s32 %v8153, 3
  %v8158 = vand.u32 %v8157, 3
  %vm8159 = vcmp.lt.s32.totalorder %v8158, 2
  %vm8160 = vcmp.eq.s32.totalorder %v8158, 0
  %v8161 = vxor.u32 %v8155, 2147483648
  %v8162 = vsel %vm8160, %v8154, %v8161
  %vm8163 = vcmp.eq.s32.totalorder %v8158, 2
  %v8164 = vxor.u32 %v8154, 2147483648
  %v8165 = vsel %vm8163, %v8164, %v8155
  %v8166 = vsel %vm8159, %v8162, %v8165
  %v8167 = vsel %vm8156, nan, %v8166
  %v8240 = vrot.slane %v783, 4
  %v8241 = vrot.slane %v887, 4
  %v8242 = vrot.slane %v991, 4
  %v8243 = vrot.slane %v1095, 4
  %v8244 = vrot.slane %v1199, 4
  %v8245 = vsel %vm403, %v8240, %v8244
  %v8246 = vrot.slane %v1303, 4
  %v8247 = vsel %vm403, %v8241, %v8246
  %v8248 = vrot.slane %v1407, 4
  %v8249 = vsel %vm403, %v8242, %v8248
  %v8250 = vrot.slane %v1511, 4
  %v8251 = vsel %vm403, %v8243, %v8250
  %v8252 = vrot.slane %v1615, 4
  %v8253 = vsel %vm403, %v8244, %v8252
  %v8254 = vrot.slane %v1719, 4
  %v8255 = vsel %vm403, %v8246, %v8254
  %v8256 = vrot.slane %v1823, 4
  %v8257 = vsel %vm403, %v8248, %v8256
  %v8258 = vrot.slane %v1927, 4
  %v8259 = vsel %vm403, %v8250, %v8258
  %v8260 = vrot.slane %v2031, 4
  %v8261 = vsel %vm403, %v8252, %v8260
  %v8262 = vrot.slane %v2135, 4
  %v8263 = vsel %vm403, %v8254, %v8262
  %v8264 = vrot.slane %v2239, 4
  %v8265 = vsel %vm403, %v8256, %v8264
  %v8266 = vrot.slane %v2343, 4
  %v8267 = vsel %vm403, %v8258, %v8266
  %v8268 = vrot.slane %v2447, 4
  %v8269 = vsel %vm403, %v8260, %v8268
  %v8270 = vrot.slane %v2551, 4
  %v8271 = vsel %vm403, %v8262, %v8270
  %v8272 = vrot.slane %v2655, 4
  %v8273 = vsel %vm403, %v8264, %v8272
  %v8274 = vrot.slane %v2759, 4
  %v8275 = vsel %vm403, %v8266, %v8274
  %v8276 = vrot.slane %v2863, 4
  %v8277 = vsel %vm403, %v8268, %v8276
  %v8278 = vrot.slane %v2967, 4
  %v8279 = vsel %vm403, %v8270, %v8278
  %v8280 = vrot.slane %v3071, 4
  %v8281 = vsel %vm403, %v8272, %v8280
  %v8282 = vrot.slane %v3175, 4
  %v8283 = vsel %vm403, %v8274, %v8282
  %v8284 = vrot.slane %v3279, 4
  %v8285 = vsel %vm403, %v8276, %v8284
  %v8286 = vrot.slane %v3383, 4
  %v8287 = vsel %vm403, %v8278, %v8286
  %v8288 = vrot.slane %v3487, 4
  %v8289 = vsel %vm403, %v8280, %v8288
  %v8290 = vrot.slane %v3591, 4
  %v8291 = vsel %vm403, %v8282, %v8290
  %v8292 = vrot.slane %v3695, 4
  %v8293 = vsel %vm403, %v8284, %v8292
  %v8294 = vrot.slane %v3799, 4
  %v8295 = vsel %vm403, %v8286, %v8294
  %v8296 = vrot.slane %v3903, 4
  %v8297 = vsel %vm403, %v8288, %v8296
  %v8298 = vrot.slane %v4007, 4
  %v8299 = vsel %vm403, %v8290, %v8298
  %v8300 = vrot.slane %v4111, 4
  %v8301 = vsel %vm403, %v8292, %v8300
  %v8302 = vrot.slane %v4215, 4
  %v8303 = vsel %vm403, %v8294, %v8302
  %v8304 = vrot.slane %v4319, 4
  %v8305 = vsel %vm403, %v8296, %v8304
  %v8306 = vrot.slane %v4423, 4
  %v8307 = vsel %vm403, %v8298, %v8306
  %v8308 = vrot.slane %v4527, 4
  %v8309 = vsel %vm403, %v8300, %v8308
  %v8310 = vrot.slane %v4631, 4
  %v8311 = vsel %vm403, %v8302, %v8310
  %v8312 = vrot.slane %v4735, 4
  %v8313 = vsel %vm403, %v8304, %v8312
  %v8314 = vrot.slane %v4839, 4
  %v8315 = vsel %vm403, %v8306, %v8314
  %v8316 = vrot.slane %v4943, 4
  %v8317 = vsel %vm403, %v8308, %v8316
  %v8318 = vrot.slane %v5047, 4
  %v8319 = vsel %vm403, %v8310, %v8318
  %v8320 = vrot.slane %v5151, 4
  %v8321 = vsel %vm403, %v8312, %v8320
  %v8322 = vrot.slane %v5255, 4
  %v8323 = vsel %vm403, %v8314, %v8322
  %v8324 = vrot.slane %v5359, 4
  %v8325 = vsel %vm403, %v8316, %v8324
  %v8326 = vrot.slane %v5463, 4
  %v8327 = vsel %vm403, %v8318, %v8326
  %v8328 = vrot.slane %v5567, 4
  %v8329 = vsel %vm403, %v8320, %v8328
  %v8330 = vrot.slane %v5671, 4
  %v8331 = vsel %vm403, %v8322, %v8330
  %v8332 = vrot.slane %v5775, 4
  %v8333 = vsel %vm403, %v8324, %v8332
  %v8334 = vrot.slane %v5879, 4
  %v8335 = vsel %vm403, %v8326, %v8334
  %v8336 = vrot.slane %v5983, 4
  %v8337 = vsel %vm403, %v8328, %v8336
  %v8338 = vrot.slane %v6087, 4
  %v8339 = vsel %vm403, %v8330, %v8338
  %v8340 = vrot.slane %v6191, 4
  %v8341 = vsel %vm403, %v8332, %v8340
  %v8342 = vrot.slane %v6295, 4
  %v8343 = vsel %vm403, %v8334, %v8342
  %v8344 = vrot.slane %v6399, 4
  %v8345 = vsel %vm403, %v8336, %v8344
  %v8346 = vrot.slane %v6503, 4
  %v8347 = vsel %vm403, %v8338, %v8346
  %v8348 = vrot.slane %v6607, 4
  %v8349 = vsel %vm403, %v8340, %v8348
  %v8350 = vrot.slane %v6711, 4
  %v8351 = vsel %vm403, %v8342, %v8350
  %v8352 = vrot.slane %v6815, 4
  %v8353 = vsel %vm403, %v8344, %v8352
  %v8354 = vrot.slane %v6919, 4
  %v8355 = vsel %vm403, %v8346, %v8354
  %v8356 = vrot.slane %v7023, 4
  %v8357 = vsel %vm403, %v8348, %v8356
  %v8358 = vrot.slane %v7127, 4
  %v8359 = vsel %vm403, %v8350, %v8358
  %v8360 = vrot.slane %v7231, 4
  %v8361 = vsel %vm403, %v8352, %v8360
  %v8362 = vrot.slane %v7335, 4
  %v8363 = vsel %vm403, %v8354, %v8362
  %v8364 = vrot.slane %v7439, 4
  %v8365 = vsel %vm403, %v8356, %v8364
  %v8366 = vrot.slane %v7543, 4
  %v8367 = vsel %vm403, %v8358, %v8366
  %v8368 = vrot.slane %v7647, 4
  %v8369 = vsel %vm403, %v8360, %v8368
  %v8370 = vrot.slane %v7751, 4
  %v8371 = vsel %vm403, %v8362, %v8370
  %v8372 = vrot.slane %v7855, 4
  %v8373 = vsel %vm403, %v8364, %v8372
  %v8374 = vrot.slane %v7959, 4
  %v8375 = vsel %vm403, %v8366, %v8374
  %v8376 = vrot.slane %v8063, 4
  %v8377 = vsel %vm403, %v8368, %v8376
  %v8378 = vrot.slane %v8167, 4
  %v8379 = vsel %vm403, %v8370, %v8378
  %v8452 = vsel %vm403, %v351, %v8240
  %v8453 = vsel %vm403, %v352, %v8241
  %v8454 = vsel %vm403, %v353, %v8242
  %v8455 = vsel %vm403, %v354, %v8243
  %v8456 = vld [vmem:[%s2] sm:$0xff]
  %v8457 = vld [vmem:[%s2 + $0x8] sm:$0xff]
  %v8458 = vld [vmem:[%s4] sm:$0xff]
  %8460 = vset.pattern.permute.xlu0 0
  %8461 = vperm.xlu0 %8460, %v8458
  %v8462 = vpop.permute.xlu0 %8461
  %vm8464 = vcmask 424960
  %v8466 = vsel %vm8464, %v8457, 0
  %v8468 = vsel %vm403, %v8372, 0
  %v8470 = vsel %vm403, %v8374, 0
  %v8472 = vsel %vm403, %v8376, 0
  %v8474 = vsel %vm403, %v8378, 0
  %8476 = vmatprep.subr.mxu0 %v405
  %8477 = vmatpush1.msra.mxu0 %v404
  %8478 = vmatprep.subr.mxu0 %v409
  %8479 = vmatpush1.msra.mxu0 %v408
  %8480 = vmatprep.subr.mxu0 %v413
  %8481 = vmatpush1.msra.mxu0 %v412
  %8482 = vmatprep.subr.mxu0 %v417
  %8483 = vmatpush1.msra.mxu0 %v416
  %8484 = vmatprep.subr.mxu0 %v8453
  %8485 = vmatpush1.msra.mxu0 %v8452
  %8486 = vmatprep.subr.mxu0 %v8247
  %8487 = vmatpush1.msra.mxu0 %v8245
  %8488 = vmatprep.subr.mxu0 %v8255
  %8489 = vmatpush1.msra.mxu0 %v8253
  %8490 = vmatprep.subr.mxu0 %v8263
  %8491 = vmatpush1.msra.mxu0 %v8261
  %8492 = vmatprep.subr.mxu0 %v8271
  %8493 = vmatpush1.msra.mxu0 %v8269
  %8494 = vmatprep.subr.mxu0 %v8279
  %8495 = vmatpush1.msra.mxu0 %v8277
  %8496 = vmatprep.subr.mxu0 %v8287
  %8497 = vmatpush1.msra.mxu0 %v8285
  %8498 = vmatprep.subr.mxu0 %v8295
  %8499 = vmatpush1.msra.mxu0 %v8293
  %8500 = vmatprep.subr.mxu0 %v8303
  %8501 = vmatpush1.msra.mxu0 %v8301
  %8502 = vmatprep.subr.mxu0 %v8311
  %8503 = vmatpush1.msra.mxu0 %v8309
  %8504 = vmatprep.subr.mxu0 %v8319
  %8505 = vmatpush1.msra.mxu0 %v8317
  %8506 = vmatprep.subr.mxu0 %v8327
  %8507 = vmatpush1.msra.mxu0 %v8325
  %8508 = vmatprep.subr.mxu0 %v8335
  %8509 = vmatpush1.msra.mxu0 %v8333
  %8510 = vmatprep.subr.mxu0 %v8343
  %8511 = vmatpush1.msra.mxu0 %v8341
  %8512 = vmatprep.subr.mxu0 %v8351
  %8513 = vmatpush1.msra.mxu0 %v8349
  %8514 = vmatprep.subr.mxu0 %v8359
  %8515 = vmatpush1.msra.mxu0 %v8357
  %8516 = vmatprep.subr.mxu0 %v8367
  %8517 = vmatpush1.msra.mxu0 %v8365
  %8518 = vmatprep.subr.mxu0 %v8375
  %8519 = vmatpush1.msra.mxu0 %v8373
  %8520 = vmatprep.subr.mxu0 %v8470
  %8521 = vmatpush1.msra.mxu0 %v8468
  %8522 = vmatprep.subr.mxu0 0.0
  %8523 = vmatpush1.msra.mxu0 0.0
  %8524 = vmatprep.subr.mxu0 0.0
  %8525 = vmatpush1.msra.mxu0 0.0
  %8526 = vmatprep.subr.mxu0 0.0
  %8527 = vmatpush1.msra.mxu0 0.0
  %8528 = vmatprep.subr.mxu0 0.0
  %8529 = vmatpush1.msra.mxu0 0.0
  %8530 = vmatprep.subr.mxu0 0.0
  %8531 = vmatpush1.msra.mxu0 0.0
  %8532 = vmatprep.subr.mxu0 0.0
  %8533 = vmatpush1.msra.mxu0 0.0
  %8534 = vmatprep.subr.mxu0 0.0
  %8535 = vmatpush1.msra.mxu0 0.0
  %8536 = vmatprep.subr.mxu0 0.0
  %8537 = vmatpush1.msra.mxu0 0.0
  %8538 = vmatprep.subr.mxu0 0.0
  %8539 = vmatpush1.msra.mxu0 0.0
  %8540 = vmatprep.mubr.f32.mxu0 %v8466
  %8541 = vmatmul.mubr.f32.gmra.mrb[0].mxu0 %v8456
  %v8542 = vpop.f32.mrb[0].mxu0
  %v8543 = vadd.f32 %v8462, %v8542
  %v8544 = vpop.f32.mrb[0].mxu0
  %v8545 = vadd.f32 %v8462, %v8544
  %8546 = vdwg.mxu0
  %8547 = vmatprep.subr.mxu0 %v407
  %8548 = vmatpush1.msra.mxu0 %v406
  %8549 = vmatprep.subr.mxu0 %v411
  %8550 = vmatpush1.msra.mxu0 %v410
  %8551 = vmatprep.subr.mxu0 %v415
  %8552 = vmatpush1.msra.mxu0 %v414
  %8553 = vmatprep.subr.mxu0 %v419
  %8554 = vmatpush1.msra.mxu0 %v418
  %8555 = vmatprep.subr.mxu0 %v8455
  %8556 = vmatpush1.msra.mxu0 %v8454
  %8557 = vmatprep.subr.mxu0 %v8251
  %8558 = vmatpush1.msra.mxu0 %v8249
  %8559 = vmatprep.subr.mxu0 %v8259
  %8560 = vmatpush1.msra.mxu0 %v8257
  %8561 = vmatprep.subr.mxu0 %v8267
  %8562 = vmatpush1.msra.mxu0 %v8265
  %8563 = vmatprep.subr.mxu0 %v8275
  %8564 = vmatpush1.msra.mxu0 %v8273
  %8565 = vmatprep.subr.mxu0 %v8283
  %8566 = vmatpush1.msra.mxu0 %v8281
  %8567 = vmatprep.subr.mxu0 %v8291
  %8568 = vmatpush1.msra.mxu0 %v8289
  %8569 = vmatprep.subr.mxu0 %v8299
  %8570 = vmatpush1.msra.mxu0 %v8297
  %8571 = vmatprep.subr.mxu0 %v8307
  %8572 = vmatpush1.msra.mxu0 %v8305
  %8573 = vmatprep.subr.mxu0 %v8315
  %8574 = vmatpush1.msra.mxu0 %v8313
  %8575 = vmatprep.subr.mxu0 %v8323
  %8576 = vmatpush1.msra.mxu0 %v8321
  %8577 = vmatprep.subr.mxu0 %v8331
  %8578 = vmatpush1.msra.mxu0 %v8329
  %8579 = vmatprep.subr.mxu0 %v8339
  %8580 = vmatpush1.msra.mxu0 %v8337
  %8581 = vmatprep.subr.mxu0 %v8347
  %8582 = vmatpush1.msra.mxu0 %v8345
  %8583 = vmatprep.subr.mxu0 %v8355
  %8584 = vmatpush1.msra.mxu0 %v8353
  %8585 = vmatprep.subr.mxu0 %v8363
  %8586 = vmatpush1.msra.mxu0 %v8361
  %8587 = vmatprep.subr.mxu0 %v8371
  %8588 = vmatpush1.msra.mxu0 %v8369
  %8589 = vmatprep.subr.mxu0 %v8379
  %8590 = vmatpush1.msra.mxu0 %v8377
  %8591 = vmatprep.subr.mxu0 %v8474
  %8592 = vmatpush1.msra.mxu0 %v8472
  %8593 = vmatprep.subr.mxu0 0.0
  %8594 = vmatpush1.msra.mxu0 0.0
  %8595 = vmatprep.subr.mxu0 0.0
  %8596 = vmatpush1.msra.mxu0 0.0
  %8597 = vmatprep.subr.mxu0 0.0
  %8598 = vmatpush1.msra.mxu0 0.0
  %8599 = vmatprep.subr.mxu0 0.0
  %8600 = vmatpush1.msra.mxu0 0.0
  %8601 = vmatprep.subr.mxu0 0.0
  %8602 = vmatpush1.msra.mxu0 0.0
  %8603 = vmatprep.subr.mxu0 0.0
  %8604 = vmatpush1.msra.mxu0 0.0
  %8605 = vmatprep.subr.mxu0 0.0
  %8606 = vmatpush1.msra.mxu0 0.0
  %8607 = vmatprep.subr.mxu0 0.0
  %8608 = vmatpush1.msra.mxu0 0.0
  %8609 = vmatprep.subr.mxu0 0.0
  %8610 = vmatpush1.msra.mxu0 0.0
  %8611 = vmatprep.mubr.f32.mxu0 %v8466
  %8612 = vmatmul.mubr.f32.gmra.mrb[0].mxu0 %v8456
  %v8613 = vpop.f32.mrb[0].mxu0
  %v8614 = vadd.f32 %v8462, %v8613
  %v8615 = vpop.f32.mrb[0].mxu0
  %v8616 = vadd.f32 %v8462, %v8615
  %8617 = vdwg.mxu0
  %v8618 = vtanh.pop %v8543
  %v8619 = vtanh.pop %v8545
  %v8620 = vtanh.pop %v8614
  %v8621 = vtanh.pop %v8616
  %v8622 = vmul.f32 %v8618, %v8618
  %v8623 = vmul.f32 %v8619, %v8619
  %v8624 = vmul.f32 %v8620, %v8620
  %v8625 = vmul.f32 %v8621, %v8621
  %v8626 = vmul.f32 %v8622, %v8618
  %v8627 = vmul.f32 %v8623, %v8619
  %v8628 = vmul.f32 %v8624, %v8620
  %v8629 = vmul.f32 %v8625, %v8621
  %8630 = vrot.lane.b32.xlu0 %v8626, 17
  %v8631 = vpop.permute.xlu0 %8630
  %8632 = vrot.lane.b32.xlu0 %v8627, 17
  %v8633 = vpop.permute.xlu0 %8632
  %8634 = vrot.lane.b32.xlu0 %v8628, 17
  %v8635 = vpop.permute.xlu0 %8634
  %8636 = vrot.lane.b32.xlu0 %v8629, 17
  %v8637 = vpop.permute.xlu0 %8636
  %v8638 = vsel %vm44, %v8635, %v8637
  %v8639 = vsel %vm44, %v8633, %v8635
  %v8640 = vsel %vm44, %v8631, %v8633
  %v8641 = vsel %vm44, %v8637, %v8631
  %v8642 = vmul.f32 %v8641, %v54
  %v8643 = vmul.f32 %v8640, %v58
  %v8644 = vmul.f32 %v8639, %v62
  %v8645 = vmul.f32 %v8638, %v66
  %8646 = vrot.lane.b32.xlu0 %v8626, 16
  %v8647 = vpop.permute.xlu0 %8646
  %8648 = vrot.lane.b32.xlu0 %v8627, 16
  %v8649 = vpop.permute.xlu0 %8648
  %8650 = vrot.lane.b32.xlu0 %v8628, 16
  %v8651 = vpop.permute.xlu0 %8650
  %8652 = vrot.lane.b32.xlu0 %v8629, 16
  %v8653 = vpop.permute.xlu0 %8652
  %v8654 = vsel %vm83, %v8651, %v8653
  %v8655 = vsel %vm83, %v8649, %v8651
  %v8656 = vsel %vm83, %v8647, %v8649
  %v8657 = vsel %vm83, %v8653, %v8647
  %v8658 = vmul.f32 %v8657, %v94
  %v8659 = vmul.f32 %v8656, %v98
  %v8660 = vmul.f32 %v8655, %v102
  %v8661 = vmul.f32 %v8654, %v106
  %8662 = vrot.lane.b32.xlu0 %v8626, 15
  %v8663 = vpop.permute.xlu0 %8662
  %8664 = vrot.lane.b32.xlu0 %v8627, 15
  %v8665 = vpop.permute.xlu0 %8664
  %8666 = vrot.lane.b32.xlu0 %v8628, 15
  %v8667 = vpop.permute.xlu0 %8666
  %8668 = vrot.lane.b32.xlu0 %v8629, 15
  %v8669 = vpop.permute.xlu0 %8668
  %v8670 = vsel %vm123, %v8667, %v8669
  %v8671 = vsel %vm123, %v8665, %v8667
  %v8672 = vsel %vm123, %v8663, %v8665
  %v8673 = vsel %vm123, %v8669, %v8663
  %v8674 = vmul.f32 %v8673, %v134
  %v8675 = vmul.f32 %v8672, %v138
  %v8676 = vmul.f32 %v8671, %v142
  %v8677 = vmul.f32 %v8670, %v146
  %8678 = vrot.lane.b32.xlu0 %v8626, 1
  %v8679 = vpop.permute.xlu0 %8678
  %8680 = vrot.lane.b32.xlu0 %v8627, 1
  %v8681 = vpop.permute.xlu0 %8680
  %8682 = vrot.lane.b32.xlu0 %v8628, 1
  %v8683 = vpop.permute.xlu0 %8682
  %8684 = vrot.lane.b32.xlu0 %v8629, 1
  %v8685 = vpop.permute.xlu0 %8684
  %v8686 = vsel %vm163, %v8683, %v8685
  %v8687 = vsel %vm163, %v8681, %v8683
  %v8688 = vsel %vm163, %v8679, %v8681
  %v8689 = vsel %vm163, %v8685, %v8679
  %v8690 = vmul.f32 %v8689, %v174
  %v8691 = vmul.f32 %v8688, %v178
  %v8692 = vmul.f32 %v8687, %v182
  %v8693 = vmul.f32 %v8686, %v186
  %8694 = vrot.lane.b32.xlu0 %v8626, 127
  %v8695 = vpop.permute.xlu0 %8694
  %8696 = vrot.lane.b32.xlu0 %v8627, 127
  %v8697 = vpop.permute.xlu0 %8696
  %8698 = vrot.lane.b32.xlu0 %v8628, 127
  %v8699 = vpop.permute.xlu0 %8698
  %8700 = vrot.lane.b32.xlu0 %v8629, 127
  %v8701 = vpop.permute.xlu0 %8700
  %v8702 = vsel %vm203, %v8699, %v8701
  %v8703 = vsel %vm203, %v8697, %v8699
  %v8704 = vsel %vm203, %v8695, %v8697
  %v8705 = vsel %vm203, %v8701, %v8695
  %v8706 = vmul.f32 %v8704, %v214
  %v8707 = vmul.f32 %v8703, %v218
  %v8708 = vmul.f32 %v8702, %v222
  %v8709 = vmul.f32 %v8705, %v226
  %8710 = vrot.lane.b32.xlu0 %v8626, 113
  %v8711 = vpop.permute.xlu0 %8710
  %8712 = vrot.lane.b32.xlu0 %v8627, 113
  %v8713 = vpop.permute.xlu0 %8712
  %8714 = vrot.lane.b32.xlu0 %v8628, 113
  %v8715 = vpop.permute.xlu0 %8714
  %8716 = vrot.lane.b32.xlu0 %v8629, 113
  %v8717 = vpop.permute.xlu0 %8716
  %v8718 = vsel %vm243, %v8715, %v8717
  %v8719 = vsel %vm243, %v8713, %v8715
  %v8720 = vsel %vm243, %v8711, %v8713
  %v8721 = vsel %vm243, %v8717, %v8711
  %v8722 = vmul.f32 %v8720, %v254
  %v8723 = vmul.f32 %v8719, %v258
  %v8724 = vmul.f32 %v8718, %v262
  %v8725 = vmul.f32 %v8721, %v266
  %8726 = vrot.lane.b32.xlu0 %v8626, 112
  %v8727 = vpop.permute.xlu0 %8726
  %8728 = vrot.lane.b32.xlu0 %v8627, 112
  %v8729 = vpop.permute.xlu0 %8728
  %8730 = vrot.lane.b32.xlu0 %v8628, 112
  %v8731 = vpop.permute.xlu0 %8730
  %8732 = vrot.lane.b32.xlu0 %v8629, 112
  %v8733 = vpop.permute.xlu0 %8732
  %v8734 = vsel %vm283, %v8731, %v8733
  %v8735 = vsel %vm283, %v8729, %v8731
  %v8736 = vsel %vm283, %v8727, %v8729
  %v8737 = vsel %vm283, %v8733, %v8727
  %v8738 = vmul.f32 %v8736, %v294
  %v8739 = vmul.f32 %v8735, %v298
  %v8740 = vmul.f32 %v8734, %v302
  %v8741 = vmul.f32 %v8737, %v306
  %8742 = vrot.lane.b32.xlu0 %v8626, 111
  %v8743 = vpop.permute.xlu0 %8742
  %8744 = vrot.lane.b32.xlu0 %v8627, 111
  %v8745 = vpop.permute.xlu0 %8744
  %8746 = vrot.lane.b32.xlu0 %v8628, 111
  %v8747 = vpop.permute.xlu0 %8746
  %8748 = vrot.lane.b32.xlu0 %v8629, 111
  %v8749 = vpop.permute.xlu0 %8748
  %v8750 = vsel %vm323, %v8747, %v8749
  %v8751 = vsel %vm323, %v8745, %v8747
  %v8752 = vsel %vm323, %v8743, %v8745
  %v8753 = vsel %vm323, %v8749, %v8743
  %v8754 = vmul.f32 %v8752, %v334
  %v8755 = vmul.f32 %v8751, %v338
  %v8756 = vmul.f32 %v8750, %v342
  %v8757 = vmul.f32 %v8753, %v346
  %v8758 = vld [vmem:[%s5] sm:$0xf]
  %v8759 = vld [vmem:[%s6] sm:$0xf]
  %8761 = vset.pattern.permute.xlu0 0
  %8762 = vperm.xlu0 %8761, %v8759
  %v8763 = vpop.permute.xlu0 %8762
  %vm8765 = vcmask 588800
  %v8767 = vsel %vm8765, %v8758, 0
  %8769 = vmatprep.subr.mxu0 %v8643
  %8770 = vmatpush1.msra.mxu0 %v8642
  %8771 = vmatprep.subr.mxu0 %v8659
  %8772 = vmatpush1.msra.mxu0 %v8658
  %8773 = vmatprep.subr.mxu0 %v8675
  %8774 = vmatpush1.msra.mxu0 %v8674
  %8775 = vmatprep.subr.mxu0 %v8691
  %8776 = vmatpush1.msra.mxu0 %v8690
  %8777 = vmatprep.subr.mxu0 %v8627
  %8778 = vmatpush1.msra.mxu0 %v8626
  %8779 = vmatprep.subr.mxu0 %v8707
  %8780 = vmatpush1.msra.mxu0 %v8706
  %8781 = vmatprep.subr.mxu0 %v8723
  %8782 = vmatpush1.msra.mxu0 %v8722
  %8783 = vmatprep.subr.mxu0 %v8739
  %8784 = vmatpush1.msra.mxu0 %v8738
  %8785 = vmatprep.subr.mxu0 %v8755
  %8786 = vmatpush1.msra.mxu0 %v8754
  %8787 = vmatprep.subr.mxu0 0.0
  %8788 = vmatpush1.msra.mxu0 0.0
  %8789 = vmatprep.subr.mxu0 0.0
  %8790 = vmatpush1.msra.mxu0 0.0
  %8791 = vmatprep.subr.mxu0 0.0
  %8792 = vmatpush1.msra.mxu0 0.0
  %8793 = vmatprep.subr.mxu0 0.0
  %8794 = vmatpush1.msra.mxu0 0.0
  %8795 = vmatprep.subr.mxu0 0.0
  %8796 = vmatpush1.msra.mxu0 0.0
  %8797 = vmatprep.subr.mxu0 0.0
  %8798 = vmatpush1.msra.mxu0 0.0
  %8799 = vmatprep.subr.mxu0 0.0
  %8800 = vmatpush1.msra.mxu0 0.0
  %8801 = vmatprep.subr.mxu0 0.0
  %8802 = vmatpush1.msra.mxu0 0.0
  %8803 = vmatprep.subr.mxu0 0.0
  %8804 = vmatpush1.msra.mxu0 0.0
  %8805 = vmatprep.subr.mxu0 0.0
  %8806 = vmatpush1.msra.mxu0 0.0
  %8807 = vmatprep.subr.mxu0 0.0
  %8808 = vmatpush1.msra.mxu0 0.0
  %8809 = vmatprep.subr.mxu0 0.0
  %8810 = vmatpush1.msra.mxu0 0.0
  %8811 = vmatprep.subr.mxu0 0.0
  %8812 = vmatpush1.msra.mxu0 0.0
  %8813 = vmatprep.subr.mxu0 0.0
  %8814 = vmatpush1.msra.mxu0 0.0
  %8815 = vmatprep.subr.mxu0 0.0
  %8816 = vmatpush1.msra.mxu0 0.0
  %8817 = vmatprep.subr.mxu0 0.0
  %8818 = vmatpush1.msra.mxu0 0.0
  %8819 = vmatprep.subr.mxu0 0.0
  %8820 = vmatpush1.msra.mxu0 0.0
  %8821 = vmatprep.subr.mxu0 0.0
  %8822 = vmatpush1.msra.mxu0 0.0
  %8823 = vmatprep.subr.mxu0 0.0
  %8824 = vmatpush1.msra.mxu0 0.0
  %8825 = vmatprep.subr.mxu0 0.0
  %8826 = vmatpush1.msra.mxu0 0.0
  %8827 = vmatprep.subr.mxu0 0.0
  %8828 = vmatpush1.msra.mxu0 0.0
  %8829 = vmatprep.subr.mxu0 0.0
  %8830 = vmatpush1.msra.mxu0 0.0
  %8831 = vmatprep.subr.mxu0 0.0
  %8832 = vmatpush1.msra.mxu0 0.0
  %8833 = vmatprep.mubr.f32.mxu0 0.0
  %8834 = vmatmul.mubr.f32.gmra.mrb[0].mxu0 %v8767
  %v8835 = vpop.f32.mrb[0].mxu0
  %v8836 = vadd.f32 %v8763, %v8835
  %v8837 = vpop.f32.mrb[0].mxu0
  %v8838 = vadd.f32 %v8763, %v8837
  %8839 = vdwg.mxu0
  %8840 = vmatprep.subr.mxu0 %v8645
  %8841 = vmatpush1.msra.mxu0 %v8644
  %8842 = vmatprep.subr.mxu0 %v8661
  %8843 = vmatpush1.msra.mxu0 %v8660
  %8844 = vmatprep.subr.mxu0 %v8677
  %8845 = vmatpush1.msra.mxu0 %v8676
  %8846 = vmatprep.subr.mxu0 %v8693
  %8847 = vmatpush1.msra.mxu0 %v8692
  %8848 = vmatprep.subr.mxu0 %v8629
  %8849 = vmatpush1.msra.mxu0 %v8628
  %8850 = vmatprep.subr.mxu0 %v8709
  %8851 = vmatpush1.msra.mxu0 %v8708
  %8852 = vmatprep.subr.mxu0 %v8725
  %8853 = vmatpush1.msra.mxu0 %v8724
  %8854 = vmatprep.subr.mxu0 %v8741
  %8855 = vmatpush1.msra.mxu0 %v8740
  %8856 = vmatprep.subr.mxu0 %v8757
  %8857 = vmatpush1.msra.mxu0 %v8756
  %8858 = vmatprep.subr.mxu0 0.0
  %8859 = vmatpush1.msra.mxu0 0.0
  %8860 = vmatprep.subr.mxu0 0.0
  %8861 = vmatpush1.msra.mxu0 0.0
  %8862 = vmatprep.subr.mxu0 0.0
  %8863 = vmatpush1.msra.mxu0 0.0
  %8864 = vmatprep.subr.mxu0 0.0
  %8865 = vmatpush1.msra.mxu0 0.0
  %8866 = vmatprep.subr.mxu0 0.0
  %8867 = vmatpush1.msra.mxu0 0.0
  %8868 = vmatprep.subr.mxu0 0.0
  %8869 = vmatpush1.msra.mxu0 0.0
  %8870 = vmatprep.subr.mxu0 0.0
  %8871 = vmatpush1.msra.mxu0 0.0
  %8872 = vmatprep.subr.mxu0 0.0
  %8873 = vmatpush1.msra.mxu0 0.0
  %8874 = vmatprep.subr.mxu0 0.0
  %8875 = vmatpush1.msra.mxu0 0.0
  %8876 = vmatprep.subr.mxu0 0.0
  %8877 = vmatpush1.msra.mxu0 0.0
  %8878 = vmatprep.subr.mxu0 0.0
  %8879 = vmatpush1.msra.mxu0 0.0
  %8880 = vmatprep.subr.mxu0 0.0
  %8881 = vmatpush1.msra.mxu0 0.0
  %8882 = vmatprep.subr.mxu0 0.0
  %8883 = vmatpush1.msra.mxu0 0.0
  %8884 = vmatprep.subr.mxu0 0.0
  %8885 = vmatpush1.msra.mxu0 0.0
  %8886 = vmatprep.subr.mxu0 0.0
  %8887 = vmatpush1.msra.mxu0 0.0
  %8888 = vmatprep.subr.mxu0 0.0
  %8889 = vmatpush1.msra.mxu0 0.0
  %8890 = vmatprep.subr.mxu0 0.0
  %8891 = vmatpush1.msra.mxu0 0.0
  %8892 = vmatprep.subr.mxu0 0.0
  %8893 = vmatpush1.msra.mxu0 0.0
  %8894 = vmatprep.subr.mxu0 0.0
  %8895 = vmatpush1.msra.mxu0 0.0
  %8896 = vmatprep.subr.mxu0 0.0
  %8897 = vmatpush1.msra.mxu0 0.0
  %8898 = vmatprep.subr.mxu0 0.0
  %8899 = vmatpush1.msra.mxu0 0.0
  %8900 = vmatprep.subr.mxu0 0.0
  %8901 = vmatpush1.msra.mxu0 0.0
  %8902 = vmatprep.subr.mxu0 0.0
  %8903 = vmatpush1.msra.mxu0 0.0
  %8904 = vmatprep.mubr.f32.mxu0 0.0
  %8905 = vmatmul.mubr.f32.gmra.mrb[0].mxu0 %v8767
  %v8906 = vpop.f32.mrb[0].mxu0
  %v8907 = vadd.f32 %v8763, %v8906
  %v8908 = vpop.f32.mrb[0].mxu0
  %v8909 = vadd.f32 %v8763, %v8908
  %8910 = vdwg.mxu0
  %v8911 = vtanh.pop %v8836
  %v8912 = vtanh.pop %v8838
  %v8913 = vtanh.pop %v8907
  %v8914 = vtanh.pop %v8909
  %v8919 = vcombine.low %v8911, %v8912
  %v8920 = vcombine.low %v8913, %v8914
  %8923 = vst [vmem:[%s7] sm:$0xff] %v8919
  %8924 = vst [vmem:[%s7 + $0x8] sm:$0xff] %v8920
  // Predicated region
  $region30: #{op_network_forward.1} parent=0 // pred_check
    _
  $region31: #{op_network_forward.1} parent=0 // pred_check_branch
    %8926 = sbr.rel (0) target = $region33
  $region32: #{op_network_forward.1} parent=0 // pred_region
    _
  $region33: #{op_network_forward.1} parent=0 // pred_fallthru
    _
  // Predicated region
  $region34: #{op_network_forward.1} parent=0 // pred_check
    _
  $region35: #{op_network_forward.1} parent=0 // pred_check_branch
    %8928 = sbr.rel (0) target = $region37
  $region36: #{op_network_forward.1} parent=0 // pred_region
    _
  $region37: #{op_network_forward.1} parent=0 // pred_fallthru
    _

</llo_original>
